<compile_context>
chip_gen: v5e
topology: v5e:2x2
jax: 0.10.0
libtpu: 0.0.40
codegen_flags: <defaults>
</compile_context>

<pallas_src>
import math

import jax
import jax.numpy as jnp
from jax import lax
from jax.experimental import pallas as pl
from jax.experimental.pallas import tpu as pltpu

_LANE = 128


def _rup(n, m=_LANE):
    return ((n + m - 1) // m) * m


def _pad_axis(a, axis, target):
    pad = target - a.shape[axis]
    if pad == 0:
        return a
    widths = [(0, 0)] * a.ndim
    widths[axis] = (0, pad)
    return jnp.pad(a, widths)


def unet_up_block_kernel(x_ref, br_ref, wt_ref, bt_ref, w1_ref, b1_ref,
                         w2_ref, b2_ref, o_ref, s1_ref, s2_ref):
    # x_ref  : (1, H, W, Cin_p)        bf16 input to the transposed conv
    # br_ref : (1, Hb, Wb, Cb_p)       bf16 full bridge (NHWC, channel-padded); the center
    #                                  crop is applied with static offsets in the read below
    # wt_ref : (2, Cin_p, 2*Cup_p)     bf16 row-fused ConvTranspose2d weight (per out-row parity)
    # bt_ref : (1, 2*Cup_p)            f32  tiled transposed-conv bias
    # w1_ref : (3, 3*Ccat_p, C1_p)     bf16 conv1 weight, kw folded into K (K = kw*Ccat_p + cin)
    # w2_ref : (3, 3*C1_p,  C2_p)      bf16 conv2 weight, kw folded into K
    # b1/b2  : (1, C)                  f32  biases
    # s1_ref : (Ho+2, Wo, 3*Ccat_p)    bf16 kw-stacked, row-padded conv1 input scratch
    # s2_ref : (Ho+2, Wo, 3*C1_p)      bf16 kw-stacked, row-padded conv2 input scratch
    _, H, W, Cin = x_ref.shape
    _, Ho, Wo, C2 = o_ref.shape
    _, Hb, Wb, _ = br_ref.shape
    Cup = wt_ref.shape[2] // 2
    Ccat = w1_ref.shape[1] // 3
    C1 = w1_ref.shape[2]
    dy = (Hb - Ho) // 2            # static center-crop offsets
    dx = (Wb - Wo) // 2
    f32 = jnp.float32
    bf16 = s1_ref.dtype

    # ---- halo zeroing (tiny): rows 0 / Ho+1 plus the two never-written column strips ----
    # Re-zeroed every step so the scratch carries no cross-step state; the interior is
    # fully overwritten below.  This replaces the previous whole-buffer zero per step.
    def zero_halo(dst, cblk):
        cw = dst.shape[2]
        zrow = jnp.zeros((1, Wo, cw), dst.dtype)
        dst[0:1, :, :] = zrow
        dst[Ho + 1:Ho + 2, :, :] = zrow
        zcol = jnp.zeros((Ho, 1, cblk), dst.dtype)
        dst[1:Ho + 1, 0:1, 0:cblk] = zcol                         # kw=0 block, left halo col
        dst[1:Ho + 1, Wo - 1:Wo, 2 * cblk:3 * cblk] = zcol        # kw=2 block, right halo col

    zero_halo(s1_ref, Ccat)
    zero_halo(s2_ref, C1)

    # S[hp, w, kw*cblk + c0 + c] = P[hp, w + kw], where P is `val` with a 1-px zero border.
    # Three disjoint, lane-aligned channel-block stores; kw=0/2 are shifted by one column.
    def stack_store(dst, val, cblk, c0):
        cn = val.shape[2]
        dst[1:Ho + 1, 1:Wo, c0:c0 + cn] = val[:, 0:Wo - 1, :]                        # kw = 0
        dst[1:Ho + 1, :, cblk + c0:cblk + c0 + cn] = val                             # kw = 1
        dst[1:Ho + 1, 0:Wo - 1, 2 * cblk + c0:2 * cblk + c0 + cn] = val[:, 1:Wo, :]  # kw = 2

    # ---- ConvTranspose2d(k=2, s=2): two row-fused matmuls (kw taps fused into N=2*Cup_p) ----
    x_flat = x_ref[0].reshape(H * W, Cin)
    bt = bt_ref[...]                                             # hoisted bias read
    parts = []
    for p in range(2):                                           # output-row parity
        r = jnp.dot(x_flat, wt_ref[p], preferred_element_type=f32) + bt
        # (H*W, 2*Cup) laid out as (kw, c) -> (H, 2W, Cup): up[h, 2w+kw, c]
        parts.append(r.reshape(H, Wo, Cup).astype(bf16))
    # Interleave the two parities: leading-axis stack + leading-dim merge (cheap, no
    # lane/sublane relayout), done in bf16 to keep the intermediate small.
    up = jnp.stack(parts, axis=1).reshape(Ho, Wo, Cup)
    stack_store(s1_ref, up, Ccat, 0)

    # "concat([up, bridge])": the cropped bridge fills the second half of every kw block.
    crop = br_ref[0, dy:dy + Ho, dx:dx + Wo, :]
    stack_store(s1_ref, crop, Ccat, Cup)

    # ---- Conv2d 3x3 pad=1 + ReLU: 3 row taps, K = 3*Ccat_p (view-preserving LHS loads) ----
    b1 = b1_ref[...]
    acc1 = None
    for kh in range(3):
        lhs = s1_ref[kh:kh + Ho, :, :].reshape(Ho * Wo, 3 * Ccat)   # contiguous rows, free reshape
        t = jnp.dot(lhs, w1_ref[kh], preferred_element_type=f32)
        acc1 = t if acc1 is None else acc1 + t
    h1 = jnp.maximum(acc1 + b1, 0.0).astype(bf16).reshape(Ho, Wo, C1)
    stack_store(s2_ref, h1, C1, 0)

    # ---- second Conv2d 3x3 pad=1 + ReLU: 3 row taps, K = 3*C1_p ----
    b2 = b2_ref[...]
    acc2 = None
    for kh in range(3):
        lhs = s2_ref[kh:kh + Ho, :, :].reshape(Ho * Wo, 3 * C1)
        t = jnp.dot(lhs, w2_ref[kh], preferred_element_type=f32)
        acc2 = t if acc2 is None else acc2 + t
    h2 = jnp.maximum(acc2 + b2, 0.0)
    o_ref[0] = h2.reshape(Ho, Wo, C2).astype(o_ref.dtype)        # lane-dense store (C2_p % 128 == 0)


def unet_up_block_forward(x_nchw, bridge_nchw, params, out_dtype=jnp.float32):
    """PyTorch-equivalent forward. x/bridge are NCHW f32; returns NCHW output
    (f32 by default, bf16 with out_dtype=jnp.bfloat16 to halve HBM writeback)."""
    N, Cin, H, W = x_nchw.shape
    Ho, Wo = 2 * H, 2 * W
    Cup = params["wt_pt"].shape[1]
    C1 = params["w1_pt"].shape[0]
    C2 = params["w2_pt"].shape[0]
    _, Cb, Hb, Wb = bridge_nchw.shape
    assert Cup + Cb == params["w1_pt"].shape[1], "concat channels must match conv1 in_size"
    assert Hb >= Ho and Wb >= Wo, "bridge must be at least as large as the upsampled map"
    assert Wo % 8 == 0, "upsampled width must be a multiple of 8"  # TODO(synk): pad W otherwise

    # channel padding to lane multiples (no-op for production channel counts >= 128)
    Cin_p, Cup_p, Cb_p = _rup(Cin), _rup(Cup), _rup(Cb)
    C1_p, C2_p = _rup(C1), _rup(C2)
    Ccat_p = Cup_p + Cb_p
    out_bytes = jnp.dtype(out_dtype).itemsize

    # --- ConvTranspose2d weight (Cin, Cup, 2, 2) -> 2 row-fused slabs (kh, Cin_p, 2*Cup_p) ---
    wt = jnp.transpose(params["wt_pt"], (0, 2, 3, 1))             # (Cin, kh, kw, Cup)
    wt = _pad_axis(_pad_axis(wt, 3, Cup_p), 0, Cin_p)             # (Cin_p, 2, 2, Cup_p)
    wt_rows = jnp.transpose(wt, (1, 0, 2, 3)).reshape(2, Cin_p, 2 * Cup_p).astype(jnp.bfloat16)
    bt2 = jnp.tile(_pad_axis(params["bt"], 0, Cup_p), 2).reshape(1, 2 * Cup_p).astype(jnp.float32)

    # --- conv1 weight: split in-channels into (up | bridge), pad each, fold kw into K ---
    w1 = jnp.transpose(params["w1_pt"], (2, 3, 1, 0))             # (3, 3, Cup+Cb, C1)
    w1_up = _pad_axis(w1[:, :, :Cup, :], 2, Cup_p)
    w1_br = _pad_axis(w1[:, :, Cup:, :], 2, Cb_p)
    w1p = _pad_axis(jnp.concatenate([w1_up, w1_br], axis=2), 3, C1_p)   # (3, 3, Ccat_p, C1_p)
    w1k = w1p.reshape(3, 3 * Ccat_p, C1_p).astype(jnp.bfloat16)         # K index = kw*Ccat_p + cin
    b1 = _pad_axis(params["b1"], 0, C1_p).reshape(1, C1_p).astype(jnp.float32)

    # --- conv2 weight: fold kw into K ---
    w2 = jnp.transpose(params["w2_pt"], (2, 3, 1, 0))             # (3, 3, C1, C2)
    w2p = _pad_axis(_pad_axis(w2, 2, C1_p), 3, C2_p)
    w2k = w2p.reshape(3, 3 * C1_p, C2_p).astype(jnp.bfloat16)
    b2 = _pad_axis(params["b2"], 0, C2_p).reshape(1, C2_p).astype(jnp.float32)

    # --- activations: NCHW -> NHWC, channel pad, bf16. The bridge is passed UNCROPPED; the
    # center crop is folded into the kernel's read.  (These adapter transposes only exist to
    # match the PyTorch NCHW interface; a chained NHWC pipeline would skip them entirely.)
    x_nhwc = _pad_axis(jnp.transpose(x_nchw, (0, 2, 3, 1)), 3, Cin_p).astype(jnp.bfloat16)
    br_nhwc = _pad_axis(jnp.transpose(bridge_nchw, (0, 2, 3, 1)), 3, Cb_p).astype(jnp.bfloat16)

    flops = N * (2 * 2 * H * W * Cin_p * (2 * Cup_p)
                 + 2 * 3 * Ho * Wo * (3 * Ccat_p) * C1_p
                 + 2 * 3 * Ho * Wo * (3 * C1_p) * C2_p)
    bytes_accessed = ((N * H * W * Cin_p + N * Hb * Wb * Cb_p
                       + 2 * Cin_p * 2 * Cup_p + 9 * Ccat_p * C1_p + 9 * C1_p * C2_p) * 2
                      + (2 * Cup_p + C1_p + C2_p) * 4
                      + N * Ho * Wo * C2_p * out_bytes)

    scratch_bytes = (Ho + 2) * Wo * 3 * (Ccat_p + C1_p) * 2
    block_bytes = (2 * (H * W * Cin_p + Hb * Wb * Cb_p) * 2
                   + 2 * Ho * Wo * C2_p * out_bytes
                   + (2 * Cin_p * 2 * Cup_p + 9 * Ccat_p * C1_p + 9 * C1_p * C2_p) * 2
                   + (2 * Cup_p + C1_p + C2_p) * 4)
    vmem_limit = int(min(48 * 2 ** 20, max(16 * 2 ** 20, 2 * (scratch_bytes + block_bytes))))

    out_nhwc = pl.pallas_call(
        unet_up_block_kernel,
        out_shape=jax.ShapeDtypeStruct((N, Ho, Wo, C2_p), out_dtype),
        grid_spec=pltpu.PrefetchScalarGridSpec(
            num_scalar_prefetch=0,
            grid=(N,),
            in_specs=[
                pl.BlockSpec((1, H, W, Cin_p), lambda n: (n, 0, 0, 0)),
                pl.BlockSpec((1, Hb, Wb, Cb_p), lambda n: (n, 0, 0, 0)),
                pl.BlockSpec((2, Cin_p, 2 * Cup_p), lambda n: (0, 0, 0)),
                pl.BlockSpec((1, 2 * Cup_p), lambda n: (0, 0)),
                pl.BlockSpec((3, 3 * Ccat_p, C1_p), lambda n: (0, 0, 0)),
                pl.BlockSpec((1, C1_p), lambda n: (0, 0)),
                pl.BlockSpec((3, 3 * C1_p, C2_p), lambda n: (0, 0, 0)),
                pl.BlockSpec((1, C2_p), lambda n: (0, 0)),
            ],
            out_specs=pl.BlockSpec((1, Ho, Wo, C2_p), lambda n: (n, 0, 0, 0)),
            scratch_shapes=[
                pltpu.VMEM((Ho + 2, Wo, 3 * Ccat_p), jnp.bfloat16),
                pltpu.VMEM((Ho + 2, Wo, 3 * C1_p), jnp.bfloat16),
            ],
        ),
        compiler_params=pltpu.CompilerParams(
            dimension_semantics=("parallel",),
            vmem_limit_bytes=vmem_limit),
        cost_estimate=pl.CostEstimate(
            flops=int(flops), transcendentals=0, bytes_accessed=int(bytes_accessed)),
    )(x_nhwc, br_nhwc, wt_rows, bt2, w1k, b1, w2k, b2)

    # NCHW adapter to match the PyTorch module's interface (drops padded channels).
    return jnp.transpose(out_nhwc[:, :, :, :C2], (0, 3, 1, 2))


def init_params(key, in_size, out_size):
    """Deterministic synthetic parameters matching the PyTorch module's shapes/init."""
    k1, k2, k3, k4 = jax.random.split(key, 4)
    # ConvTranspose2d(in_size, out_size, 2, 2): weight (in, out, 2, 2)
    wt_pt = jax.random.normal(k1, (in_size, out_size, 2, 2), jnp.float32) \
        * (1.0 / math.sqrt(in_size * 4))
    bt = 0.1 * jax.random.normal(k2, (out_size,), jnp.float32)
    # Conv2d weights: kaiming_normal fan_out, relu -> std = sqrt(2 / (cout*kh*kw))
    std = math.sqrt(2.0 / (out_size * 9))
    w1_pt = jax.random.normal(k3, (out_size, in_size, 3, 3), jnp.float32) * std
    w2_pt = jax.random.normal(k4, (out_size, out_size, 3, 3), jnp.float32) * std
    b1 = jnp.zeros((out_size,), jnp.float32)   # nn.init.constant_(bias, 0)
    b2 = jnp.zeros((out_size,), jnp.float32)
    return dict(wt_pt=wt_pt, bt=bt, w1_pt=w1_pt, b1=b1, w2_pt=w2_pt, b2=b2)


def reference_forward(x, bridge, p, mirror_bf16=False):
    """Pure-JAX (XLA) reference, NCHW. With mirror_bf16=True it reproduces the kernel's
    numerics (bf16 operands / activations, f32 accumulation)."""
    if mirror_bf16:
        cast = lambda a: a.astype(jnp.bfloat16).astype(jnp.float32)
    else:
        cast = lambda a: a
    N, Cin, H, W = x.shape
    Ho, Wo = 2 * H, 2 * W
    Cup = p["wt_pt"].shape[1]
    # ConvTranspose2d k=2 s=2: up[n,o,2h+k,2w+l] = sum_c x[n,c,h,w] * Wt[c,o,k,l]
    up = jnp.einsum('nchw,cokl->nohkwl', cast(x), cast(p["wt_pt"]),
                    precision=lax.Precision.HIGHEST).reshape(N, Cup, Ho, Wo)
    up = cast(up + p["bt"][None, :, None, None])
    _, Cb, Hb, Wb = bridge.shape
    dy = (Hb - Ho) // 2
    dx = (Wb - Wo) // 2
    crop = cast(bridge[:, :, dy:dy + Ho, dx:dx + Wo])
    cat = jnp.concatenate([up, crop], axis=1)
    dn = ('NCHW', 'OIHW', 'NCHW')
    h1 = lax.conv_general_dilated(cat, cast(p["w1_pt"]), (1, 1), [(1, 1), (1, 1)],
                                  dimension_numbers=dn, precision=lax.Precision.HIGHEST)
    h1 = cast(jnp.maximum(h1 + p["b1"][None, :, None, None], 0.0))
    h2 = lax.conv_general_dilated(h1, cast(p["w2_pt"]), (1, 1), [(1, 1), (1, 1)],
                                  dimension_numbers=dn, precision=lax.Precision.HIGHEST)
    h2 = jnp.maximum(h2 + p["b2"][None, :, None, None], 0.0)
    return h2


if __name__ == "__main__":
    in_size, out_size = 8, 4           # conv_block input = out_size + bridge_channels = in_size
    N, H, W = 2, 8, 8                  # x spatial 8x8 -> upsampled to 16x16
    key = jax.random.PRNGKey(0)
    kx, kb, kp = jax.random.split(key, 3)
    x = jax.random.normal(kx, (N, in_size, H, W), jnp.float32)
    # bridge slightly larger spatially to exercise the fused center_crop (18 -> 16)
    bridge = jax.random.normal(
        kb, (N, in_size - out_size, 2 * H + 2, 2 * W + 2), jnp.float32)
    params = init_params(kp, in_size, out_size)

    # f32 output (module-faithful)
    out = unet_up_block_forward(x, bridge, params)
    out = jax.block_until_ready(out)
    assert out.shape == (N, out_size, 2 * H, 2 * W), out.shape
    assert out.dtype == jnp.float32

    ref_bf = reference_forward(x, bridge, params, mirror_bf16=True)
    ref_fp = reference_forward(x, bridge, params, mirror_bf16=False)
    err_bf = float(jnp.max(jnp.abs(out - ref_bf)))
    err_fp = float(jnp.max(jnp.abs(out - ref_fp)))
    assert err_bf < 3e-2, f"max abs error vs bf16-mirrored reference: {err_bf}"
    assert err_fp < 1e-1, f"max abs error vs f32 reference: {err_fp}"

    # bf16 writeback path (halves HBM writeback when the next UNet block consumes bf16)
    out_bf = jax.block_until_ready(
        unet_up_block_forward(x, bridge, params, out_dtype=jnp.bfloat16))
    assert out_bf.dtype == jnp.bfloat16
    err_bf16out = float(jnp.max(jnp.abs(out_bf.astype(jnp.float32) - ref_bf)))
    assert err_bf16out < 1e-1, f"max abs error (bf16 output) vs mirrored reference: {err_bf16out}"

    print("KERNEL_OK")
</pallas_src>

<mosaic_0001>
module attributes {stable_mosaic.version = 11 : i64} {
  func.func @unet_up_block_kernel(%arg0: i32, %arg1: memref<1x8x8x128xbf16, #tpu.memory_space<vmem>>, %arg2: memref<1x18x18x128xbf16, #tpu.memory_space<vmem>>, %arg3: memref<2x128x256xbf16, #tpu.memory_space<vmem>>, %arg4: memref<1x256xf32, #tpu.memory_space<vmem>>, %arg5: memref<3x768x128xbf16, #tpu.memory_space<vmem>>, %arg6: memref<1x128xf32, #tpu.memory_space<vmem>>, %arg7: memref<3x384x128xbf16, #tpu.memory_space<vmem>>, %arg8: memref<1x128xf32, #tpu.memory_space<vmem>>, %arg9: memref<1x16x16x128xf32, #tpu.memory_space<vmem>>, %arg10: memref<18x16x768xbf16, #tpu.memory_space<vmem>>, %arg11: memref<18x16x384xbf16, #tpu.memory_space<vmem>>) attributes {dimension_semantics = [#tpu.dimension_semantics<parallel>], iteration_bounds = array<i64: 2>, scalar_prefetch = 0 : i64, scratch_operands = 2 : i64, tpu.core_type = #tpu.core_type<tc>, window_params = [{transform_indices = @transform_0, window_bounds = array<i64: 1, 8, 8, 128>}, {transform_indices = @transform_1, window_bounds = array<i64: 1, 18, 18, 128>}, {pipeline_mode = #tpu.pipeline_mode<synchronous>, transform_indices = @transform_2, window_bounds = array<i64: 2, 128, 256>}, {pipeline_mode = #tpu.pipeline_mode<synchronous>, transform_indices = @transform_3, window_bounds = array<i64: 1, 256>}, {pipeline_mode = #tpu.pipeline_mode<synchronous>, transform_indices = @transform_4, window_bounds = array<i64: 3, 768, 128>}, {pipeline_mode = #tpu.pipeline_mode<synchronous>, transform_indices = @transform_5, window_bounds = array<i64: 1, 128>}, {pipeline_mode = #tpu.pipeline_mode<synchronous>, transform_indices = @transform_6, window_bounds = array<i64: 3, 384, 128>}, {pipeline_mode = #tpu.pipeline_mode<synchronous>, transform_indices = @transform_7, window_bounds = array<i64: 1, 128>}, {transform_indices = @transform_8, window_bounds = array<i64: 1, 16, 16, 128>}]} {
    %cst = arith.constant 0.000000e+00 : bf16
    %0 = vector.broadcast %cst : bf16 to vector<1x16x768xbf16>
    %c0 = arith.constant 0 : index
    %c0_0 = arith.constant 0 : index
    %c0_1 = arith.constant 0 : index
    %1 = vector.load %arg10[%c0, %c0_0, %c0_1] : memref<18x16x768xbf16, #tpu.memory_space<vmem>>, vector<1x16x768xbf16>
    tpu.vector_store %arg10[%c0, %c0_0, %c0_1], %0 {strides = array<i32>} : memref<18x16x768xbf16, #tpu.memory_space<vmem>>, vector<1x16x768xbf16>,
    %c17 = arith.constant 17 : index
    %c0_2 = arith.constant 0 : index
    %c0_3 = arith.constant 0 : index
    %2 = vector.load %arg10[%c17, %c0_2, %c0_3] : memref<18x16x768xbf16, #tpu.memory_space<vmem>>, vector<1x16x768xbf16>
    tpu.vector_store %arg10[%c17, %c0_2, %c0_3], %0 {strides = array<i32>} : memref<18x16x768xbf16, #tpu.memory_space<vmem>>, vector<1x16x768xbf16>,
    %cst_4 = arith.constant 0.000000e+00 : bf16
    %3 = vector.broadcast %cst_4 : bf16 to vector<16x1x256xbf16>
    %c1 = arith.constant 1 : index
    %c0_5 = arith.constant 0 : index
    %c0_6 = arith.constant 0 : index
    %4 = vector.load %arg10[%c1, %c0_5, %c0_6] : memref<18x16x768xbf16, #tpu.memory_space<vmem>>, vector<16x1x256xbf16>
    tpu.vector_store %arg10[%c1, %c0_5, %c0_6], %3 {strides = array<i32>} : memref<18x16x768xbf16, #tpu.memory_space<vmem>>, vector<16x1x256xbf16>,
    %c1_7 = arith.constant 1 : index
    %c15 = arith.constant 15 : index
    %c512 = arith.constant 512 : index
    %5 = vector.load %arg10[%c1_7, %c15, %c512] : memref<18x16x768xbf16, #tpu.memory_space<vmem>>, vector<16x1x256xbf16>
    tpu.vector_store %arg10[%c1_7, %c15, %c512], %3 {strides = array<i32>} : memref<18x16x768xbf16, #tpu.memory_space<vmem>>, vector<16x1x256xbf16>,
    %cst_8 = arith.constant 0.000000e+00 : bf16
    %6 = vector.broadcast %cst_8 : bf16 to vector<1x16x384xbf16>
    %c0_9 = arith.constant 0 : index
    %c0_10 = arith.constant 0 : index
    %c0_11 = arith.constant 0 : index
    %7 = vector.load %arg11[%c0_9, %c0_10, %c0_11] : memref<18x16x384xbf16, #tpu.memory_space<vmem>>, vector<1x16x384xbf16>
    tpu.vector_store %arg11[%c0_9, %c0_10, %c0_11], %6 {strides = array<i32>} : memref<18x16x384xbf16, #tpu.memory_space<vmem>>, vector<1x16x384xbf16>,
    %c17_12 = arith.constant 17 : index
    %c0_13 = arith.constant 0 : index
    %c0_14 = arith.constant 0 : index
    %8 = vector.load %arg11[%c17_12, %c0_13, %c0_14] : memref<18x16x384xbf16, #tpu.memory_space<vmem>>, vector<1x16x384xbf16>
    tpu.vector_store %arg11[%c17_12, %c0_13, %c0_14], %6 {strides = array<i32>} : memref<18x16x384xbf16, #tpu.memory_space<vmem>>, vector<1x16x384xbf16>,
    %cst_15 = arith.constant 0.000000e+00 : bf16
    %9 = vector.broadcast %cst_15 : bf16 to vector<16x1x128xbf16>
    %c1_16 = arith.constant 1 : index
    %c0_17 = arith.constant 0 : index
    %c0_18 = arith.constant 0 : index
    %10 = vector.load %arg11[%c1_16, %c0_17, %c0_18] : memref<18x16x384xbf16, #tpu.memory_space<vmem>>, vector<16x1x128xbf16>
    tpu.vector_store %arg11[%c1_16, %c0_17, %c0_18], %9 {strides = array<i32>} : memref<18x16x384xbf16, #tpu.memory_space<vmem>>, vector<16x1x128xbf16>,
    %c1_19 = arith.constant 1 : index
    %c15_20 = arith.constant 15 : index
    %c256 = arith.constant 256 : index
    %11 = vector.load %arg11[%c1_19, %c15_20, %c256] : memref<18x16x384xbf16, #tpu.memory_space<vmem>>, vector<16x1x128xbf16>
    tpu.vector_store %arg11[%c1_19, %c15_20, %c256], %9 {strides = array<i32>} : memref<18x16x384xbf16, #tpu.memory_space<vmem>>, vector<16x1x128xbf16>,
    %c0_21 = arith.constant 0 : index
    %c0_22 = arith.constant 0 : index
    %c0_23 = arith.constant 0 : index
    %c0_24 = arith.constant 0 : index
    %12 = vector.load %arg1[%c0_21, %c0_22, %c0_23, %c0_24] : memref<1x8x8x128xbf16, #tpu.memory_space<vmem>>, vector<1x8x8x128xbf16>
    %13 = vector.shape_cast %12 : vector<1x8x8x128xbf16> to vector<8x8x128xbf16>
    %14 = vector.shape_cast %13 : vector<8x8x128xbf16> to vector<64x128xbf16>
    %c0_25 = arith.constant 0 : index
    %c0_26 = arith.constant 0 : index
    %15 = vector.load %arg4[%c0_25, %c0_26] : memref<1x256xf32, #tpu.memory_space<vmem>>, vector<1x256xf32>
    %c0_27 = arith.constant 0 : index
    %c0_28 = arith.constant 0 : index
    %c0_29 = arith.constant 0 : index
    %16 = vector.load %arg3[%c0_27, %c0_28, %c0_29] : memref<2x128x256xbf16, #tpu.memory_space<vmem>>, vector<1x128x256xbf16>
    %17 = vector.shape_cast %16 : vector<1x128x256xbf16> to vector<128x256xbf16>
    %cst_30 = arith.constant dense<0.000000e+00> : vector<64x256xf32>
    %18 = tpu.matmul %14, %17, %cst_30 {dimension_numbers = #tpu.dot_dimension_numbers<[1], [0], [0], [1], [0, 0, 1, 1], [], []>} : vector<64x128xbf16>, vector<128x256xbf16>, vector<64x256xf32> -> vector<64x256xf32>
    %19 = vector.broadcast %15 : vector<1x256xf32> to vector<64x256xf32>
    %20 = arith.addf %18, %19 : vector<64x256xf32>
    %21 = vector.shape_cast %20 : vector<64x256xf32> to vector<8x16x128xf32>
    %22 = arith.truncf %21 : vector<8x16x128xf32> to vector<8x16x128xbf16>
    %c1_31 = arith.constant 1 : index
    %c0_32 = arith.constant 0 : index
    %c0_33 = arith.constant 0 : index
    %23 = vector.load %arg3[%c1_31, %c0_32, %c0_33] : memref<2x128x256xbf16, #tpu.memory_space<vmem>>, vector<1x128x256xbf16>
    %24 = vector.shape_cast %23 : vector<1x128x256xbf16> to vector<128x256xbf16>
    %cst_34 = arith.constant dense<0.000000e+00> : vector<64x256xf32>
    %25 = tpu.matmul %14, %24, %cst_34 {dimension_numbers = #tpu.dot_dimension_numbers<[1], [0], [0], [1], [0, 0, 1, 1], [], []>} : vector<64x128xbf16>, vector<128x256xbf16>, vector<64x256xf32> -> vector<64x256xf32>
    %26 = vector.broadcast %15 : vector<1x256xf32> to vector<64x256xf32>
    %27 = arith.addf %25, %26 : vector<64x256xf32>
    %28 = vector.shape_cast %27 : vector<64x256xf32> to vector<8x16x128xf32>
    %29 = arith.truncf %28 : vector<8x16x128xf32> to vector<8x16x128xbf16>
    %30 = vector.shape_cast %22 : vector<8x16x128xbf16> to vector<8x1x16x128xbf16>
    %31 = vector.shape_cast %29 : vector<8x16x128xbf16> to vector<8x1x16x128xbf16>
    %32 = tpu.concatenate %30, %31 in 1 : vector<8x1x16x128xbf16>, vector<8x1x16x128xbf16> -> vector<8x2x16x128xbf16>
    %33 = vector.shape_cast %32 : vector<8x2x16x128xbf16> to vector<16x16x128xbf16>
    %34 = vector.extract_strided_slice %33 {offsets = [0, 0, 0], sizes = [16, 15, 128], strides = [1, 1, 1]} : vector<16x16x128xbf16> to vector<16x15x128xbf16>
    %c1_35 = arith.constant 1 : index
    %c1_36 = arith.constant 1 : index
    %c0_37 = arith.constant 0 : index
    %35 = vector.load %arg10[%c1_35, %c1_36, %c0_37] : memref<18x16x768xbf16, #tpu.memory_space<vmem>>, vector<16x15x128xbf16>
    tpu.vector_store %arg10[%c1_35, %c1_36, %c0_37], %34 {strides = array<i32>} : memref<18x16x768xbf16, #tpu.memory_space<vmem>>, vector<16x15x128xbf16>,
    %c1_38 = arith.constant 1 : index
    %c0_39 = arith.constant 0 : index
    %c256_40 = arith.constant 256 : index
    %36 = vector.load %arg10[%c1_38, %c0_39, %c256_40] : memref<18x16x768xbf16, #tpu.memory_space<vmem>>, vector<16x16x128xbf16>
    tpu.vector_store %arg10[%c1_38, %c0_39, %c256_40], %33 {strides = array<i32>} : memref<18x16x768xbf16, #tpu.memory_space<vmem>>, vector<16x16x128xbf16>,
    %37 = vector.extract_strided_slice %33 {offsets = [0, 1, 0], sizes = [16, 15, 128], strides = [1, 1, 1]} : vector<16x16x128xbf16> to vector<16x15x128xbf16>
    %c1_41 = arith.constant 1 : index
    %c0_42 = arith.constant 0 : index
    %c512_43 = arith.constant 512 : index
    %38 = vector.load %arg10[%c1_41, %c0_42, %c512_43] : memref<18x16x768xbf16, #tpu.memory_space<vmem>>, vector<16x15x128xbf16>
    tpu.vector_store %arg10[%c1_41, %c0_42, %c512_43], %37 {strides = array<i32>} : memref<18x16x768xbf16, #tpu.memory_space<vmem>>, vector<16x15x128xbf16>,
    %c0_44 = arith.constant 0 : index
    %c1_45 = arith.constant 1 : index
    %c1_46 = arith.constant 1 : index
    %c0_47 = arith.constant 0 : index
    %39 = vector.load %arg2[%c0_44, %c1_45, %c1_46, %c0_47] : memref<1x18x18x128xbf16, #tpu.memory_space<vmem>>, vector<1x16x16x128xbf16>
    %40 = vector.shape_cast %39 : vector<1x16x16x128xbf16> to vector<16x16x128xbf16>
    %41 = vector.extract_strided_slice %40 {offsets = [0, 0, 0], sizes = [16, 15, 128], strides = [1, 1, 1]} : vector<16x16x128xbf16> to vector<16x15x128xbf16>
    %c1_48 = arith.constant 1 : index
    %c1_49 = arith.constant 1 : index
    %c128 = arith.constant 128 : index
    %42 = vector.load %arg10[%c1_48, %c1_49, %c128] : memref<18x16x768xbf16, #tpu.memory_space<vmem>>, vector<16x15x128xbf16>
    tpu.vector_store %arg10[%c1_48, %c1_49, %c128], %41 {strides = array<i32>} : memref<18x16x768xbf16, #tpu.memory_space<vmem>>, vector<16x15x128xbf16>,
    %c1_50 = arith.constant 1 : index
    %c0_51 = arith.constant 0 : index
    %c384 = arith.constant 384 : index
    %43 = vector.load %arg10[%c1_50, %c0_51, %c384] : memref<18x16x768xbf16, #tpu.memory_space<vmem>>, vector<16x16x128xbf16>
    tpu.vector_store %arg10[%c1_50, %c0_51, %c384], %40 {strides = array<i32>} : memref<18x16x768xbf16, #tpu.memory_space<vmem>>, vector<16x16x128xbf16>,
    %44 = vector.extract_strided_slice %40 {offsets = [0, 1, 0], sizes = [16, 15, 128], strides = [1, 1, 1]} : vector<16x16x128xbf16> to vector<16x15x128xbf16>
    %c1_52 = arith.constant 1 : index
    %c0_53 = arith.constant 0 : index
    %c640 = arith.constant 640 : index
    %45 = vector.load %arg10[%c1_52, %c0_53, %c640] : memref<18x16x768xbf16, #tpu.memory_space<vmem>>, vector<16x15x128xbf16>
    tpu.vector_store %arg10[%c1_52, %c0_53, %c640], %44 {strides = array<i32>} : memref<18x16x768xbf16, #tpu.memory_space<vmem>>, vector<16x15x128xbf16>,
    %c0_54 = arith.constant 0 : index
    %c0_55 = arith.constant 0 : index
    %46 = vector.load %arg6[%c0_54, %c0_55] : memref<1x128xf32, #tpu.memory_space<vmem>>, vector<1x128xf32>
    %c0_56 = arith.constant 0 : index
    %c0_57 = arith.constant 0 : index
    %c0_58 = arith.constant 0 : index
    %47 = vector.load %arg10[%c0_56, %c0_57, %c0_58] : memref<18x16x768xbf16, #tpu.memory_space<vmem>>, vector<16x16x768xbf16>
    %48 = vector.shape_cast %47 : vector<16x16x768xbf16> to vector<256x768xbf16>
    %c0_59 = arith.constant 0 : index
    %c0_60 = arith.constant 0 : index
    %c0_61 = arith.constant 0 : index
    %49 = vector.load %arg5[%c0_59, %c0_60, %c0_61] : memref<3x768x128xbf16, #tpu.memory_space<vmem>>, vector<1x768x128xbf16>
    %50 = vector.shape_cast %49 : vector<1x768x128xbf16> to vector<768x128xbf16>
    %cst_62 = arith.constant dense<0.000000e+00> : vector<256x128xf32>
    %51 = tpu.matmul %48, %50, %cst_62 {dimension_numbers = #tpu.dot_dimension_numbers<[1], [0], [0], [1], [0, 0, 1, 1], [], []>} : vector<256x768xbf16>, vector<768x128xbf16>, vector<256x128xf32> -> vector<256x128xf32>
    %c1_63 = arith.constant 1 : index
    %c0_64 = arith.constant 0 : index
    %c0_65 = arith.constant 0 : index
    %52 = vector.load %arg10[%c1_63, %c0_64, %c0_65] : memref<18x16x768xbf16, #tpu.memory_space<vmem>>, vector<16x16x768xbf16>
    %53 = vector.shape_cast %52 : vector<16x16x768xbf16> to vector<256x768xbf16>
    %c1_66 = arith.constant 1 : index
    %c0_67 = arith.constant 0 : index
    %c0_68 = arith.constant 0 : index
    %54 = vector.load %arg5[%c1_66, %c0_67, %c0_68] : memref<3x768x128xbf16, #tpu.memory_space<vmem>>, vector<1x768x128xbf16>
    %55 = vector.shape_cast %54 : vector<1x768x128xbf16> to vector<768x128xbf16>
    %cst_69 = arith.constant dense<0.000000e+00> : vector<256x128xf32>
    %56 = tpu.matmul %53, %55, %cst_69 {dimension_numbers = #tpu.dot_dimension_numbers<[1], [0], [0], [1], [0, 0, 1, 1], [], []>} : vector<256x768xbf16>, vector<768x128xbf16>, vector<256x128xf32> -> vector<256x128xf32>
    %57 = arith.addf %51, %56 : vector<256x128xf32>
    %c2 = arith.constant 2 : index
    %c0_70 = arith.constant 0 : index
    %c0_71 = arith.constant 0 : index
    %58 = vector.load %arg10[%c2, %c0_70, %c0_71] : memref<18x16x768xbf16, #tpu.memory_space<vmem>>, vector<16x16x768xbf16>
    %59 = vector.shape_cast %58 : vector<16x16x768xbf16> to vector<256x768xbf16>
    %c2_72 = arith.constant 2 : index
    %c0_73 = arith.constant 0 : index
    %c0_74 = arith.constant 0 : index
    %60 = vector.load %arg5[%c2_72, %c0_73, %c0_74] : memref<3x768x128xbf16, #tpu.memory_space<vmem>>, vector<1x768x128xbf16>
    %61 = vector.shape_cast %60 : vector<1x768x128xbf16> to vector<768x128xbf16>
    %cst_75 = arith.constant dense<0.000000e+00> : vector<256x128xf32>
    %62 = tpu.matmul %59, %61, %cst_75 {dimension_numbers = #tpu.dot_dimension_numbers<[1], [0], [0], [1], [0, 0, 1, 1], [], []>} : vector<256x768xbf16>, vector<768x128xbf16>, vector<256x128xf32> -> vector<256x128xf32>
    %63 = arith.addf %57, %62 : vector<256x128xf32>
    %64 = vector.broadcast %46 : vector<1x128xf32> to vector<256x128xf32>
    %65 = arith.addf %63, %64 : vector<256x128xf32>
    %cst_76 = arith.constant 0.000000e+00 : f32
    %66 = vector.broadcast %cst_76 : f32 to vector<256x128xf32>
    %67 = arith.maximumf %65, %66 : vector<256x128xf32>
    %68 = arith.truncf %67 : vector<256x128xf32> to vector<256x128xbf16>
    %69 = vector.shape_cast %68 : vector<256x128xbf16> to vector<16x16x128xbf16>
    %70 = vector.extract_strided_slice %69 {offsets = [0, 0, 0], sizes = [16, 15, 128], strides = [1, 1, 1]} : vector<16x16x128xbf16> to vector<16x15x128xbf16>
    %c1_77 = arith.constant 1 : index
    %c1_78 = arith.constant 1 : index
    %c0_79 = arith.constant 0 : index
    %71 = vector.load %arg11[%c1_77, %c1_78, %c0_79] : memref<18x16x384xbf16, #tpu.memory_space<vmem>>, vector<16x15x128xbf16>
    tpu.vector_store %arg11[%c1_77, %c1_78, %c0_79], %70 {strides = array<i32>} : memref<18x16x384xbf16, #tpu.memory_space<vmem>>, vector<16x15x128xbf16>,
    %c1_80 = arith.constant 1 : index
    %c0_81 = arith.constant 0 : index
    %c128_82 = arith.constant 128 : index
    %72 = vector.load %arg11[%c1_80, %c0_81, %c128_82] : memref<18x16x384xbf16, #tpu.memory_space<vmem>>, vector<16x16x128xbf16>
    tpu.vector_store %arg11[%c1_80, %c0_81, %c128_82], %69 {strides = array<i32>} : memref<18x16x384xbf16, #tpu.memory_space<vmem>>, vector<16x16x128xbf16>,
    %73 = vector.extract_strided_slice %69 {offsets = [0, 1, 0], sizes = [16, 15, 128], strides = [1, 1, 1]} : vector<16x16x128xbf16> to vector<16x15x128xbf16>
    %c1_83 = arith.constant 1 : index
    %c0_84 = arith.constant 0 : index
    %c256_85 = arith.constant 256 : index
    %74 = vector.load %arg11[%c1_83, %c0_84, %c256_85] : memref<18x16x384xbf16, #tpu.memory_space<vmem>>, vector<16x15x128xbf16>
    tpu.vector_store %arg11[%c1_83, %c0_84, %c256_85], %73 {strides = array<i32>} : memref<18x16x384xbf16, #tpu.memory_space<vmem>>, vector<16x15x128xbf16>,
    %c0_86 = arith.constant 0 : index
    %c0_87 = arith.constant 0 : index
    %75 = vector.load %arg8[%c0_86, %c0_87] : memref<1x128xf32, #tpu.memory_space<vmem>>, vector<1x128xf32>
    %c0_88 = arith.constant 0 : index
    %c0_89 = arith.constant 0 : index
    %c0_90 = arith.constant 0 : index
    %76 = vector.load %arg11[%c0_88, %c0_89, %c0_90] : memref<18x16x384xbf16, #tpu.memory_space<vmem>>, vector<16x16x384xbf16>
    %77 = vector.shape_cast %76 : vector<16x16x384xbf16> to vector<256x384xbf16>
    %c0_91 = arith.constant 0 : index
    %c0_92 = arith.constant 0 : index
    %c0_93 = arith.constant 0 : index
    %78 = vector.load %arg7[%c0_91, %c0_92, %c0_93] : memref<3x384x128xbf16, #tpu.memory_space<vmem>>, vector<1x384x128xbf16>
    %79 = vector.shape_cast %78 : vector<1x384x128xbf16> to vector<384x128xbf16>
    %cst_94 = arith.constant dense<0.000000e+00> : vector<256x128xf32>
    %80 = tpu.matmul %77, %79, %cst_94 {dimension_numbers = #tpu.dot_dimension_numbers<[1], [0], [0], [1], [0, 0, 1, 1], [], []>} : vector<256x384xbf16>, vector<384x128xbf16>, vector<256x128xf32> -> vector<256x128xf32>
    %c1_95 = arith.constant 1 : index
    %c0_96 = arith.constant 0 : index
    %c0_97 = arith.constant 0 : index
    %81 = vector.load %arg11[%c1_95, %c0_96, %c0_97] : memref<18x16x384xbf16, #tpu.memory_space<vmem>>, vector<16x16x384xbf16>
    %82 = vector.shape_cast %81 : vector<16x16x384xbf16> to vector<256x384xbf16>
    %c1_98 = arith.constant 1 : index
    %c0_99 = arith.constant 0 : index
    %c0_100 = arith.constant 0 : index
    %83 = vector.load %arg7[%c1_98, %c0_99, %c0_100] : memref<3x384x128xbf16, #tpu.memory_space<vmem>>, vector<1x384x128xbf16>
    %84 = vector.shape_cast %83 : vector<1x384x128xbf16> to vector<384x128xbf16>
    %cst_101 = arith.constant dense<0.000000e+00> : vector<256x128xf32>
    %85 = tpu.matmul %82, %84, %cst_101 {dimension_numbers = #tpu.dot_dimension_numbers<[1], [0], [0], [1], [0, 0, 1, 1], [], []>} : vector<256x384xbf16>, vector<384x128xbf16>, vector<256x128xf32> -> vector<256x128xf32>
    %86 = arith.addf %80, %85 : vector<256x128xf32>
    %c2_102 = arith.constant 2 : index
    %c0_103 = arith.constant 0 : index
    %c0_104 = arith.constant 0 : index
    %87 = vector.load %arg11[%c2_102, %c0_103, %c0_104] : memref<18x16x384xbf16, #tpu.memory_space<vmem>>, vector<16x16x384xbf16>
    %88 = vector.shape_cast %87 : vector<16x16x384xbf16> to vector<256x384xbf16>
    %c2_105 = arith.constant 2 : index
    %c0_106 = arith.constant 0 : index
    %c0_107 = arith.constant 0 : index
    %89 = vector.load %arg7[%c2_105, %c0_106, %c0_107] : memref<3x384x128xbf16, #tpu.memory_space<vmem>>, vector<1x384x128xbf16>
    %90 = vector.shape_cast %89 : vector<1x384x128xbf16> to vector<384x128xbf16>
    %cst_108 = arith.constant dense<0.000000e+00> : vector<256x128xf32>
    %91 = tpu.matmul %88, %90, %cst_108 {dimension_numbers = #tpu.dot_dimension_numbers<[1], [0], [0], [1], [0, 0, 1, 1], [], []>} : vector<256x384xbf16>, vector<384x128xbf16>, vector<256x128xf32> -> vector<256x128xf32>
    %92 = arith.addf %86, %91 : vector<256x128xf32>
    %93 = vector.broadcast %75 : vector<1x128xf32> to vector<256x128xf32>
    %94 = arith.addf %92, %93 : vector<256x128xf32>
    %cst_109 = arith.constant 0.000000e+00 : f32
    %95 = vector.broadcast %cst_109 : f32 to vector<256x128xf32>
    %96 = arith.maximumf %94, %95 : vector<256x128xf32>
    %97 = vector.shape_cast %96 : vector<256x128xf32> to vector<16x16x128xf32>
    %c0_110 = arith.constant 0 : index
    %c0_111 = arith.constant 0 : index
    %c0_112 = arith.constant 0 : index
    %c0_113 = arith.constant 0 : index
    %98 = vector.load %arg9[%c0_110, %c0_111, %c0_112, %c0_113] : memref<1x16x16x128xf32, #tpu.memory_space<vmem>>, vector<1x16x16x128xf32>
    %99 = vector.shape_cast %98 : vector<1x16x16x128xf32> to vector<16x16x128xf32>
    %100 = vector.shape_cast %97 : vector<16x16x128xf32> to vector<1x16x16x128xf32>
    tpu.vector_store %arg9[%c0_110, %c0_111, %c0_112, %c0_113], %100 {strides = array<i32>} : memref<1x16x16x128xf32, #tpu.memory_space<vmem>>, vector<1x16x16x128xf32>,
    return
  }
  func.func @transform_0(%arg0: i32) -> (i32, i32, i32, i32) {
    %c0_i32 = arith.constant 0 : i32
    %c0_i32_0 = arith.constant 0 : i32
    %c0_i32_1 = arith.constant 0 : i32
    %c0_i32_2 = arith.constant 0 : i32
    return %arg0, %c0_i32, %c0_i32_0, %c0_i32_1 : i32, i32, i32, i32
  }
  func.func @transform_1(%arg0: i32) -> (i32, i32, i32, i32) {
    %c0_i32 = arith.constant 0 : i32
    %c0_i32_0 = arith.constant 0 : i32
    %c0_i32_1 = arith.constant 0 : i32
    %c0_i32_2 = arith.constant 0 : i32
    return %arg0, %c0_i32, %c0_i32_0, %c0_i32_1 : i32, i32, i32, i32
  }
  func.func @transform_2(%arg0: i32) -> (i32, i32, i32) {
    %c0_i32 = arith.constant 0 : i32
    %c0_i32_0 = arith.constant 0 : i32
    %c0_i32_1 = arith.constant 0 : i32
    %c0_i32_2 = arith.constant 0 : i32
    return %c0_i32, %c0_i32_0, %c0_i32_1 : i32, i32, i32
  }
  func.func @transform_3(%arg0: i32) -> (i32, i32) {
    %c0_i32 = arith.constant 0 : i32
    %c0_i32_0 = arith.constant 0 : i32
    %c0_i32_1 = arith.constant 0 : i32
    return %c0_i32, %c0_i32_0 : i32, i32
  }
  func.func @transform_4(%arg0: i32) -> (i32, i32, i32) {
    %c0_i32 = arith.constant 0 : i32
    %c0_i32_0 = arith.constant 0 : i32
    %c0_i32_1 = arith.constant 0 : i32
    %c0_i32_2 = arith.constant 0 : i32
    return %c0_i32, %c0_i32_0, %c0_i32_1 : i32, i32, i32
  }
  func.func @transform_5(%arg0: i32) -> (i32, i32) {
    %c0_i32 = arith.constant 0 : i32
    %c0_i32_0 = arith.constant 0 : i32
    %c0_i32_1 = arith.constant 0 : i32
    return %c0_i32, %c0_i32_0 : i32, i32
  }
  func.func @transform_6(%arg0: i32) -> (i32, i32, i32) {
    %c0_i32 = arith.constant 0 : i32
    %c0_i32_0 = arith.constant 0 : i32
    %c0_i32_1 = arith.constant 0 : i32
    %c0_i32_2 = arith.constant 0 : i32
    return %c0_i32, %c0_i32_0, %c0_i32_1 : i32, i32, i32
  }
  func.func @transform_7(%arg0: i32) -> (i32, i32) {
    %c0_i32 = arith.constant 0 : i32
    %c0_i32_0 = arith.constant 0 : i32
    %c0_i32_1 = arith.constant 0 : i32
    return %c0_i32, %c0_i32_0 : i32, i32
  }
  func.func @transform_8(%arg0: i32) -> (i32, i32, i32, i32) {
    %c0_i32 = arith.constant 0 : i32
    %c0_i32_0 = arith.constant 0 : i32
    %c0_i32_1 = arith.constant 0 : i32
    %c0_i32_2 = arith.constant 0 : i32
    return %arg0, %c0_i32, %c0_i32_0, %c0_i32_1 : i32, i32, i32, i32
  }
}

</mosaic_0001>

<llo_original>
// kernel: tpu_custom_call.1
$region0: #{tpu_custom_call.1}
  #allocation0 [shape = 'u32[]', space=smem, size = 0x4, offset = 0x4, fixed_abs, tag = 'smem constant byte address 0x4 - core index']
  #allocation1 [shape = 'u32[72,128]{1,0:T(1,128)}', space=vmem, size = 0x9000, scoped, tag = 'internal scratch']
  #allocation2 [shape = 'bf16[18,16,768]{2,1,0:T(8,128)(2,1)}', space=vmem, size = 0x6c000, scoped, tag = 'scratch operand']
  #allocation3 [shape = 'bf16[18,16,384]{2,1,0:T(8,128)(2,1)}', space=vmem, size = 0x36000, scoped, tag = 'scratch operand']
  %s0 = inlined_call_operand.vmem [shape: bf16[2,8,8,128], index: 0, kind: input, shape index: {}]
  %s1 = inlined_call_operand.vmem [shape: bf16[2,18,18,128], index: 1, kind: input, shape index: {}]
  %s2 = inlined_call_operand.hbm [shape: bf16[2,128,256], index: 2, kind: input, shape index: {}]
  %s3 = inlined_call_operand.vmem [shape: f32[1,256], index: 3, kind: input, shape index: {}]
  %s4 = inlined_call_operand.hbm [shape: bf16[3,768,128], index: 4, kind: input, shape index: {}]
  %s5 = inlined_call_operand.vmem [shape: f32[1,128], index: 5, kind: input, shape index: {}]
  %s6 = inlined_call_operand.vmem [shape: bf16[3,384,128], index: 6, kind: input, shape index: {}]
  %s7 = inlined_call_operand.vmem [shape: f32[1,128], index: 7, kind: input, shape index: {}]
  %s8 = inlined_call_operand.hbm [shape: f32[2,16,16,128], index: 8, kind: output, shape index: {}]
  %s9 = sld [smem:[#allocation0]]
  $region73: #{tpu_custom_call.1} parent=0
    _
  %s11 = ssub.s32 1, %s9
  %s12 = scalar_select 0, %s11, %s9
  $region1: #{tpu_custom_call.1} parent=0
    #allocation4 [shape = 'u8[131072]{0}', space=vmem, size = 0x20000, scoped, tag = 'input window, operand 2, single buffered']
    #allocation5 [shape = 's32[2]{0}', space=sflag, size = 0x8, scoped, tag = 'scoped memory for tpu_custom_call.1']
    #allocation6 [shape = 's32[2]{0}', space=sflag, size = 0x8, scoped, tag = 'scoped memory for tpu_custom_call.1']
    #allocation7 [shape = 'u8[589824]{0}', space=vmem, size = 0x90000, scoped, tag = 'input window, operand 4, single buffered']
    #allocation8 [shape = 's32[1]{0}', space=sflag, size = 0x4, scoped, tag = 'scoped memory for tpu_custom_call.1']
    #allocation9 [shape = 'u8[262144]{0}', space=vmem, size = 0x40000, scoped, tag = 'output window, operand 0']
    %13 = vsyncpa [#allocation5], 0
    %14 = vsyncpa [#allocation8], 0
    %15 = vsyncpa [#allocation6], 0
    %s16 = scalar_lea.sflag [#allocation6], 1
    %17 = vsyncpa %s16, 0
    loop: start=0, step=1, limit=4
    $region2: #{tpu_custom_call.1} parent=1 // loop_pre_header
      _
    $region3: #{tpu_custom_call.1} parent=1 // loop_header
      %s19 = sphi 0, %s23
      %p20 = scmp.ge.s32.totalorder %s19, 4
      %s29 = sphi 0, %s31
      %s32 = sphi 0, %s29
      %s33 = sphi 0, %s32
      %s49 = sphi 0, %s33
      %s55 = sphi 0, %s57
      %s58 = sphi 0, %s55
      %s59 = sphi 0, %s58
      %s75 = sphi 0, %s59
      %s79 = sphi 0, %s79
      %s81 = sphi 0, %s79
      %s82 = sphi 0, %s81
      %s96 = sphi 0, %s82
      %s100 = sphi 0, %s100
      %s102 = sphi 0, %s100
      %s103 = sphi 0, %s102
      %s117 = sphi 0, %s103
      %s121 = sphi 0, %s121
      %s123 = sphi 0, %s121
      %s124 = sphi 0, %s123
      %s138 = sphi 0, %s124
      %s142 = sphi 0, %s142
      %s144 = sphi 0, %s142
      %s145 = sphi 0, %s144
      %s159 = sphi 0, %s145
      %s163 = sphi 0, %s163
      %s165 = sphi 0, %s163
      %s166 = sphi 0, %s165
      %s180 = sphi 0, %s166
      %s184 = sphi 0, %s184
      %s186 = sphi 0, %s184
      %s187 = sphi 0, %s186
      %s201 = sphi 0, %s187
      %s207 = sphi 0, %s209
      %s210 = sphi 0, %s207
      %s211 = sphi 0, %s210
      %s227 = sphi 0, %s211
    $region4: #{tpu_custom_call.1} parent=1 // loop_header_branch
      %22 = sbr.rel (%p20) target = $region8
    $region5: #{tpu_custom_call.1} parent=1 // loop_body
      %s24 = ssub.s32 %s19, 1
      %s25 = ssub.s32 %s19, 2
      %s26 = sadd.s32 %s19, 1
      %s27 = ssub.s32 %s19, %s26
      %p28 = scmp.eq.s32.totalorder %s27, 0
      %s30 = sadd.s32 %s29, 1
      %s31 = scalar_select %p28, %s29, %s30
      %p34 = pneg %p28
      %p35 = scmp.eq.s32.totalorder %s19, 1
      %p36 = por %p34, %p35
      %p37 = scmp.ne.s32.totalorder %s29, %s32
      %p38 = scmp.eq.s32.totalorder %s19, 0
      %p39 = por %p37, %p38
      %p40 = scmp.ne.s32.totalorder %s29, %s32
      %p41 = scmp.eq.s32.totalorder %s24, 1
      %p42 = por %p40, %p41
      %p43 = scmp.ne.s32.totalorder %s32, %s33
      %p44 = scmp.eq.s32.totalorder %s24, 0
      %p45 = por %p43, %p44
      %p46 = scmp.ne.s32.totalorder %s32, %s33
      %p47 = scmp.eq.s32.totalorder %s25, 1
      %p48 = por %p46, %p47
      %p50 = scmp.ne.s32.totalorder %s33, %s49
      %p51 = scmp.eq.s32.totalorder %s25, 0
      %p52 = por %p50, %p51
      %s53 = ssub.s32 %s19, %s26
      %p54 = scmp.eq.s32.totalorder %s53, 0
      %s56 = sadd.s32 %s55, 1
      %s57 = scalar_select %p54, %s55, %s56
      %p60 = pneg %p54
      %p61 = scmp.eq.s32.totalorder %s19, 1
      %p62 = por %p60, %p61
      %p63 = scmp.ne.s32.totalorder %s55, %s58
      %p64 = scmp.eq.s32.totalorder %s19, 0
      %p65 = por %p63, %p64
      %p66 = scmp.ne.s32.totalorder %s55, %s58
      %p67 = scmp.eq.s32.totalorder %s24, 1
      %p68 = por %p66, %p67
      %p69 = scmp.ne.s32.totalorder %s58, %s59
      %p70 = scmp.eq.s32.totalorder %s24, 0
      %p71 = por %p69, %p70
      %p72 = scmp.ne.s32.totalorder %s58, %s59
      %p73 = scmp.eq.s32.totalorder %s25, 1
      %p74 = por %p72, %p73
      %p76 = scmp.ne.s32.totalorder %s59, %s75
      %p77 = scmp.eq.s32.totalorder %s25, 0
      %p78 = por %p76, %p77
      %s80 = sadd.s32 %s79, 1
      %p83 = scmp.eq.s32.totalorder %s19, 1
      %p84 = scmp.ne.s32.totalorder %s79, %s81
      %p85 = scmp.eq.s32.totalorder %s19, 0
      %p86 = por %p84, %p85
      %p87 = scmp.ne.s32.totalorder %s79, %s81
      %p88 = scmp.eq.s32.totalorder %s24, 1
      %p89 = por %p87, %p88
      %p90 = scmp.ne.s32.totalorder %s81, %s82
      %p91 = scmp.eq.s32.totalorder %s24, 0
      %p92 = por %p90, %p91
      %p93 = scmp.ne.s32.totalorder %s81, %s82
      %p94 = scmp.eq.s32.totalorder %s25, 1
      %p95 = por %p93, %p94
      %p97 = scmp.ne.s32.totalorder %s82, %s96
      %p98 = scmp.eq.s32.totalorder %s25, 0
      %p99 = por %p97, %p98
      %s101 = sadd.s32 %s100, 1
      %p104 = scmp.eq.s32.totalorder %s19, 1
      %p105 = scmp.ne.s32.totalorder %s100, %s102
      %p106 = scmp.eq.s32.totalorder %s19, 0
      %p107 = por %p105, %p106
      %p108 = scmp.ne.s32.totalorder %s100, %s102
      %p109 = scmp.eq.s32.totalorder %s24, 1
      %p110 = por %p108, %p109
      %p111 = scmp.ne.s32.totalorder %s102, %s103
      %p112 = scmp.eq.s32.totalorder %s24, 0
      %p113 = por %p111, %p112
      %p114 = scmp.ne.s32.totalorder %s102, %s103
      %p115 = scmp.eq.s32.totalorder %s25, 1
      %p116 = por %p114, %p115
      %p118 = scmp.ne.s32.totalorder %s103, %s117
      %p119 = scmp.eq.s32.totalorder %s25, 0
      %p120 = por %p118, %p119
      %s122 = sadd.s32 %s121, 1
      %p125 = scmp.eq.s32.totalorder %s19, 1
      %p126 = scmp.ne.s32.totalorder %s121, %s123
      %p127 = scmp.eq.s32.totalorder %s19, 0
      %p128 = por %p126, %p127
      %p129 = scmp.ne.s32.totalorder %s121, %s123
      %p130 = scmp.eq.s32.totalorder %s24, 1
      %p131 = por %p129, %p130
      %p132 = scmp.ne.s32.totalorder %s123, %s124
      %p133 = scmp.eq.s32.totalorder %s24, 0
      %p134 = por %p132, %p133
      %p135 = scmp.ne.s32.totalorder %s123, %s124
      %p136 = scmp.eq.s32.totalorder %s25, 1
      %p137 = por %p135, %p136
      %p139 = scmp.ne.s32.totalorder %s124, %s138
      %p140 = scmp.eq.s32.totalorder %s25, 0
      %p141 = por %p139, %p140
      %s143 = sadd.s32 %s142, 1
      %p146 = scmp.eq.s32.totalorder %s19, 1
      %p147 = scmp.ne.s32.totalorder %s142, %s144
      %p148 = scmp.eq.s32.totalorder %s19, 0
      %p149 = por %p147, %p148
      %p150 = scmp.ne.s32.totalorder %s142, %s144
      %p151 = scmp.eq.s32.totalorder %s24, 1
      %p152 = por %p150, %p151
      %p153 = scmp.ne.s32.totalorder %s144, %s145
      %p154 = scmp.eq.s32.totalorder %s24, 0
      %p155 = por %p153, %p154
      %p156 = scmp.ne.s32.totalorder %s144, %s145
      %p157 = scmp.eq.s32.totalorder %s25, 1
      %p158 = por %p156, %p157
      %p160 = scmp.ne.s32.totalorder %s145, %s159
      %p161 = scmp.eq.s32.totalorder %s25, 0
      %p162 = por %p160, %p161
      %s164 = sadd.s32 %s163, 1
      %p167 = scmp.eq.s32.totalorder %s19, 1
      %p168 = scmp.ne.s32.totalorder %s163, %s165
      %p169 = scmp.eq.s32.totalorder %s19, 0
      %p170 = por %p168, %p169
      %p171 = scmp.ne.s32.totalorder %s163, %s165
      %p172 = scmp.eq.s32.totalorder %s24, 1
      %p173 = por %p171, %p172
      %p174 = scmp.ne.s32.totalorder %s165, %s166
      %p175 = scmp.eq.s32.totalorder %s24, 0
      %p176 = por %p174, %p175
      %p177 = scmp.ne.s32.totalorder %s165, %s166
      %p178 = scmp.eq.s32.totalorder %s25, 1
      %p179 = por %p177, %p178
      %p181 = scmp.ne.s32.totalorder %s166, %s180
      %p182 = scmp.eq.s32.totalorder %s25, 0
      %p183 = por %p181, %p182
      %s185 = sadd.s32 %s184, 1
      %p188 = scmp.eq.s32.totalorder %s19, 1
      %p189 = scmp.ne.s32.totalorder %s184, %s186
      %p190 = scmp.eq.s32.totalorder %s19, 0
      %p191 = por %p189, %p190
      %p192 = scmp.ne.s32.totalorder %s184, %s186
      %p193 = scmp.eq.s32.totalorder %s24, 1
      %p194 = por %p192, %p193
      %p195 = scmp.ne.s32.totalorder %s186, %s187
      %p196 = scmp.eq.s32.totalorder %s24, 0
      %p197 = por %p195, %p196
      %p198 = scmp.ne.s32.totalorder %s186, %s187
      %p199 = scmp.eq.s32.totalorder %s25, 1
      %p200 = por %p198, %p199
      %p202 = scmp.ne.s32.totalorder %s187, %s201
      %p203 = scmp.eq.s32.totalorder %s25, 0
      %p204 = por %p202, %p203
      %s205 = ssub.s32 %s19, %s26
      %p206 = scmp.eq.s32.totalorder %s205, 0
      %s208 = sadd.s32 %s207, 1
      %s209 = scalar_select %p206, %s207, %s208
      %p212 = pneg %p206
      %p213 = scmp.eq.s32.totalorder %s19, 1
      %p214 = por %p212, %p213
      %p215 = scmp.ne.s32.totalorder %s207, %s210
      %p216 = scmp.eq.s32.totalorder %s19, 0
      %p217 = por %p215, %p216
      %p218 = scmp.ne.s32.totalorder %s207, %s210
      %p219 = scmp.eq.s32.totalorder %s24, 1
      %p220 = por %p218, %p219
      %p221 = scmp.ne.s32.totalorder %s210, %s211
      %p222 = scmp.eq.s32.totalorder %s24, 0
      %p223 = por %p221, %p222
      %p224 = scmp.ne.s32.totalorder %s210, %s211
      %p225 = scmp.eq.s32.totalorder %s25, 1
      %p226 = por %p224, %p225
      %p228 = scmp.ne.s32.totalorder %s211, %s227
      %p229 = scmp.eq.s32.totalorder %s25, 0
      %p230 = por %p228, %p229
      %p231 = scmp.le.s32.totalorder 1, %s19
      %p232 = scmp.lt.s32.totalorder %s19, 3
      %p233 = pnand %p231, %p232
      %p234 = pneg %p233
      // Predicated region
      $region9: #{tpu_custom_call.1} parent=5 // pred_check
        _
      $region10: #{tpu_custom_call.1} parent=5 // pred_check_branch
        %236 = sbr.rel (%p233) target = $region12
      $region11: #{tpu_custom_call.1} parent=5 // pred_region
        %s237 = ssub.s32 %s19, 1
        // Predicated region
        $region13: #{tpu_custom_call.1} parent=11 // pred_check
          %p238 = pneg %p92
        $region14: #{tpu_custom_call.1} parent=11 // pred_check_branch
          %240 = sbr.rel (%p238) target = $region16
        $region15: #{tpu_custom_call.1} parent=11 // pred_region
          %242 = vsyncadd [#allocation5], 0
          %s243 = sshll.u32 %s2, 4
          %s244 = int_to_ptr.hbm [resolvable:$true] %s243
          %s245 = sshll.u32 [#allocation4], 4
          %s246 = int_to_ptr.vmem [resolvable:$true] %s245
          %251 = dma.hbm_to_vmem [thread:$0]  %s244, 4096, %s246, [#allocation5], 128, 128, 8
        $region16: #{tpu_custom_call.1} parent=11 // pred_fallthru
          _
        // Predicated region
        $region17: #{tpu_custom_call.1} parent=11 // pred_check
          %p252 = pneg %p113
        $region18: #{tpu_custom_call.1} parent=11 // pred_check_branch
          %254 = sbr.rel (%p252) target = $region20
        $region19: #{tpu_custom_call.1} parent=11 // pred_region
          _
        $region20: #{tpu_custom_call.1} parent=11 // pred_fallthru
          _
        // Predicated region
        $region21: #{tpu_custom_call.1} parent=11 // pred_check
          %p255 = pneg %p134
        $region22: #{tpu_custom_call.1} parent=11 // pred_check_branch
          %257 = sbr.rel (%p255) target = $region24
        $region23: #{tpu_custom_call.1} parent=11 // pred_region
          %259 = vsyncadd [#allocation8], 0
          %s260 = sshll.u32 %s4, 4
          %s261 = int_to_ptr.hbm [resolvable:$true] %s260
          %s262 = sshll.u32 [#allocation7], 4
          %s263 = int_to_ptr.vmem [resolvable:$true] %s262
          %268 = dma.hbm_to_vmem [thread:$0]  %s261, 18432, %s263, [#allocation8], 64, 64, 4
        $region24: #{tpu_custom_call.1} parent=11 // pred_fallthru
          _
        // Predicated region
        $region25: #{tpu_custom_call.1} parent=11 // pred_check
          %p269 = pneg %p155
        $region26: #{tpu_custom_call.1} parent=11 // pred_check_branch
          %271 = sbr.rel (%p269) target = $region28
        $region27: #{tpu_custom_call.1} parent=11 // pred_region
          _
        $region28: #{tpu_custom_call.1} parent=11 // pred_fallthru
          _
        // Predicated region
        $region29: #{tpu_custom_call.1} parent=11 // pred_check
          %p272 = pneg %p176
        $region30: #{tpu_custom_call.1} parent=11 // pred_check_branch
          %274 = sbr.rel (%p272) target = $region32
        $region31: #{tpu_custom_call.1} parent=11 // pred_region
          _
        $region32: #{tpu_custom_call.1} parent=11 // pred_fallthru
          _
        // Predicated region
        $region33: #{tpu_custom_call.1} parent=11 // pred_check
          %p275 = pneg %p197
        $region34: #{tpu_custom_call.1} parent=11 // pred_check_branch
          %277 = sbr.rel (%p275) target = $region36
        $region35: #{tpu_custom_call.1} parent=11 // pred_region
          _
        $region36: #{tpu_custom_call.1} parent=11 // pred_fallthru
          _
      $region12: #{tpu_custom_call.1} parent=5 // pred_fallthru
        _
      %p278 = scmp.lt.s32.totalorder %s19, 2
      // Predicated region
      $region37: #{tpu_custom_call.1} parent=5 // pred_check
        %p279 = pneg %p278
      $region38: #{tpu_custom_call.1} parent=5 // pred_check_branch
        %281 = sbr.rel (%p279) target = $region40
      $region39: #{tpu_custom_call.1} parent=5 // pred_region
        // Predicated region
        $region41: #{tpu_custom_call.1} parent=39 // pred_check
          %p282 = pneg %p39
        $region42: #{tpu_custom_call.1} parent=39 // pred_check_branch
          %284 = sbr.rel (%p282) target = $region44
        $region43: #{tpu_custom_call.1} parent=39 // pred_region
          %p285 = scmp.lt.s32.totalorder %s19, 1
          %s286 = scalar_select %p285, %s19, 1
          %s287 = smul.addr %s286, 8
          %s288 = smul.addr %s287, 4
          %s289 = scalar_lea.vmem %s0, %s288
        $region44: #{tpu_custom_call.1} parent=39 // pred_fallthru
          _
        // Predicated region
        $region45: #{tpu_custom_call.1} parent=39 // pred_check
          %p290 = pneg %p65
        $region46: #{tpu_custom_call.1} parent=39 // pred_check_branch
          %292 = sbr.rel (%p290) target = $region48
        $region47: #{tpu_custom_call.1} parent=39 // pred_region
          %p293 = scmp.lt.s32.totalorder %s19, 1
          %s294 = scalar_select %p293, %s19, 1
          %s295 = smul.addr %s294, 54
          %s296 = smul.addr %s295, 4
          %s297 = scalar_lea.vmem %s1, %s296
        $region48: #{tpu_custom_call.1} parent=39 // pred_fallthru
          _
      $region40: #{tpu_custom_call.1} parent=5 // pred_fallthru
        _
      %p298 = scmp.le.s32.totalorder 1, %s19
      %p299 = scmp.lt.s32.totalorder %s19, 3
      %p300 = pnand %p298, %p299
      %p301 = pneg %p300
      // Predicated region
      $region49: #{tpu_custom_call.1} parent=5 // pred_check
        _
      $region50: #{tpu_custom_call.1} parent=5 // pred_check_branch
        %303 = sbr.rel (%p300) target = $region52
      $region51: #{tpu_custom_call.1} parent=5 // pred_region
        %s304 = ssub.s32 %s19, 1
        // Predicated region
        $region53: #{tpu_custom_call.1} parent=51 // pred_check
          %p305 = pneg %p92
        $region54: #{tpu_custom_call.1} parent=51 // pred_check_branch
          %307 = sbr.rel (%p305) target = $region56
        $region55: #{tpu_custom_call.1} parent=51 // pred_region
          %309 = dma.done [#allocation5], 4096
        $region56: #{tpu_custom_call.1} parent=51 // pred_fallthru
          _
        // Predicated region
        $region57: #{tpu_custom_call.1} parent=51 // pred_check
          %p310 = pneg %p134
        $region58: #{tpu_custom_call.1} parent=51 // pred_check_branch
          %312 = sbr.rel (%p310) target = $region60
        $region59: #{tpu_custom_call.1} parent=51 // pred_region
          %314 = dma.done [#allocation8], 18432
        $region60: #{tpu_custom_call.1} parent=51 // pred_fallthru
          _
        %p315 = scmp.lt.s32.totalorder %s24, 1
        %s316 = scalar_select %p315, %s24, 1
        %s317 = smul.addr %s316, 8
        %s318 = smul.addr %s317, 4
        %s319 = scalar_lea.vmem %s0, %s318
        %p320 = pneg %p45
        %p321 = pneg %p42
        %p322 = scmp.lt.s32.totalorder %s24, 1
        %s323 = scalar_select %p322, %s24, 1
        %s324 = smul.addr %s323, 54
        %s325 = smul.addr %s324, 4
        %s326 = scalar_lea.vmem %s1, %s325
        %p327 = pneg %p71
        %p328 = pneg %p68
        %p329 = pneg %p92
        %p330 = pneg %p89
        %p331 = pneg %p113
        %p332 = pneg %p110
        %p333 = pneg %p134
        %p334 = pneg %p131
        %p335 = pneg %p155
        %p336 = pneg %p152
        %p337 = pneg %p176
        %p338 = pneg %p173
        %p339 = pneg %p197
        %p340 = pneg %p194
        %p341 = pneg %p223
        %p342 = pneg %p220
        %s343 = sand.u32 %s210, 1
        %s344 = scalar_lea.sflag [#allocation6], %s343
        %s345 = sand.u32 %s210, 1
        %s346 = smul.addr %s345, 256
        %s347 = scalar_lea.vmem [#allocation9], %s346
        %p348 = scmp.lt.s32.totalorder %s24, 1
        %s349 = scalar_select %p348, %s24, 1
        %s350 = smul.addr %s349, 8
        %s351 = smul.addr %s350, 4
        %s352 = scalar_lea.vmem %s0, %s351
        %p353 = scmp.lt.s32.totalorder %s24, 1
        %s354 = scalar_select %p353, %s24, 1
        %s355 = smul.addr %s354, 54
        %s356 = smul.addr %s355, 4
        %s357 = scalar_lea.vmem %s1, %s356
        %359 = vst [vmem:[#allocation2] sm:$0xff] 0
        %360 = vst [vmem:[#allocation2 + $0x8] sm:$0xff] 0
        %361 = vst [vmem:[#allocation2 + $0x10] sm:$0xff] 0
        %362 = vst [vmem:[#allocation2 + $0x18] sm:$0xff] 0
        %363 = vst [vmem:[#allocation2 + $0x20] sm:$0xff] 0
        %364 = vst [vmem:[#allocation2 + $0x28] sm:$0xff] 0
        %s365 = scalar_lea.vmem [#allocation2], 816
        %366 = vst [vmem:[%s365] sm:$0xff] 0
        %367 = vst [vmem:[%s365 + $0x8] sm:$0xff] 0
        %368 = vst [vmem:[%s365 + $0x10] sm:$0xff] 0
        %369 = vst [vmem:[%s365 + $0x18] sm:$0xff] 0
        %370 = vst [vmem:[%s365 + $0x20] sm:$0xff] 0
        %371 = vst [vmem:[%s365 + $0x28] sm:$0xff] 0
        %s372 = scalar_lea.vmem [#allocation2], 48
        %vm373 = vcmask 1040384
        %vm374 = vsmask.f32 256
        %vm375 = vmand %vm373, %vm374
        %vm376 = vcmask 1044484
        %vm377 = vsmask.f32 4352
        %vm378 = vmand %vm376, %vm377
        %vm379 = vmor %vm378, %vm375
        %v380 = vld [vmem:[%s372] sm:$0x11]
        %v381 = vsel %vm379, 0, %v380
        %382 = vst [vmem:[%s372] sm:$0x11] %v381
        %v383 = vld [vmem:[%s372 + $0x30] sm:$0x11]
        %v384 = vsel %vm379, 0, %v383
        %385 = vst [vmem:[%s372 + $0x30] sm:$0x11] %v384
        %v386 = vld [vmem:[%s372 + $0x60] sm:$0x11]
        %v387 = vsel %vm379, 0, %v386
        %388 = vst [vmem:[%s372 + $0x60] sm:$0x11] %v387
        %v389 = vld [vmem:[%s372 + $0x90] sm:$0x11]
        %v390 = vsel %vm379, 0, %v389
        %391 = vst [vmem:[%s372 + $0x90] sm:$0x11] %v390
        %v392 = vld [vmem:[%s372 + $0xc0] sm:$0x11]
        %v393 = vsel %vm379, 0, %v392
        %394 = vst [vmem:[%s372 + $0xc0] sm:$0x11] %v393
        %v395 = vld [vmem:[%s372 + $0xf0] sm:$0x11]
        %v396 = vsel %vm379, 0, %v395
        %397 = vst [vmem:[%s372 + $0xf0] sm:$0x11] %v396
        %v398 = vld [vmem:[%s372 + $0x120] sm:$0x11]
        %v399 = vsel %vm379, 0, %v398
        %400 = vst [vmem:[%s372 + $0x120] sm:$0x11] %v399
        %v401 = vld [vmem:[%s372 + $0x150] sm:$0x11]
        %v402 = vsel %vm379, 0, %v401
        %403 = vst [vmem:[%s372 + $0x150] sm:$0x11] %v402
        %v404 = vld [vmem:[%s372 + $0x180] sm:$0x11]
        %v405 = vsel %vm379, 0, %v404
        %406 = vst [vmem:[%s372 + $0x180] sm:$0x11] %v405
        %v407 = vld [vmem:[%s372 + $0x1b0] sm:$0x11]
        %v408 = vsel %vm379, 0, %v407
        %409 = vst [vmem:[%s372 + $0x1b0] sm:$0x11] %v408
        %v410 = vld [vmem:[%s372 + $0x1e0] sm:$0x11]
        %v411 = vsel %vm379, 0, %v410
        %412 = vst [vmem:[%s372 + $0x1e0] sm:$0x11] %v411
        %v413 = vld [vmem:[%s372 + $0x210] sm:$0x11]
        %v414 = vsel %vm379, 0, %v413
        %415 = vst [vmem:[%s372 + $0x210] sm:$0x11] %v414
        %v416 = vld [vmem:[%s372 + $0x240] sm:$0x11]
        %v417 = vsel %vm379, 0, %v416
        %418 = vst [vmem:[%s372 + $0x240] sm:$0x11] %v417
        %v419 = vld [vmem:[%s372 + $0x270] sm:$0x11]
        %v420 = vsel %vm379, 0, %v419
        %421 = vst [vmem:[%s372 + $0x270] sm:$0x11] %v420
        %v422 = vld [vmem:[%s372 + $0x2a0] sm:$0x11]
        %v423 = vsel %vm379, 0, %v422
        %424 = vst [vmem:[%s372 + $0x2a0] sm:$0x11] %v423
        %v425 = vld [vmem:[%s372 + $0x2d0] sm:$0x11]
        %v426 = vsel %vm379, 0, %v425
        %427 = vst [vmem:[%s372 + $0x2d0] sm:$0x11] %v426
        %vm428 = vcmask 1043459
        %vm429 = vsmask.f32 7950
        %vm430 = vmand %vm428, %vm429
        %vm431 = vcmask 1047559
        %vm432 = vsmask.f32 7966
        %vm433 = vmand %vm431, %vm432
        %vm434 = vmor %vm433, %vm430
        %v435 = vld [vmem:[%s372 + $0x28] sm:$0x88]
        %v436 = vsel %vm434, 0, %v435
        %437 = vst [vmem:[%s372 + $0x28] sm:$0x88] %v436
        %v438 = vld [vmem:[%s372 + $0x58] sm:$0x88]
        %v439 = vsel %vm434, 0, %v438
        %440 = vst [vmem:[%s372 + $0x58] sm:$0x88] %v439
        %v441 = vld [vmem:[%s372 + $0x88] sm:$0x88]
        %v442 = vsel %vm434, 0, %v441
        %443 = vst [vmem:[%s372 + $0x88] sm:$0x88] %v442
        %v444 = vld [vmem:[%s372 + $0xb8] sm:$0x88]
        %v445 = vsel %vm434, 0, %v444
        %446 = vst [vmem:[%s372 + $0xb8] sm:$0x88] %v445
        %v447 = vld [vmem:[%s372 + $0xe8] sm:$0x88]
        %v448 = vsel %vm434, 0, %v447
        %449 = vst [vmem:[%s372 + $0xe8] sm:$0x88] %v448
        %v450 = vld [vmem:[%s372 + $0x118] sm:$0x88]
        %v451 = vsel %vm434, 0, %v450
        %452 = vst [vmem:[%s372 + $0x118] sm:$0x88] %v451
        %v453 = vld [vmem:[%s372 + $0x148] sm:$0x88]
        %v454 = vsel %vm434, 0, %v453
        %455 = vst [vmem:[%s372 + $0x148] sm:$0x88] %v454
        %v456 = vld [vmem:[%s372 + $0x178] sm:$0x88]
        %v457 = vsel %vm434, 0, %v456
        %458 = vst [vmem:[%s372 + $0x178] sm:$0x88] %v457
        %v459 = vld [vmem:[%s372 + $0x1a8] sm:$0x88]
        %v460 = vsel %vm434, 0, %v459
        %461 = vst [vmem:[%s372 + $0x1a8] sm:$0x88] %v460
        %v462 = vld [vmem:[%s372 + $0x1d8] sm:$0x88]
        %v463 = vsel %vm434, 0, %v462
        %464 = vst [vmem:[%s372 + $0x1d8] sm:$0x88] %v463
        %v465 = vld [vmem:[%s372 + $0x208] sm:$0x88]
        %v466 = vsel %vm434, 0, %v465
        %467 = vst [vmem:[%s372 + $0x208] sm:$0x88] %v466
        %v468 = vld [vmem:[%s372 + $0x238] sm:$0x88]
        %v469 = vsel %vm434, 0, %v468
        %470 = vst [vmem:[%s372 + $0x238] sm:$0x88] %v469
        %v471 = vld [vmem:[%s372 + $0x268] sm:$0x88]
        %v472 = vsel %vm434, 0, %v471
        %473 = vst [vmem:[%s372 + $0x268] sm:$0x88] %v472
        %v474 = vld [vmem:[%s372 + $0x298] sm:$0x88]
        %v475 = vsel %vm434, 0, %v474
        %476 = vst [vmem:[%s372 + $0x298] sm:$0x88] %v475
        %v477 = vld [vmem:[%s372 + $0x2c8] sm:$0x88]
        %v478 = vsel %vm434, 0, %v477
        %479 = vst [vmem:[%s372 + $0x2c8] sm:$0x88] %v478
        %v480 = vld [vmem:[%s372 + $0x2f8] sm:$0x88]
        %v481 = vsel %vm434, 0, %v480
        %482 = vst [vmem:[%s372 + $0x2f8] sm:$0x88] %v481
        %483 = vst [vmem:[#allocation3] sm:$0xff] 0
        %484 = vst [vmem:[#allocation3 + $0x8] sm:$0xf] 0
        %485 = vst [vmem:[#allocation3 + $0xc] sm:$0xff] 0
        %486 = vst [vmem:[#allocation3 + $0x14] sm:$0xf] 0
        %s487 = scalar_lea.vmem [#allocation3], 408
        %488 = vst [vmem:[%s487] sm:$0xff] 0
        %489 = vst [vmem:[%s487 + $0x8] sm:$0xf] 0
        %490 = vst [vmem:[%s487 + $0xc] sm:$0xff] 0
        %491 = vst [vmem:[%s487 + $0x14] sm:$0xf] 0
        %s492 = scalar_lea.vmem [#allocation3], 24
        %v493 = vld [vmem:[%s492] sm:$0x1]
        %v494 = vsel %vm375, 0, %v493
        %495 = vst [vmem:[%s492] sm:$0x1] %v494
        %v496 = vld [vmem:[%s492 + $0x18] sm:$0x1]
        %v497 = vsel %vm375, 0, %v496
        %498 = vst [vmem:[%s492 + $0x18] sm:$0x1] %v497
        %v499 = vld [vmem:[%s492 + $0x30] sm:$0x1]
        %v500 = vsel %vm375, 0, %v499
        %501 = vst [vmem:[%s492 + $0x30] sm:$0x1] %v500
        %v502 = vld [vmem:[%s492 + $0x48] sm:$0x1]
        %v503 = vsel %vm375, 0, %v502
        %504 = vst [vmem:[%s492 + $0x48] sm:$0x1] %v503
        %v505 = vld [vmem:[%s492 + $0x60] sm:$0x1]
        %v506 = vsel %vm375, 0, %v505
        %507 = vst [vmem:[%s492 + $0x60] sm:$0x1] %v506
        %v508 = vld [vmem:[%s492 + $0x78] sm:$0x1]
        %v509 = vsel %vm375, 0, %v508
        %510 = vst [vmem:[%s492 + $0x78] sm:$0x1] %v509
        %v511 = vld [vmem:[%s492 + $0x90] sm:$0x1]
        %v512 = vsel %vm375, 0, %v511
        %513 = vst [vmem:[%s492 + $0x90] sm:$0x1] %v512
        %v514 = vld [vmem:[%s492 + $0xa8] sm:$0x1]
        %v515 = vsel %vm375, 0, %v514
        %516 = vst [vmem:[%s492 + $0xa8] sm:$0x1] %v515
        %v517 = vld [vmem:[%s492 + $0xc0] sm:$0x1]
        %v518 = vsel %vm375, 0, %v517
        %519 = vst [vmem:[%s492 + $0xc0] sm:$0x1] %v518
        %v520 = vld [vmem:[%s492 + $0xd8] sm:$0x1]
        %v521 = vsel %vm375, 0, %v520
        %522 = vst [vmem:[%s492 + $0xd8] sm:$0x1] %v521
        %v523 = vld [vmem:[%s492 + $0xf0] sm:$0x1]
        %v524 = vsel %vm375, 0, %v523
        %525 = vst [vmem:[%s492 + $0xf0] sm:$0x1] %v524
        %v526 = vld [vmem:[%s492 + $0x108] sm:$0x1]
        %v527 = vsel %vm375, 0, %v526
        %528 = vst [vmem:[%s492 + $0x108] sm:$0x1] %v527
        %v529 = vld [vmem:[%s492 + $0x120] sm:$0x1]
        %v530 = vsel %vm375, 0, %v529
        %531 = vst [vmem:[%s492 + $0x120] sm:$0x1] %v530
        %v532 = vld [vmem:[%s492 + $0x138] sm:$0x1]
        %v533 = vsel %vm375, 0, %v532
        %534 = vst [vmem:[%s492 + $0x138] sm:$0x1] %v533
        %v535 = vld [vmem:[%s492 + $0x150] sm:$0x1]
        %v536 = vsel %vm375, 0, %v535
        %537 = vst [vmem:[%s492 + $0x150] sm:$0x1] %v536
        %v538 = vld [vmem:[%s492 + $0x168] sm:$0x1]
        %v539 = vsel %vm375, 0, %v538
        %540 = vst [vmem:[%s492 + $0x168] sm:$0x1] %v539
        %v541 = vld [vmem:[%s492 + $0x14] sm:$0x8]
        %v542 = vsel %vm430, 0, %v541
        %543 = vst [vmem:[%s492 + $0x14] sm:$0x8] %v542
        %v544 = vld [vmem:[%s492 + $0x2c] sm:$0x8]
        %v545 = vsel %vm430, 0, %v544
        %546 = vst [vmem:[%s492 + $0x2c] sm:$0x8] %v545
        %v547 = vld [vmem:[%s492 + $0x44] sm:$0x8]
        %v548 = vsel %vm430, 0, %v547
        %549 = vst [vmem:[%s492 + $0x44] sm:$0x8] %v548
        %v550 = vld [vmem:[%s492 + $0x5c] sm:$0x8]
        %v551 = vsel %vm430, 0, %v550
        %552 = vst [vmem:[%s492 + $0x5c] sm:$0x8] %v551
        %v553 = vld [vmem:[%s492 + $0x74] sm:$0x8]
        %v554 = vsel %vm430, 0, %v553
        %555 = vst [vmem:[%s492 + $0x74] sm:$0x8] %v554
        %v556 = vld [vmem:[%s492 + $0x8c] sm:$0x8]
        %v557 = vsel %vm430, 0, %v556
        %558 = vst [vmem:[%s492 + $0x8c] sm:$0x8] %v557
        %v559 = vld [vmem:[%s492 + $0xa4] sm:$0x8]
        %v560 = vsel %vm430, 0, %v559
        %561 = vst [vmem:[%s492 + $0xa4] sm:$0x8] %v560
        %v562 = vld [vmem:[%s492 + $0xbc] sm:$0x8]
        %v563 = vsel %vm430, 0, %v562
        %564 = vst [vmem:[%s492 + $0xbc] sm:$0x8] %v563
        %v565 = vld [vmem:[%s492 + $0xd4] sm:$0x8]
        %v566 = vsel %vm430, 0, %v565
        %567 = vst [vmem:[%s492 + $0xd4] sm:$0x8] %v566
        %v568 = vld [vmem:[%s492 + $0xec] sm:$0x8]
        %v569 = vsel %vm430, 0, %v568
        %570 = vst [vmem:[%s492 + $0xec] sm:$0x8] %v569
        %v571 = vld [vmem:[%s492 + $0x104] sm:$0x8]
        %v572 = vsel %vm430, 0, %v571
        %573 = vst [vmem:[%s492 + $0x104] sm:$0x8] %v572
        %v574 = vld [vmem:[%s492 + $0x11c] sm:$0x8]
        %v575 = vsel %vm430, 0, %v574
        %576 = vst [vmem:[%s492 + $0x11c] sm:$0x8] %v575
        %v577 = vld [vmem:[%s492 + $0x134] sm:$0x8]
        %v578 = vsel %vm430, 0, %v577
        %579 = vst [vmem:[%s492 + $0x134] sm:$0x8] %v578
        %v580 = vld [vmem:[%s492 + $0x14c] sm:$0x8]
        %v581 = vsel %vm430, 0, %v580
        %582 = vst [vmem:[%s492 + $0x14c] sm:$0x8] %v581
        %v583 = vld [vmem:[%s492 + $0x164] sm:$0x8]
        %v584 = vsel %vm430, 0, %v583
        %585 = vst [vmem:[%s492 + $0x164] sm:$0x8] %v584
        %v586 = vld [vmem:[%s492 + $0x17c] sm:$0x8]
        %v587 = vsel %vm430, 0, %v586
        %588 = vst [vmem:[%s492 + $0x17c] sm:$0x8] %v587
        %v589 = vld [vmem:[%s352] sm:$0xf]
        %v590 = vld [vmem:[%s352 + $0x4] sm:$0xf]
        %v591 = vld [vmem:[%s352 + $0x8] sm:$0xf]
        %v592 = vld [vmem:[%s352 + $0xc] sm:$0xf]
        %v593 = vld [vmem:[%s352 + $0x10] sm:$0xf]
        %v594 = vld [vmem:[%s352 + $0x14] sm:$0xf]
        %v595 = vld [vmem:[%s352 + $0x18] sm:$0xf]
        %v596 = vld [vmem:[%s352 + $0x1c] sm:$0xf]
        %v597 = vld [vmem:[%s3] sm:$0x3]
        %v598 = vld [vmem:[#allocation4] sm:$0xff]
        %v599 = vld [vmem:[#allocation4 + $0x8] sm:$0xff]
        %v600 = vld [vmem:[#allocation4 + $0x10] sm:$0xff]
        %v601 = vld [vmem:[#allocation4 + $0x18] sm:$0xff]
        %v602 = vld [vmem:[#allocation4 + $0x20] sm:$0xff]
        %v603 = vld [vmem:[#allocation4 + $0x28] sm:$0xff]
        %v604 = vld [vmem:[#allocation4 + $0x30] sm:$0xff]
        %v605 = vld [vmem:[#allocation4 + $0x38] sm:$0xff]
        %v606 = vld [vmem:[#allocation4 + $0x40] sm:$0xff]
        %v607 = vld [vmem:[#allocation4 + $0x48] sm:$0xff]
        %v608 = vld [vmem:[#allocation4 + $0x50] sm:$0xff]
        %v609 = vld [vmem:[#allocation4 + $0x58] sm:$0xff]
        %v610 = vld [vmem:[#allocation4 + $0x60] sm:$0xff]
        %v611 = vld [vmem:[#allocation4 + $0x68] sm:$0xff]
        %v612 = vld [vmem:[#allocation4 + $0x70] sm:$0xff]
        %v613 = vld [vmem:[#allocation4 + $0x78] sm:$0xff]
        %v615 = vperm.slane %v597, 0
        %v616 = vperm.slane %v597, 1
        %v627 = vunpack.c.l.b16 %v589
        %v628 = vunpack.c.l.b16 %v590
        %v629 = vunpack.c.l.b16 %v591
        %v630 = vunpack.c.l.b16 %v592
        %v631 = vunpack.c.l.b16 %v593
        %v632 = vunpack.c.l.b16 %v594
        %v633 = vunpack.c.l.b16 %v595
        %v634 = vunpack.c.l.b16 %v596
        %v635 = vpack.c.b16 %v628, %v627
        %v636 = vpack.c.b16 %v630, %v629
        %v637 = vpack.c.b16 %v632, %v631
        %v638 = vpack.c.b16 %v634, %v633
        %v659 = vunpack.c.l.b16 %v598
        %v660 = vunpack.c.h.b16 %v598
        %v661 = vunpack.c.l.b16 %v599
        %v662 = vunpack.c.h.b16 %v599
        %v663 = vunpack.c.l.b16 %v600
        %v664 = vunpack.c.h.b16 %v600
        %v665 = vunpack.c.l.b16 %v601
        %v666 = vunpack.c.h.b16 %v601
        %v667 = vunpack.c.l.b16 %v602
        %v668 = vunpack.c.h.b16 %v602
        %v669 = vunpack.c.l.b16 %v603
        %v670 = vunpack.c.h.b16 %v603
        %v671 = vunpack.c.l.b16 %v604
        %v672 = vunpack.c.h.b16 %v604
        %v673 = vunpack.c.l.b16 %v605
        %v674 = vunpack.c.h.b16 %v605
        %v675 = vunpack.c.l.b16 %v606
        %v676 = vunpack.c.h.b16 %v606
        %v677 = vunpack.c.l.b16 %v607
        %v678 = vunpack.c.h.b16 %v607
        %v679 = vunpack.c.l.b16 %v608
        %v680 = vunpack.c.h.b16 %v608
        %v681 = vunpack.c.l.b16 %v609
        %v682 = vunpack.c.h.b16 %v609
        %v683 = vunpack.c.l.b16 %v610
        %v684 = vunpack.c.h.b16 %v610
        %v685 = vunpack.c.l.b16 %v611
        %v686 = vunpack.c.h.b16 %v611
        %v687 = vunpack.c.l.b16 %v612
        %v688 = vunpack.c.h.b16 %v612
        %v689 = vunpack.c.l.b16 %v613
        %v690 = vunpack.c.h.b16 %v613
        %v691 = vpack.c.b16 %v661, %v659
        %v692 = vpack.c.b16 %v662, %v660
        %v693 = vpack.c.b16 %v665, %v663
        %v694 = vpack.c.b16 %v666, %v664
        %v695 = vpack.c.b16 %v669, %v667
        %v696 = vpack.c.b16 %v670, %v668
        %v697 = vpack.c.b16 %v673, %v671
        %v698 = vpack.c.b16 %v674, %v672
        %v699 = vpack.c.b16 %v677, %v675
        %v700 = vpack.c.b16 %v678, %v676
        %v701 = vpack.c.b16 %v681, %v679
        %v702 = vpack.c.b16 %v682, %v680
        %v703 = vpack.c.b16 %v685, %v683
        %v704 = vpack.c.b16 %v686, %v684
        %v705 = vpack.c.b16 %v689, %v687
        %v706 = vpack.c.b16 %v690, %v688
        %723 = vmatpush.bf16.msra.mxu0 %v705
        %724 = vmatpush.bf16.msra.mxu0 %v703
        %725 = vmatpush.bf16.msra.mxu0 %v701
        %726 = vmatpush.bf16.msra.mxu0 %v699
        %727 = vmatpush.bf16.msra.mxu0 %v697
        %728 = vmatpush.bf16.msra.mxu0 %v695
        %729 = vmatpush.bf16.msra.mxu0 %v693
        %730 = vmatpush.bf16.msra.mxu0 %v691
        %731 = vmatmul.bf16.gmra.mxu0 %v635
        %v732 = vpop.f32.mrf.mxu0
        %v733 = vadd.f32 %v615, %v732
        %v734 = vpop.f32.mrf.mxu0
        %v735 = vadd.f32 %v615, %v734
        %736 = vmatmul.bf16.gmra.mxu0 %v636
        %v737 = vpop.f32.mrf.mxu0
        %v738 = vadd.f32 %v615, %v737
        %v739 = vpop.f32.mrf.mxu0
        %v740 = vadd.f32 %v615, %v739
        %741 = vmatmul.bf16.gmra.mxu0 %v637
        %v742 = vpop.f32.mrf.mxu0
        %v743 = vadd.f32 %v615, %v742
        %v744 = vpop.f32.mrf.mxu0
        %v745 = vadd.f32 %v615, %v744
        %746 = vmatmul.bf16.gmra.mxu0 %v638
        %v747 = vpop.f32.mrf.mxu0
        %v748 = vadd.f32 %v615, %v747
        %v749 = vpop.f32.mrf.mxu0
        %v750 = vadd.f32 %v615, %v749
        %751 = vdwg.mxu0
        %752 = vmatpush.bf16.msra.mxu0 %v706
        %753 = vmatpush.bf16.msra.mxu0 %v704
        %754 = vmatpush.bf16.msra.mxu0 %v702
        %755 = vmatpush.bf16.msra.mxu0 %v700
        %756 = vmatpush.bf16.msra.mxu0 %v698
        %757 = vmatpush.bf16.msra.mxu0 %v696
        %758 = vmatpush.bf16.msra.mxu0 %v694
        %759 = vmatpush.bf16.msra.mxu0 %v692
        %760 = vmatmul.bf16.gmra.mxu0 %v635
        %v761 = vpop.f32.mrf.mxu0
        %v762 = vadd.f32 %v616, %v761
        %v763 = vpop.f32.mrf.mxu0
        %v764 = vadd.f32 %v616, %v763
        %765 = vmatmul.bf16.gmra.mxu0 %v636
        %v766 = vpop.f32.mrf.mxu0
        %v767 = vadd.f32 %v616, %v766
        %v768 = vpop.f32.mrf.mxu0
        %v769 = vadd.f32 %v616, %v768
        %770 = vmatmul.bf16.gmra.mxu0 %v637
        %v771 = vpop.f32.mrf.mxu0
        %v772 = vadd.f32 %v616, %v771
        %v773 = vpop.f32.mrf.mxu0
        %v774 = vadd.f32 %v616, %v773
        %775 = vmatmul.bf16.gmra.mxu0 %v638
        %v776 = vpop.f32.mrf.mxu0
        %v777 = vadd.f32 %v616, %v776
        %v778 = vpop.f32.mrf.mxu0
        %v779 = vadd.f32 %v616, %v778
        %780 = vdwg.mxu0
        %v797 = vrot.slane %v762, 4
        %v798 = vrot.slane %v764, 4
        %v799 = vrot.slane %v767, 4
        %v800 = vrot.slane %v769, 4
        %v801 = vrot.slane %v772, 4
        %v802 = vrot.slane %v774, 4
        %v803 = vrot.slane %v777, 4
        %v804 = vrot.slane %v779, 4
        %vm805 = vcmask 1043456
        %v806 = vsel %vm805, %v733, %v797
        %v807 = vsel %vm805, %v797, %v733
        %v808 = vrot.slane %v807, 4
        %v809 = vsel %vm805, %v735, %v798
        %v810 = vsel %vm805, %v798, %v735
        %v811 = vrot.slane %v810, 4
        %v812 = vsel %vm805, %v738, %v799
        %v813 = vsel %vm805, %v799, %v738
        %v814 = vrot.slane %v813, 4
        %v815 = vsel %vm805, %v740, %v800
        %v816 = vsel %vm805, %v800, %v740
        %v817 = vrot.slane %v816, 4
        %v818 = vsel %vm805, %v743, %v801
        %v819 = vsel %vm805, %v801, %v743
        %v820 = vrot.slane %v819, 4
        %v821 = vsel %vm805, %v745, %v802
        %v822 = vsel %vm805, %v802, %v745
        %v823 = vrot.slane %v822, 4
        %v824 = vsel %vm805, %v748, %v803
        %v825 = vsel %vm805, %v803, %v748
        %v826 = vrot.slane %v825, 4
        %v827 = vsel %vm805, %v750, %v804
        %v828 = vsel %vm805, %v804, %v750
        %v829 = vrot.slane %v828, 4
        %v847 = vunpack.c.l.s4 1935823168
        %v848 = vunpack.c.0.s8 %v847
        %v849 = vperm.slane %v806, %v848
        %v851 = vunpack.c.l.s4 1935823168
        %v852 = vunpack.c.0.s8 %v851
        %v853 = vperm.slane %v808, %v852
        %v855 = vunpack.c.l.s4 1935823168
        %v856 = vunpack.c.0.s8 %v855
        %v857 = vperm.slane %v809, %v856
        %v859 = vunpack.c.l.s4 1935823168
        %v860 = vunpack.c.0.s8 %v859
        %v861 = vperm.slane %v811, %v860
        %v863 = vunpack.c.l.s4 1935823168
        %v864 = vunpack.c.0.s8 %v863
        %v865 = vperm.slane %v812, %v864
        %v867 = vunpack.c.l.s4 1935823168
        %v868 = vunpack.c.0.s8 %v867
        %v869 = vperm.slane %v814, %v868
        %v871 = vunpack.c.l.s4 1935823168
        %v872 = vunpack.c.0.s8 %v871
        %v873 = vperm.slane %v815, %v872
        %v875 = vunpack.c.l.s4 1935823168
        %v876 = vunpack.c.0.s8 %v875
        %v877 = vperm.slane %v817, %v876
        %v879 = vunpack.c.l.s4 1935823168
        %v880 = vunpack.c.0.s8 %v879
        %v881 = vperm.slane %v818, %v880
        %v883 = vunpack.c.l.s4 1935823168
        %v884 = vunpack.c.0.s8 %v883
        %v885 = vperm.slane %v820, %v884
        %v887 = vunpack.c.l.s4 1935823168
        %v888 = vunpack.c.0.s8 %v887
        %v889 = vperm.slane %v821, %v888
        %v891 = vunpack.c.l.s4 1935823168
        %v892 = vunpack.c.0.s8 %v891
        %v893 = vperm.slane %v823, %v892
        %v895 = vunpack.c.l.s4 1935823168
        %v896 = vunpack.c.0.s8 %v895
        %v897 = vperm.slane %v824, %v896
        %v899 = vunpack.c.l.s4 1935823168
        %v900 = vunpack.c.0.s8 %v899
        %v901 = vperm.slane %v826, %v900
        %v903 = vunpack.c.l.s4 1935823168
        %v904 = vunpack.c.0.s8 %v903
        %v905 = vperm.slane %v827, %v904
        %v907 = vunpack.c.l.s4 1935823168
        %v908 = vunpack.c.0.s8 %v907
        %v909 = vperm.slane %v829, %v908
        %v910 = vpack.c.bf16 %v849, %v849
        %v911 = vpack.c.bf16 %v853, %v853
        %v912 = vpack.c.bf16 %v857, %v857
        %v913 = vpack.c.bf16 %v861, %v861
        %v914 = vpack.c.bf16 %v865, %v865
        %v915 = vpack.c.bf16 %v869, %v869
        %v916 = vpack.c.bf16 %v873, %v873
        %v917 = vpack.c.bf16 %v877, %v877
        %v918 = vpack.c.bf16 %v881, %v881
        %v919 = vpack.c.bf16 %v885, %v885
        %v920 = vpack.c.bf16 %v889, %v889
        %v921 = vpack.c.bf16 %v893, %v893
        %v922 = vpack.c.bf16 %v897, %v897
        %v923 = vpack.c.bf16 %v901, %v901
        %v924 = vpack.c.bf16 %v905, %v905
        %v925 = vpack.c.bf16 %v909, %v909
        %s926 = scalar_lea.vmem [#allocation4], 128
        %v927 = vld [vmem:[%s926] sm:$0xff]
        %v928 = vld [vmem:[%s926 + $0x8] sm:$0xff]
        %v929 = vld [vmem:[%s926 + $0x10] sm:$0xff]
        %v930 = vld [vmem:[%s926 + $0x18] sm:$0xff]
        %v931 = vld [vmem:[%s926 + $0x20] sm:$0xff]
        %v932 = vld [vmem:[%s926 + $0x28] sm:$0xff]
        %v933 = vld [vmem:[%s926 + $0x30] sm:$0xff]
        %v934 = vld [vmem:[%s926 + $0x38] sm:$0xff]
        %v935 = vld [vmem:[%s926 + $0x40] sm:$0xff]
        %v936 = vld [vmem:[%s926 + $0x48] sm:$0xff]
        %v937 = vld [vmem:[%s926 + $0x50] sm:$0xff]
        %v938 = vld [vmem:[%s926 + $0x58] sm:$0xff]
        %v939 = vld [vmem:[%s926 + $0x60] sm:$0xff]
        %v940 = vld [vmem:[%s926 + $0x68] sm:$0xff]
        %v941 = vld [vmem:[%s926 + $0x70] sm:$0xff]
        %v942 = vld [vmem:[%s926 + $0x78] sm:$0xff]
        %v959 = vunpack.c.l.b16 %v927
        %v960 = vunpack.c.h.b16 %v927
        %v961 = vunpack.c.l.b16 %v928
        %v962 = vunpack.c.h.b16 %v928
        %v963 = vunpack.c.l.b16 %v929
        %v964 = vunpack.c.h.b16 %v929
        %v965 = vunpack.c.l.b16 %v930
        %v966 = vunpack.c.h.b16 %v930
        %v967 = vunpack.c.l.b16 %v931
        %v968 = vunpack.c.h.b16 %v931
        %v969 = vunpack.c.l.b16 %v932
        %v970 = vunpack.c.h.b16 %v932
        %v971 = vunpack.c.l.b16 %v933
        %v972 = vunpack.c.h.b16 %v933
        %v973 = vunpack.c.l.b16 %v934
        %v974 = vunpack.c.h.b16 %v934
        %v975 = vunpack.c.l.b16 %v935
        %v976 = vunpack.c.h.b16 %v935
        %v977 = vunpack.c.l.b16 %v936
        %v978 = vunpack.c.h.b16 %v936
        %v979 = vunpack.c.l.b16 %v937
        %v980 = vunpack.c.h.b16 %v937
        %v981 = vunpack.c.l.b16 %v938
        %v982 = vunpack.c.h.b16 %v938
        %v983 = vunpack.c.l.b16 %v939
        %v984 = vunpack.c.h.b16 %v939
        %v985 = vunpack.c.l.b16 %v940
        %v986 = vunpack.c.h.b16 %v940
        %v987 = vunpack.c.l.b16 %v941
        %v988 = vunpack.c.h.b16 %v941
        %v989 = vunpack.c.l.b16 %v942
        %v990 = vunpack.c.h.b16 %v942
        %v991 = vpack.c.b16 %v961, %v959
        %v992 = vpack.c.b16 %v962, %v960
        %v993 = vpack.c.b16 %v965, %v963
        %v994 = vpack.c.b16 %v966, %v964
        %v995 = vpack.c.b16 %v969, %v967
        %v996 = vpack.c.b16 %v970, %v968
        %v997 = vpack.c.b16 %v973, %v971
        %v998 = vpack.c.b16 %v974, %v972
        %v999 = vpack.c.b16 %v977, %v975
        %v1000 = vpack.c.b16 %v978, %v976
        %v1001 = vpack.c.b16 %v981, %v979
        %v1002 = vpack.c.b16 %v982, %v980
        %v1003 = vpack.c.b16 %v985, %v983
        %v1004 = vpack.c.b16 %v986, %v984
        %v1005 = vpack.c.b16 %v989, %v987
        %v1006 = vpack.c.b16 %v990, %v988
        %1023 = vmatpush.bf16.msra.mxu0 %v1005
        %1024 = vmatpush.bf16.msra.mxu0 %v1003
        %1025 = vmatpush.bf16.msra.mxu0 %v1001
        %1026 = vmatpush.bf16.msra.mxu0 %v999
        %1027 = vmatpush.bf16.msra.mxu0 %v997
        %1028 = vmatpush.bf16.msra.mxu0 %v995
        %1029 = vmatpush.bf16.msra.mxu0 %v993
        %1030 = vmatpush.bf16.msra.mxu0 %v991
        %1031 = vmatmul.bf16.gmra.mxu0 %v635
        %v1032 = vpop.f32.mrf.mxu0
        %v1033 = vadd.f32 %v615, %v1032
        %v1034 = vpop.f32.mrf.mxu0
        %v1035 = vadd.f32 %v615, %v1034
        %1036 = vmatmul.bf16.gmra.mxu0 %v636
        %v1037 = vpop.f32.mrf.mxu0
        %v1038 = vadd.f32 %v615, %v1037
        %v1039 = vpop.f32.mrf.mxu0
        %v1040 = vadd.f32 %v615, %v1039
        %1041 = vmatmul.bf16.gmra.mxu0 %v637
        %v1042 = vpop.f32.mrf.mxu0
        %v1043 = vadd.f32 %v615, %v1042
        %v1044 = vpop.f32.mrf.mxu0
        %v1045 = vadd.f32 %v615, %v1044
        %1046 = vmatmul.bf16.gmra.mxu0 %v638
        %v1047 = vpop.f32.mrf.mxu0
        %v1048 = vadd.f32 %v615, %v1047
        %v1049 = vpop.f32.mrf.mxu0
        %v1050 = vadd.f32 %v615, %v1049
        %1051 = vdwg.mxu0
        %1052 = vmatpush.bf16.msra.mxu0 %v1006
        %1053 = vmatpush.bf16.msra.mxu0 %v1004
        %1054 = vmatpush.bf16.msra.mxu0 %v1002
        %1055 = vmatpush.bf16.msra.mxu0 %v1000
        %1056 = vmatpush.bf16.msra.mxu0 %v998
        %1057 = vmatpush.bf16.msra.mxu0 %v996
        %1058 = vmatpush.bf16.msra.mxu0 %v994
        %1059 = vmatpush.bf16.msra.mxu0 %v992
        %1060 = vmatmul.bf16.gmra.mxu0 %v635
        %v1061 = vpop.f32.mrf.mxu0
        %v1062 = vadd.f32 %v616, %v1061
        %v1063 = vpop.f32.mrf.mxu0
        %v1064 = vadd.f32 %v616, %v1063
        %1065 = vmatmul.bf16.gmra.mxu0 %v636
        %v1066 = vpop.f32.mrf.mxu0
        %v1067 = vadd.f32 %v616, %v1066
        %v1068 = vpop.f32.mrf.mxu0
        %v1069 = vadd.f32 %v616, %v1068
        %1070 = vmatmul.bf16.gmra.mxu0 %v637
        %v1071 = vpop.f32.mrf.mxu0
        %v1072 = vadd.f32 %v616, %v1071
        %v1073 = vpop.f32.mrf.mxu0
        %v1074 = vadd.f32 %v616, %v1073
        %1075 = vmatmul.bf16.gmra.mxu0 %v638
        %v1076 = vpop.f32.mrf.mxu0
        %v1077 = vadd.f32 %v616, %v1076
        %v1078 = vpop.f32.mrf.mxu0
        %v1079 = vadd.f32 %v616, %v1078
        %1080 = vdwg.mxu0
        %v1097 = vrot.slane %v1062, 4
        %v1098 = vrot.slane %v1064, 4
        %v1099 = vrot.slane %v1067, 4
        %v1100 = vrot.slane %v1069, 4
        %v1101 = vrot.slane %v1072, 4
        %v1102 = vrot.slane %v1074, 4
        %v1103 = vrot.slane %v1077, 4
        %v1104 = vrot.slane %v1079, 4
        %v1105 = vsel %vm805, %v1033, %v1097
        %v1106 = vsel %vm805, %v1097, %v1033
        %v1107 = vrot.slane %v1106, 4
        %v1108 = vsel %vm805, %v1035, %v1098
        %v1109 = vsel %vm805, %v1098, %v1035
        %v1110 = vrot.slane %v1109, 4
        %v1111 = vsel %vm805, %v1038, %v1099
        %v1112 = vsel %vm805, %v1099, %v1038
        %v1113 = vrot.slane %v1112, 4
        %v1114 = vsel %vm805, %v1040, %v1100
        %v1115 = vsel %vm805, %v1100, %v1040
        %v1116 = vrot.slane %v1115, 4
        %v1117 = vsel %vm805, %v1043, %v1101
        %v1118 = vsel %vm805, %v1101, %v1043
        %v1119 = vrot.slane %v1118, 4
        %v1120 = vsel %vm805, %v1045, %v1102
        %v1121 = vsel %vm805, %v1102, %v1045
        %v1122 = vrot.slane %v1121, 4
        %v1123 = vsel %vm805, %v1048, %v1103
        %v1124 = vsel %vm805, %v1103, %v1048
        %v1125 = vrot.slane %v1124, 4
        %v1126 = vsel %vm805, %v1050, %v1104
        %v1127 = vsel %vm805, %v1104, %v1050
        %v1128 = vrot.slane %v1127, 4
        %v1146 = vunpack.c.l.s4 1935823168
        %v1147 = vunpack.c.0.s8 %v1146
        %v1148 = vperm.slane %v1105, %v1147
        %v1150 = vunpack.c.l.s4 1935823168
        %v1151 = vunpack.c.0.s8 %v1150
        %v1152 = vperm.slane %v1107, %v1151
        %v1154 = vunpack.c.l.s4 1935823168
        %v1155 = vunpack.c.0.s8 %v1154
        %v1156 = vperm.slane %v1108, %v1155
        %v1158 = vunpack.c.l.s4 1935823168
        %v1159 = vunpack.c.0.s8 %v1158
        %v1160 = vperm.slane %v1110, %v1159
        %v1162 = vunpack.c.l.s4 1935823168
        %v1163 = vunpack.c.0.s8 %v1162
        %v1164 = vperm.slane %v1111, %v1163
        %v1166 = vunpack.c.l.s4 1935823168
        %v1167 = vunpack.c.0.s8 %v1166
        %v1168 = vperm.slane %v1113, %v1167
        %v1170 = vunpack.c.l.s4 1935823168
        %v1171 = vunpack.c.0.s8 %v1170
        %v1172 = vperm.slane %v1114, %v1171
        %v1174 = vunpack.c.l.s4 1935823168
        %v1175 = vunpack.c.0.s8 %v1174
        %v1176 = vperm.slane %v1116, %v1175
        %v1178 = vunpack.c.l.s4 1935823168
        %v1179 = vunpack.c.0.s8 %v1178
        %v1180 = vperm.slane %v1117, %v1179
        %v1182 = vunpack.c.l.s4 1935823168
        %v1183 = vunpack.c.0.s8 %v1182
        %v1184 = vperm.slane %v1119, %v1183
        %v1186 = vunpack.c.l.s4 1935823168
        %v1187 = vunpack.c.0.s8 %v1186
        %v1188 = vperm.slane %v1120, %v1187
        %v1190 = vunpack.c.l.s4 1935823168
        %v1191 = vunpack.c.0.s8 %v1190
        %v1192 = vperm.slane %v1122, %v1191
        %v1194 = vunpack.c.l.s4 1935823168
        %v1195 = vunpack.c.0.s8 %v1194
        %v1196 = vperm.slane %v1123, %v1195
        %v1198 = vunpack.c.l.s4 1935823168
        %v1199 = vunpack.c.0.s8 %v1198
        %v1200 = vperm.slane %v1125, %v1199
        %v1202 = vunpack.c.l.s4 1935823168
        %v1203 = vunpack.c.0.s8 %v1202
        %v1204 = vperm.slane %v1126, %v1203
        %v1206 = vunpack.c.l.s4 1935823168
        %v1207 = vunpack.c.0.s8 %v1206
        %v1208 = vperm.slane %v1128, %v1207
        %v1209 = vpack.c.bf16 %v1148, %v1148
        %v1210 = vpack.c.bf16 %v1152, %v1152
        %v1211 = vpack.c.bf16 %v1156, %v1156
        %v1212 = vpack.c.bf16 %v1160, %v1160
        %v1213 = vpack.c.bf16 %v1164, %v1164
        %v1214 = vpack.c.bf16 %v1168, %v1168
        %v1215 = vpack.c.bf16 %v1172, %v1172
        %v1216 = vpack.c.bf16 %v1176, %v1176
        %v1217 = vpack.c.bf16 %v1180, %v1180
        %v1218 = vpack.c.bf16 %v1184, %v1184
        %v1219 = vpack.c.bf16 %v1188, %v1188
        %v1220 = vpack.c.bf16 %v1192, %v1192
        %v1221 = vpack.c.bf16 %v1196, %v1196
        %v1222 = vpack.c.bf16 %v1200, %v1200
        %v1223 = vpack.c.bf16 %v1204, %v1204
        %v1224 = vpack.c.bf16 %v1208, %v1208
        %vm1225 = vsmask.f32 4368
        %vm1226 = vmor %vm374, %vm1225
        %v1228 = vshrl.u32 %v910, 16
        %v1230 = vrot.slane %v1228, 7
        %v1231 = vshll.u32 %v910, 16
        %v1233 = vor.u32 %v1230, %v1231
        %v1234 = vrot.slane %v1230, 4
        %v1236 = vshrl.u32 %v911, 16
        %v1238 = vrot.slane %v1236, 7
        %v1239 = vshll.u32 %v911, 16
        %v1241 = vor.u32 %v1238, %v1239
        %v1242 = vsel %vm1226, %v1234, %v1241
        %v1244 = vshrl.u32 %v1209, 16
        %v1246 = vrot.slane %v1244, 7
        %v1247 = vshll.u32 %v1209, 16
        %v1249 = vor.u32 %v1246, %v1247
        %v1250 = vrot.slane %v1246, 4
        %v1252 = vshrl.u32 %v1210, 16
        %v1254 = vrot.slane %v1252, 7
        %v1255 = vshll.u32 %v1210, 16
        %v1257 = vor.u32 %v1254, %v1255
        %v1258 = vsel %vm1226, %v1250, %v1257
        %v1260 = vshrl.u32 %v912, 16
        %v1262 = vrot.slane %v1260, 7
        %v1263 = vshll.u32 %v912, 16
        %v1265 = vor.u32 %v1262, %v1263
        %v1266 = vrot.slane %v1262, 4
        %v1268 = vshrl.u32 %v913, 16
        %v1270 = vrot.slane %v1268, 7
        %v1271 = vshll.u32 %v913, 16
        %v1273 = vor.u32 %v1270, %v1271
        %v1274 = vsel %vm1226, %v1266, %v1273
        %v1276 = vshrl.u32 %v1211, 16
        %v1278 = vrot.slane %v1276, 7
        %v1279 = vshll.u32 %v1211, 16
        %v1281 = vor.u32 %v1278, %v1279
        %v1282 = vrot.slane %v1278, 4
        %v1284 = vshrl.u32 %v1212, 16
        %v1286 = vrot.slane %v1284, 7
        %v1287 = vshll.u32 %v1212, 16
        %v1289 = vor.u32 %v1286, %v1287
        %v1290 = vsel %vm1226, %v1282, %v1289
        %v1292 = vshrl.u32 %v914, 16
        %v1294 = vrot.slane %v1292, 7
        %v1295 = vshll.u32 %v914, 16
        %v1297 = vor.u32 %v1294, %v1295
        %v1298 = vrot.slane %v1294, 4
        %v1300 = vshrl.u32 %v915, 16
        %v1302 = vrot.slane %v1300, 7
        %v1303 = vshll.u32 %v915, 16
        %v1305 = vor.u32 %v1302, %v1303
        %v1306 = vsel %vm1226, %v1298, %v1305
        %v1308 = vshrl.u32 %v1213, 16
        %v1310 = vrot.slane %v1308, 7
        %v1311 = vshll.u32 %v1213, 16
        %v1313 = vor.u32 %v1310, %v1311
        %v1314 = vrot.slane %v1310, 4
        %v1316 = vshrl.u32 %v1214, 16
        %v1318 = vrot.slane %v1316, 7
        %v1319 = vshll.u32 %v1214, 16
        %v1321 = vor.u32 %v1318, %v1319
        %v1322 = vsel %vm1226, %v1314, %v1321
        %v1324 = vshrl.u32 %v916, 16
        %v1326 = vrot.slane %v1324, 7
        %v1327 = vshll.u32 %v916, 16
        %v1329 = vor.u32 %v1326, %v1327
        %v1330 = vrot.slane %v1326, 4
        %v1332 = vshrl.u32 %v917, 16
        %v1334 = vrot.slane %v1332, 7
        %v1335 = vshll.u32 %v917, 16
        %v1337 = vor.u32 %v1334, %v1335
        %v1338 = vsel %vm1226, %v1330, %v1337
        %v1340 = vshrl.u32 %v1215, 16
        %v1342 = vrot.slane %v1340, 7
        %v1343 = vshll.u32 %v1215, 16
        %v1345 = vor.u32 %v1342, %v1343
        %v1346 = vrot.slane %v1342, 4
        %v1348 = vshrl.u32 %v1216, 16
        %v1350 = vrot.slane %v1348, 7
        %v1351 = vshll.u32 %v1216, 16
        %v1353 = vor.u32 %v1350, %v1351
        %v1354 = vsel %vm1226, %v1346, %v1353
        %v1356 = vshrl.u32 %v918, 16
        %v1358 = vrot.slane %v1356, 7
        %v1359 = vshll.u32 %v918, 16
        %v1361 = vor.u32 %v1358, %v1359
        %v1362 = vrot.slane %v1358, 4
        %v1364 = vshrl.u32 %v919, 16
        %v1366 = vrot.slane %v1364, 7
        %v1367 = vshll.u32 %v919, 16
        %v1369 = vor.u32 %v1366, %v1367
        %v1370 = vsel %vm1226, %v1362, %v1369
        %v1372 = vshrl.u32 %v1217, 16
        %v1374 = vrot.slane %v1372, 7
        %v1375 = vshll.u32 %v1217, 16
        %v1377 = vor.u32 %v1374, %v1375
        %v1378 = vrot.slane %v1374, 4
        %v1380 = vshrl.u32 %v1218, 16
        %v1382 = vrot.slane %v1380, 7
        %v1383 = vshll.u32 %v1218, 16
        %v1385 = vor.u32 %v1382, %v1383
        %v1386 = vsel %vm1226, %v1378, %v1385
        %v1388 = vshrl.u32 %v920, 16
        %v1390 = vrot.slane %v1388, 7
        %v1391 = vshll.u32 %v920, 16
        %v1393 = vor.u32 %v1390, %v1391
        %v1394 = vrot.slane %v1390, 4
        %v1396 = vshrl.u32 %v921, 16
        %v1398 = vrot.slane %v1396, 7
        %v1399 = vshll.u32 %v921, 16
        %v1401 = vor.u32 %v1398, %v1399
        %v1402 = vsel %vm1226, %v1394, %v1401
        %v1404 = vshrl.u32 %v1219, 16
        %v1406 = vrot.slane %v1404, 7
        %v1407 = vshll.u32 %v1219, 16
        %v1409 = vor.u32 %v1406, %v1407
        %v1410 = vrot.slane %v1406, 4
        %v1412 = vshrl.u32 %v1220, 16
        %v1414 = vrot.slane %v1412, 7
        %v1415 = vshll.u32 %v1220, 16
        %v1417 = vor.u32 %v1414, %v1415
        %v1418 = vsel %vm1226, %v1410, %v1417
        %v1420 = vshrl.u32 %v922, 16
        %v1422 = vrot.slane %v1420, 7
        %v1423 = vshll.u32 %v922, 16
        %v1425 = vor.u32 %v1422, %v1423
        %v1426 = vrot.slane %v1422, 4
        %v1428 = vshrl.u32 %v923, 16
        %v1430 = vrot.slane %v1428, 7
        %v1431 = vshll.u32 %v923, 16
        %v1433 = vor.u32 %v1430, %v1431
        %v1434 = vsel %vm1226, %v1426, %v1433
        %v1436 = vshrl.u32 %v1221, 16
        %v1438 = vrot.slane %v1436, 7
        %v1439 = vshll.u32 %v1221, 16
        %v1441 = vor.u32 %v1438, %v1439
        %v1442 = vrot.slane %v1438, 4
        %v1444 = vshrl.u32 %v1222, 16
        %v1446 = vrot.slane %v1444, 7
        %v1447 = vshll.u32 %v1222, 16
        %v1449 = vor.u32 %v1446, %v1447
        %v1450 = vsel %vm1226, %v1442, %v1449
        %v1452 = vshrl.u32 %v924, 16
        %v1454 = vrot.slane %v1452, 7
        %v1455 = vshll.u32 %v924, 16
        %v1457 = vor.u32 %v1454, %v1455
        %v1458 = vrot.slane %v1454, 4
        %v1460 = vshrl.u32 %v925, 16
        %v1462 = vrot.slane %v1460, 7
        %v1463 = vshll.u32 %v925, 16
        %v1465 = vor.u32 %v1462, %v1463
        %v1466 = vsel %vm1226, %v1458, %v1465
        %v1468 = vshrl.u32 %v1223, 16
        %v1470 = vrot.slane %v1468, 7
        %v1471 = vshll.u32 %v1223, 16
        %v1473 = vor.u32 %v1470, %v1471
        %v1474 = vrot.slane %v1470, 4
        %v1476 = vshrl.u32 %v1224, 16
        %v1478 = vrot.slane %v1476, 7
        %v1479 = vshll.u32 %v1224, 16
        %v1481 = vor.u32 %v1478, %v1479
        %v1482 = vsel %vm1226, %v1474, %v1481
        %vm1515 = vcmask 1043456
        %vm1516 = vsmask.f32 7938
        %vm1517 = vmand %vm1515, %vm1516
        %v1518 = vld [vmem:[%s372] sm:$0xf]
        %v1519 = vsel %vm1517, %v1233, %v1518
        %1520 = vst [vmem:[%s372] sm:$0xf] %v1519
        %1521 = vst [vmem:[%s372 + $0x18] sm:$0xf] %v1242
        %v1522 = vld [vmem:[%s372 + $0x30] sm:$0xf]
        %v1523 = vsel %vm1517, %v1249, %v1522
        %1524 = vst [vmem:[%s372 + $0x30] sm:$0xf] %v1523
        %1525 = vst [vmem:[%s372 + $0x48] sm:$0xf] %v1258
        %v1526 = vld [vmem:[%s372 + $0x60] sm:$0xf]
        %v1527 = vsel %vm1517, %v1265, %v1526
        %1528 = vst [vmem:[%s372 + $0x60] sm:$0xf] %v1527
        %1529 = vst [vmem:[%s372 + $0x78] sm:$0xf] %v1274
        %v1530 = vld [vmem:[%s372 + $0x90] sm:$0xf]
        %v1531 = vsel %vm1517, %v1281, %v1530
        %1532 = vst [vmem:[%s372 + $0x90] sm:$0xf] %v1531
        %1533 = vst [vmem:[%s372 + $0xa8] sm:$0xf] %v1290
        %v1534 = vld [vmem:[%s372 + $0xc0] sm:$0xf]
        %v1535 = vsel %vm1517, %v1297, %v1534
        %1536 = vst [vmem:[%s372 + $0xc0] sm:$0xf] %v1535
        %1537 = vst [vmem:[%s372 + $0xd8] sm:$0xf] %v1306
        %v1538 = vld [vmem:[%s372 + $0xf0] sm:$0xf]
        %v1539 = vsel %vm1517, %v1313, %v1538
        %1540 = vst [vmem:[%s372 + $0xf0] sm:$0xf] %v1539
        %1541 = vst [vmem:[%s372 + $0x108] sm:$0xf] %v1322
        %v1542 = vld [vmem:[%s372 + $0x120] sm:$0xf]
        %v1543 = vsel %vm1517, %v1329, %v1542
        %1544 = vst [vmem:[%s372 + $0x120] sm:$0xf] %v1543
        %1545 = vst [vmem:[%s372 + $0x138] sm:$0xf] %v1338
        %v1546 = vld [vmem:[%s372 + $0x150] sm:$0xf]
        %v1547 = vsel %vm1517, %v1345, %v1546
        %1548 = vst [vmem:[%s372 + $0x150] sm:$0xf] %v1547
        %1549 = vst [vmem:[%s372 + $0x168] sm:$0xf] %v1354
        %v1550 = vld [vmem:[%s372 + $0x180] sm:$0xf]
        %v1551 = vsel %vm1517, %v1361, %v1550
        %1552 = vst [vmem:[%s372 + $0x180] sm:$0xf] %v1551
        %1553 = vst [vmem:[%s372 + $0x198] sm:$0xf] %v1370
        %v1554 = vld [vmem:[%s372 + $0x1b0] sm:$0xf]
        %v1555 = vsel %vm1517, %v1377, %v1554
        %1556 = vst [vmem:[%s372 + $0x1b0] sm:$0xf] %v1555
        %1557 = vst [vmem:[%s372 + $0x1c8] sm:$0xf] %v1386
        %v1558 = vld [vmem:[%s372 + $0x1e0] sm:$0xf]
        %v1559 = vsel %vm1517, %v1393, %v1558
        %1560 = vst [vmem:[%s372 + $0x1e0] sm:$0xf] %v1559
        %1561 = vst [vmem:[%s372 + $0x1f8] sm:$0xf] %v1402
        %v1562 = vld [vmem:[%s372 + $0x210] sm:$0xf]
        %v1563 = vsel %vm1517, %v1409, %v1562
        %1564 = vst [vmem:[%s372 + $0x210] sm:$0xf] %v1563
        %1565 = vst [vmem:[%s372 + $0x228] sm:$0xf] %v1418
        %v1566 = vld [vmem:[%s372 + $0x240] sm:$0xf]
        %v1567 = vsel %vm1517, %v1425, %v1566
        %1568 = vst [vmem:[%s372 + $0x240] sm:$0xf] %v1567
        %1569 = vst [vmem:[%s372 + $0x258] sm:$0xf] %v1434
        %v1570 = vld [vmem:[%s372 + $0x270] sm:$0xf]
        %v1571 = vsel %vm1517, %v1441, %v1570
        %1572 = vst [vmem:[%s372 + $0x270] sm:$0xf] %v1571
        %1573 = vst [vmem:[%s372 + $0x288] sm:$0xf] %v1450
        %v1574 = vld [vmem:[%s372 + $0x2a0] sm:$0xf]
        %v1575 = vsel %vm1517, %v1457, %v1574
        %1576 = vst [vmem:[%s372 + $0x2a0] sm:$0xf] %v1575
        %1577 = vst [vmem:[%s372 + $0x2b8] sm:$0xf] %v1466
        %v1578 = vld [vmem:[%s372 + $0x2d0] sm:$0xf]
        %v1579 = vsel %vm1517, %v1473, %v1578
        %1580 = vst [vmem:[%s372 + $0x2d0] sm:$0xf] %v1579
        %1581 = vst [vmem:[%s372 + $0x2e8] sm:$0xf] %v1482
        %1582 = vst [vmem:[%s372 + $0x8] sm:$0xf] %v910
        %1583 = vst [vmem:[%s372 + $0x20] sm:$0xf] %v911
        %1584 = vst [vmem:[%s372 + $0x38] sm:$0xf] %v1209
        %1585 = vst [vmem:[%s372 + $0x50] sm:$0xf] %v1210
        %1586 = vst [vmem:[%s372 + $0x68] sm:$0xf] %v912
        %1587 = vst [vmem:[%s372 + $0x80] sm:$0xf] %v913
        %1588 = vst [vmem:[%s372 + $0x98] sm:$0xf] %v1211
        %1589 = vst [vmem:[%s372 + $0xb0] sm:$0xf] %v1212
        %1590 = vst [vmem:[%s372 + $0xc8] sm:$0xf] %v914
        %1591 = vst [vmem:[%s372 + $0xe0] sm:$0xf] %v915
        %1592 = vst [vmem:[%s372 + $0xf8] sm:$0xf] %v1213
        %1593 = vst [vmem:[%s372 + $0x110] sm:$0xf] %v1214
        %1594 = vst [vmem:[%s372 + $0x128] sm:$0xf] %v916
        %1595 = vst [vmem:[%s372 + $0x140] sm:$0xf] %v917
        %1596 = vst [vmem:[%s372 + $0x158] sm:$0xf] %v1215
        %1597 = vst [vmem:[%s372 + $0x170] sm:$0xf] %v1216
        %1598 = vst [vmem:[%s372 + $0x188] sm:$0xf] %v918
        %1599 = vst [vmem:[%s372 + $0x1a0] sm:$0xf] %v919
        %1600 = vst [vmem:[%s372 + $0x1b8] sm:$0xf] %v1217
        %1601 = vst [vmem:[%s372 + $0x1d0] sm:$0xf] %v1218
        %1602 = vst [vmem:[%s372 + $0x1e8] sm:$0xf] %v920
        %1603 = vst [vmem:[%s372 + $0x200] sm:$0xf] %v921
        %1604 = vst [vmem:[%s372 + $0x218] sm:$0xf] %v1219
        %1605 = vst [vmem:[%s372 + $0x230] sm:$0xf] %v1220
        %1606 = vst [vmem:[%s372 + $0x248] sm:$0xf] %v922
        %1607 = vst [vmem:[%s372 + $0x260] sm:$0xf] %v923
        %1608 = vst [vmem:[%s372 + $0x278] sm:$0xf] %v1221
        %1609 = vst [vmem:[%s372 + $0x290] sm:$0xf] %v1222
        %1610 = vst [vmem:[%s372 + $0x2a8] sm:$0xf] %v924
        %1611 = vst [vmem:[%s372 + $0x2c0] sm:$0xf] %v925
        %1612 = vst [vmem:[%s372 + $0x2d8] sm:$0xf] %v1223
        %1613 = vst [vmem:[%s372 + $0x2f0] sm:$0xf] %v1224
        %vm1614 = vsmask.f32 3328
        %vm1615 = vsmask.f32 7440
        %vm1616 = vmor %vm1614, %vm1615
        %v1617 = vrot.slane %v1228, 4
        %v1618 = vrot.slane %v1231, 5
        %v1619 = vor.u32 %v1617, %v1618
        %v1620 = vrot.slane %v1619, 4
        %v1621 = vrot.slane %v1239, 5
        %v1622 = vsel %vm1616, %v1620, %v1621
        %v1623 = vrot.slane %v1236, 4
        %v1624 = vor.u32 %v1623, %v1621
        %v1625 = vrot.slane %v1624, 4
        %v1626 = vrot.slane %v1244, 4
        %v1627 = vrot.slane %v1247, 5
        %v1628 = vor.u32 %v1626, %v1627
        %v1629 = vrot.slane %v1628, 4
        %v1630 = vrot.slane %v1255, 5
        %v1631 = vsel %vm1616, %v1629, %v1630
        %v1632 = vrot.slane %v1252, 4
        %v1633 = vor.u32 %v1632, %v1630
        %v1634 = vrot.slane %v1633, 4
        %v1635 = vrot.slane %v1260, 4
        %v1636 = vrot.slane %v1263, 5
        %v1637 = vor.u32 %v1635, %v1636
        %v1638 = vrot.slane %v1637, 4
        %v1639 = vrot.slane %v1271, 5
        %v1640 = vsel %vm1616, %v1638, %v1639
        %v1641 = vrot.slane %v1268, 4
        %v1642 = vor.u32 %v1641, %v1639
        %v1643 = vrot.slane %v1642, 4
        %v1644 = vrot.slane %v1276, 4
        %v1645 = vrot.slane %v1279, 5
        %v1646 = vor.u32 %v1644, %v1645
        %v1647 = vrot.slane %v1646, 4
        %v1648 = vrot.slane %v1287, 5
        %v1649 = vsel %vm1616, %v1647, %v1648
        %v1650 = vrot.slane %v1284, 4
        %v1651 = vor.u32 %v1650, %v1648
        %v1652 = vrot.slane %v1651, 4
        %v1653 = vrot.slane %v1292, 4
        %v1654 = vrot.slane %v1295, 5
        %v1655 = vor.u32 %v1653, %v1654
        %v1656 = vrot.slane %v1655, 4
        %v1657 = vrot.slane %v1303, 5
        %v1658 = vsel %vm1616, %v1656, %v1657
        %v1659 = vrot.slane %v1300, 4
        %v1660 = vor.u32 %v1659, %v1657
        %v1661 = vrot.slane %v1660, 4
        %v1662 = vrot.slane %v1308, 4
        %v1663 = vrot.slane %v1311, 5
        %v1664 = vor.u32 %v1662, %v1663
        %v1665 = vrot.slane %v1664, 4
        %v1666 = vrot.slane %v1319, 5
        %v1667 = vsel %vm1616, %v1665, %v1666
        %v1668 = vrot.slane %v1316, 4
        %v1669 = vor.u32 %v1668, %v1666
        %v1670 = vrot.slane %v1669, 4
        %v1671 = vrot.slane %v1324, 4
        %v1672 = vrot.slane %v1327, 5
        %v1673 = vor.u32 %v1671, %v1672
        %v1674 = vrot.slane %v1673, 4
        %v1675 = vrot.slane %v1335, 5
        %v1676 = vsel %vm1616, %v1674, %v1675
        %v1677 = vrot.slane %v1332, 4
        %v1678 = vor.u32 %v1677, %v1675
        %v1679 = vrot.slane %v1678, 4
        %v1680 = vrot.slane %v1340, 4
        %v1681 = vrot.slane %v1343, 5
        %v1682 = vor.u32 %v1680, %v1681
        %v1683 = vrot.slane %v1682, 4
        %v1684 = vrot.slane %v1351, 5
        %v1685 = vsel %vm1616, %v1683, %v1684
        %v1686 = vrot.slane %v1348, 4
        %v1687 = vor.u32 %v1686, %v1684
        %v1688 = vrot.slane %v1687, 4
        %v1689 = vrot.slane %v1356, 4
        %v1690 = vrot.slane %v1359, 5
        %v1691 = vor.u32 %v1689, %v1690
        %v1692 = vrot.slane %v1691, 4
        %v1693 = vrot.slane %v1367, 5
        %v1694 = vsel %vm1616, %v1692, %v1693
        %v1695 = vrot.slane %v1364, 4
        %v1696 = vor.u32 %v1695, %v1693
        %v1697 = vrot.slane %v1696, 4
        %v1698 = vrot.slane %v1372, 4
        %v1699 = vrot.slane %v1375, 5
        %v1700 = vor.u32 %v1698, %v1699
        %v1701 = vrot.slane %v1700, 4
        %v1702 = vrot.slane %v1383, 5
        %v1703 = vsel %vm1616, %v1701, %v1702
        %v1704 = vrot.slane %v1380, 4
        %v1705 = vor.u32 %v1704, %v1702
        %v1706 = vrot.slane %v1705, 4
        %v1707 = vrot.slane %v1388, 4
        %v1708 = vrot.slane %v1391, 5
        %v1709 = vor.u32 %v1707, %v1708
        %v1710 = vrot.slane %v1709, 4
        %v1711 = vrot.slane %v1399, 5
        %v1712 = vsel %vm1616, %v1710, %v1711
        %v1713 = vrot.slane %v1396, 4
        %v1714 = vor.u32 %v1713, %v1711
        %v1715 = vrot.slane %v1714, 4
        %v1716 = vrot.slane %v1404, 4
        %v1717 = vrot.slane %v1407, 5
        %v1718 = vor.u32 %v1716, %v1717
        %v1719 = vrot.slane %v1718, 4
        %v1720 = vrot.slane %v1415, 5
        %v1721 = vsel %vm1616, %v1719, %v1720
        %v1722 = vrot.slane %v1412, 4
        %v1723 = vor.u32 %v1722, %v1720
        %v1724 = vrot.slane %v1723, 4
        %v1725 = vrot.slane %v1420, 4
        %v1726 = vrot.slane %v1423, 5
        %v1727 = vor.u32 %v1725, %v1726
        %v1728 = vrot.slane %v1727, 4
        %v1729 = vrot.slane %v1431, 5
        %v1730 = vsel %vm1616, %v1728, %v1729
        %v1731 = vrot.slane %v1428, 4
        %v1732 = vor.u32 %v1731, %v1729
        %v1733 = vrot.slane %v1732, 4
        %v1734 = vrot.slane %v1436, 4
        %v1735 = vrot.slane %v1439, 5
        %v1736 = vor.u32 %v1734, %v1735
        %v1737 = vrot.slane %v1736, 4
        %v1738 = vrot.slane %v1447, 5
        %v1739 = vsel %vm1616, %v1737, %v1738
        %v1740 = vrot.slane %v1444, 4
        %v1741 = vor.u32 %v1740, %v1738
        %v1742 = vrot.slane %v1741, 4
        %v1743 = vrot.slane %v1452, 4
        %v1744 = vrot.slane %v1455, 5
        %v1745 = vor.u32 %v1743, %v1744
        %v1746 = vrot.slane %v1745, 4
        %v1747 = vrot.slane %v1463, 5
        %v1748 = vsel %vm1616, %v1746, %v1747
        %v1749 = vrot.slane %v1460, 4
        %v1750 = vor.u32 %v1749, %v1747
        %v1751 = vrot.slane %v1750, 4
        %v1752 = vrot.slane %v1468, 4
        %v1753 = vrot.slane %v1471, 5
        %v1754 = vor.u32 %v1752, %v1753
        %v1755 = vrot.slane %v1754, 4
        %v1756 = vrot.slane %v1479, 5
        %v1757 = vsel %vm1616, %v1755, %v1756
        %v1758 = vrot.slane %v1476, 4
        %v1759 = vor.u32 %v1758, %v1756
        %v1760 = vrot.slane %v1759, 4
        %1793 = vst [vmem:[%s372 + $0x10] sm:$0xf] %v1622
        %vm1794 = vmand %vm1515, %vm1614
        %v1795 = vld [vmem:[%s372 + $0x28] sm:$0xf]
        %v1796 = vsel %vm1794, %v1625, %v1795
        %1797 = vst [vmem:[%s372 + $0x28] sm:$0xf] %v1796
        %1798 = vst [vmem:[%s372 + $0x40] sm:$0xf] %v1631
        %v1799 = vld [vmem:[%s372 + $0x58] sm:$0xf]
        %v1800 = vsel %vm1794, %v1634, %v1799
        %1801 = vst [vmem:[%s372 + $0x58] sm:$0xf] %v1800
        %1802 = vst [vmem:[%s372 + $0x70] sm:$0xf] %v1640
        %v1803 = vld [vmem:[%s372 + $0x88] sm:$0xf]
        %v1804 = vsel %vm1794, %v1643, %v1803
        %1805 = vst [vmem:[%s372 + $0x88] sm:$0xf] %v1804
        %1806 = vst [vmem:[%s372 + $0xa0] sm:$0xf] %v1649
        %v1807 = vld [vmem:[%s372 + $0xb8] sm:$0xf]
        %v1808 = vsel %vm1794, %v1652, %v1807
        %1809 = vst [vmem:[%s372 + $0xb8] sm:$0xf] %v1808
        %1810 = vst [vmem:[%s372 + $0xd0] sm:$0xf] %v1658
        %v1811 = vld [vmem:[%s372 + $0xe8] sm:$0xf]
        %v1812 = vsel %vm1794, %v1661, %v1811
        %1813 = vst [vmem:[%s372 + $0xe8] sm:$0xf] %v1812
        %1814 = vst [vmem:[%s372 + $0x100] sm:$0xf] %v1667
        %v1815 = vld [vmem:[%s372 + $0x118] sm:$0xf]
        %v1816 = vsel %vm1794, %v1670, %v1815
        %1817 = vst [vmem:[%s372 + $0x118] sm:$0xf] %v1816
        %1818 = vst [vmem:[%s372 + $0x130] sm:$0xf] %v1676
        %v1819 = vld [vmem:[%s372 + $0x148] sm:$0xf]
        %v1820 = vsel %vm1794, %v1679, %v1819
        %1821 = vst [vmem:[%s372 + $0x148] sm:$0xf] %v1820
        %1822 = vst [vmem:[%s372 + $0x160] sm:$0xf] %v1685
        %v1823 = vld [vmem:[%s372 + $0x178] sm:$0xf]
        %v1824 = vsel %vm1794, %v1688, %v1823
        %1825 = vst [vmem:[%s372 + $0x178] sm:$0xf] %v1824
        %1826 = vst [vmem:[%s372 + $0x190] sm:$0xf] %v1694
        %v1827 = vld [vmem:[%s372 + $0x1a8] sm:$0xf]
        %v1828 = vsel %vm1794, %v1697, %v1827
        %1829 = vst [vmem:[%s372 + $0x1a8] sm:$0xf] %v1828
        %1830 = vst [vmem:[%s372 + $0x1c0] sm:$0xf] %v1703
        %v1831 = vld [vmem:[%s372 + $0x1d8] sm:$0xf]
        %v1832 = vsel %vm1794, %v1706, %v1831
        %1833 = vst [vmem:[%s372 + $0x1d8] sm:$0xf] %v1832
        %1834 = vst [vmem:[%s372 + $0x1f0] sm:$0xf] %v1712
        %v1835 = vld [vmem:[%s372 + $0x208] sm:$0xf]
        %v1836 = vsel %vm1794, %v1715, %v1835
        %1837 = vst [vmem:[%s372 + $0x208] sm:$0xf] %v1836
        %1838 = vst [vmem:[%s372 + $0x220] sm:$0xf] %v1721
        %v1839 = vld [vmem:[%s372 + $0x238] sm:$0xf]
        %v1840 = vsel %vm1794, %v1724, %v1839
        %1841 = vst [vmem:[%s372 + $0x238] sm:$0xf] %v1840
        %1842 = vst [vmem:[%s372 + $0x250] sm:$0xf] %v1730
        %v1843 = vld [vmem:[%s372 + $0x268] sm:$0xf]
        %v1844 = vsel %vm1794, %v1733, %v1843
        %1845 = vst [vmem:[%s372 + $0x268] sm:$0xf] %v1844
        %1846 = vst [vmem:[%s372 + $0x280] sm:$0xf] %v1739
        %v1847 = vld [vmem:[%s372 + $0x298] sm:$0xf]
        %v1848 = vsel %vm1794, %v1742, %v1847
        %1849 = vst [vmem:[%s372 + $0x298] sm:$0xf] %v1848
        %1850 = vst [vmem:[%s372 + $0x2b0] sm:$0xf] %v1748
        %v1851 = vld [vmem:[%s372 + $0x2c8] sm:$0xf]
        %v1852 = vsel %vm1794, %v1751, %v1851
        %1853 = vst [vmem:[%s372 + $0x2c8] sm:$0xf] %v1852
        %1854 = vst [vmem:[%s372 + $0x2e0] sm:$0xf] %v1757
        %v1855 = vld [vmem:[%s372 + $0x2f8] sm:$0xf]
        %v1856 = vsel %vm1794, %v1760, %v1855
        %1857 = vst [vmem:[%s372 + $0x2f8] sm:$0xf] %v1856
        %s1858 = scalar_lea.vmem %s357, 12
        %v1859 = vld [vmem:[%s1858] sm:$0xf]
        %v1860 = vld [vmem:[%s1858 + $0x4] sm:$0xf]
        %v1861 = vld [vmem:[%s1858 + $0x8] sm:$0x1]
        %v1862 = vld [vmem:[%s1858 + $0xc] sm:$0xf]
        %v1863 = vld [vmem:[%s1858 + $0x10] sm:$0xf]
        %v1864 = vld [vmem:[%s1858 + $0x14] sm:$0x1]
        %v1865 = vld [vmem:[%s1858 + $0x18] sm:$0xf]
        %v1866 = vld [vmem:[%s1858 + $0x1c] sm:$0xf]
        %v1867 = vld [vmem:[%s1858 + $0x20] sm:$0x1]
        %v1868 = vld [vmem:[%s1858 + $0x24] sm:$0xf]
        %v1869 = vld [vmem:[%s1858 + $0x28] sm:$0xf]
        %v1870 = vld [vmem:[%s1858 + $0x2c] sm:$0x1]
        %v1871 = vld [vmem:[%s1858 + $0x30] sm:$0xf]
        %v1872 = vld [vmem:[%s1858 + $0x34] sm:$0xf]
        %v1873 = vld [vmem:[%s1858 + $0x38] sm:$0x1]
        %v1874 = vld [vmem:[%s1858 + $0x3c] sm:$0xf]
        %v1875 = vld [vmem:[%s1858 + $0x40] sm:$0xf]
        %v1876 = vld [vmem:[%s1858 + $0x44] sm:$0x1]
        %v1877 = vld [vmem:[%s1858 + $0x48] sm:$0xf]
        %v1878 = vld [vmem:[%s1858 + $0x4c] sm:$0xf]
        %v1879 = vld [vmem:[%s1858 + $0x50] sm:$0x1]
        %v1880 = vld [vmem:[%s1858 + $0x54] sm:$0xf]
        %v1881 = vld [vmem:[%s1858 + $0x58] sm:$0xf]
        %v1882 = vld [vmem:[%s1858 + $0x5c] sm:$0x1]
        %v1883 = vld [vmem:[%s1858 + $0x60] sm:$0xf]
        %v1884 = vld [vmem:[%s1858 + $0x64] sm:$0xf]
        %v1885 = vld [vmem:[%s1858 + $0x68] sm:$0x1]
        %v1886 = vld [vmem:[%s1858 + $0x6c] sm:$0xf]
        %v1887 = vld [vmem:[%s1858 + $0x70] sm:$0xf]
        %v1888 = vld [vmem:[%s1858 + $0x74] sm:$0x1]
        %v1889 = vld [vmem:[%s1858 + $0x78] sm:$0xf]
        %v1890 = vld [vmem:[%s1858 + $0x7c] sm:$0xf]
        %v1891 = vld [vmem:[%s1858 + $0x80] sm:$0x1]
        %v1892 = vld [vmem:[%s1858 + $0x84] sm:$0xf]
        %v1893 = vld [vmem:[%s1858 + $0x88] sm:$0xf]
        %v1894 = vld [vmem:[%s1858 + $0x8c] sm:$0x1]
        %v1895 = vld [vmem:[%s1858 + $0x90] sm:$0xf]
        %v1896 = vld [vmem:[%s1858 + $0x94] sm:$0xf]
        %v1897 = vld [vmem:[%s1858 + $0x98] sm:$0x1]
        %v1898 = vld [vmem:[%s1858 + $0x9c] sm:$0xf]
        %v1899 = vld [vmem:[%s1858 + $0xa0] sm:$0xf]
        %v1900 = vld [vmem:[%s1858 + $0xa4] sm:$0x1]
        %v1901 = vld [vmem:[%s1858 + $0xa8] sm:$0xf]
        %v1902 = vld [vmem:[%s1858 + $0xac] sm:$0xf]
        %v1903 = vld [vmem:[%s1858 + $0xb0] sm:$0x1]
        %v1904 = vld [vmem:[%s1858 + $0xb4] sm:$0xf]
        %v1905 = vld [vmem:[%s1858 + $0xb8] sm:$0xf]
        %v1906 = vld [vmem:[%s1858 + $0xbc] sm:$0x1]
        %v1907 = vld [vmem:[%s372 + $0x4] sm:$0xf]
        %v1908 = vsel %vm1517, %v1859, %v1907
        %1909 = vst [vmem:[%s372 + $0x4] sm:$0xf] %v1908
        %1910 = vst [vmem:[%s372 + $0x1c] sm:$0xf] %v1860
        %v1911 = vld [vmem:[%s372 + $0x34] sm:$0xf]
        %v1912 = vsel %vm1517, %v1862, %v1911
        %1913 = vst [vmem:[%s372 + $0x34] sm:$0xf] %v1912
        %1914 = vst [vmem:[%s372 + $0x4c] sm:$0xf] %v1863
        %v1915 = vld [vmem:[%s372 + $0x64] sm:$0xf]
        %v1916 = vsel %vm1517, %v1865, %v1915
        %1917 = vst [vmem:[%s372 + $0x64] sm:$0xf] %v1916
        %1918 = vst [vmem:[%s372 + $0x7c] sm:$0xf] %v1866
        %v1919 = vld [vmem:[%s372 + $0x94] sm:$0xf]
        %v1920 = vsel %vm1517, %v1868, %v1919
        %1921 = vst [vmem:[%s372 + $0x94] sm:$0xf] %v1920
        %1922 = vst [vmem:[%s372 + $0xac] sm:$0xf] %v1869
        %v1923 = vld [vmem:[%s372 + $0xc4] sm:$0xf]
        %v1924 = vsel %vm1517, %v1871, %v1923
        %1925 = vst [vmem:[%s372 + $0xc4] sm:$0xf] %v1924
        %1926 = vst [vmem:[%s372 + $0xdc] sm:$0xf] %v1872
        %v1927 = vld [vmem:[%s372 + $0xf4] sm:$0xf]
        %v1928 = vsel %vm1517, %v1874, %v1927
        %1929 = vst [vmem:[%s372 + $0xf4] sm:$0xf] %v1928
        %1930 = vst [vmem:[%s372 + $0x10c] sm:$0xf] %v1875
        %v1931 = vld [vmem:[%s372 + $0x124] sm:$0xf]
        %v1932 = vsel %vm1517, %v1877, %v1931
        %1933 = vst [vmem:[%s372 + $0x124] sm:$0xf] %v1932
        %1934 = vst [vmem:[%s372 + $0x13c] sm:$0xf] %v1878
        %v1935 = vld [vmem:[%s372 + $0x154] sm:$0xf]
        %v1936 = vsel %vm1517, %v1880, %v1935
        %1937 = vst [vmem:[%s372 + $0x154] sm:$0xf] %v1936
        %1938 = vst [vmem:[%s372 + $0x16c] sm:$0xf] %v1881
        %v1939 = vld [vmem:[%s372 + $0x184] sm:$0xf]
        %v1940 = vsel %vm1517, %v1883, %v1939
        %1941 = vst [vmem:[%s372 + $0x184] sm:$0xf] %v1940
        %1942 = vst [vmem:[%s372 + $0x19c] sm:$0xf] %v1884
        %v1943 = vld [vmem:[%s372 + $0x1b4] sm:$0xf]
        %v1944 = vsel %vm1517, %v1886, %v1943
        %1945 = vst [vmem:[%s372 + $0x1b4] sm:$0xf] %v1944
        %1946 = vst [vmem:[%s372 + $0x1cc] sm:$0xf] %v1887
        %v1947 = vld [vmem:[%s372 + $0x1e4] sm:$0xf]
        %v1948 = vsel %vm1517, %v1889, %v1947
        %1949 = vst [vmem:[%s372 + $0x1e4] sm:$0xf] %v1948
        %1950 = vst [vmem:[%s372 + $0x1fc] sm:$0xf] %v1890
        %v1951 = vld [vmem:[%s372 + $0x214] sm:$0xf]
        %v1952 = vsel %vm1517, %v1892, %v1951
        %1953 = vst [vmem:[%s372 + $0x214] sm:$0xf] %v1952
        %1954 = vst [vmem:[%s372 + $0x22c] sm:$0xf] %v1893
        %v1955 = vld [vmem:[%s372 + $0x244] sm:$0xf]
        %v1956 = vsel %vm1517, %v1895, %v1955
        %1957 = vst [vmem:[%s372 + $0x244] sm:$0xf] %v1956
        %1958 = vst [vmem:[%s372 + $0x25c] sm:$0xf] %v1896
        %v1959 = vld [vmem:[%s372 + $0x274] sm:$0xf]
        %v1960 = vsel %vm1517, %v1898, %v1959
        %1961 = vst [vmem:[%s372 + $0x274] sm:$0xf] %v1960
        %1962 = vst [vmem:[%s372 + $0x28c] sm:$0xf] %v1899
        %v1963 = vld [vmem:[%s372 + $0x2a4] sm:$0xf]
        %v1964 = vsel %vm1517, %v1901, %v1963
        %1965 = vst [vmem:[%s372 + $0x2a4] sm:$0xf] %v1964
        %1966 = vst [vmem:[%s372 + $0x2bc] sm:$0xf] %v1902
        %v1967 = vld [vmem:[%s372 + $0x2d4] sm:$0xf]
        %v1968 = vsel %vm1517, %v1904, %v1967
        %1969 = vst [vmem:[%s372 + $0x2d4] sm:$0xf] %v1968
        %1970 = vst [vmem:[%s372 + $0x2ec] sm:$0xf] %v1905
        %v1972 = vshrl.u32 %v1859, 16
        %v1974 = vrot.slane %v1972, 4
        %v1975 = vshll.u32 %v1859, 16
        %v1977 = vrot.slane %v1975, 5
        %v1978 = vor.u32 %v1974, %v1977
        %v1979 = vrot.slane %v1978, 4
        %v1981 = vshll.u32 %v1860, 16
        %v1983 = vrot.slane %v1981, 5
        %v1984 = vsel %vm1616, %v1979, %v1983
        %v1985 = vshrl.u32 %v1860, 16
        %v1987 = vrot.slane %v1985, 4
        %v1988 = vor.u32 %v1987, %v1983
        %v1989 = vrot.slane %v1988, 4
        %v1991 = vshll.u32 %v1861, 16
        %v1993 = vrot.slane %v1991, 5
        %v1994 = vsel %vm1616, %v1989, %v1993
        %v1996 = vshrl.u32 %v1862, 16
        %v1998 = vrot.slane %v1996, 4
        %v1999 = vshll.u32 %v1862, 16
        %v2001 = vrot.slane %v1999, 5
        %v2002 = vor.u32 %v1998, %v2001
        %v2003 = vrot.slane %v2002, 4
        %v2005 = vshll.u32 %v1863, 16
        %v2007 = vrot.slane %v2005, 5
        %v2008 = vsel %vm1616, %v2003, %v2007
        %v2009 = vshrl.u32 %v1863, 16
        %v2011 = vrot.slane %v2009, 4
        %v2012 = vor.u32 %v2011, %v2007
        %v2013 = vrot.slane %v2012, 4
        %v2015 = vshll.u32 %v1864, 16
        %v2017 = vrot.slane %v2015, 5
        %v2018 = vsel %vm1616, %v2013, %v2017
        %v2020 = vshrl.u32 %v1865, 16
        %v2022 = vrot.slane %v2020, 4
        %v2023 = vshll.u32 %v1865, 16
        %v2025 = vrot.slane %v2023, 5
        %v2026 = vor.u32 %v2022, %v2025
        %v2027 = vrot.slane %v2026, 4
        %v2029 = vshll.u32 %v1866, 16
        %v2031 = vrot.slane %v2029, 5
        %v2032 = vsel %vm1616, %v2027, %v2031
        %v2033 = vshrl.u32 %v1866, 16
        %v2035 = vrot.slane %v2033, 4
        %v2036 = vor.u32 %v2035, %v2031
        %v2037 = vrot.slane %v2036, 4
        %v2039 = vshll.u32 %v1867, 16
        %v2041 = vrot.slane %v2039, 5
        %v2042 = vsel %vm1616, %v2037, %v2041
        %v2044 = vshrl.u32 %v1868, 16
        %v2046 = vrot.slane %v2044, 4
        %v2047 = vshll.u32 %v1868, 16
        %v2049 = vrot.slane %v2047, 5
        %v2050 = vor.u32 %v2046, %v2049
        %v2051 = vrot.slane %v2050, 4
        %v2053 = vshll.u32 %v1869, 16
        %v2055 = vrot.slane %v2053, 5
        %v2056 = vsel %vm1616, %v2051, %v2055
        %v2057 = vshrl.u32 %v1869, 16
        %v2059 = vrot.slane %v2057, 4
        %v2060 = vor.u32 %v2059, %v2055
        %v2061 = vrot.slane %v2060, 4
        %v2063 = vshll.u32 %v1870, 16
        %v2065 = vrot.slane %v2063, 5
        %v2066 = vsel %vm1616, %v2061, %v2065
        %v2068 = vshrl.u32 %v1871, 16
        %v2070 = vrot.slane %v2068, 4
        %v2071 = vshll.u32 %v1871, 16
        %v2073 = vrot.slane %v2071, 5
        %v2074 = vor.u32 %v2070, %v2073
        %v2075 = vrot.slane %v2074, 4
        %v2077 = vshll.u32 %v1872, 16
        %v2079 = vrot.slane %v2077, 5
        %v2080 = vsel %vm1616, %v2075, %v2079
        %v2081 = vshrl.u32 %v1872, 16
        %v2083 = vrot.slane %v2081, 4
        %v2084 = vor.u32 %v2083, %v2079
        %v2085 = vrot.slane %v2084, 4
        %v2087 = vshll.u32 %v1873, 16
        %v2089 = vrot.slane %v2087, 5
        %v2090 = vsel %vm1616, %v2085, %v2089
        %v2092 = vshrl.u32 %v1874, 16
        %v2094 = vrot.slane %v2092, 4
        %v2095 = vshll.u32 %v1874, 16
        %v2097 = vrot.slane %v2095, 5
        %v2098 = vor.u32 %v2094, %v2097
        %v2099 = vrot.slane %v2098, 4
        %v2101 = vshll.u32 %v1875, 16
        %v2103 = vrot.slane %v2101, 5
        %v2104 = vsel %vm1616, %v2099, %v2103
        %v2105 = vshrl.u32 %v1875, 16
        %v2107 = vrot.slane %v2105, 4
        %v2108 = vor.u32 %v2107, %v2103
        %v2109 = vrot.slane %v2108, 4
        %v2111 = vshll.u32 %v1876, 16
        %v2113 = vrot.slane %v2111, 5
        %v2114 = vsel %vm1616, %v2109, %v2113
        %v2116 = vshrl.u32 %v1877, 16
        %v2118 = vrot.slane %v2116, 4
        %v2119 = vshll.u32 %v1877, 16
        %v2121 = vrot.slane %v2119, 5
        %v2122 = vor.u32 %v2118, %v2121
        %v2123 = vrot.slane %v2122, 4
        %v2125 = vshll.u32 %v1878, 16
        %v2127 = vrot.slane %v2125, 5
        %v2128 = vsel %vm1616, %v2123, %v2127
        %v2129 = vshrl.u32 %v1878, 16
        %v2131 = vrot.slane %v2129, 4
        %v2132 = vor.u32 %v2131, %v2127
        %v2133 = vrot.slane %v2132, 4
        %v2135 = vshll.u32 %v1879, 16
        %v2137 = vrot.slane %v2135, 5
        %v2138 = vsel %vm1616, %v2133, %v2137
        %v2140 = vshrl.u32 %v1880, 16
        %v2142 = vrot.slane %v2140, 4
        %v2143 = vshll.u32 %v1880, 16
        %v2145 = vrot.slane %v2143, 5
        %v2146 = vor.u32 %v2142, %v2145
        %v2147 = vrot.slane %v2146, 4
        %v2149 = vshll.u32 %v1881, 16
        %v2151 = vrot.slane %v2149, 5
        %v2152 = vsel %vm1616, %v2147, %v2151
        %v2153 = vshrl.u32 %v1881, 16
        %v2155 = vrot.slane %v2153, 4
        %v2156 = vor.u32 %v2155, %v2151
        %v2157 = vrot.slane %v2156, 4
        %v2159 = vshll.u32 %v1882, 16
        %v2161 = vrot.slane %v2159, 5
        %v2162 = vsel %vm1616, %v2157, %v2161
        %v2164 = vshrl.u32 %v1883, 16
        %v2166 = vrot.slane %v2164, 4
        %v2167 = vshll.u32 %v1883, 16
        %v2169 = vrot.slane %v2167, 5
        %v2170 = vor.u32 %v2166, %v2169
        %v2171 = vrot.slane %v2170, 4
        %v2173 = vshll.u32 %v1884, 16
        %v2175 = vrot.slane %v2173, 5
        %v2176 = vsel %vm1616, %v2171, %v2175
        %v2177 = vshrl.u32 %v1884, 16
        %v2179 = vrot.slane %v2177, 4
        %v2180 = vor.u32 %v2179, %v2175
        %v2181 = vrot.slane %v2180, 4
        %v2183 = vshll.u32 %v1885, 16
        %v2185 = vrot.slane %v2183, 5
        %v2186 = vsel %vm1616, %v2181, %v2185
        %v2188 = vshrl.u32 %v1886, 16
        %v2190 = vrot.slane %v2188, 4
        %v2191 = vshll.u32 %v1886, 16
        %v2193 = vrot.slane %v2191, 5
        %v2194 = vor.u32 %v2190, %v2193
        %v2195 = vrot.slane %v2194, 4
        %v2197 = vshll.u32 %v1887, 16
        %v2199 = vrot.slane %v2197, 5
        %v2200 = vsel %vm1616, %v2195, %v2199
        %v2201 = vshrl.u32 %v1887, 16
        %v2203 = vrot.slane %v2201, 4
        %v2204 = vor.u32 %v2203, %v2199
        %v2205 = vrot.slane %v2204, 4
        %v2207 = vshll.u32 %v1888, 16
        %v2209 = vrot.slane %v2207, 5
        %v2210 = vsel %vm1616, %v2205, %v2209
        %v2212 = vshrl.u32 %v1889, 16
        %v2214 = vrot.slane %v2212, 4
        %v2215 = vshll.u32 %v1889, 16
        %v2217 = vrot.slane %v2215, 5
        %v2218 = vor.u32 %v2214, %v2217
        %v2219 = vrot.slane %v2218, 4
        %v2221 = vshll.u32 %v1890, 16
        %v2223 = vrot.slane %v2221, 5
        %v2224 = vsel %vm1616, %v2219, %v2223
        %v2225 = vshrl.u32 %v1890, 16
        %v2227 = vrot.slane %v2225, 4
        %v2228 = vor.u32 %v2227, %v2223
        %v2229 = vrot.slane %v2228, 4
        %v2231 = vshll.u32 %v1891, 16
        %v2233 = vrot.slane %v2231, 5
        %v2234 = vsel %vm1616, %v2229, %v2233
        %v2236 = vshrl.u32 %v1892, 16
        %v2238 = vrot.slane %v2236, 4
        %v2239 = vshll.u32 %v1892, 16
        %v2241 = vrot.slane %v2239, 5
        %v2242 = vor.u32 %v2238, %v2241
        %v2243 = vrot.slane %v2242, 4
        %v2245 = vshll.u32 %v1893, 16
        %v2247 = vrot.slane %v2245, 5
        %v2248 = vsel %vm1616, %v2243, %v2247
        %v2249 = vshrl.u32 %v1893, 16
        %v2251 = vrot.slane %v2249, 4
        %v2252 = vor.u32 %v2251, %v2247
        %v2253 = vrot.slane %v2252, 4
        %v2255 = vshll.u32 %v1894, 16
        %v2257 = vrot.slane %v2255, 5
        %v2258 = vsel %vm1616, %v2253, %v2257
        %v2260 = vshrl.u32 %v1895, 16
        %v2262 = vrot.slane %v2260, 4
        %v2263 = vshll.u32 %v1895, 16
        %v2265 = vrot.slane %v2263, 5
        %v2266 = vor.u32 %v2262, %v2265
        %v2267 = vrot.slane %v2266, 4
        %v2269 = vshll.u32 %v1896, 16
        %v2271 = vrot.slane %v2269, 5
        %v2272 = vsel %vm1616, %v2267, %v2271
        %v2273 = vshrl.u32 %v1896, 16
        %v2275 = vrot.slane %v2273, 4
        %v2276 = vor.u32 %v2275, %v2271
        %v2277 = vrot.slane %v2276, 4
        %v2279 = vshll.u32 %v1897, 16
        %v2281 = vrot.slane %v2279, 5
        %v2282 = vsel %vm1616, %v2277, %v2281
        %v2284 = vshrl.u32 %v1898, 16
        %v2286 = vrot.slane %v2284, 4
        %v2287 = vshll.u32 %v1898, 16
        %v2289 = vrot.slane %v2287, 5
        %v2290 = vor.u32 %v2286, %v2289
        %v2291 = vrot.slane %v2290, 4
        %v2293 = vshll.u32 %v1899, 16
        %v2295 = vrot.slane %v2293, 5
        %v2296 = vsel %vm1616, %v2291, %v2295
        %v2297 = vshrl.u32 %v1899, 16
        %v2299 = vrot.slane %v2297, 4
        %v2300 = vor.u32 %v2299, %v2295
        %v2301 = vrot.slane %v2300, 4
        %v2303 = vshll.u32 %v1900, 16
        %v2305 = vrot.slane %v2303, 5
        %v2306 = vsel %vm1616, %v2301, %v2305
        %v2308 = vshrl.u32 %v1901, 16
        %v2310 = vrot.slane %v2308, 4
        %v2311 = vshll.u32 %v1901, 16
        %v2313 = vrot.slane %v2311, 5
        %v2314 = vor.u32 %v2310, %v2313
        %v2315 = vrot.slane %v2314, 4
        %v2317 = vshll.u32 %v1902, 16
        %v2319 = vrot.slane %v2317, 5
        %v2320 = vsel %vm1616, %v2315, %v2319
        %v2321 = vshrl.u32 %v1902, 16
        %v2323 = vrot.slane %v2321, 4
        %v2324 = vor.u32 %v2323, %v2319
        %v2325 = vrot.slane %v2324, 4
        %v2327 = vshll.u32 %v1903, 16
        %v2329 = vrot.slane %v2327, 5
        %v2330 = vsel %vm1616, %v2325, %v2329
        %v2332 = vshrl.u32 %v1904, 16
        %v2334 = vrot.slane %v2332, 4
        %v2335 = vshll.u32 %v1904, 16
        %v2337 = vrot.slane %v2335, 5
        %v2338 = vor.u32 %v2334, %v2337
        %v2339 = vrot.slane %v2338, 4
        %v2341 = vshll.u32 %v1905, 16
        %v2343 = vrot.slane %v2341, 5
        %v2344 = vsel %vm1616, %v2339, %v2343
        %v2345 = vshrl.u32 %v1905, 16
        %v2347 = vrot.slane %v2345, 4
        %v2348 = vor.u32 %v2347, %v2343
        %v2349 = vrot.slane %v2348, 4
        %v2351 = vshll.u32 %v1906, 16
        %v2353 = vrot.slane %v2351, 5
        %v2354 = vsel %vm1616, %v2349, %v2353
        %2387 = vst [vmem:[%s372 + $0xc] sm:$0xf] %v1984
        %2388 = vst [vmem:[%s372 + $0x24] sm:$0xf] %v1994
        %2389 = vst [vmem:[%s372 + $0x3c] sm:$0xf] %v2008
        %2390 = vst [vmem:[%s372 + $0x54] sm:$0xf] %v2018
        %2391 = vst [vmem:[%s372 + $0x6c] sm:$0xf] %v2032
        %2392 = vst [vmem:[%s372 + $0x84] sm:$0xf] %v2042
        %2393 = vst [vmem:[%s372 + $0x9c] sm:$0xf] %v2056
        %2394 = vst [vmem:[%s372 + $0xb4] sm:$0xf] %v2066
        %2395 = vst [vmem:[%s372 + $0xcc] sm:$0xf] %v2080
        %2396 = vst [vmem:[%s372 + $0xe4] sm:$0xf] %v2090
        %2397 = vst [vmem:[%s372 + $0xfc] sm:$0xf] %v2104
        %2398 = vst [vmem:[%s372 + $0x114] sm:$0xf] %v2114
        %2399 = vst [vmem:[%s372 + $0x12c] sm:$0xf] %v2128
        %2400 = vst [vmem:[%s372 + $0x144] sm:$0xf] %v2138
        %2401 = vst [vmem:[%s372 + $0x15c] sm:$0xf] %v2152
        %2402 = vst [vmem:[%s372 + $0x174] sm:$0xf] %v2162
        %2403 = vst [vmem:[%s372 + $0x18c] sm:$0xf] %v2176
        %2404 = vst [vmem:[%s372 + $0x1a4] sm:$0xf] %v2186
        %2405 = vst [vmem:[%s372 + $0x1bc] sm:$0xf] %v2200
        %2406 = vst [vmem:[%s372 + $0x1d4] sm:$0xf] %v2210
        %2407 = vst [vmem:[%s372 + $0x1ec] sm:$0xf] %v2224
        %2408 = vst [vmem:[%s372 + $0x204] sm:$0xf] %v2234
        %2409 = vst [vmem:[%s372 + $0x21c] sm:$0xf] %v2248
        %2410 = vst [vmem:[%s372 + $0x234] sm:$0xf] %v2258
        %2411 = vst [vmem:[%s372 + $0x24c] sm:$0xf] %v2272
        %2412 = vst [vmem:[%s372 + $0x264] sm:$0xf] %v2282
        %2413 = vst [vmem:[%s372 + $0x27c] sm:$0xf] %v2296
        %2414 = vst [vmem:[%s372 + $0x294] sm:$0xf] %v2306
        %2415 = vst [vmem:[%s372 + $0x2ac] sm:$0xf] %v2320
        %2416 = vst [vmem:[%s372 + $0x2c4] sm:$0xf] %v2330
        %2417 = vst [vmem:[%s372 + $0x2dc] sm:$0xf] %v2344
        %2418 = vst [vmem:[%s372 + $0x2f4] sm:$0xf] %v2354
        %vm2467 = vcmask 1042432
        %vm2468 = vcmask 1046532
        %vm2469 = vmor %vm2467, %vm2468
        %v2470 = vrot.slane %v1859, 5
        %v2471 = vrot.slane %v2470, 4
        %v2472 = vrot.slane %v1860, 5
        %v2473 = vsel %vm2469, %v2471, %v2472
        %v2474 = vrot.slane %v2472, 4
        %v2475 = vrot.slane %v1861, 5
        %v2476 = vsel %vm2469, %v2474, %v2475
        %v2477 = vrot.slane %v1862, 5
        %v2478 = vrot.slane %v2477, 4
        %v2479 = vrot.slane %v1863, 5
        %v2480 = vsel %vm2469, %v2478, %v2479
        %v2481 = vrot.slane %v2479, 4
        %v2482 = vrot.slane %v1864, 5
        %v2483 = vsel %vm2469, %v2481, %v2482
        %v2484 = vrot.slane %v1865, 5
        %v2485 = vrot.slane %v2484, 4
        %v2486 = vrot.slane %v1866, 5
        %v2487 = vsel %vm2469, %v2485, %v2486
        %v2488 = vrot.slane %v2486, 4
        %v2489 = vrot.slane %v1867, 5
        %v2490 = vsel %vm2469, %v2488, %v2489
        %v2491 = vrot.slane %v1868, 5
        %v2492 = vrot.slane %v2491, 4
        %v2493 = vrot.slane %v1869, 5
        %v2494 = vsel %vm2469, %v2492, %v2493
        %v2495 = vrot.slane %v2493, 4
        %v2496 = vrot.slane %v1870, 5
        %v2497 = vsel %vm2469, %v2495, %v2496
        %v2498 = vrot.slane %v1871, 5
        %v2499 = vrot.slane %v2498, 4
        %v2500 = vrot.slane %v1872, 5
        %v2501 = vsel %vm2469, %v2499, %v2500
        %v2502 = vrot.slane %v2500, 4
        %v2503 = vrot.slane %v1873, 5
        %v2504 = vsel %vm2469, %v2502, %v2503
        %v2505 = vrot.slane %v1874, 5
        %v2506 = vrot.slane %v2505, 4
        %v2507 = vrot.slane %v1875, 5
        %v2508 = vsel %vm2469, %v2506, %v2507
        %v2509 = vrot.slane %v2507, 4
        %v2510 = vrot.slane %v1876, 5
        %v2511 = vsel %vm2469, %v2509, %v2510
        %v2512 = vrot.slane %v1877, 5
        %v2513 = vrot.slane %v2512, 4
        %v2514 = vrot.slane %v1878, 5
        %v2515 = vsel %vm2469, %v2513, %v2514
        %v2516 = vrot.slane %v2514, 4
        %v2517 = vrot.slane %v1879, 5
        %v2518 = vsel %vm2469, %v2516, %v2517
        %v2519 = vrot.slane %v1880, 5
        %v2520 = vrot.slane %v2519, 4
        %v2521 = vrot.slane %v1881, 5
        %v2522 = vsel %vm2469, %v2520, %v2521
        %v2523 = vrot.slane %v2521, 4
        %v2524 = vrot.slane %v1882, 5
        %v2525 = vsel %vm2469, %v2523, %v2524
        %v2526 = vrot.slane %v1883, 5
        %v2527 = vrot.slane %v2526, 4
        %v2528 = vrot.slane %v1884, 5
        %v2529 = vsel %vm2469, %v2527, %v2528
        %v2530 = vrot.slane %v2528, 4
        %v2531 = vrot.slane %v1885, 5
        %v2532 = vsel %vm2469, %v2530, %v2531
        %v2533 = vrot.slane %v1886, 5
        %v2534 = vrot.slane %v2533, 4
        %v2535 = vrot.slane %v1887, 5
        %v2536 = vsel %vm2469, %v2534, %v2535
        %v2537 = vrot.slane %v2535, 4
        %v2538 = vrot.slane %v1888, 5
        %v2539 = vsel %vm2469, %v2537, %v2538
        %v2540 = vrot.slane %v1889, 5
        %v2541 = vrot.slane %v2540, 4
        %v2542 = vrot.slane %v1890, 5
        %v2543 = vsel %vm2469, %v2541, %v2542
        %v2544 = vrot.slane %v2542, 4
        %v2545 = vrot.slane %v1891, 5
        %v2546 = vsel %vm2469, %v2544, %v2545
        %v2547 = vrot.slane %v1892, 5
        %v2548 = vrot.slane %v2547, 4
        %v2549 = vrot.slane %v1893, 5
        %v2550 = vsel %vm2469, %v2548, %v2549
        %v2551 = vrot.slane %v2549, 4
        %v2552 = vrot.slane %v1894, 5
        %v2553 = vsel %vm2469, %v2551, %v2552
        %v2554 = vrot.slane %v1895, 5
        %v2555 = vrot.slane %v2554, 4
        %v2556 = vrot.slane %v1896, 5
        %v2557 = vsel %vm2469, %v2555, %v2556
        %v2558 = vrot.slane %v2556, 4
        %v2559 = vrot.slane %v1897, 5
        %v2560 = vsel %vm2469, %v2558, %v2559
        %v2561 = vrot.slane %v1898, 5
        %v2562 = vrot.slane %v2561, 4
        %v2563 = vrot.slane %v1899, 5
        %v2564 = vsel %vm2469, %v2562, %v2563
        %v2565 = vrot.slane %v2563, 4
        %v2566 = vrot.slane %v1900, 5
        %v2567 = vsel %vm2469, %v2565, %v2566
        %v2568 = vrot.slane %v1901, 5
        %v2569 = vrot.slane %v2568, 4
        %v2570 = vrot.slane %v1902, 5
        %v2571 = vsel %vm2469, %v2569, %v2570
        %v2572 = vrot.slane %v2570, 4
        %v2573 = vrot.slane %v1903, 5
        %v2574 = vsel %vm2469, %v2572, %v2573
        %v2575 = vrot.slane %v1904, 5
        %v2576 = vrot.slane %v2575, 4
        %v2577 = vrot.slane %v1905, 5
        %v2578 = vsel %vm2469, %v2576, %v2577
        %v2579 = vrot.slane %v2577, 4
        %v2580 = vrot.slane %v1906, 5
        %v2581 = vsel %vm2469, %v2579, %v2580
        %2614 = vst [vmem:[%s372 + $0x14] sm:$0xf] %v2473
        %v2615 = vld [vmem:[%s372 + $0x2c] sm:$0xf]
        %v2616 = vsel %vm1794, %v2476, %v2615
        %2617 = vst [vmem:[%s372 + $0x2c] sm:$0xf] %v2616
        %2618 = vst [vmem:[%s372 + $0x44] sm:$0xf] %v2480
        %v2619 = vld [vmem:[%s372 + $0x5c] sm:$0xf]
        %v2620 = vsel %vm1794, %v2483, %v2619
        %2621 = vst [vmem:[%s372 + $0x5c] sm:$0xf] %v2620
        %2622 = vst [vmem:[%s372 + $0x74] sm:$0xf] %v2487
        %v2623 = vld [vmem:[%s372 + $0x8c] sm:$0xf]
        %v2624 = vsel %vm1794, %v2490, %v2623
        %2625 = vst [vmem:[%s372 + $0x8c] sm:$0xf] %v2624
        %2626 = vst [vmem:[%s372 + $0xa4] sm:$0xf] %v2494
        %v2627 = vld [vmem:[%s372 + $0xbc] sm:$0xf]
        %v2628 = vsel %vm1794, %v2497, %v2627
        %2629 = vst [vmem:[%s372 + $0xbc] sm:$0xf] %v2628
        %2630 = vst [vmem:[%s372 + $0xd4] sm:$0xf] %v2501
        %v2631 = vld [vmem:[%s372 + $0xec] sm:$0xf]
        %v2632 = vsel %vm1794, %v2504, %v2631
        %2633 = vst [vmem:[%s372 + $0xec] sm:$0xf] %v2632
        %2634 = vst [vmem:[%s372 + $0x104] sm:$0xf] %v2508
        %v2635 = vld [vmem:[%s372 + $0x11c] sm:$0xf]
        %v2636 = vsel %vm1794, %v2511, %v2635
        %2637 = vst [vmem:[%s372 + $0x11c] sm:$0xf] %v2636
        %2638 = vst [vmem:[%s372 + $0x134] sm:$0xf] %v2515
        %v2639 = vld [vmem:[%s372 + $0x14c] sm:$0xf]
        %v2640 = vsel %vm1794, %v2518, %v2639
        %2641 = vst [vmem:[%s372 + $0x14c] sm:$0xf] %v2640
        %2642 = vst [vmem:[%s372 + $0x164] sm:$0xf] %v2522
        %v2643 = vld [vmem:[%s372 + $0x17c] sm:$0xf]
        %v2644 = vsel %vm1794, %v2525, %v2643
        %2645 = vst [vmem:[%s372 + $0x17c] sm:$0xf] %v2644
        %2646 = vst [vmem:[%s372 + $0x194] sm:$0xf] %v2529
        %v2647 = vld [vmem:[%s372 + $0x1ac] sm:$0xf]
        %v2648 = vsel %vm1794, %v2532, %v2647
        %2649 = vst [vmem:[%s372 + $0x1ac] sm:$0xf] %v2648
        %2650 = vst [vmem:[%s372 + $0x1c4] sm:$0xf] %v2536
        %v2651 = vld [vmem:[%s372 + $0x1dc] sm:$0xf]
        %v2652 = vsel %vm1794, %v2539, %v2651
        %2653 = vst [vmem:[%s372 + $0x1dc] sm:$0xf] %v2652
        %2654 = vst [vmem:[%s372 + $0x1f4] sm:$0xf] %v2543
        %v2655 = vld [vmem:[%s372 + $0x20c] sm:$0xf]
        %v2656 = vsel %vm1794, %v2546, %v2655
        %2657 = vst [vmem:[%s372 + $0x20c] sm:$0xf] %v2656
        %2658 = vst [vmem:[%s372 + $0x224] sm:$0xf] %v2550
        %v2659 = vld [vmem:[%s372 + $0x23c] sm:$0xf]
        %v2660 = vsel %vm1794, %v2553, %v2659
        %2661 = vst [vmem:[%s372 + $0x23c] sm:$0xf] %v2660
        %2662 = vst [vmem:[%s372 + $0x254] sm:$0xf] %v2557
        %v2663 = vld [vmem:[%s372 + $0x26c] sm:$0xf]
        %v2664 = vsel %vm1794, %v2560, %v2663
        %2665 = vst [vmem:[%s372 + $0x26c] sm:$0xf] %v2664
        %2666 = vst [vmem:[%s372 + $0x284] sm:$0xf] %v2564
        %v2667 = vld [vmem:[%s372 + $0x29c] sm:$0xf]
        %v2668 = vsel %vm1794, %v2567, %v2667
        %2669 = vst [vmem:[%s372 + $0x29c] sm:$0xf] %v2668
        %2670 = vst [vmem:[%s372 + $0x2b4] sm:$0xf] %v2571
        %v2671 = vld [vmem:[%s372 + $0x2cc] sm:$0xf]
        %v2672 = vsel %vm1794, %v2574, %v2671
        %2673 = vst [vmem:[%s372 + $0x2cc] sm:$0xf] %v2672
        %2674 = vst [vmem:[%s372 + $0x2e4] sm:$0xf] %v2578
        %v2675 = vld [vmem:[%s372 + $0x2fc] sm:$0xf]
        %v2676 = vsel %vm1794, %v2581, %v2675
        %2677 = vst [vmem:[%s372 + $0x2fc] sm:$0xf] %v2676
        %v2678 = vld [vmem:[%s5] sm:$0x1]
        %v2679 = vld [vmem:[#allocation2] sm:$0xff]
        %v2680 = vld [vmem:[#allocation2 + $0x8] sm:$0xff]
        %v2681 = vld [vmem:[#allocation2 + $0x10] sm:$0xff]
        %v2682 = vld [vmem:[#allocation2 + $0x18] sm:$0xff]
        %v2683 = vld [vmem:[#allocation2 + $0x20] sm:$0xff]
        %v2684 = vld [vmem:[#allocation2 + $0x28] sm:$0xff]
        %v2685 = vld [vmem:[#allocation2 + $0x30] sm:$0xff]
        %v2686 = vld [vmem:[#allocation2 + $0x38] sm:$0xff]
        %v2687 = vld [vmem:[#allocation2 + $0x40] sm:$0xff]
        %v2688 = vld [vmem:[#allocation2 + $0x48] sm:$0xff]
        %v2689 = vld [vmem:[#allocation2 + $0x50] sm:$0xff]
        %v2690 = vld [vmem:[#allocation2 + $0x58] sm:$0xff]
        %v2691 = vld [vmem:[#allocation2 + $0x60] sm:$0xff]
        %v2692 = vld [vmem:[#allocation2 + $0x68] sm:$0xff]
        %v2693 = vld [vmem:[#allocation2 + $0x70] sm:$0xff]
        %v2694 = vld [vmem:[#allocation2 + $0x78] sm:$0xff]
        %v2695 = vld [vmem:[#allocation2 + $0x80] sm:$0xff]
        %v2696 = vld [vmem:[#allocation2 + $0x88] sm:$0xff]
        %v2697 = vld [vmem:[#allocation2 + $0x90] sm:$0xff]
        %v2698 = vld [vmem:[#allocation2 + $0x98] sm:$0xff]
        %v2699 = vld [vmem:[#allocation2 + $0xa0] sm:$0xff]
        %v2700 = vld [vmem:[#allocation2 + $0xa8] sm:$0xff]
        %v2701 = vld [vmem:[#allocation2 + $0xb0] sm:$0xff]
        %v2702 = vld [vmem:[#allocation2 + $0xb8] sm:$0xff]
        %v2703 = vld [vmem:[#allocation2 + $0xc0] sm:$0xff]
        %v2704 = vld [vmem:[#allocation2 + $0xc8] sm:$0xff]
        %v2705 = vld [vmem:[#allocation2 + $0xd0] sm:$0xff]
        %v2706 = vld [vmem:[#allocation2 + $0xd8] sm:$0xff]
        %v2707 = vld [vmem:[#allocation2 + $0xe0] sm:$0xff]
        %v2708 = vld [vmem:[#allocation2 + $0xe8] sm:$0xff]
        %v2709 = vld [vmem:[#allocation2 + $0xf0] sm:$0xff]
        %v2710 = vld [vmem:[#allocation2 + $0xf8] sm:$0xff]
        %v2711 = vld [vmem:[#allocation2 + $0x100] sm:$0xff]
        %v2712 = vld [vmem:[#allocation2 + $0x108] sm:$0xff]
        %v2713 = vld [vmem:[#allocation2 + $0x110] sm:$0xff]
        %v2714 = vld [vmem:[#allocation2 + $0x118] sm:$0xff]
        %v2715 = vld [vmem:[#allocation2 + $0x120] sm:$0xff]
        %v2716 = vld [vmem:[#allocation2 + $0x128] sm:$0xff]
        %v2717 = vld [vmem:[#allocation2 + $0x130] sm:$0xff]
        %v2718 = vld [vmem:[#allocation2 + $0x138] sm:$0xff]
        %v2719 = vld [vmem:[#allocation2 + $0x140] sm:$0xff]
        %v2720 = vld [vmem:[#allocation2 + $0x148] sm:$0xff]
        %v2721 = vld [vmem:[#allocation2 + $0x150] sm:$0xff]
        %v2722 = vld [vmem:[#allocation2 + $0x158] sm:$0xff]
        %v2723 = vld [vmem:[#allocation2 + $0x160] sm:$0xff]
        %v2724 = vld [vmem:[#allocation2 + $0x168] sm:$0xff]
        %v2725 = vld [vmem:[#allocation2 + $0x170] sm:$0xff]
        %v2726 = vld [vmem:[#allocation2 + $0x178] sm:$0xff]
        %v2727 = vld [vmem:[#allocation2 + $0x180] sm:$0xff]
        %v2728 = vld [vmem:[#allocation2 + $0x188] sm:$0xff]
        %v2729 = vld [vmem:[#allocation2 + $0x190] sm:$0xff]
        %v2730 = vld [vmem:[#allocation2 + $0x198] sm:$0xff]
        %v2731 = vld [vmem:[#allocation2 + $0x1a0] sm:$0xff]
        %v2732 = vld [vmem:[#allocation2 + $0x1a8] sm:$0xff]
        %v2733 = vld [vmem:[#allocation2 + $0x1b0] sm:$0xff]
        %v2734 = vld [vmem:[#allocation2 + $0x1b8] sm:$0xff]
        %v2735 = vld [vmem:[#allocation2 + $0x1c0] sm:$0xff]
        %v2736 = vld [vmem:[#allocation2 + $0x1c8] sm:$0xff]
        %v2737 = vld [vmem:[#allocation2 + $0x1d0] sm:$0xff]
        %v2738 = vld [vmem:[#allocation2 + $0x1d8] sm:$0xff]
        %v2739 = vld [vmem:[#allocation2 + $0x1e0] sm:$0xff]
        %v2740 = vld [vmem:[#allocation2 + $0x1e8] sm:$0xff]
        %v2741 = vld [vmem:[#allocation2 + $0x1f0] sm:$0xff]
        %v2742 = vld [vmem:[#allocation2 + $0x1f8] sm:$0xff]
        %v2743 = vld [vmem:[#allocation2 + $0x200] sm:$0xff]
        %v2744 = vld [vmem:[#allocation2 + $0x208] sm:$0xff]
        %v2745 = vld [vmem:[#allocation2 + $0x210] sm:$0xff]
        %v2746 = vld [vmem:[#allocation2 + $0x218] sm:$0xff]
        %v2747 = vld [vmem:[#allocation2 + $0x220] sm:$0xff]
        %v2748 = vld [vmem:[#allocation2 + $0x228] sm:$0xff]
        %v2749 = vld [vmem:[#allocation2 + $0x230] sm:$0xff]
        %v2750 = vld [vmem:[#allocation2 + $0x238] sm:$0xff]
        %v2751 = vld [vmem:[#allocation2 + $0x240] sm:$0xff]
        %v2752 = vld [vmem:[#allocation2 + $0x248] sm:$0xff]
        %v2753 = vld [vmem:[#allocation2 + $0x250] sm:$0xff]
        %v2754 = vld [vmem:[#allocation2 + $0x258] sm:$0xff]
        %v2755 = vld [vmem:[#allocation2 + $0x260] sm:$0xff]
        %v2756 = vld [vmem:[#allocation2 + $0x268] sm:$0xff]
        %v2757 = vld [vmem:[#allocation2 + $0x270] sm:$0xff]
        %v2758 = vld [vmem:[#allocation2 + $0x278] sm:$0xff]
        %v2759 = vld [vmem:[#allocation2 + $0x280] sm:$0xff]
        %v2760 = vld [vmem:[#allocation2 + $0x288] sm:$0xff]
        %v2761 = vld [vmem:[#allocation2 + $0x290] sm:$0xff]
        %v2762 = vld [vmem:[#allocation2 + $0x298] sm:$0xff]
        %v2763 = vld [vmem:[#allocation2 + $0x2a0] sm:$0xff]
        %v2764 = vld [vmem:[#allocation2 + $0x2a8] sm:$0xff]
        %v2765 = vld [vmem:[#allocation2 + $0x2b0] sm:$0xff]
        %v2766 = vld [vmem:[#allocation2 + $0x2b8] sm:$0xff]
        %v2767 = vld [vmem:[#allocation2 + $0x2c0] sm:$0xff]
        %v2768 = vld [vmem:[#allocation2 + $0x2c8] sm:$0xff]
        %v2769 = vld [vmem:[#allocation2 + $0x2d0] sm:$0xff]
        %v2770 = vld [vmem:[#allocation2 + $0x2d8] sm:$0xff]
        %v2771 = vld [vmem:[#allocation2 + $0x2e0] sm:$0xff]
        %v2772 = vld [vmem:[#allocation2 + $0x2e8] sm:$0xff]
        %v2773 = vld [vmem:[#allocation2 + $0x2f0] sm:$0xff]
        %v2774 = vld [vmem:[#allocation2 + $0x2f8] sm:$0xff]
        %v2775 = vld [vmem:[#allocation7] sm:$0xf]
        %v2776 = vld [vmem:[#allocation7 + $0x4] sm:$0xf]
        %v2777 = vld [vmem:[#allocation7 + $0x8] sm:$0xf]
        %v2778 = vld [vmem:[#allocation7 + $0xc] sm:$0xf]
        %v2779 = vld [vmem:[#allocation7 + $0x10] sm:$0xf]
        %v2780 = vld [vmem:[#allocation7 + $0x14] sm:$0xf]
        %v2781 = vld [vmem:[#allocation7 + $0x18] sm:$0xf]
        %v2782 = vld [vmem:[#allocation7 + $0x1c] sm:$0xf]
        %v2783 = vld [vmem:[#allocation7 + $0x20] sm:$0xf]
        %v2784 = vld [vmem:[#allocation7 + $0x24] sm:$0xf]
        %v2785 = vld [vmem:[#allocation7 + $0x28] sm:$0xf]
        %v2786 = vld [vmem:[#allocation7 + $0x2c] sm:$0xf]
        %v2787 = vld [vmem:[#allocation7 + $0x30] sm:$0xf]
        %v2788 = vld [vmem:[#allocation7 + $0x34] sm:$0xf]
        %v2789 = vld [vmem:[#allocation7 + $0x38] sm:$0xf]
        %v2790 = vld [vmem:[#allocation7 + $0x3c] sm:$0xf]
        %v2791 = vld [vmem:[#allocation7 + $0x40] sm:$0xf]
        %v2792 = vld [vmem:[#allocation7 + $0x44] sm:$0xf]
        %v2793 = vld [vmem:[#allocation7 + $0x48] sm:$0xf]
        %v2794 = vld [vmem:[#allocation7 + $0x4c] sm:$0xf]
        %v2795 = vld [vmem:[#allocation7 + $0x50] sm:$0xf]
        %v2796 = vld [vmem:[#allocation7 + $0x54] sm:$0xf]
        %v2797 = vld [vmem:[#allocation7 + $0x58] sm:$0xf]
        %v2798 = vld [vmem:[#allocation7 + $0x5c] sm:$0xf]
        %v2799 = vld [vmem:[#allocation7 + $0x60] sm:$0xf]
        %v2800 = vld [vmem:[#allocation7 + $0x64] sm:$0xf]
        %v2801 = vld [vmem:[#allocation7 + $0x68] sm:$0xf]
        %v2802 = vld [vmem:[#allocation7 + $0x6c] sm:$0xf]
        %v2803 = vld [vmem:[#allocation7 + $0x70] sm:$0xf]
        %v2804 = vld [vmem:[#allocation7 + $0x74] sm:$0xf]
        %v2805 = vld [vmem:[#allocation7 + $0x78] sm:$0xf]
        %v2806 = vld [vmem:[#allocation7 + $0x7c] sm:$0xf]
        %v2807 = vld [vmem:[#allocation7 + $0x80] sm:$0xf]
        %v2808 = vld [vmem:[#allocation7 + $0x84] sm:$0xf]
        %v2809 = vld [vmem:[#allocation7 + $0x88] sm:$0xf]
        %v2810 = vld [vmem:[#allocation7 + $0x8c] sm:$0xf]
        %v2811 = vld [vmem:[#allocation7 + $0x90] sm:$0xf]
        %v2812 = vld [vmem:[#allocation7 + $0x94] sm:$0xf]
        %v2813 = vld [vmem:[#allocation7 + $0x98] sm:$0xf]
        %v2814 = vld [vmem:[#allocation7 + $0x9c] sm:$0xf]
        %v2815 = vld [vmem:[#allocation7 + $0xa0] sm:$0xf]
        %v2816 = vld [vmem:[#allocation7 + $0xa4] sm:$0xf]
        %v2817 = vld [vmem:[#allocation7 + $0xa8] sm:$0xf]
        %v2818 = vld [vmem:[#allocation7 + $0xac] sm:$0xf]
        %v2819 = vld [vmem:[#allocation7 + $0xb0] sm:$0xf]
        %v2820 = vld [vmem:[#allocation7 + $0xb4] sm:$0xf]
        %v2821 = vld [vmem:[#allocation7 + $0xb8] sm:$0xf]
        %v2822 = vld [vmem:[#allocation7 + $0xbc] sm:$0xf]
        %v2823 = vld [vmem:[#allocation7 + $0xc0] sm:$0xf]
        %v2824 = vld [vmem:[#allocation7 + $0xc4] sm:$0xf]
        %v2825 = vld [vmem:[#allocation7 + $0xc8] sm:$0xf]
        %v2826 = vld [vmem:[#allocation7 + $0xcc] sm:$0xf]
        %v2827 = vld [vmem:[#allocation7 + $0xd0] sm:$0xf]
        %v2828 = vld [vmem:[#allocation7 + $0xd4] sm:$0xf]
        %v2829 = vld [vmem:[#allocation7 + $0xd8] sm:$0xf]
        %v2830 = vld [vmem:[#allocation7 + $0xdc] sm:$0xf]
        %v2831 = vld [vmem:[#allocation7 + $0xe0] sm:$0xf]
        %v2832 = vld [vmem:[#allocation7 + $0xe4] sm:$0xf]
        %v2833 = vld [vmem:[#allocation7 + $0xe8] sm:$0xf]
        %v2834 = vld [vmem:[#allocation7 + $0xec] sm:$0xf]
        %v2835 = vld [vmem:[#allocation7 + $0xf0] sm:$0xf]
        %v2836 = vld [vmem:[#allocation7 + $0xf4] sm:$0xf]
        %v2837 = vld [vmem:[#allocation7 + $0xf8] sm:$0xf]
        %v2838 = vld [vmem:[#allocation7 + $0xfc] sm:$0xf]
        %v2839 = vld [vmem:[#allocation7 + $0x100] sm:$0xf]
        %v2840 = vld [vmem:[#allocation7 + $0x104] sm:$0xf]
        %v2841 = vld [vmem:[#allocation7 + $0x108] sm:$0xf]
        %v2842 = vld [vmem:[#allocation7 + $0x10c] sm:$0xf]
        %v2843 = vld [vmem:[#allocation7 + $0x110] sm:$0xf]
        %v2844 = vld [vmem:[#allocation7 + $0x114] sm:$0xf]
        %v2845 = vld [vmem:[#allocation7 + $0x118] sm:$0xf]
        %v2846 = vld [vmem:[#allocation7 + $0x11c] sm:$0xf]
        %v2847 = vld [vmem:[#allocation7 + $0x120] sm:$0xf]
        %v2848 = vld [vmem:[#allocation7 + $0x124] sm:$0xf]
        %v2849 = vld [vmem:[#allocation7 + $0x128] sm:$0xf]
        %v2850 = vld [vmem:[#allocation7 + $0x12c] sm:$0xf]
        %v2851 = vld [vmem:[#allocation7 + $0x130] sm:$0xf]
        %v2852 = vld [vmem:[#allocation7 + $0x134] sm:$0xf]
        %v2853 = vld [vmem:[#allocation7 + $0x138] sm:$0xf]
        %v2854 = vld [vmem:[#allocation7 + $0x13c] sm:$0xf]
        %v2855 = vld [vmem:[#allocation7 + $0x140] sm:$0xf]
        %v2856 = vld [vmem:[#allocation7 + $0x144] sm:$0xf]
        %v2857 = vld [vmem:[#allocation7 + $0x148] sm:$0xf]
        %v2858 = vld [vmem:[#allocation7 + $0x14c] sm:$0xf]
        %v2859 = vld [vmem:[#allocation7 + $0x150] sm:$0xf]
        %v2860 = vld [vmem:[#allocation7 + $0x154] sm:$0xf]
        %v2861 = vld [vmem:[#allocation7 + $0x158] sm:$0xf]
        %v2862 = vld [vmem:[#allocation7 + $0x15c] sm:$0xf]
        %v2863 = vld [vmem:[#allocation7 + $0x160] sm:$0xf]
        %v2864 = vld [vmem:[#allocation7 + $0x164] sm:$0xf]
        %v2865 = vld [vmem:[#allocation7 + $0x168] sm:$0xf]
        %v2866 = vld [vmem:[#allocation7 + $0x16c] sm:$0xf]
        %v2867 = vld [vmem:[#allocation7 + $0x170] sm:$0xf]
        %v2868 = vld [vmem:[#allocation7 + $0x174] sm:$0xf]
        %v2869 = vld [vmem:[#allocation7 + $0x178] sm:$0xf]
        %v2870 = vld [vmem:[#allocation7 + $0x17c] sm:$0xf]
        %v2871 = vld [vmem:[%s372] sm:$0xff]
        %v2872 = vld [vmem:[%s372 + $0x8] sm:$0xff]
        %v2873 = vld [vmem:[%s372 + $0x10] sm:$0xff]
        %v2874 = vld [vmem:[%s372 + $0x18] sm:$0xff]
        %v2875 = vld [vmem:[%s372 + $0x20] sm:$0xff]
        %v2876 = vld [vmem:[%s372 + $0x28] sm:$0xff]
        %v2877 = vld [vmem:[%s372 + $0x30] sm:$0xff]
        %v2878 = vld [vmem:[%s372 + $0x38] sm:$0xff]
        %v2879 = vld [vmem:[%s372 + $0x40] sm:$0xff]
        %v2880 = vld [vmem:[%s372 + $0x48] sm:$0xff]
        %v2881 = vld [vmem:[%s372 + $0x50] sm:$0xff]
        %v2882 = vld [vmem:[%s372 + $0x58] sm:$0xff]
        %v2883 = vld [vmem:[%s372 + $0x60] sm:$0xff]
        %v2884 = vld [vmem:[%s372 + $0x68] sm:$0xff]
        %v2885 = vld [vmem:[%s372 + $0x70] sm:$0xff]
        %v2886 = vld [vmem:[%s372 + $0x78] sm:$0xff]
        %v2887 = vld [vmem:[%s372 + $0x80] sm:$0xff]
        %v2888 = vld [vmem:[%s372 + $0x88] sm:$0xff]
        %v2889 = vld [vmem:[%s372 + $0x90] sm:$0xff]
        %v2890 = vld [vmem:[%s372 + $0x98] sm:$0xff]
        %v2891 = vld [vmem:[%s372 + $0xa0] sm:$0xff]
        %v2892 = vld [vmem:[%s372 + $0xa8] sm:$0xff]
        %v2893 = vld [vmem:[%s372 + $0xb0] sm:$0xff]
        %v2894 = vld [vmem:[%s372 + $0xb8] sm:$0xff]
        %v2895 = vld [vmem:[%s372 + $0xc0] sm:$0xff]
        %v2896 = vld [vmem:[%s372 + $0xc8] sm:$0xff]
        %v2897 = vld [vmem:[%s372 + $0xd0] sm:$0xff]
        %v2898 = vld [vmem:[%s372 + $0xd8] sm:$0xff]
        %v2899 = vld [vmem:[%s372 + $0xe0] sm:$0xff]
        %v2900 = vld [vmem:[%s372 + $0xe8] sm:$0xff]
        %v2901 = vld [vmem:[%s372 + $0xf0] sm:$0xff]
        %v2902 = vld [vmem:[%s372 + $0xf8] sm:$0xff]
        %v2903 = vld [vmem:[%s372 + $0x100] sm:$0xff]
        %v2904 = vld [vmem:[%s372 + $0x108] sm:$0xff]
        %v2905 = vld [vmem:[%s372 + $0x110] sm:$0xff]
        %v2906 = vld [vmem:[%s372 + $0x118] sm:$0xff]
        %v2907 = vld [vmem:[%s372 + $0x120] sm:$0xff]
        %v2908 = vld [vmem:[%s372 + $0x128] sm:$0xff]
        %v2909 = vld [vmem:[%s372 + $0x130] sm:$0xff]
        %v2910 = vld [vmem:[%s372 + $0x138] sm:$0xff]
        %v2911 = vld [vmem:[%s372 + $0x140] sm:$0xff]
        %v2912 = vld [vmem:[%s372 + $0x148] sm:$0xff]
        %v2913 = vld [vmem:[%s372 + $0x150] sm:$0xff]
        %v2914 = vld [vmem:[%s372 + $0x158] sm:$0xff]
        %v2915 = vld [vmem:[%s372 + $0x160] sm:$0xff]
        %v2916 = vld [vmem:[%s372 + $0x168] sm:$0xff]
        %v2917 = vld [vmem:[%s372 + $0x170] sm:$0xff]
        %v2918 = vld [vmem:[%s372 + $0x178] sm:$0xff]
        %v2919 = vld [vmem:[%s372 + $0x180] sm:$0xff]
        %v2920 = vld [vmem:[%s372 + $0x188] sm:$0xff]
        %v2921 = vld [vmem:[%s372 + $0x190] sm:$0xff]
        %v2922 = vld [vmem:[%s372 + $0x198] sm:$0xff]
        %v2923 = vld [vmem:[%s372 + $0x1a0] sm:$0xff]
        %v2924 = vld [vmem:[%s372 + $0x1a8] sm:$0xff]
        %v2925 = vld [vmem:[%s372 + $0x1b0] sm:$0xff]
        %v2926 = vld [vmem:[%s372 + $0x1b8] sm:$0xff]
        %v2927 = vld [vmem:[%s372 + $0x1c0] sm:$0xff]
        %v2928 = vld [vmem:[%s372 + $0x1c8] sm:$0xff]
        %v2929 = vld [vmem:[%s372 + $0x1d0] sm:$0xff]
        %v2930 = vld [vmem:[%s372 + $0x1d8] sm:$0xff]
        %v2931 = vld [vmem:[%s372 + $0x1e0] sm:$0xff]
        %v2932 = vld [vmem:[%s372 + $0x1e8] sm:$0xff]
        %v2933 = vld [vmem:[%s372 + $0x1f0] sm:$0xff]
        %v2934 = vld [vmem:[%s372 + $0x1f8] sm:$0xff]
        %v2935 = vld [vmem:[%s372 + $0x200] sm:$0xff]
        %v2936 = vld [vmem:[%s372 + $0x208] sm:$0xff]
        %v2937 = vld [vmem:[%s372 + $0x210] sm:$0xff]
        %v2938 = vld [vmem:[%s372 + $0x218] sm:$0xff]
        %v2939 = vld [vmem:[%s372 + $0x220] sm:$0xff]
        %v2940 = vld [vmem:[%s372 + $0x228] sm:$0xff]
        %v2941 = vld [vmem:[%s372 + $0x230] sm:$0xff]
        %v2942 = vld [vmem:[%s372 + $0x238] sm:$0xff]
        %v2943 = vld [vmem:[%s372 + $0x240] sm:$0xff]
        %v2944 = vld [vmem:[%s372 + $0x248] sm:$0xff]
        %v2945 = vld [vmem:[%s372 + $0x250] sm:$0xff]
        %v2946 = vld [vmem:[%s372 + $0x258] sm:$0xff]
        %v2947 = vld [vmem:[%s372 + $0x260] sm:$0xff]
        %v2948 = vld [vmem:[%s372 + $0x268] sm:$0xff]
        %v2949 = vld [vmem:[%s372 + $0x270] sm:$0xff]
        %v2950 = vld [vmem:[%s372 + $0x278] sm:$0xff]
        %v2951 = vld [vmem:[%s372 + $0x280] sm:$0xff]
        %v2952 = vld [vmem:[%s372 + $0x288] sm:$0xff]
        %v2953 = vld [vmem:[%s372 + $0x290] sm:$0xff]
        %v2954 = vld [vmem:[%s372 + $0x298] sm:$0xff]
        %v2955 = vld [vmem:[%s372 + $0x2a0] sm:$0xff]
        %v2956 = vld [vmem:[%s372 + $0x2a8] sm:$0xff]
        %v2957 = vld [vmem:[%s372 + $0x2b0] sm:$0xff]
        %v2958 = vld [vmem:[%s372 + $0x2b8] sm:$0xff]
        %v2959 = vld [vmem:[%s372 + $0x2c0] sm:$0xff]
        %v2960 = vld [vmem:[%s372 + $0x2c8] sm:$0xff]
        %v2961 = vld [vmem:[%s372 + $0x2d0] sm:$0xff]
        %v2962 = vld [vmem:[%s372 + $0x2d8] sm:$0xff]
        %v2963 = vld [vmem:[%s372 + $0x2e0] sm:$0xff]
        %v2964 = vld [vmem:[%s372 + $0x2e8] sm:$0xff]
        %v2965 = vld [vmem:[%s372 + $0x2f0] sm:$0xff]
        %v2966 = vld [vmem:[%s372 + $0x2f8] sm:$0xff]
        %s2967 = scalar_lea.vmem [#allocation7], 384
        %v2968 = vld [vmem:[%s2967] sm:$0xf]
        %v2969 = vld [vmem:[%s2967 + $0x4] sm:$0xf]
        %v2970 = vld [vmem:[%s2967 + $0x8] sm:$0xf]
        %v2971 = vld [vmem:[%s2967 + $0xc] sm:$0xf]
        %v2972 = vld [vmem:[%s2967 + $0x10] sm:$0xf]
        %v2973 = vld [vmem:[%s2967 + $0x14] sm:$0xf]
        %v2974 = vld [vmem:[%s2967 + $0x18] sm:$0xf]
        %v2975 = vld [vmem:[%s2967 + $0x1c] sm:$0xf]
        %v2976 = vld [vmem:[%s2967 + $0x20] sm:$0xf]
        %v2977 = vld [vmem:[%s2967 + $0x24] sm:$0xf]
        %v2978 = vld [vmem:[%s2967 + $0x28] sm:$0xf]
        %v2979 = vld [vmem:[%s2967 + $0x2c] sm:$0xf]
        %v2980 = vld [vmem:[%s2967 + $0x30] sm:$0xf]
        %v2981 = vld [vmem:[%s2967 + $0x34] sm:$0xf]
        %v2982 = vld [vmem:[%s2967 + $0x38] sm:$0xf]
        %v2983 = vld [vmem:[%s2967 + $0x3c] sm:$0xf]
        %v2984 = vld [vmem:[%s2967 + $0x40] sm:$0xf]
        %v2985 = vld [vmem:[%s2967 + $0x44] sm:$0xf]
        %v2986 = vld [vmem:[%s2967 + $0x48] sm:$0xf]
        %v2987 = vld [vmem:[%s2967 + $0x4c] sm:$0xf]
        %v2988 = vld [vmem:[%s2967 + $0x50] sm:$0xf]
        %v2989 = vld [vmem:[%s2967 + $0x54] sm:$0xf]
        %v2990 = vld [vmem:[%s2967 + $0x58] sm:$0xf]
        %v2991 = vld [vmem:[%s2967 + $0x5c] sm:$0xf]
        %v2992 = vld [vmem:[%s2967 + $0x60] sm:$0xf]
        %v2993 = vld [vmem:[%s2967 + $0x64] sm:$0xf]
        %v2994 = vld [vmem:[%s2967 + $0x68] sm:$0xf]
        %v2995 = vld [vmem:[%s2967 + $0x6c] sm:$0xf]
        %v2996 = vld [vmem:[%s2967 + $0x70] sm:$0xf]
        %v2997 = vld [vmem:[%s2967 + $0x74] sm:$0xf]
        %v2998 = vld [vmem:[%s2967 + $0x78] sm:$0xf]
        %v2999 = vld [vmem:[%s2967 + $0x7c] sm:$0xf]
        %v3000 = vld [vmem:[%s2967 + $0x80] sm:$0xf]
        %v3001 = vld [vmem:[%s2967 + $0x84] sm:$0xf]
        %v3002 = vld [vmem:[%s2967 + $0x88] sm:$0xf]
        %v3003 = vld [vmem:[%s2967 + $0x8c] sm:$0xf]
        %v3004 = vld [vmem:[%s2967 + $0x90] sm:$0xf]
        %v3005 = vld [vmem:[%s2967 + $0x94] sm:$0xf]
        %v3006 = vld [vmem:[%s2967 + $0x98] sm:$0xf]
        %v3007 = vld [vmem:[%s2967 + $0x9c] sm:$0xf]
        %v3008 = vld [vmem:[%s2967 + $0xa0] sm:$0xf]
        %v3009 = vld [vmem:[%s2967 + $0xa4] sm:$0xf]
        %v3010 = vld [vmem:[%s2967 + $0xa8] sm:$0xf]
        %v3011 = vld [vmem:[%s2967 + $0xac] sm:$0xf]
        %v3012 = vld [vmem:[%s2967 + $0xb0] sm:$0xf]
        %v3013 = vld [vmem:[%s2967 + $0xb4] sm:$0xf]
        %v3014 = vld [vmem:[%s2967 + $0xb8] sm:$0xf]
        %v3015 = vld [vmem:[%s2967 + $0xbc] sm:$0xf]
        %v3016 = vld [vmem:[%s2967 + $0xc0] sm:$0xf]
        %v3017 = vld [vmem:[%s2967 + $0xc4] sm:$0xf]
        %v3018 = vld [vmem:[%s2967 + $0xc8] sm:$0xf]
        %v3019 = vld [vmem:[%s2967 + $0xcc] sm:$0xf]
        %v3020 = vld [vmem:[%s2967 + $0xd0] sm:$0xf]
        %v3021 = vld [vmem:[%s2967 + $0xd4] sm:$0xf]
        %v3022 = vld [vmem:[%s2967 + $0xd8] sm:$0xf]
        %v3023 = vld [vmem:[%s2967 + $0xdc] sm:$0xf]
        %v3024 = vld [vmem:[%s2967 + $0xe0] sm:$0xf]
        %v3025 = vld [vmem:[%s2967 + $0xe4] sm:$0xf]
        %v3026 = vld [vmem:[%s2967 + $0xe8] sm:$0xf]
        %v3027 = vld [vmem:[%s2967 + $0xec] sm:$0xf]
        %v3028 = vld [vmem:[%s2967 + $0xf0] sm:$0xf]
        %v3029 = vld [vmem:[%s2967 + $0xf4] sm:$0xf]
        %v3030 = vld [vmem:[%s2967 + $0xf8] sm:$0xf]
        %v3031 = vld [vmem:[%s2967 + $0xfc] sm:$0xf]
        %v3032 = vld [vmem:[%s2967 + $0x100] sm:$0xf]
        %v3033 = vld [vmem:[%s2967 + $0x104] sm:$0xf]
        %v3034 = vld [vmem:[%s2967 + $0x108] sm:$0xf]
        %v3035 = vld [vmem:[%s2967 + $0x10c] sm:$0xf]
        %v3036 = vld [vmem:[%s2967 + $0x110] sm:$0xf]
        %v3037 = vld [vmem:[%s2967 + $0x114] sm:$0xf]
        %v3038 = vld [vmem:[%s2967 + $0x118] sm:$0xf]
        %v3039 = vld [vmem:[%s2967 + $0x11c] sm:$0xf]
        %v3040 = vld [vmem:[%s2967 + $0x120] sm:$0xf]
        %v3041 = vld [vmem:[%s2967 + $0x124] sm:$0xf]
        %v3042 = vld [vmem:[%s2967 + $0x128] sm:$0xf]
        %v3043 = vld [vmem:[%s2967 + $0x12c] sm:$0xf]
        %v3044 = vld [vmem:[%s2967 + $0x130] sm:$0xf]
        %v3045 = vld [vmem:[%s2967 + $0x134] sm:$0xf]
        %v3046 = vld [vmem:[%s2967 + $0x138] sm:$0xf]
        %v3047 = vld [vmem:[%s2967 + $0x13c] sm:$0xf]
        %v3048 = vld [vmem:[%s2967 + $0x140] sm:$0xf]
        %v3049 = vld [vmem:[%s2967 + $0x144] sm:$0xf]
        %v3050 = vld [vmem:[%s2967 + $0x148] sm:$0xf]
        %v3051 = vld [vmem:[%s2967 + $0x14c] sm:$0xf]
        %v3052 = vld [vmem:[%s2967 + $0x150] sm:$0xf]
        %v3053 = vld [vmem:[%s2967 + $0x154] sm:$0xf]
        %v3054 = vld [vmem:[%s2967 + $0x158] sm:$0xf]
        %v3055 = vld [vmem:[%s2967 + $0x15c] sm:$0xf]
        %v3056 = vld [vmem:[%s2967 + $0x160] sm:$0xf]
        %v3057 = vld [vmem:[%s2967 + $0x164] sm:$0xf]
        %v3058 = vld [vmem:[%s2967 + $0x168] sm:$0xf]
        %v3059 = vld [vmem:[%s2967 + $0x16c] sm:$0xf]
        %v3060 = vld [vmem:[%s2967 + $0x170] sm:$0xf]
        %v3061 = vld [vmem:[%s2967 + $0x174] sm:$0xf]
        %v3062 = vld [vmem:[%s2967 + $0x178] sm:$0xf]
        %v3063 = vld [vmem:[%s2967 + $0x17c] sm:$0xf]
        %v3160 = vunpack.c.l.b16 %v2871
        %v3161 = vunpack.c.h.b16 %v2871
        %v3162 = vunpack.c.l.b16 %v2872
        %v3163 = vunpack.c.h.b16 %v2872
        %v3164 = vunpack.c.l.b16 %v2873
        %v3165 = vunpack.c.h.b16 %v2873
        %v3166 = vunpack.c.l.b16 %v2874
        %v3167 = vunpack.c.h.b16 %v2874
        %v3168 = vunpack.c.l.b16 %v2875
        %v3169 = vunpack.c.h.b16 %v2875
        %v3170 = vunpack.c.l.b16 %v2876
        %v3171 = vunpack.c.h.b16 %v2876
        %v3172 = vunpack.c.l.b16 %v2877
        %v3173 = vunpack.c.h.b16 %v2877
        %v3174 = vunpack.c.l.b16 %v2878
        %v3175 = vunpack.c.h.b16 %v2878
        %v3176 = vunpack.c.l.b16 %v2879
        %v3177 = vunpack.c.h.b16 %v2879
        %v3178 = vunpack.c.l.b16 %v2880
        %v3179 = vunpack.c.h.b16 %v2880
        %v3180 = vunpack.c.l.b16 %v2881
        %v3181 = vunpack.c.h.b16 %v2881
        %v3182 = vunpack.c.l.b16 %v2882
        %v3183 = vunpack.c.h.b16 %v2882
        %v3184 = vunpack.c.l.b16 %v2883
        %v3185 = vunpack.c.h.b16 %v2883
        %v3186 = vunpack.c.l.b16 %v2884
        %v3187 = vunpack.c.h.b16 %v2884
        %v3188 = vunpack.c.l.b16 %v2885
        %v3189 = vunpack.c.h.b16 %v2885
        %v3190 = vunpack.c.l.b16 %v2886
        %v3191 = vunpack.c.h.b16 %v2886
        %v3192 = vunpack.c.l.b16 %v2887
        %v3193 = vunpack.c.h.b16 %v2887
        %v3194 = vunpack.c.l.b16 %v2888
        %v3195 = vunpack.c.h.b16 %v2888
        %v3196 = vunpack.c.l.b16 %v2889
        %v3197 = vunpack.c.h.b16 %v2889
        %v3198 = vunpack.c.l.b16 %v2890
        %v3199 = vunpack.c.h.b16 %v2890
        %v3200 = vunpack.c.l.b16 %v2891
        %v3201 = vunpack.c.h.b16 %v2891
        %v3202 = vunpack.c.l.b16 %v2892
        %v3203 = vunpack.c.h.b16 %v2892
        %v3204 = vunpack.c.l.b16 %v2893
        %v3205 = vunpack.c.h.b16 %v2893
        %v3206 = vunpack.c.l.b16 %v2894
        %v3207 = vunpack.c.h.b16 %v2894
        %v3208 = vunpack.c.l.b16 %v2895
        %v3209 = vunpack.c.h.b16 %v2895
        %v3210 = vunpack.c.l.b16 %v2896
        %v3211 = vunpack.c.h.b16 %v2896
        %v3212 = vunpack.c.l.b16 %v2897
        %v3213 = vunpack.c.h.b16 %v2897
        %v3214 = vunpack.c.l.b16 %v2898
        %v3215 = vunpack.c.h.b16 %v2898
        %v3216 = vunpack.c.l.b16 %v2899
        %v3217 = vunpack.c.h.b16 %v2899
        %v3218 = vunpack.c.l.b16 %v2900
        %v3219 = vunpack.c.h.b16 %v2900
        %v3220 = vunpack.c.l.b16 %v2901
        %v3221 = vunpack.c.h.b16 %v2901
        %v3222 = vunpack.c.l.b16 %v2902
        %v3223 = vunpack.c.h.b16 %v2902
        %v3224 = vunpack.c.l.b16 %v2903
        %v3225 = vunpack.c.h.b16 %v2903
        %v3226 = vunpack.c.l.b16 %v2904
        %v3227 = vunpack.c.h.b16 %v2904
        %v3228 = vunpack.c.l.b16 %v2905
        %v3229 = vunpack.c.h.b16 %v2905
        %v3230 = vunpack.c.l.b16 %v2906
        %v3231 = vunpack.c.h.b16 %v2906
        %v3232 = vunpack.c.l.b16 %v2907
        %v3233 = vunpack.c.h.b16 %v2907
        %v3234 = vunpack.c.l.b16 %v2908
        %v3235 = vunpack.c.h.b16 %v2908
        %v3236 = vunpack.c.l.b16 %v2909
        %v3237 = vunpack.c.h.b16 %v2909
        %v3238 = vunpack.c.l.b16 %v2910
        %v3239 = vunpack.c.h.b16 %v2910
        %v3240 = vunpack.c.l.b16 %v2911
        %v3241 = vunpack.c.h.b16 %v2911
        %v3242 = vunpack.c.l.b16 %v2912
        %v3243 = vunpack.c.h.b16 %v2912
        %v3244 = vunpack.c.l.b16 %v2913
        %v3245 = vunpack.c.h.b16 %v2913
        %v3246 = vunpack.c.l.b16 %v2914
        %v3247 = vunpack.c.h.b16 %v2914
        %v3248 = vunpack.c.l.b16 %v2915
        %v3249 = vunpack.c.h.b16 %v2915
        %v3250 = vunpack.c.l.b16 %v2916
        %v3251 = vunpack.c.h.b16 %v2916
        %v3252 = vunpack.c.l.b16 %v2917
        %v3253 = vunpack.c.h.b16 %v2917
        %v3254 = vunpack.c.l.b16 %v2918
        %v3255 = vunpack.c.h.b16 %v2918
        %v3256 = vunpack.c.l.b16 %v2919
        %v3257 = vunpack.c.h.b16 %v2919
        %v3258 = vunpack.c.l.b16 %v2920
        %v3259 = vunpack.c.h.b16 %v2920
        %v3260 = vunpack.c.l.b16 %v2921
        %v3261 = vunpack.c.h.b16 %v2921
        %v3262 = vunpack.c.l.b16 %v2922
        %v3263 = vunpack.c.h.b16 %v2922
        %v3264 = vunpack.c.l.b16 %v2923
        %v3265 = vunpack.c.h.b16 %v2923
        %v3266 = vunpack.c.l.b16 %v2924
        %v3267 = vunpack.c.h.b16 %v2924
        %v3268 = vunpack.c.l.b16 %v2925
        %v3269 = vunpack.c.h.b16 %v2925
        %v3270 = vunpack.c.l.b16 %v2926
        %v3271 = vunpack.c.h.b16 %v2926
        %v3272 = vunpack.c.l.b16 %v2927
        %v3273 = vunpack.c.h.b16 %v2927
        %v3274 = vunpack.c.l.b16 %v2928
        %v3275 = vunpack.c.h.b16 %v2928
        %v3276 = vunpack.c.l.b16 %v2929
        %v3277 = vunpack.c.h.b16 %v2929
        %v3278 = vunpack.c.l.b16 %v2930
        %v3279 = vunpack.c.h.b16 %v2930
        %v3280 = vunpack.c.l.b16 %v2931
        %v3281 = vunpack.c.h.b16 %v2931
        %v3282 = vunpack.c.l.b16 %v2932
        %v3283 = vunpack.c.h.b16 %v2932
        %v3284 = vunpack.c.l.b16 %v2933
        %v3285 = vunpack.c.h.b16 %v2933
        %v3286 = vunpack.c.l.b16 %v2934
        %v3287 = vunpack.c.h.b16 %v2934
        %v3288 = vunpack.c.l.b16 %v2935
        %v3289 = vunpack.c.h.b16 %v2935
        %v3290 = vunpack.c.l.b16 %v2936
        %v3291 = vunpack.c.h.b16 %v2936
        %v3292 = vunpack.c.l.b16 %v2937
        %v3293 = vunpack.c.h.b16 %v2937
        %v3294 = vunpack.c.l.b16 %v2938
        %v3295 = vunpack.c.h.b16 %v2938
        %v3296 = vunpack.c.l.b16 %v2939
        %v3297 = vunpack.c.h.b16 %v2939
        %v3298 = vunpack.c.l.b16 %v2940
        %v3299 = vunpack.c.h.b16 %v2940
        %v3300 = vunpack.c.l.b16 %v2941
        %v3301 = vunpack.c.h.b16 %v2941
        %v3302 = vunpack.c.l.b16 %v2942
        %v3303 = vunpack.c.h.b16 %v2942
        %v3304 = vunpack.c.l.b16 %v2943
        %v3305 = vunpack.c.h.b16 %v2943
        %v3306 = vunpack.c.l.b16 %v2944
        %v3307 = vunpack.c.h.b16 %v2944
        %v3308 = vunpack.c.l.b16 %v2945
        %v3309 = vunpack.c.h.b16 %v2945
        %v3310 = vunpack.c.l.b16 %v2946
        %v3311 = vunpack.c.h.b16 %v2946
        %v3312 = vunpack.c.l.b16 %v2947
        %v3313 = vunpack.c.h.b16 %v2947
        %v3314 = vunpack.c.l.b16 %v2948
        %v3315 = vunpack.c.h.b16 %v2948
        %v3316 = vunpack.c.l.b16 %v2949
        %v3317 = vunpack.c.h.b16 %v2949
        %v3318 = vunpack.c.l.b16 %v2950
        %v3319 = vunpack.c.h.b16 %v2950
        %v3320 = vunpack.c.l.b16 %v2951
        %v3321 = vunpack.c.h.b16 %v2951
        %v3322 = vunpack.c.l.b16 %v2952
        %v3323 = vunpack.c.h.b16 %v2952
        %v3324 = vunpack.c.l.b16 %v2953
        %v3325 = vunpack.c.h.b16 %v2953
        %v3326 = vunpack.c.l.b16 %v2954
        %v3327 = vunpack.c.h.b16 %v2954
        %v3328 = vunpack.c.l.b16 %v2955
        %v3329 = vunpack.c.h.b16 %v2955
        %v3330 = vunpack.c.l.b16 %v2956
        %v3331 = vunpack.c.h.b16 %v2956
        %v3332 = vunpack.c.l.b16 %v2957
        %v3333 = vunpack.c.h.b16 %v2957
        %v3334 = vunpack.c.l.b16 %v2958
        %v3335 = vunpack.c.h.b16 %v2958
        %v3336 = vunpack.c.l.b16 %v2959
        %v3337 = vunpack.c.h.b16 %v2959
        %v3338 = vunpack.c.l.b16 %v2960
        %v3339 = vunpack.c.h.b16 %v2960
        %v3340 = vunpack.c.l.b16 %v2961
        %v3341 = vunpack.c.h.b16 %v2961
        %v3342 = vunpack.c.l.b16 %v2962
        %v3343 = vunpack.c.h.b16 %v2962
        %v3344 = vunpack.c.l.b16 %v2963
        %v3345 = vunpack.c.h.b16 %v2963
        %v3346 = vunpack.c.l.b16 %v2964
        %v3347 = vunpack.c.h.b16 %v2964
        %v3348 = vunpack.c.l.b16 %v2965
        %v3349 = vunpack.c.h.b16 %v2965
        %v3350 = vunpack.c.l.b16 %v2966
        %v3351 = vunpack.c.h.b16 %v2966
        %v3352 = vpack.c.b16 %v3166, %v3160
        %v3353 = vpack.c.b16 %v3167, %v3161
        %v3354 = vpack.c.b16 %v3168, %v3162
        %v3355 = vpack.c.b16 %v3169, %v3163
        %v3356 = vpack.c.b16 %v3170, %v3164
        %v3357 = vpack.c.b16 %v3171, %v3165
        %v3358 = vpack.c.b16 %v3178, %v3172
        %v3359 = vpack.c.b16 %v3179, %v3173
        %v3360 = vpack.c.b16 %v3180, %v3174
        %v3361 = vpack.c.b16 %v3181, %v3175
        %v3362 = vpack.c.b16 %v3182, %v3176
        %v3363 = vpack.c.b16 %v3183, %v3177
        %v3364 = vpack.c.b16 %v3190, %v3184
        %v3365 = vpack.c.b16 %v3191, %v3185
        %v3366 = vpack.c.b16 %v3192, %v3186
        %v3367 = vpack.c.b16 %v3193, %v3187
        %v3368 = vpack.c.b16 %v3194, %v3188
        %v3369 = vpack.c.b16 %v3195, %v3189
        %v3370 = vpack.c.b16 %v3202, %v3196
        %v3371 = vpack.c.b16 %v3203, %v3197
        %v3372 = vpack.c.b16 %v3204, %v3198
        %v3373 = vpack.c.b16 %v3205, %v3199
        %v3374 = vpack.c.b16 %v3206, %v3200
        %v3375 = vpack.c.b16 %v3207, %v3201
        %v3376 = vpack.c.b16 %v3214, %v3208
        %v3377 = vpack.c.b16 %v3215, %v3209
        %v3378 = vpack.c.b16 %v3216, %v3210
        %v3379 = vpack.c.b16 %v3217, %v3211
        %v3380 = vpack.c.b16 %v3218, %v3212
        %v3381 = vpack.c.b16 %v3219, %v3213
        %v3382 = vpack.c.b16 %v3226, %v3220
        %v3383 = vpack.c.b16 %v3227, %v3221
        %v3384 = vpack.c.b16 %v3228, %v3222
        %v3385 = vpack.c.b16 %v3229, %v3223
        %v3386 = vpack.c.b16 %v3230, %v3224
        %v3387 = vpack.c.b16 %v3231, %v3225
        %v3388 = vpack.c.b16 %v3238, %v3232
        %v3389 = vpack.c.b16 %v3239, %v3233
        %v3390 = vpack.c.b16 %v3240, %v3234
        %v3391 = vpack.c.b16 %v3241, %v3235
        %v3392 = vpack.c.b16 %v3242, %v3236
        %v3393 = vpack.c.b16 %v3243, %v3237
        %v3394 = vpack.c.b16 %v3250, %v3244
        %v3395 = vpack.c.b16 %v3251, %v3245
        %v3396 = vpack.c.b16 %v3252, %v3246
        %v3397 = vpack.c.b16 %v3253, %v3247
        %v3398 = vpack.c.b16 %v3254, %v3248
        %v3399 = vpack.c.b16 %v3255, %v3249
        %v3400 = vpack.c.b16 %v3262, %v3256
        %v3401 = vpack.c.b16 %v3263, %v3257
        %v3402 = vpack.c.b16 %v3264, %v3258
        %v3403 = vpack.c.b16 %v3265, %v3259
        %v3404 = vpack.c.b16 %v3266, %v3260
        %v3405 = vpack.c.b16 %v3267, %v3261
        %v3406 = vpack.c.b16 %v3274, %v3268
        %v3407 = vpack.c.b16 %v3275, %v3269
        %v3408 = vpack.c.b16 %v3276, %v3270
        %v3409 = vpack.c.b16 %v3277, %v3271
        %v3410 = vpack.c.b16 %v3278, %v3272
        %v3411 = vpack.c.b16 %v3279, %v3273
        %v3412 = vpack.c.b16 %v3286, %v3280
        %v3413 = vpack.c.b16 %v3287, %v3281
        %v3414 = vpack.c.b16 %v3288, %v3282
        %v3415 = vpack.c.b16 %v3289, %v3283
        %v3416 = vpack.c.b16 %v3290, %v3284
        %v3417 = vpack.c.b16 %v3291, %v3285
        %v3418 = vpack.c.b16 %v3298, %v3292
        %v3419 = vpack.c.b16 %v3299, %v3293
        %v3420 = vpack.c.b16 %v3300, %v3294
        %v3421 = vpack.c.b16 %v3301, %v3295
        %v3422 = vpack.c.b16 %v3302, %v3296
        %v3423 = vpack.c.b16 %v3303, %v3297
        %v3424 = vpack.c.b16 %v3310, %v3304
        %v3425 = vpack.c.b16 %v3311, %v3305
        %v3426 = vpack.c.b16 %v3312, %v3306
        %v3427 = vpack.c.b16 %v3313, %v3307
        %v3428 = vpack.c.b16 %v3314, %v3308
        %v3429 = vpack.c.b16 %v3315, %v3309
        %v3430 = vpack.c.b16 %v3322, %v3316
        %v3431 = vpack.c.b16 %v3323, %v3317
        %v3432 = vpack.c.b16 %v3324, %v3318
        %v3433 = vpack.c.b16 %v3325, %v3319
        %v3434 = vpack.c.b16 %v3326, %v3320
        %v3435 = vpack.c.b16 %v3327, %v3321
        %v3436 = vpack.c.b16 %v3334, %v3328
        %v3437 = vpack.c.b16 %v3335, %v3329
        %v3438 = vpack.c.b16 %v3336, %v3330
        %v3439 = vpack.c.b16 %v3337, %v3331
        %v3440 = vpack.c.b16 %v3338, %v3332
        %v3441 = vpack.c.b16 %v3339, %v3333
        %v3442 = vpack.c.b16 %v3346, %v3340
        %v3443 = vpack.c.b16 %v3347, %v3341
        %v3444 = vpack.c.b16 %v3348, %v3342
        %v3445 = vpack.c.b16 %v3349, %v3343
        %v3446 = vpack.c.b16 %v3350, %v3344
        %v3447 = vpack.c.b16 %v3351, %v3345
        %v3640 = vunpack.c.l.b16 %v2968
        %v3641 = vunpack.c.l.b16 %v2969
        %v3642 = vunpack.c.l.b16 %v2970
        %v3643 = vunpack.c.l.b16 %v2971
        %v3644 = vunpack.c.l.b16 %v2972
        %v3645 = vunpack.c.l.b16 %v2973
        %v3646 = vunpack.c.l.b16 %v2974
        %v3647 = vunpack.c.l.b16 %v2975
        %v3648 = vunpack.c.l.b16 %v2976
        %v3649 = vunpack.c.l.b16 %v2977
        %v3650 = vunpack.c.l.b16 %v2978
        %v3651 = vunpack.c.l.b16 %v2979
        %v3652 = vunpack.c.l.b16 %v2980
        %v3653 = vunpack.c.l.b16 %v2981
        %v3654 = vunpack.c.l.b16 %v2982
        %v3655 = vunpack.c.l.b16 %v2983
        %v3656 = vunpack.c.l.b16 %v2984
        %v3657 = vunpack.c.l.b16 %v2985
        %v3658 = vunpack.c.l.b16 %v2986
        %v3659 = vunpack.c.l.b16 %v2987
        %v3660 = vunpack.c.l.b16 %v2988
        %v3661 = vunpack.c.l.b16 %v2989
        %v3662 = vunpack.c.l.b16 %v2990
        %v3663 = vunpack.c.l.b16 %v2991
        %v3664 = vunpack.c.l.b16 %v2992
        %v3665 = vunpack.c.l.b16 %v2993
        %v3666 = vunpack.c.l.b16 %v2994
        %v3667 = vunpack.c.l.b16 %v2995
        %v3668 = vunpack.c.l.b16 %v2996
        %v3669 = vunpack.c.l.b16 %v2997
        %v3670 = vunpack.c.l.b16 %v2998
        %v3671 = vunpack.c.l.b16 %v2999
        %v3672 = vunpack.c.l.b16 %v3000
        %v3673 = vunpack.c.l.b16 %v3001
        %v3674 = vunpack.c.l.b16 %v3002
        %v3675 = vunpack.c.l.b16 %v3003
        %v3676 = vunpack.c.l.b16 %v3004
        %v3677 = vunpack.c.l.b16 %v3005
        %v3678 = vunpack.c.l.b16 %v3006
        %v3679 = vunpack.c.l.b16 %v3007
        %v3680 = vunpack.c.l.b16 %v3008
        %v3681 = vunpack.c.l.b16 %v3009
        %v3682 = vunpack.c.l.b16 %v3010
        %v3683 = vunpack.c.l.b16 %v3011
        %v3684 = vunpack.c.l.b16 %v3012
        %v3685 = vunpack.c.l.b16 %v3013
        %v3686 = vunpack.c.l.b16 %v3014
        %v3687 = vunpack.c.l.b16 %v3015
        %v3688 = vunpack.c.l.b16 %v3016
        %v3689 = vunpack.c.l.b16 %v3017
        %v3690 = vunpack.c.l.b16 %v3018
        %v3691 = vunpack.c.l.b16 %v3019
        %v3692 = vunpack.c.l.b16 %v3020
        %v3693 = vunpack.c.l.b16 %v3021
        %v3694 = vunpack.c.l.b16 %v3022
        %v3695 = vunpack.c.l.b16 %v3023
        %v3696 = vunpack.c.l.b16 %v3024
        %v3697 = vunpack.c.l.b16 %v3025
        %v3698 = vunpack.c.l.b16 %v3026
        %v3699 = vunpack.c.l.b16 %v3027
        %v3700 = vunpack.c.l.b16 %v3028
        %v3701 = vunpack.c.l.b16 %v3029
        %v3702 = vunpack.c.l.b16 %v3030
        %v3703 = vunpack.c.l.b16 %v3031
        %v3704 = vunpack.c.l.b16 %v3032
        %v3705 = vunpack.c.l.b16 %v3033
        %v3706 = vunpack.c.l.b16 %v3034
        %v3707 = vunpack.c.l.b16 %v3035
        %v3708 = vunpack.c.l.b16 %v3036
        %v3709 = vunpack.c.l.b16 %v3037
        %v3710 = vunpack.c.l.b16 %v3038
        %v3711 = vunpack.c.l.b16 %v3039
        %v3712 = vunpack.c.l.b16 %v3040
        %v3713 = vunpack.c.l.b16 %v3041
        %v3714 = vunpack.c.l.b16 %v3042
        %v3715 = vunpack.c.l.b16 %v3043
        %v3716 = vunpack.c.l.b16 %v3044
        %v3717 = vunpack.c.l.b16 %v3045
        %v3718 = vunpack.c.l.b16 %v3046
        %v3719 = vunpack.c.l.b16 %v3047
        %v3720 = vunpack.c.l.b16 %v3048
        %v3721 = vunpack.c.l.b16 %v3049
        %v3722 = vunpack.c.l.b16 %v3050
        %v3723 = vunpack.c.l.b16 %v3051
        %v3724 = vunpack.c.l.b16 %v3052
        %v3725 = vunpack.c.l.b16 %v3053
        %v3726 = vunpack.c.l.b16 %v3054
        %v3727 = vunpack.c.l.b16 %v3055
        %v3728 = vunpack.c.l.b16 %v3056
        %v3729 = vunpack.c.l.b16 %v3057
        %v3730 = vunpack.c.l.b16 %v3058
        %v3731 = vunpack.c.l.b16 %v3059
        %v3732 = vunpack.c.l.b16 %v3060
        %v3733 = vunpack.c.l.b16 %v3061
        %v3734 = vunpack.c.l.b16 %v3062
        %v3735 = vunpack.c.l.b16 %v3063
        %v3736 = vpack.c.b16 %v3641, %v3640
        %v3737 = vpack.c.b16 %v3643, %v3642
        %v3738 = vpack.c.b16 %v3645, %v3644
        %v3739 = vpack.c.b16 %v3647, %v3646
        %v3740 = vpack.c.b16 %v3649, %v3648
        %v3741 = vpack.c.b16 %v3651, %v3650
        %v3742 = vpack.c.b16 %v3653, %v3652
        %v3743 = vpack.c.b16 %v3655, %v3654
        %v3744 = vpack.c.b16 %v3657, %v3656
        %v3745 = vpack.c.b16 %v3659, %v3658
        %v3746 = vpack.c.b16 %v3661, %v3660
        %v3747 = vpack.c.b16 %v3663, %v3662
        %v3748 = vpack.c.b16 %v3665, %v3664
        %v3749 = vpack.c.b16 %v3667, %v3666
        %v3750 = vpack.c.b16 %v3669, %v3668
        %v3751 = vpack.c.b16 %v3671, %v3670
        %v3752 = vpack.c.b16 %v3673, %v3672
        %v3753 = vpack.c.b16 %v3675, %v3674
        %v3754 = vpack.c.b16 %v3677, %v3676
        %v3755 = vpack.c.b16 %v3679, %v3678
        %v3756 = vpack.c.b16 %v3681, %v3680
        %v3757 = vpack.c.b16 %v3683, %v3682
        %v3758 = vpack.c.b16 %v3685, %v3684
        %v3759 = vpack.c.b16 %v3687, %v3686
        %v3760 = vpack.c.b16 %v3689, %v3688
        %v3761 = vpack.c.b16 %v3691, %v3690
        %v3762 = vpack.c.b16 %v3693, %v3692
        %v3763 = vpack.c.b16 %v3695, %v3694
        %v3764 = vpack.c.b16 %v3697, %v3696
        %v3765 = vpack.c.b16 %v3699, %v3698
        %v3766 = vpack.c.b16 %v3701, %v3700
        %v3767 = vpack.c.b16 %v3703, %v3702
        %v3768 = vpack.c.b16 %v3705, %v3704
        %v3769 = vpack.c.b16 %v3707, %v3706
        %v3770 = vpack.c.b16 %v3709, %v3708
        %v3771 = vpack.c.b16 %v3711, %v3710
        %v3772 = vpack.c.b16 %v3713, %v3712
        %v3773 = vpack.c.b16 %v3715, %v3714
        %v3774 = vpack.c.b16 %v3717, %v3716
        %v3775 = vpack.c.b16 %v3719, %v3718
        %v3776 = vpack.c.b16 %v3721, %v3720
        %v3777 = vpack.c.b16 %v3723, %v3722
        %v3778 = vpack.c.b16 %v3725, %v3724
        %v3779 = vpack.c.b16 %v3727, %v3726
        %v3780 = vpack.c.b16 %v3729, %v3728
        %v3781 = vpack.c.b16 %v3731, %v3730
        %v3782 = vpack.c.b16 %v3733, %v3732
        %v3783 = vpack.c.b16 %v3735, %v3734
        %3832 = vmatpush.bf16.msra.mxu0 %v3743
        %3833 = vmatpush.bf16.msra.mxu0 %v3742
        %3834 = vmatpush.bf16.msra.mxu0 %v3741
        %3835 = vmatpush.bf16.msra.mxu0 %v3740
        %3836 = vmatpush.bf16.msra.mxu0 %v3739
        %3837 = vmatpush.bf16.msra.mxu0 %v3738
        %3838 = vmatpush.bf16.msra.mxu0 %v3737
        %3839 = vmatpush.bf16.msra.mxu0 %v3736
        %3840 = vmatmul.bf16.gmra.mxu0 %v3352
        %v3841 = vpop.f32.mrf.mxu0
        %v3842 = vadd.f32 0.0, %v3841
        %v3843 = vpop.f32.mrf.mxu0
        %v3844 = vadd.f32 0.0, %v3843
        %3845 = vmatmul.bf16.gmra.mxu0 %v3358
        %v3846 = vpop.f32.mrf.mxu0
        %v3847 = vadd.f32 0.0, %v3846
        %v3848 = vpop.f32.mrf.mxu0
        %v3849 = vadd.f32 0.0, %v3848
        %3850 = vmatmul.bf16.gmra.mxu0 %v3364
        %v3851 = vpop.f32.mrf.mxu0
        %v3852 = vadd.f32 0.0, %v3851
        %v3853 = vpop.f32.mrf.mxu0
        %v3854 = vadd.f32 0.0, %v3853
        %3855 = vmatmul.bf16.gmra.mxu0 %v3370
        %v3856 = vpop.f32.mrf.mxu0
        %v3857 = vadd.f32 0.0, %v3856
        %v3858 = vpop.f32.mrf.mxu0
        %v3859 = vadd.f32 0.0, %v3858
        %3860 = vmatmul.bf16.gmra.mxu0 %v3376
        %v3861 = vpop.f32.mrf.mxu0
        %v3862 = vadd.f32 0.0, %v3861
        %v3863 = vpop.f32.mrf.mxu0
        %v3864 = vadd.f32 0.0, %v3863
        %3865 = vmatmul.bf16.gmra.mxu0 %v3382
        %v3866 = vpop.f32.mrf.mxu0
        %v3867 = vadd.f32 0.0, %v3866
        %v3868 = vpop.f32.mrf.mxu0
        %v3869 = vadd.f32 0.0, %v3868
        %3870 = vmatmul.bf16.gmra.mxu0 %v3388
        %v3871 = vpop.f32.mrf.mxu0
        %v3872 = vadd.f32 0.0, %v3871
        %v3873 = vpop.f32.mrf.mxu0
        %v3874 = vadd.f32 0.0, %v3873
        %3875 = vmatmul.bf16.gmra.mxu0 %v3394
        %v3876 = vpop.f32.mrf.mxu0
        %v3877 = vadd.f32 0.0, %v3876
        %v3878 = vpop.f32.mrf.mxu0
        %v3879 = vadd.f32 0.0, %v3878
        %3880 = vmatmul.bf16.gmra.mxu0 %v3400
        %v3881 = vpop.f32.mrf.mxu0
        %v3882 = vadd.f32 0.0, %v3881
        %v3883 = vpop.f32.mrf.mxu0
        %v3884 = vadd.f32 0.0, %v3883
        %3885 = vmatmul.bf16.gmra.mxu0 %v3406
        %v3886 = vpop.f32.mrf.mxu0
        %v3887 = vadd.f32 0.0, %v3886
        %v3888 = vpop.f32.mrf.mxu0
        %v3889 = vadd.f32 0.0, %v3888
        %3890 = vmatmul.bf16.gmra.mxu0 %v3412
        %v3891 = vpop.f32.mrf.mxu0
        %v3892 = vadd.f32 0.0, %v3891
        %v3893 = vpop.f32.mrf.mxu0
        %v3894 = vadd.f32 0.0, %v3893
        %3895 = vmatmul.bf16.gmra.mxu0 %v3418
        %v3896 = vpop.f32.mrf.mxu0
        %v3897 = vadd.f32 0.0, %v3896
        %v3898 = vpop.f32.mrf.mxu0
        %v3899 = vadd.f32 0.0, %v3898
        %3900 = vmatmul.bf16.gmra.mxu0 %v3424
        %v3901 = vpop.f32.mrf.mxu0
        %v3902 = vadd.f32 0.0, %v3901
        %v3903 = vpop.f32.mrf.mxu0
        %v3904 = vadd.f32 0.0, %v3903
        %3905 = vmatmul.bf16.gmra.mxu0 %v3430
        %v3906 = vpop.f32.mrf.mxu0
        %v3907 = vadd.f32 0.0, %v3906
        %v3908 = vpop.f32.mrf.mxu0
        %v3909 = vadd.f32 0.0, %v3908
        %3910 = vmatmul.bf16.gmra.mxu0 %v3436
        %v3911 = vpop.f32.mrf.mxu0
        %v3912 = vadd.f32 0.0, %v3911
        %v3913 = vpop.f32.mrf.mxu0
        %v3914 = vadd.f32 0.0, %v3913
        %3915 = vmatmul.bf16.gmra.mxu0 %v3442
        %v3916 = vpop.f32.mrf.mxu0
        %v3917 = vadd.f32 0.0, %v3916
        %v3918 = vpop.f32.mrf.mxu0
        %v3919 = vadd.f32 0.0, %v3918
        %3920 = vdwg.mxu0
        %3921 = vmatpush.bf16.msra.mxu0 %v3751
        %3922 = vmatpush.bf16.msra.mxu0 %v3750
        %3923 = vmatpush.bf16.msra.mxu0 %v3749
        %3924 = vmatpush.bf16.msra.mxu0 %v3748
        %3925 = vmatpush.bf16.msra.mxu0 %v3747
        %3926 = vmatpush.bf16.msra.mxu0 %v3746
        %3927 = vmatpush.bf16.msra.mxu0 %v3745
        %3928 = vmatpush.bf16.msra.mxu0 %v3744
        %3929 = vmatmul.bf16.gmra.mxu0 %v3353
        %v3930 = vpop.f32.mrf.mxu0
        %v3931 = vadd.f32 %v3842, %v3930
        %v3932 = vpop.f32.mrf.mxu0
        %v3933 = vadd.f32 %v3844, %v3932
        %3934 = vmatmul.bf16.gmra.mxu0 %v3359
        %v3935 = vpop.f32.mrf.mxu0
        %v3936 = vadd.f32 %v3847, %v3935
        %v3937 = vpop.f32.mrf.mxu0
        %v3938 = vadd.f32 %v3849, %v3937
        %3939 = vmatmul.bf16.gmra.mxu0 %v3365
        %v3940 = vpop.f32.mrf.mxu0
        %v3941 = vadd.f32 %v3852, %v3940
        %v3942 = vpop.f32.mrf.mxu0
        %v3943 = vadd.f32 %v3854, %v3942
        %3944 = vmatmul.bf16.gmra.mxu0 %v3371
        %v3945 = vpop.f32.mrf.mxu0
        %v3946 = vadd.f32 %v3857, %v3945
        %v3947 = vpop.f32.mrf.mxu0
        %v3948 = vadd.f32 %v3859, %v3947
        %3949 = vmatmul.bf16.gmra.mxu0 %v3377
        %v3950 = vpop.f32.mrf.mxu0
        %v3951 = vadd.f32 %v3862, %v3950
        %v3952 = vpop.f32.mrf.mxu0
        %v3953 = vadd.f32 %v3864, %v3952
        %3954 = vmatmul.bf16.gmra.mxu0 %v3383
        %v3955 = vpop.f32.mrf.mxu0
        %v3956 = vadd.f32 %v3867, %v3955
        %v3957 = vpop.f32.mrf.mxu0
        %v3958 = vadd.f32 %v3869, %v3957
        %3959 = vmatmul.bf16.gmra.mxu0 %v3389
        %v3960 = vpop.f32.mrf.mxu0
        %v3961 = vadd.f32 %v3872, %v3960
        %v3962 = vpop.f32.mrf.mxu0
        %v3963 = vadd.f32 %v3874, %v3962
        %3964 = vmatmul.bf16.gmra.mxu0 %v3395
        %v3965 = vpop.f32.mrf.mxu0
        %v3966 = vadd.f32 %v3877, %v3965
        %v3967 = vpop.f32.mrf.mxu0
        %v3968 = vadd.f32 %v3879, %v3967
        %3969 = vmatmul.bf16.gmra.mxu0 %v3401
        %v3970 = vpop.f32.mrf.mxu0
        %v3971 = vadd.f32 %v3882, %v3970
        %v3972 = vpop.f32.mrf.mxu0
        %v3973 = vadd.f32 %v3884, %v3972
        %3974 = vmatmul.bf16.gmra.mxu0 %v3407
        %v3975 = vpop.f32.mrf.mxu0
        %v3976 = vadd.f32 %v3887, %v3975
        %v3977 = vpop.f32.mrf.mxu0
        %v3978 = vadd.f32 %v3889, %v3977
        %3979 = vmatmul.bf16.gmra.mxu0 %v3413
        %v3980 = vpop.f32.mrf.mxu0
        %v3981 = vadd.f32 %v3892, %v3980
        %v3982 = vpop.f32.mrf.mxu0
        %v3983 = vadd.f32 %v3894, %v3982
        %3984 = vmatmul.bf16.gmra.mxu0 %v3419
        %v3985 = vpop.f32.mrf.mxu0
        %v3986 = vadd.f32 %v3897, %v3985
        %v3987 = vpop.f32.mrf.mxu0
        %v3988 = vadd.f32 %v3899, %v3987
        %3989 = vmatmul.bf16.gmra.mxu0 %v3425
        %v3990 = vpop.f32.mrf.mxu0
        %v3991 = vadd.f32 %v3902, %v3990
        %v3992 = vpop.f32.mrf.mxu0
        %v3993 = vadd.f32 %v3904, %v3992
        %3994 = vmatmul.bf16.gmra.mxu0 %v3431
        %v3995 = vpop.f32.mrf.mxu0
        %v3996 = vadd.f32 %v3907, %v3995
        %v3997 = vpop.f32.mrf.mxu0
        %v3998 = vadd.f32 %v3909, %v3997
        %3999 = vmatmul.bf16.gmra.mxu0 %v3437
        %v4000 = vpop.f32.mrf.mxu0
        %v4001 = vadd.f32 %v3912, %v4000
        %v4002 = vpop.f32.mrf.mxu0
        %v4003 = vadd.f32 %v3914, %v4002
        %4004 = vmatmul.bf16.gmra.mxu0 %v3443
        %v4005 = vpop.f32.mrf.mxu0
        %v4006 = vadd.f32 %v3917, %v4005
        %v4007 = vpop.f32.mrf.mxu0
        %v4008 = vadd.f32 %v3919, %v4007
        %4009 = vdwg.mxu0
        %4010 = vmatpush.bf16.msra.mxu0 %v3759
        %4011 = vmatpush.bf16.msra.mxu0 %v3758
        %4012 = vmatpush.bf16.msra.mxu0 %v3757
        %4013 = vmatpush.bf16.msra.mxu0 %v3756
        %4014 = vmatpush.bf16.msra.mxu0 %v3755
        %4015 = vmatpush.bf16.msra.mxu0 %v3754
        %4016 = vmatpush.bf16.msra.mxu0 %v3753
        %4017 = vmatpush.bf16.msra.mxu0 %v3752
        %4018 = vmatmul.bf16.gmra.mxu0 %v3354
        %v4019 = vpop.f32.mrf.mxu0
        %v4020 = vadd.f32 %v3931, %v4019
        %v4021 = vpop.f32.mrf.mxu0
        %v4022 = vadd.f32 %v3933, %v4021
        %4023 = vmatmul.bf16.gmra.mxu0 %v3360
        %v4024 = vpop.f32.mrf.mxu0
        %v4025 = vadd.f32 %v3936, %v4024
        %v4026 = vpop.f32.mrf.mxu0
        %v4027 = vadd.f32 %v3938, %v4026
        %4028 = vmatmul.bf16.gmra.mxu0 %v3366
        %v4029 = vpop.f32.mrf.mxu0
        %v4030 = vadd.f32 %v3941, %v4029
        %v4031 = vpop.f32.mrf.mxu0
        %v4032 = vadd.f32 %v3943, %v4031
        %4033 = vmatmul.bf16.gmra.mxu0 %v3372
        %v4034 = vpop.f32.mrf.mxu0
        %v4035 = vadd.f32 %v3946, %v4034
        %v4036 = vpop.f32.mrf.mxu0
        %v4037 = vadd.f32 %v3948, %v4036
        %4038 = vmatmul.bf16.gmra.mxu0 %v3378
        %v4039 = vpop.f32.mrf.mxu0
        %v4040 = vadd.f32 %v3951, %v4039
        %v4041 = vpop.f32.mrf.mxu0
        %v4042 = vadd.f32 %v3953, %v4041
        %4043 = vmatmul.bf16.gmra.mxu0 %v3384
        %v4044 = vpop.f32.mrf.mxu0
        %v4045 = vadd.f32 %v3956, %v4044
        %v4046 = vpop.f32.mrf.mxu0
        %v4047 = vadd.f32 %v3958, %v4046
        %4048 = vmatmul.bf16.gmra.mxu0 %v3390
        %v4049 = vpop.f32.mrf.mxu0
        %v4050 = vadd.f32 %v3961, %v4049
        %v4051 = vpop.f32.mrf.mxu0
        %v4052 = vadd.f32 %v3963, %v4051
        %4053 = vmatmul.bf16.gmra.mxu0 %v3396
        %v4054 = vpop.f32.mrf.mxu0
        %v4055 = vadd.f32 %v3966, %v4054
        %v4056 = vpop.f32.mrf.mxu0
        %v4057 = vadd.f32 %v3968, %v4056
        %4058 = vmatmul.bf16.gmra.mxu0 %v3402
        %v4059 = vpop.f32.mrf.mxu0
        %v4060 = vadd.f32 %v3971, %v4059
        %v4061 = vpop.f32.mrf.mxu0
        %v4062 = vadd.f32 %v3973, %v4061
        %4063 = vmatmul.bf16.gmra.mxu0 %v3408
        %v4064 = vpop.f32.mrf.mxu0
        %v4065 = vadd.f32 %v3976, %v4064
        %v4066 = vpop.f32.mrf.mxu0
        %v4067 = vadd.f32 %v3978, %v4066
        %4068 = vmatmul.bf16.gmra.mxu0 %v3414
        %v4069 = vpop.f32.mrf.mxu0
        %v4070 = vadd.f32 %v3981, %v4069
        %v4071 = vpop.f32.mrf.mxu0
        %v4072 = vadd.f32 %v3983, %v4071
        %4073 = vmatmul.bf16.gmra.mxu0 %v3420
        %v4074 = vpop.f32.mrf.mxu0
        %v4075 = vadd.f32 %v3986, %v4074
        %v4076 = vpop.f32.mrf.mxu0
        %v4077 = vadd.f32 %v3988, %v4076
        %4078 = vmatmul.bf16.gmra.mxu0 %v3426
        %v4079 = vpop.f32.mrf.mxu0
        %v4080 = vadd.f32 %v3991, %v4079
        %v4081 = vpop.f32.mrf.mxu0
        %v4082 = vadd.f32 %v3993, %v4081
        %4083 = vmatmul.bf16.gmra.mxu0 %v3432
        %v4084 = vpop.f32.mrf.mxu0
        %v4085 = vadd.f32 %v3996, %v4084
        %v4086 = vpop.f32.mrf.mxu0
        %v4087 = vadd.f32 %v3998, %v4086
        %4088 = vmatmul.bf16.gmra.mxu0 %v3438
        %v4089 = vpop.f32.mrf.mxu0
        %v4090 = vadd.f32 %v4001, %v4089
        %v4091 = vpop.f32.mrf.mxu0
        %v4092 = vadd.f32 %v4003, %v4091
        %4093 = vmatmul.bf16.gmra.mxu0 %v3444
        %v4094 = vpop.f32.mrf.mxu0
        %v4095 = vadd.f32 %v4006, %v4094
        %v4096 = vpop.f32.mrf.mxu0
        %v4097 = vadd.f32 %v4008, %v4096
        %4098 = vdwg.mxu0
        %4099 = vmatpush.bf16.msra.mxu0 %v3767
        %4100 = vmatpush.bf16.msra.mxu0 %v3766
        %4101 = vmatpush.bf16.msra.mxu0 %v3765
        %4102 = vmatpush.bf16.msra.mxu0 %v3764
        %4103 = vmatpush.bf16.msra.mxu0 %v3763
        %4104 = vmatpush.bf16.msra.mxu0 %v3762
        %4105 = vmatpush.bf16.msra.mxu0 %v3761
        %4106 = vmatpush.bf16.msra.mxu0 %v3760
        %4107 = vmatmul.bf16.gmra.mxu0 %v3355
        %v4108 = vpop.f32.mrf.mxu0
        %v4109 = vadd.f32 %v4020, %v4108
        %v4110 = vpop.f32.mrf.mxu0
        %v4111 = vadd.f32 %v4022, %v4110
        %4112 = vmatmul.bf16.gmra.mxu0 %v3361
        %v4113 = vpop.f32.mrf.mxu0
        %v4114 = vadd.f32 %v4025, %v4113
        %v4115 = vpop.f32.mrf.mxu0
        %v4116 = vadd.f32 %v4027, %v4115
        %4117 = vmatmul.bf16.gmra.mxu0 %v3367
        %v4118 = vpop.f32.mrf.mxu0
        %v4119 = vadd.f32 %v4030, %v4118
        %v4120 = vpop.f32.mrf.mxu0
        %v4121 = vadd.f32 %v4032, %v4120
        %4122 = vmatmul.bf16.gmra.mxu0 %v3373
        %v4123 = vpop.f32.mrf.mxu0
        %v4124 = vadd.f32 %v4035, %v4123
        %v4125 = vpop.f32.mrf.mxu0
        %v4126 = vadd.f32 %v4037, %v4125
        %4127 = vmatmul.bf16.gmra.mxu0 %v3379
        %v4128 = vpop.f32.mrf.mxu0
        %v4129 = vadd.f32 %v4040, %v4128
        %v4130 = vpop.f32.mrf.mxu0
        %v4131 = vadd.f32 %v4042, %v4130
        %4132 = vmatmul.bf16.gmra.mxu0 %v3385
        %v4133 = vpop.f32.mrf.mxu0
        %v4134 = vadd.f32 %v4045, %v4133
        %v4135 = vpop.f32.mrf.mxu0
        %v4136 = vadd.f32 %v4047, %v4135
        %4137 = vmatmul.bf16.gmra.mxu0 %v3391
        %v4138 = vpop.f32.mrf.mxu0
        %v4139 = vadd.f32 %v4050, %v4138
        %v4140 = vpop.f32.mrf.mxu0
        %v4141 = vadd.f32 %v4052, %v4140
        %4142 = vmatmul.bf16.gmra.mxu0 %v3397
        %v4143 = vpop.f32.mrf.mxu0
        %v4144 = vadd.f32 %v4055, %v4143
        %v4145 = vpop.f32.mrf.mxu0
        %v4146 = vadd.f32 %v4057, %v4145
        %4147 = vmatmul.bf16.gmra.mxu0 %v3403
        %v4148 = vpop.f32.mrf.mxu0
        %v4149 = vadd.f32 %v4060, %v4148
        %v4150 = vpop.f32.mrf.mxu0
        %v4151 = vadd.f32 %v4062, %v4150
        %4152 = vmatmul.bf16.gmra.mxu0 %v3409
        %v4153 = vpop.f32.mrf.mxu0
        %v4154 = vadd.f32 %v4065, %v4153
        %v4155 = vpop.f32.mrf.mxu0
        %v4156 = vadd.f32 %v4067, %v4155
        %4157 = vmatmul.bf16.gmra.mxu0 %v3415
        %v4158 = vpop.f32.mrf.mxu0
        %v4159 = vadd.f32 %v4070, %v4158
        %v4160 = vpop.f32.mrf.mxu0
        %v4161 = vadd.f32 %v4072, %v4160
        %4162 = vmatmul.bf16.gmra.mxu0 %v3421
        %v4163 = vpop.f32.mrf.mxu0
        %v4164 = vadd.f32 %v4075, %v4163
        %v4165 = vpop.f32.mrf.mxu0
        %v4166 = vadd.f32 %v4077, %v4165
        %4167 = vmatmul.bf16.gmra.mxu0 %v3427
        %v4168 = vpop.f32.mrf.mxu0
        %v4169 = vadd.f32 %v4080, %v4168
        %v4170 = vpop.f32.mrf.mxu0
        %v4171 = vadd.f32 %v4082, %v4170
        %4172 = vmatmul.bf16.gmra.mxu0 %v3433
        %v4173 = vpop.f32.mrf.mxu0
        %v4174 = vadd.f32 %v4085, %v4173
        %v4175 = vpop.f32.mrf.mxu0
        %v4176 = vadd.f32 %v4087, %v4175
        %4177 = vmatmul.bf16.gmra.mxu0 %v3439
        %v4178 = vpop.f32.mrf.mxu0
        %v4179 = vadd.f32 %v4090, %v4178
        %v4180 = vpop.f32.mrf.mxu0
        %v4181 = vadd.f32 %v4092, %v4180
        %4182 = vmatmul.bf16.gmra.mxu0 %v3445
        %v4183 = vpop.f32.mrf.mxu0
        %v4184 = vadd.f32 %v4095, %v4183
        %v4185 = vpop.f32.mrf.mxu0
        %v4186 = vadd.f32 %v4097, %v4185
        %4187 = vdwg.mxu0
        %4188 = vmatpush.bf16.msra.mxu0 %v3775
        %4189 = vmatpush.bf16.msra.mxu0 %v3774
        %4190 = vmatpush.bf16.msra.mxu0 %v3773
        %4191 = vmatpush.bf16.msra.mxu0 %v3772
        %4192 = vmatpush.bf16.msra.mxu0 %v3771
        %4193 = vmatpush.bf16.msra.mxu0 %v3770
        %4194 = vmatpush.bf16.msra.mxu0 %v3769
        %4195 = vmatpush.bf16.msra.mxu0 %v3768
        %4196 = vmatmul.bf16.gmra.mxu0 %v3356
        %v4197 = vpop.f32.mrf.mxu0
        %v4198 = vadd.f32 %v4109, %v4197
        %v4199 = vpop.f32.mrf.mxu0
        %v4200 = vadd.f32 %v4111, %v4199
        %4201 = vmatmul.bf16.gmra.mxu0 %v3362
        %v4202 = vpop.f32.mrf.mxu0
        %v4203 = vadd.f32 %v4114, %v4202
        %v4204 = vpop.f32.mrf.mxu0
        %v4205 = vadd.f32 %v4116, %v4204
        %4206 = vmatmul.bf16.gmra.mxu0 %v3368
        %v4207 = vpop.f32.mrf.mxu0
        %v4208 = vadd.f32 %v4119, %v4207
        %v4209 = vpop.f32.mrf.mxu0
        %v4210 = vadd.f32 %v4121, %v4209
        %4211 = vmatmul.bf16.gmra.mxu0 %v3374
        %v4212 = vpop.f32.mrf.mxu0
        %v4213 = vadd.f32 %v4124, %v4212
        %v4214 = vpop.f32.mrf.mxu0
        %v4215 = vadd.f32 %v4126, %v4214
        %4216 = vmatmul.bf16.gmra.mxu0 %v3380
        %v4217 = vpop.f32.mrf.mxu0
        %v4218 = vadd.f32 %v4129, %v4217
        %v4219 = vpop.f32.mrf.mxu0
        %v4220 = vadd.f32 %v4131, %v4219
        %4221 = vmatmul.bf16.gmra.mxu0 %v3386
        %v4222 = vpop.f32.mrf.mxu0
        %v4223 = vadd.f32 %v4134, %v4222
        %v4224 = vpop.f32.mrf.mxu0
        %v4225 = vadd.f32 %v4136, %v4224
        %4226 = vmatmul.bf16.gmra.mxu0 %v3392
        %v4227 = vpop.f32.mrf.mxu0
        %v4228 = vadd.f32 %v4139, %v4227
        %v4229 = vpop.f32.mrf.mxu0
        %v4230 = vadd.f32 %v4141, %v4229
        %4231 = vmatmul.bf16.gmra.mxu0 %v3398
        %v4232 = vpop.f32.mrf.mxu0
        %v4233 = vadd.f32 %v4144, %v4232
        %v4234 = vpop.f32.mrf.mxu0
        %v4235 = vadd.f32 %v4146, %v4234
        %4236 = vmatmul.bf16.gmra.mxu0 %v3404
        %v4237 = vpop.f32.mrf.mxu0
        %v4238 = vadd.f32 %v4149, %v4237
        %v4239 = vpop.f32.mrf.mxu0
        %v4240 = vadd.f32 %v4151, %v4239
        %4241 = vmatmul.bf16.gmra.mxu0 %v3410
        %v4242 = vpop.f32.mrf.mxu0
        %v4243 = vadd.f32 %v4154, %v4242
        %v4244 = vpop.f32.mrf.mxu0
        %v4245 = vadd.f32 %v4156, %v4244
        %4246 = vmatmul.bf16.gmra.mxu0 %v3416
        %v4247 = vpop.f32.mrf.mxu0
        %v4248 = vadd.f32 %v4159, %v4247
        %v4249 = vpop.f32.mrf.mxu0
        %v4250 = vadd.f32 %v4161, %v4249
        %4251 = vmatmul.bf16.gmra.mxu0 %v3422
        %v4252 = vpop.f32.mrf.mxu0
        %v4253 = vadd.f32 %v4164, %v4252
        %v4254 = vpop.f32.mrf.mxu0
        %v4255 = vadd.f32 %v4166, %v4254
        %4256 = vmatmul.bf16.gmra.mxu0 %v3428
        %v4257 = vpop.f32.mrf.mxu0
        %v4258 = vadd.f32 %v4169, %v4257
        %v4259 = vpop.f32.mrf.mxu0
        %v4260 = vadd.f32 %v4171, %v4259
        %4261 = vmatmul.bf16.gmra.mxu0 %v3434
        %v4262 = vpop.f32.mrf.mxu0
        %v4263 = vadd.f32 %v4174, %v4262
        %v4264 = vpop.f32.mrf.mxu0
        %v4265 = vadd.f32 %v4176, %v4264
        %4266 = vmatmul.bf16.gmra.mxu0 %v3440
        %v4267 = vpop.f32.mrf.mxu0
        %v4268 = vadd.f32 %v4179, %v4267
        %v4269 = vpop.f32.mrf.mxu0
        %v4270 = vadd.f32 %v4181, %v4269
        %4271 = vmatmul.bf16.gmra.mxu0 %v3446
        %v4272 = vpop.f32.mrf.mxu0
        %v4273 = vadd.f32 %v4184, %v4272
        %v4274 = vpop.f32.mrf.mxu0
        %v4275 = vadd.f32 %v4186, %v4274
        %4276 = vdwg.mxu0
        %4277 = vmatpush.bf16.msra.mxu0 %v3783
        %4278 = vmatpush.bf16.msra.mxu0 %v3782
        %4279 = vmatpush.bf16.msra.mxu0 %v3781
        %4280 = vmatpush.bf16.msra.mxu0 %v3780
        %4281 = vmatpush.bf16.msra.mxu0 %v3779
        %4282 = vmatpush.bf16.msra.mxu0 %v3778
        %4283 = vmatpush.bf16.msra.mxu0 %v3777
        %4284 = vmatpush.bf16.msra.mxu0 %v3776
        %4285 = vmatmul.bf16.gmra.mxu0 %v3357
        %v4286 = vpop.f32.mrf.mxu0
        %v4287 = vadd.f32 %v4198, %v4286
        %v4288 = vpop.f32.mrf.mxu0
        %v4289 = vadd.f32 %v4200, %v4288
        %4290 = vmatmul.bf16.gmra.mxu0 %v3363
        %v4291 = vpop.f32.mrf.mxu0
        %v4292 = vadd.f32 %v4203, %v4291
        %v4293 = vpop.f32.mrf.mxu0
        %v4294 = vadd.f32 %v4205, %v4293
        %4295 = vmatmul.bf16.gmra.mxu0 %v3369
        %v4296 = vpop.f32.mrf.mxu0
        %v4297 = vadd.f32 %v4208, %v4296
        %v4298 = vpop.f32.mrf.mxu0
        %v4299 = vadd.f32 %v4210, %v4298
        %4300 = vmatmul.bf16.gmra.mxu0 %v3375
        %v4301 = vpop.f32.mrf.mxu0
        %v4302 = vadd.f32 %v4213, %v4301
        %v4303 = vpop.f32.mrf.mxu0
        %v4304 = vadd.f32 %v4215, %v4303
        %4305 = vmatmul.bf16.gmra.mxu0 %v3381
        %v4306 = vpop.f32.mrf.mxu0
        %v4307 = vadd.f32 %v4218, %v4306
        %v4308 = vpop.f32.mrf.mxu0
        %v4309 = vadd.f32 %v4220, %v4308
        %4310 = vmatmul.bf16.gmra.mxu0 %v3387
        %v4311 = vpop.f32.mrf.mxu0
        %v4312 = vadd.f32 %v4223, %v4311
        %v4313 = vpop.f32.mrf.mxu0
        %v4314 = vadd.f32 %v4225, %v4313
        %4315 = vmatmul.bf16.gmra.mxu0 %v3393
        %v4316 = vpop.f32.mrf.mxu0
        %v4317 = vadd.f32 %v4228, %v4316
        %v4318 = vpop.f32.mrf.mxu0
        %v4319 = vadd.f32 %v4230, %v4318
        %4320 = vmatmul.bf16.gmra.mxu0 %v3399
        %v4321 = vpop.f32.mrf.mxu0
        %v4322 = vadd.f32 %v4233, %v4321
        %v4323 = vpop.f32.mrf.mxu0
        %v4324 = vadd.f32 %v4235, %v4323
        %4325 = vmatmul.bf16.gmra.mxu0 %v3405
        %v4326 = vpop.f32.mrf.mxu0
        %v4327 = vadd.f32 %v4238, %v4326
        %v4328 = vpop.f32.mrf.mxu0
        %v4329 = vadd.f32 %v4240, %v4328
        %4330 = vmatmul.bf16.gmra.mxu0 %v3411
        %v4331 = vpop.f32.mrf.mxu0
        %v4332 = vadd.f32 %v4243, %v4331
        %v4333 = vpop.f32.mrf.mxu0
        %v4334 = vadd.f32 %v4245, %v4333
        %4335 = vmatmul.bf16.gmra.mxu0 %v3417
        %v4336 = vpop.f32.mrf.mxu0
        %v4337 = vadd.f32 %v4248, %v4336
        %v4338 = vpop.f32.mrf.mxu0
        %v4339 = vadd.f32 %v4250, %v4338
        %4340 = vmatmul.bf16.gmra.mxu0 %v3423
        %v4341 = vpop.f32.mrf.mxu0
        %v4342 = vadd.f32 %v4253, %v4341
        %v4343 = vpop.f32.mrf.mxu0
        %v4344 = vadd.f32 %v4255, %v4343
        %4345 = vmatmul.bf16.gmra.mxu0 %v3429
        %v4346 = vpop.f32.mrf.mxu0
        %v4347 = vadd.f32 %v4258, %v4346
        %v4348 = vpop.f32.mrf.mxu0
        %v4349 = vadd.f32 %v4260, %v4348
        %4350 = vmatmul.bf16.gmra.mxu0 %v3435
        %v4351 = vpop.f32.mrf.mxu0
        %v4352 = vadd.f32 %v4263, %v4351
        %v4353 = vpop.f32.mrf.mxu0
        %v4354 = vadd.f32 %v4265, %v4353
        %4355 = vmatmul.bf16.gmra.mxu0 %v3441
        %v4356 = vpop.f32.mrf.mxu0
        %v4357 = vadd.f32 %v4268, %v4356
        %v4358 = vpop.f32.mrf.mxu0
        %v4359 = vadd.f32 %v4270, %v4358
        %4360 = vmatmul.bf16.gmra.mxu0 %v3447
        %v4361 = vpop.f32.mrf.mxu0
        %v4362 = vadd.f32 %v4273, %v4361
        %v4363 = vpop.f32.mrf.mxu0
        %v4364 = vadd.f32 %v4275, %v4363
        %4365 = vdwg.mxu0
        %v4462 = vunpack.c.l.b16 %v2679
        %v4463 = vunpack.c.h.b16 %v2679
        %v4464 = vunpack.c.l.b16 %v2680
        %v4465 = vunpack.c.h.b16 %v2680
        %v4466 = vunpack.c.l.b16 %v2681
        %v4467 = vunpack.c.h.b16 %v2681
        %v4468 = vunpack.c.l.b16 %v2682
        %v4469 = vunpack.c.h.b16 %v2682
        %v4470 = vunpack.c.l.b16 %v2683
        %v4471 = vunpack.c.h.b16 %v2683
        %v4472 = vunpack.c.l.b16 %v2684
        %v4473 = vunpack.c.h.b16 %v2684
        %v4474 = vunpack.c.l.b16 %v2685
        %v4475 = vunpack.c.h.b16 %v2685
        %v4476 = vunpack.c.l.b16 %v2686
        %v4477 = vunpack.c.h.b16 %v2686
        %v4478 = vunpack.c.l.b16 %v2687
        %v4479 = vunpack.c.h.b16 %v2687
        %v4480 = vunpack.c.l.b16 %v2688
        %v4481 = vunpack.c.h.b16 %v2688
        %v4482 = vunpack.c.l.b16 %v2689
        %v4483 = vunpack.c.h.b16 %v2689
        %v4484 = vunpack.c.l.b16 %v2690
        %v4485 = vunpack.c.h.b16 %v2690
        %v4486 = vunpack.c.l.b16 %v2691
        %v4487 = vunpack.c.h.b16 %v2691
        %v4488 = vunpack.c.l.b16 %v2692
        %v4489 = vunpack.c.h.b16 %v2692
        %v4490 = vunpack.c.l.b16 %v2693
        %v4491 = vunpack.c.h.b16 %v2693
        %v4492 = vunpack.c.l.b16 %v2694
        %v4493 = vunpack.c.h.b16 %v2694
        %v4494 = vunpack.c.l.b16 %v2695
        %v4495 = vunpack.c.h.b16 %v2695
        %v4496 = vunpack.c.l.b16 %v2696
        %v4497 = vunpack.c.h.b16 %v2696
        %v4498 = vunpack.c.l.b16 %v2697
        %v4499 = vunpack.c.h.b16 %v2697
        %v4500 = vunpack.c.l.b16 %v2698
        %v4501 = vunpack.c.h.b16 %v2698
        %v4502 = vunpack.c.l.b16 %v2699
        %v4503 = vunpack.c.h.b16 %v2699
        %v4504 = vunpack.c.l.b16 %v2700
        %v4505 = vunpack.c.h.b16 %v2700
        %v4506 = vunpack.c.l.b16 %v2701
        %v4507 = vunpack.c.h.b16 %v2701
        %v4508 = vunpack.c.l.b16 %v2702
        %v4509 = vunpack.c.h.b16 %v2702
        %v4510 = vunpack.c.l.b16 %v2703
        %v4511 = vunpack.c.h.b16 %v2703
        %v4512 = vunpack.c.l.b16 %v2704
        %v4513 = vunpack.c.h.b16 %v2704
        %v4514 = vunpack.c.l.b16 %v2705
        %v4515 = vunpack.c.h.b16 %v2705
        %v4516 = vunpack.c.l.b16 %v2706
        %v4517 = vunpack.c.h.b16 %v2706
        %v4518 = vunpack.c.l.b16 %v2707
        %v4519 = vunpack.c.h.b16 %v2707
        %v4520 = vunpack.c.l.b16 %v2708
        %v4521 = vunpack.c.h.b16 %v2708
        %v4522 = vunpack.c.l.b16 %v2709
        %v4523 = vunpack.c.h.b16 %v2709
        %v4524 = vunpack.c.l.b16 %v2710
        %v4525 = vunpack.c.h.b16 %v2710
        %v4526 = vunpack.c.l.b16 %v2711
        %v4527 = vunpack.c.h.b16 %v2711
        %v4528 = vunpack.c.l.b16 %v2712
        %v4529 = vunpack.c.h.b16 %v2712
        %v4530 = vunpack.c.l.b16 %v2713
        %v4531 = vunpack.c.h.b16 %v2713
        %v4532 = vunpack.c.l.b16 %v2714
        %v4533 = vunpack.c.h.b16 %v2714
        %v4534 = vunpack.c.l.b16 %v2715
        %v4535 = vunpack.c.h.b16 %v2715
        %v4536 = vunpack.c.l.b16 %v2716
        %v4537 = vunpack.c.h.b16 %v2716
        %v4538 = vunpack.c.l.b16 %v2717
        %v4539 = vunpack.c.h.b16 %v2717
        %v4540 = vunpack.c.l.b16 %v2718
        %v4541 = vunpack.c.h.b16 %v2718
        %v4542 = vunpack.c.l.b16 %v2719
        %v4543 = vunpack.c.h.b16 %v2719
        %v4544 = vunpack.c.l.b16 %v2720
        %v4545 = vunpack.c.h.b16 %v2720
        %v4546 = vunpack.c.l.b16 %v2721
        %v4547 = vunpack.c.h.b16 %v2721
        %v4548 = vunpack.c.l.b16 %v2722
        %v4549 = vunpack.c.h.b16 %v2722
        %v4550 = vunpack.c.l.b16 %v2723
        %v4551 = vunpack.c.h.b16 %v2723
        %v4552 = vunpack.c.l.b16 %v2724
        %v4553 = vunpack.c.h.b16 %v2724
        %v4554 = vunpack.c.l.b16 %v2725
        %v4555 = vunpack.c.h.b16 %v2725
        %v4556 = vunpack.c.l.b16 %v2726
        %v4557 = vunpack.c.h.b16 %v2726
        %v4558 = vunpack.c.l.b16 %v2727
        %v4559 = vunpack.c.h.b16 %v2727
        %v4560 = vunpack.c.l.b16 %v2728
        %v4561 = vunpack.c.h.b16 %v2728
        %v4562 = vunpack.c.l.b16 %v2729
        %v4563 = vunpack.c.h.b16 %v2729
        %v4564 = vunpack.c.l.b16 %v2730
        %v4565 = vunpack.c.h.b16 %v2730
        %v4566 = vunpack.c.l.b16 %v2731
        %v4567 = vunpack.c.h.b16 %v2731
        %v4568 = vunpack.c.l.b16 %v2732
        %v4569 = vunpack.c.h.b16 %v2732
        %v4570 = vunpack.c.l.b16 %v2733
        %v4571 = vunpack.c.h.b16 %v2733
        %v4572 = vunpack.c.l.b16 %v2734
        %v4573 = vunpack.c.h.b16 %v2734
        %v4574 = vunpack.c.l.b16 %v2735
        %v4575 = vunpack.c.h.b16 %v2735
        %v4576 = vunpack.c.l.b16 %v2736
        %v4577 = vunpack.c.h.b16 %v2736
        %v4578 = vunpack.c.l.b16 %v2737
        %v4579 = vunpack.c.h.b16 %v2737
        %v4580 = vunpack.c.l.b16 %v2738
        %v4581 = vunpack.c.h.b16 %v2738
        %v4582 = vunpack.c.l.b16 %v2739
        %v4583 = vunpack.c.h.b16 %v2739
        %v4584 = vunpack.c.l.b16 %v2740
        %v4585 = vunpack.c.h.b16 %v2740
        %v4586 = vunpack.c.l.b16 %v2741
        %v4587 = vunpack.c.h.b16 %v2741
        %v4588 = vunpack.c.l.b16 %v2742
        %v4589 = vunpack.c.h.b16 %v2742
        %v4590 = vunpack.c.l.b16 %v2743
        %v4591 = vunpack.c.h.b16 %v2743
        %v4592 = vunpack.c.l.b16 %v2744
        %v4593 = vunpack.c.h.b16 %v2744
        %v4594 = vunpack.c.l.b16 %v2745
        %v4595 = vunpack.c.h.b16 %v2745
        %v4596 = vunpack.c.l.b16 %v2746
        %v4597 = vunpack.c.h.b16 %v2746
        %v4598 = vunpack.c.l.b16 %v2747
        %v4599 = vunpack.c.h.b16 %v2747
        %v4600 = vunpack.c.l.b16 %v2748
        %v4601 = vunpack.c.h.b16 %v2748
        %v4602 = vunpack.c.l.b16 %v2749
        %v4603 = vunpack.c.h.b16 %v2749
        %v4604 = vunpack.c.l.b16 %v2750
        %v4605 = vunpack.c.h.b16 %v2750
        %v4606 = vunpack.c.l.b16 %v2751
        %v4607 = vunpack.c.h.b16 %v2751
        %v4608 = vunpack.c.l.b16 %v2752
        %v4609 = vunpack.c.h.b16 %v2752
        %v4610 = vunpack.c.l.b16 %v2753
        %v4611 = vunpack.c.h.b16 %v2753
        %v4612 = vunpack.c.l.b16 %v2754
        %v4613 = vunpack.c.h.b16 %v2754
        %v4614 = vunpack.c.l.b16 %v2755
        %v4615 = vunpack.c.h.b16 %v2755
        %v4616 = vunpack.c.l.b16 %v2756
        %v4617 = vunpack.c.h.b16 %v2756
        %v4618 = vunpack.c.l.b16 %v2757
        %v4619 = vunpack.c.h.b16 %v2757
        %v4620 = vunpack.c.l.b16 %v2758
        %v4621 = vunpack.c.h.b16 %v2758
        %v4622 = vunpack.c.l.b16 %v2759
        %v4623 = vunpack.c.h.b16 %v2759
        %v4624 = vunpack.c.l.b16 %v2760
        %v4625 = vunpack.c.h.b16 %v2760
        %v4626 = vunpack.c.l.b16 %v2761
        %v4627 = vunpack.c.h.b16 %v2761
        %v4628 = vunpack.c.l.b16 %v2762
        %v4629 = vunpack.c.h.b16 %v2762
        %v4630 = vunpack.c.l.b16 %v2763
        %v4631 = vunpack.c.h.b16 %v2763
        %v4632 = vunpack.c.l.b16 %v2764
        %v4633 = vunpack.c.h.b16 %v2764
        %v4634 = vunpack.c.l.b16 %v2765
        %v4635 = vunpack.c.h.b16 %v2765
        %v4636 = vunpack.c.l.b16 %v2766
        %v4637 = vunpack.c.h.b16 %v2766
        %v4638 = vunpack.c.l.b16 %v2767
        %v4639 = vunpack.c.h.b16 %v2767
        %v4640 = vunpack.c.l.b16 %v2768
        %v4641 = vunpack.c.h.b16 %v2768
        %v4642 = vunpack.c.l.b16 %v2769
        %v4643 = vunpack.c.h.b16 %v2769
        %v4644 = vunpack.c.l.b16 %v2770
        %v4645 = vunpack.c.h.b16 %v2770
        %v4646 = vunpack.c.l.b16 %v2771
        %v4647 = vunpack.c.h.b16 %v2771
        %v4648 = vunpack.c.l.b16 %v2772
        %v4649 = vunpack.c.h.b16 %v2772
        %v4650 = vunpack.c.l.b16 %v2773
        %v4651 = vunpack.c.h.b16 %v2773
        %v4652 = vunpack.c.l.b16 %v2774
        %v4653 = vunpack.c.h.b16 %v2774
        %v4654 = vpack.c.b16 %v4468, %v4462
        %v4655 = vpack.c.b16 %v4469, %v4463
        %v4656 = vpack.c.b16 %v4470, %v4464
        %v4657 = vpack.c.b16 %v4471, %v4465
        %v4658 = vpack.c.b16 %v4472, %v4466
        %v4659 = vpack.c.b16 %v4473, %v4467
        %v4660 = vpack.c.b16 %v4480, %v4474
        %v4661 = vpack.c.b16 %v4481, %v4475
        %v4662 = vpack.c.b16 %v4482, %v4476
        %v4663 = vpack.c.b16 %v4483, %v4477
        %v4664 = vpack.c.b16 %v4484, %v4478
        %v4665 = vpack.c.b16 %v4485, %v4479
        %v4666 = vpack.c.b16 %v4492, %v4486
        %v4667 = vpack.c.b16 %v4493, %v4487
        %v4668 = vpack.c.b16 %v4494, %v4488
        %v4669 = vpack.c.b16 %v4495, %v4489
        %v4670 = vpack.c.b16 %v4496, %v4490
        %v4671 = vpack.c.b16 %v4497, %v4491
        %v4672 = vpack.c.b16 %v4504, %v4498
        %v4673 = vpack.c.b16 %v4505, %v4499
        %v4674 = vpack.c.b16 %v4506, %v4500
        %v4675 = vpack.c.b16 %v4507, %v4501
        %v4676 = vpack.c.b16 %v4508, %v4502
        %v4677 = vpack.c.b16 %v4509, %v4503
        %v4678 = vpack.c.b16 %v4516, %v4510
        %v4679 = vpack.c.b16 %v4517, %v4511
        %v4680 = vpack.c.b16 %v4518, %v4512
        %v4681 = vpack.c.b16 %v4519, %v4513
        %v4682 = vpack.c.b16 %v4520, %v4514
        %v4683 = vpack.c.b16 %v4521, %v4515
        %v4684 = vpack.c.b16 %v4528, %v4522
        %v4685 = vpack.c.b16 %v4529, %v4523
        %v4686 = vpack.c.b16 %v4530, %v4524
        %v4687 = vpack.c.b16 %v4531, %v4525
        %v4688 = vpack.c.b16 %v4532, %v4526
        %v4689 = vpack.c.b16 %v4533, %v4527
        %v4690 = vpack.c.b16 %v4540, %v4534
        %v4691 = vpack.c.b16 %v4541, %v4535
        %v4692 = vpack.c.b16 %v4542, %v4536
        %v4693 = vpack.c.b16 %v4543, %v4537
        %v4694 = vpack.c.b16 %v4544, %v4538
        %v4695 = vpack.c.b16 %v4545, %v4539
        %v4696 = vpack.c.b16 %v4552, %v4546
        %v4697 = vpack.c.b16 %v4553, %v4547
        %v4698 = vpack.c.b16 %v4554, %v4548
        %v4699 = vpack.c.b16 %v4555, %v4549
        %v4700 = vpack.c.b16 %v4556, %v4550
        %v4701 = vpack.c.b16 %v4557, %v4551
        %v4702 = vpack.c.b16 %v4564, %v4558
        %v4703 = vpack.c.b16 %v4565, %v4559
        %v4704 = vpack.c.b16 %v4566, %v4560
        %v4705 = vpack.c.b16 %v4567, %v4561
        %v4706 = vpack.c.b16 %v4568, %v4562
        %v4707 = vpack.c.b16 %v4569, %v4563
        %v4708 = vpack.c.b16 %v4576, %v4570
        %v4709 = vpack.c.b16 %v4577, %v4571
        %v4710 = vpack.c.b16 %v4578, %v4572
        %v4711 = vpack.c.b16 %v4579, %v4573
        %v4712 = vpack.c.b16 %v4580, %v4574
        %v4713 = vpack.c.b16 %v4581, %v4575
        %v4714 = vpack.c.b16 %v4588, %v4582
        %v4715 = vpack.c.b16 %v4589, %v4583
        %v4716 = vpack.c.b16 %v4590, %v4584
        %v4717 = vpack.c.b16 %v4591, %v4585
        %v4718 = vpack.c.b16 %v4592, %v4586
        %v4719 = vpack.c.b16 %v4593, %v4587
        %v4720 = vpack.c.b16 %v4600, %v4594
        %v4721 = vpack.c.b16 %v4601, %v4595
        %v4722 = vpack.c.b16 %v4602, %v4596
        %v4723 = vpack.c.b16 %v4603, %v4597
        %v4724 = vpack.c.b16 %v4604, %v4598
        %v4725 = vpack.c.b16 %v4605, %v4599
        %v4726 = vpack.c.b16 %v4612, %v4606
        %v4727 = vpack.c.b16 %v4613, %v4607
        %v4728 = vpack.c.b16 %v4614, %v4608
        %v4729 = vpack.c.b16 %v4615, %v4609
        %v4730 = vpack.c.b16 %v4616, %v4610
        %v4731 = vpack.c.b16 %v4617, %v4611
        %v4732 = vpack.c.b16 %v4624, %v4618
        %v4733 = vpack.c.b16 %v4625, %v4619
        %v4734 = vpack.c.b16 %v4626, %v4620
        %v4735 = vpack.c.b16 %v4627, %v4621
        %v4736 = vpack.c.b16 %v4628, %v4622
        %v4737 = vpack.c.b16 %v4629, %v4623
        %v4738 = vpack.c.b16 %v4636, %v4630
        %v4739 = vpack.c.b16 %v4637, %v4631
        %v4740 = vpack.c.b16 %v4638, %v4632
        %v4741 = vpack.c.b16 %v4639, %v4633
        %v4742 = vpack.c.b16 %v4640, %v4634
        %v4743 = vpack.c.b16 %v4641, %v4635
        %v4744 = vpack.c.b16 %v4648, %v4642
        %v4745 = vpack.c.b16 %v4649, %v4643
        %v4746 = vpack.c.b16 %v4650, %v4644
        %v4747 = vpack.c.b16 %v4651, %v4645
        %v4748 = vpack.c.b16 %v4652, %v4646
        %v4749 = vpack.c.b16 %v4653, %v4647
        %v4942 = vunpack.c.l.b16 %v2775
        %v4943 = vunpack.c.l.b16 %v2776
        %v4944 = vunpack.c.l.b16 %v2777
        %v4945 = vunpack.c.l.b16 %v2778
        %v4946 = vunpack.c.l.b16 %v2779
        %v4947 = vunpack.c.l.b16 %v2780
        %v4948 = vunpack.c.l.b16 %v2781
        %v4949 = vunpack.c.l.b16 %v2782
        %v4950 = vunpack.c.l.b16 %v2783
        %v4951 = vunpack.c.l.b16 %v2784
        %v4952 = vunpack.c.l.b16 %v2785
        %v4953 = vunpack.c.l.b16 %v2786
        %v4954 = vunpack.c.l.b16 %v2787
        %v4955 = vunpack.c.l.b16 %v2788
        %v4956 = vunpack.c.l.b16 %v2789
        %v4957 = vunpack.c.l.b16 %v2790
        %v4958 = vunpack.c.l.b16 %v2791
        %v4959 = vunpack.c.l.b16 %v2792
        %v4960 = vunpack.c.l.b16 %v2793
        %v4961 = vunpack.c.l.b16 %v2794
        %v4962 = vunpack.c.l.b16 %v2795
        %v4963 = vunpack.c.l.b16 %v2796
        %v4964 = vunpack.c.l.b16 %v2797
        %v4965 = vunpack.c.l.b16 %v2798
        %v4966 = vunpack.c.l.b16 %v2799
        %v4967 = vunpack.c.l.b16 %v2800
        %v4968 = vunpack.c.l.b16 %v2801
        %v4969 = vunpack.c.l.b16 %v2802
        %v4970 = vunpack.c.l.b16 %v2803
        %v4971 = vunpack.c.l.b16 %v2804
        %v4972 = vunpack.c.l.b16 %v2805
        %v4973 = vunpack.c.l.b16 %v2806
        %v4974 = vunpack.c.l.b16 %v2807
        %v4975 = vunpack.c.l.b16 %v2808
        %v4976 = vunpack.c.l.b16 %v2809
        %v4977 = vunpack.c.l.b16 %v2810
        %v4978 = vunpack.c.l.b16 %v2811
        %v4979 = vunpack.c.l.b16 %v2812
        %v4980 = vunpack.c.l.b16 %v2813
        %v4981 = vunpack.c.l.b16 %v2814
        %v4982 = vunpack.c.l.b16 %v2815
        %v4983 = vunpack.c.l.b16 %v2816
        %v4984 = vunpack.c.l.b16 %v2817
        %v4985 = vunpack.c.l.b16 %v2818
        %v4986 = vunpack.c.l.b16 %v2819
        %v4987 = vunpack.c.l.b16 %v2820
        %v4988 = vunpack.c.l.b16 %v2821
        %v4989 = vunpack.c.l.b16 %v2822
        %v4990 = vunpack.c.l.b16 %v2823
        %v4991 = vunpack.c.l.b16 %v2824
        %v4992 = vunpack.c.l.b16 %v2825
        %v4993 = vunpack.c.l.b16 %v2826
        %v4994 = vunpack.c.l.b16 %v2827
        %v4995 = vunpack.c.l.b16 %v2828
        %v4996 = vunpack.c.l.b16 %v2829
        %v4997 = vunpack.c.l.b16 %v2830
        %v4998 = vunpack.c.l.b16 %v2831
        %v4999 = vunpack.c.l.b16 %v2832
        %v5000 = vunpack.c.l.b16 %v2833
        %v5001 = vunpack.c.l.b16 %v2834
        %v5002 = vunpack.c.l.b16 %v2835
        %v5003 = vunpack.c.l.b16 %v2836
        %v5004 = vunpack.c.l.b16 %v2837
        %v5005 = vunpack.c.l.b16 %v2838
        %v5006 = vunpack.c.l.b16 %v2839
        %v5007 = vunpack.c.l.b16 %v2840
        %v5008 = vunpack.c.l.b16 %v2841
        %v5009 = vunpack.c.l.b16 %v2842
        %v5010 = vunpack.c.l.b16 %v2843
        %v5011 = vunpack.c.l.b16 %v2844
        %v5012 = vunpack.c.l.b16 %v2845
        %v5013 = vunpack.c.l.b16 %v2846
        %v5014 = vunpack.c.l.b16 %v2847
        %v5015 = vunpack.c.l.b16 %v2848
        %v5016 = vunpack.c.l.b16 %v2849
        %v5017 = vunpack.c.l.b16 %v2850
        %v5018 = vunpack.c.l.b16 %v2851
        %v5019 = vunpack.c.l.b16 %v2852
        %v5020 = vunpack.c.l.b16 %v2853
        %v5021 = vunpack.c.l.b16 %v2854
        %v5022 = vunpack.c.l.b16 %v2855
        %v5023 = vunpack.c.l.b16 %v2856
        %v5024 = vunpack.c.l.b16 %v2857
        %v5025 = vunpack.c.l.b16 %v2858
        %v5026 = vunpack.c.l.b16 %v2859
        %v5027 = vunpack.c.l.b16 %v2860
        %v5028 = vunpack.c.l.b16 %v2861
        %v5029 = vunpack.c.l.b16 %v2862
        %v5030 = vunpack.c.l.b16 %v2863
        %v5031 = vunpack.c.l.b16 %v2864
        %v5032 = vunpack.c.l.b16 %v2865
        %v5033 = vunpack.c.l.b16 %v2866
        %v5034 = vunpack.c.l.b16 %v2867
        %v5035 = vunpack.c.l.b16 %v2868
        %v5036 = vunpack.c.l.b16 %v2869
        %v5037 = vunpack.c.l.b16 %v2870
        %v5038 = vpack.c.b16 %v4943, %v4942
        %v5039 = vpack.c.b16 %v4945, %v4944
        %v5040 = vpack.c.b16 %v4947, %v4946
        %v5041 = vpack.c.b16 %v4949, %v4948
        %v5042 = vpack.c.b16 %v4951, %v4950
        %v5043 = vpack.c.b16 %v4953, %v4952
        %v5044 = vpack.c.b16 %v4955, %v4954
        %v5045 = vpack.c.b16 %v4957, %v4956
        %v5046 = vpack.c.b16 %v4959, %v4958
        %v5047 = vpack.c.b16 %v4961, %v4960
        %v5048 = vpack.c.b16 %v4963, %v4962
        %v5049 = vpack.c.b16 %v4965, %v4964
        %v5050 = vpack.c.b16 %v4967, %v4966
        %v5051 = vpack.c.b16 %v4969, %v4968
        %v5052 = vpack.c.b16 %v4971, %v4970
        %v5053 = vpack.c.b16 %v4973, %v4972
        %v5054 = vpack.c.b16 %v4975, %v4974
        %v5055 = vpack.c.b16 %v4977, %v4976
        %v5056 = vpack.c.b16 %v4979, %v4978
        %v5057 = vpack.c.b16 %v4981, %v4980
        %v5058 = vpack.c.b16 %v4983, %v4982
        %v5059 = vpack.c.b16 %v4985, %v4984
        %v5060 = vpack.c.b16 %v4987, %v4986
        %v5061 = vpack.c.b16 %v4989, %v4988
        %v5062 = vpack.c.b16 %v4991, %v4990
        %v5063 = vpack.c.b16 %v4993, %v4992
        %v5064 = vpack.c.b16 %v4995, %v4994
        %v5065 = vpack.c.b16 %v4997, %v4996
        %v5066 = vpack.c.b16 %v4999, %v4998
        %v5067 = vpack.c.b16 %v5001, %v5000
        %v5068 = vpack.c.b16 %v5003, %v5002
        %v5069 = vpack.c.b16 %v5005, %v5004
        %v5070 = vpack.c.b16 %v5007, %v5006
        %v5071 = vpack.c.b16 %v5009, %v5008
        %v5072 = vpack.c.b16 %v5011, %v5010
        %v5073 = vpack.c.b16 %v5013, %v5012
        %v5074 = vpack.c.b16 %v5015, %v5014
        %v5075 = vpack.c.b16 %v5017, %v5016
        %v5076 = vpack.c.b16 %v5019, %v5018
        %v5077 = vpack.c.b16 %v5021, %v5020
        %v5078 = vpack.c.b16 %v5023, %v5022
        %v5079 = vpack.c.b16 %v5025, %v5024
        %v5080 = vpack.c.b16 %v5027, %v5026
        %v5081 = vpack.c.b16 %v5029, %v5028
        %v5082 = vpack.c.b16 %v5031, %v5030
        %v5083 = vpack.c.b16 %v5033, %v5032
        %v5084 = vpack.c.b16 %v5035, %v5034
        %v5085 = vpack.c.b16 %v5037, %v5036
        %5134 = vmatpush.bf16.msra.mxu0 %v5045
        %5135 = vmatpush.bf16.msra.mxu0 %v5044
        %5136 = vmatpush.bf16.msra.mxu0 %v5043
        %5137 = vmatpush.bf16.msra.mxu0 %v5042
        %5138 = vmatpush.bf16.msra.mxu0 %v5041
        %5139 = vmatpush.bf16.msra.mxu0 %v5040
        %5140 = vmatpush.bf16.msra.mxu0 %v5039
        %5141 = vmatpush.bf16.msra.mxu0 %v5038
        %5142 = vmatmul.bf16.gmra.mxu0 %v4654
        %v5143 = vpop.f32.mrf.mxu0
        %v5144 = vadd.f32 %v4287, %v5143
        %v5145 = vpop.f32.mrf.mxu0
        %v5146 = vadd.f32 %v4289, %v5145
        %5147 = vmatmul.bf16.gmra.mxu0 %v4660
        %v5148 = vpop.f32.mrf.mxu0
        %v5149 = vadd.f32 %v4292, %v5148
        %v5150 = vpop.f32.mrf.mxu0
        %v5151 = vadd.f32 %v4294, %v5150
        %5152 = vmatmul.bf16.gmra.mxu0 %v4666
        %v5153 = vpop.f32.mrf.mxu0
        %v5154 = vadd.f32 %v4297, %v5153
        %v5155 = vpop.f32.mrf.mxu0
        %v5156 = vadd.f32 %v4299, %v5155
        %5157 = vmatmul.bf16.gmra.mxu0 %v4672
        %v5158 = vpop.f32.mrf.mxu0
        %v5159 = vadd.f32 %v4302, %v5158
        %v5160 = vpop.f32.mrf.mxu0
        %v5161 = vadd.f32 %v4304, %v5160
        %5162 = vmatmul.bf16.gmra.mxu0 %v4678
        %v5163 = vpop.f32.mrf.mxu0
        %v5164 = vadd.f32 %v4307, %v5163
        %v5165 = vpop.f32.mrf.mxu0
        %v5166 = vadd.f32 %v4309, %v5165
        %5167 = vmatmul.bf16.gmra.mxu0 %v4684
        %v5168 = vpop.f32.mrf.mxu0
        %v5169 = vadd.f32 %v4312, %v5168
        %v5170 = vpop.f32.mrf.mxu0
        %v5171 = vadd.f32 %v4314, %v5170
        %5172 = vmatmul.bf16.gmra.mxu0 %v4690
        %v5173 = vpop.f32.mrf.mxu0
        %v5174 = vadd.f32 %v4317, %v5173
        %v5175 = vpop.f32.mrf.mxu0
        %v5176 = vadd.f32 %v4319, %v5175
        %5177 = vmatmul.bf16.gmra.mxu0 %v4696
        %v5178 = vpop.f32.mrf.mxu0
        %v5179 = vadd.f32 %v4322, %v5178
        %v5180 = vpop.f32.mrf.mxu0
        %v5181 = vadd.f32 %v4324, %v5180
        %5182 = vmatmul.bf16.gmra.mxu0 %v4702
        %v5183 = vpop.f32.mrf.mxu0
        %v5184 = vadd.f32 %v4327, %v5183
        %v5185 = vpop.f32.mrf.mxu0
        %v5186 = vadd.f32 %v4329, %v5185
        %5187 = vmatmul.bf16.gmra.mxu0 %v4708
        %v5188 = vpop.f32.mrf.mxu0
        %v5189 = vadd.f32 %v4332, %v5188
        %v5190 = vpop.f32.mrf.mxu0
        %v5191 = vadd.f32 %v4334, %v5190
        %5192 = vmatmul.bf16.gmra.mxu0 %v4714
        %v5193 = vpop.f32.mrf.mxu0
        %v5194 = vadd.f32 %v4337, %v5193
        %v5195 = vpop.f32.mrf.mxu0
        %v5196 = vadd.f32 %v4339, %v5195
        %5197 = vmatmul.bf16.gmra.mxu0 %v4720
        %v5198 = vpop.f32.mrf.mxu0
        %v5199 = vadd.f32 %v4342, %v5198
        %v5200 = vpop.f32.mrf.mxu0
        %v5201 = vadd.f32 %v4344, %v5200
        %5202 = vmatmul.bf16.gmra.mxu0 %v4726
        %v5203 = vpop.f32.mrf.mxu0
        %v5204 = vadd.f32 %v4347, %v5203
        %v5205 = vpop.f32.mrf.mxu0
        %v5206 = vadd.f32 %v4349, %v5205
        %5207 = vmatmul.bf16.gmra.mxu0 %v4732
        %v5208 = vpop.f32.mrf.mxu0
        %v5209 = vadd.f32 %v4352, %v5208
        %v5210 = vpop.f32.mrf.mxu0
        %v5211 = vadd.f32 %v4354, %v5210
        %5212 = vmatmul.bf16.gmra.mxu0 %v4738
        %v5213 = vpop.f32.mrf.mxu0
        %v5214 = vadd.f32 %v4357, %v5213
        %v5215 = vpop.f32.mrf.mxu0
        %v5216 = vadd.f32 %v4359, %v5215
        %5217 = vmatmul.bf16.gmra.mxu0 %v4744
        %v5218 = vpop.f32.mrf.mxu0
        %v5219 = vadd.f32 %v4362, %v5218
        %v5220 = vpop.f32.mrf.mxu0
        %v5221 = vadd.f32 %v4364, %v5220
        %5222 = vdwg.mxu0
        %5223 = vmatpush.bf16.msra.mxu0 %v5053
        %5224 = vmatpush.bf16.msra.mxu0 %v5052
        %5225 = vmatpush.bf16.msra.mxu0 %v5051
        %5226 = vmatpush.bf16.msra.mxu0 %v5050
        %5227 = vmatpush.bf16.msra.mxu0 %v5049
        %5228 = vmatpush.bf16.msra.mxu0 %v5048
        %5229 = vmatpush.bf16.msra.mxu0 %v5047
        %5230 = vmatpush.bf16.msra.mxu0 %v5046
        %5231 = vmatmul.bf16.gmra.mxu0 %v4655
        %v5232 = vpop.f32.mrf.mxu0
        %v5233 = vadd.f32 %v5144, %v5232
        %v5234 = vpop.f32.mrf.mxu0
        %v5235 = vadd.f32 %v5146, %v5234
        %5236 = vmatmul.bf16.gmra.mxu0 %v4661
        %v5237 = vpop.f32.mrf.mxu0
        %v5238 = vadd.f32 %v5149, %v5237
        %v5239 = vpop.f32.mrf.mxu0
        %v5240 = vadd.f32 %v5151, %v5239
        %5241 = vmatmul.bf16.gmra.mxu0 %v4667
        %v5242 = vpop.f32.mrf.mxu0
        %v5243 = vadd.f32 %v5154, %v5242
        %v5244 = vpop.f32.mrf.mxu0
        %v5245 = vadd.f32 %v5156, %v5244
        %5246 = vmatmul.bf16.gmra.mxu0 %v4673
        %v5247 = vpop.f32.mrf.mxu0
        %v5248 = vadd.f32 %v5159, %v5247
        %v5249 = vpop.f32.mrf.mxu0
        %v5250 = vadd.f32 %v5161, %v5249
        %5251 = vmatmul.bf16.gmra.mxu0 %v4679
        %v5252 = vpop.f32.mrf.mxu0
        %v5253 = vadd.f32 %v5164, %v5252
        %v5254 = vpop.f32.mrf.mxu0
        %v5255 = vadd.f32 %v5166, %v5254
        %5256 = vmatmul.bf16.gmra.mxu0 %v4685
        %v5257 = vpop.f32.mrf.mxu0
        %v5258 = vadd.f32 %v5169, %v5257
        %v5259 = vpop.f32.mrf.mxu0
        %v5260 = vadd.f32 %v5171, %v5259
        %5261 = vmatmul.bf16.gmra.mxu0 %v4691
        %v5262 = vpop.f32.mrf.mxu0
        %v5263 = vadd.f32 %v5174, %v5262
        %v5264 = vpop.f32.mrf.mxu0
        %v5265 = vadd.f32 %v5176, %v5264
        %5266 = vmatmul.bf16.gmra.mxu0 %v4697
        %v5267 = vpop.f32.mrf.mxu0
        %v5268 = vadd.f32 %v5179, %v5267
        %v5269 = vpop.f32.mrf.mxu0
        %v5270 = vadd.f32 %v5181, %v5269
        %5271 = vmatmul.bf16.gmra.mxu0 %v4703
        %v5272 = vpop.f32.mrf.mxu0
        %v5273 = vadd.f32 %v5184, %v5272
        %v5274 = vpop.f32.mrf.mxu0
        %v5275 = vadd.f32 %v5186, %v5274
        %5276 = vmatmul.bf16.gmra.mxu0 %v4709
        %v5277 = vpop.f32.mrf.mxu0
        %v5278 = vadd.f32 %v5189, %v5277
        %v5279 = vpop.f32.mrf.mxu0
        %v5280 = vadd.f32 %v5191, %v5279
        %5281 = vmatmul.bf16.gmra.mxu0 %v4715
        %v5282 = vpop.f32.mrf.mxu0
        %v5283 = vadd.f32 %v5194, %v5282
        %v5284 = vpop.f32.mrf.mxu0
        %v5285 = vadd.f32 %v5196, %v5284
        %5286 = vmatmul.bf16.gmra.mxu0 %v4721
        %v5287 = vpop.f32.mrf.mxu0
        %v5288 = vadd.f32 %v5199, %v5287
        %v5289 = vpop.f32.mrf.mxu0
        %v5290 = vadd.f32 %v5201, %v5289
        %5291 = vmatmul.bf16.gmra.mxu0 %v4727
        %v5292 = vpop.f32.mrf.mxu0
        %v5293 = vadd.f32 %v5204, %v5292
        %v5294 = vpop.f32.mrf.mxu0
        %v5295 = vadd.f32 %v5206, %v5294
        %5296 = vmatmul.bf16.gmra.mxu0 %v4733
        %v5297 = vpop.f32.mrf.mxu0
        %v5298 = vadd.f32 %v5209, %v5297
        %v5299 = vpop.f32.mrf.mxu0
        %v5300 = vadd.f32 %v5211, %v5299
        %5301 = vmatmul.bf16.gmra.mxu0 %v4739
        %v5302 = vpop.f32.mrf.mxu0
        %v5303 = vadd.f32 %v5214, %v5302
        %v5304 = vpop.f32.mrf.mxu0
        %v5305 = vadd.f32 %v5216, %v5304
        %5306 = vmatmul.bf16.gmra.mxu0 %v4745
        %v5307 = vpop.f32.mrf.mxu0
        %v5308 = vadd.f32 %v5219, %v5307
        %v5309 = vpop.f32.mrf.mxu0
        %v5310 = vadd.f32 %v5221, %v5309
        %5311 = vdwg.mxu0
        %5312 = vmatpush.bf16.msra.mxu0 %v5061
        %5313 = vmatpush.bf16.msra.mxu0 %v5060
        %5314 = vmatpush.bf16.msra.mxu0 %v5059
        %5315 = vmatpush.bf16.msra.mxu0 %v5058
        %5316 = vmatpush.bf16.msra.mxu0 %v5057
        %5317 = vmatpush.bf16.msra.mxu0 %v5056
        %5318 = vmatpush.bf16.msra.mxu0 %v5055
        %5319 = vmatpush.bf16.msra.mxu0 %v5054
        %5320 = vmatmul.bf16.gmra.mxu0 %v4656
        %v5321 = vpop.f32.mrf.mxu0
        %v5322 = vadd.f32 %v5233, %v5321
        %v5323 = vpop.f32.mrf.mxu0
        %v5324 = vadd.f32 %v5235, %v5323
        %5325 = vmatmul.bf16.gmra.mxu0 %v4662
        %v5326 = vpop.f32.mrf.mxu0
        %v5327 = vadd.f32 %v5238, %v5326
        %v5328 = vpop.f32.mrf.mxu0
        %v5329 = vadd.f32 %v5240, %v5328
        %5330 = vmatmul.bf16.gmra.mxu0 %v4668
        %v5331 = vpop.f32.mrf.mxu0
        %v5332 = vadd.f32 %v5243, %v5331
        %v5333 = vpop.f32.mrf.mxu0
        %v5334 = vadd.f32 %v5245, %v5333
        %5335 = vmatmul.bf16.gmra.mxu0 %v4674
        %v5336 = vpop.f32.mrf.mxu0
        %v5337 = vadd.f32 %v5248, %v5336
        %v5338 = vpop.f32.mrf.mxu0
        %v5339 = vadd.f32 %v5250, %v5338
        %5340 = vmatmul.bf16.gmra.mxu0 %v4680
        %v5341 = vpop.f32.mrf.mxu0
        %v5342 = vadd.f32 %v5253, %v5341
        %v5343 = vpop.f32.mrf.mxu0
        %v5344 = vadd.f32 %v5255, %v5343
        %5345 = vmatmul.bf16.gmra.mxu0 %v4686
        %v5346 = vpop.f32.mrf.mxu0
        %v5347 = vadd.f32 %v5258, %v5346
        %v5348 = vpop.f32.mrf.mxu0
        %v5349 = vadd.f32 %v5260, %v5348
        %5350 = vmatmul.bf16.gmra.mxu0 %v4692
        %v5351 = vpop.f32.mrf.mxu0
        %v5352 = vadd.f32 %v5263, %v5351
        %v5353 = vpop.f32.mrf.mxu0
        %v5354 = vadd.f32 %v5265, %v5353
        %5355 = vmatmul.bf16.gmra.mxu0 %v4698
        %v5356 = vpop.f32.mrf.mxu0
        %v5357 = vadd.f32 %v5268, %v5356
        %v5358 = vpop.f32.mrf.mxu0
        %v5359 = vadd.f32 %v5270, %v5358
        %5360 = vmatmul.bf16.gmra.mxu0 %v4704
        %v5361 = vpop.f32.mrf.mxu0
        %v5362 = vadd.f32 %v5273, %v5361
        %v5363 = vpop.f32.mrf.mxu0
        %v5364 = vadd.f32 %v5275, %v5363
        %5365 = vmatmul.bf16.gmra.mxu0 %v4710
        %v5366 = vpop.f32.mrf.mxu0
        %v5367 = vadd.f32 %v5278, %v5366
        %v5368 = vpop.f32.mrf.mxu0
        %v5369 = vadd.f32 %v5280, %v5368
        %5370 = vmatmul.bf16.gmra.mxu0 %v4716
        %v5371 = vpop.f32.mrf.mxu0
        %v5372 = vadd.f32 %v5283, %v5371
        %v5373 = vpop.f32.mrf.mxu0
        %v5374 = vadd.f32 %v5285, %v5373
        %5375 = vmatmul.bf16.gmra.mxu0 %v4722
        %v5376 = vpop.f32.mrf.mxu0
        %v5377 = vadd.f32 %v5288, %v5376
        %v5378 = vpop.f32.mrf.mxu0
        %v5379 = vadd.f32 %v5290, %v5378
        %5380 = vmatmul.bf16.gmra.mxu0 %v4728
        %v5381 = vpop.f32.mrf.mxu0
        %v5382 = vadd.f32 %v5293, %v5381
        %v5383 = vpop.f32.mrf.mxu0
        %v5384 = vadd.f32 %v5295, %v5383
        %5385 = vmatmul.bf16.gmra.mxu0 %v4734
        %v5386 = vpop.f32.mrf.mxu0
        %v5387 = vadd.f32 %v5298, %v5386
        %v5388 = vpop.f32.mrf.mxu0
        %v5389 = vadd.f32 %v5300, %v5388
        %5390 = vmatmul.bf16.gmra.mxu0 %v4740
        %v5391 = vpop.f32.mrf.mxu0
        %v5392 = vadd.f32 %v5303, %v5391
        %v5393 = vpop.f32.mrf.mxu0
        %v5394 = vadd.f32 %v5305, %v5393
        %5395 = vmatmul.bf16.gmra.mxu0 %v4746
        %v5396 = vpop.f32.mrf.mxu0
        %v5397 = vadd.f32 %v5308, %v5396
        %v5398 = vpop.f32.mrf.mxu0
        %v5399 = vadd.f32 %v5310, %v5398
        %5400 = vdwg.mxu0
        %5401 = vmatpush.bf16.msra.mxu0 %v5069
        %5402 = vmatpush.bf16.msra.mxu0 %v5068
        %5403 = vmatpush.bf16.msra.mxu0 %v5067
        %5404 = vmatpush.bf16.msra.mxu0 %v5066
        %5405 = vmatpush.bf16.msra.mxu0 %v5065
        %5406 = vmatpush.bf16.msra.mxu0 %v5064
        %5407 = vmatpush.bf16.msra.mxu0 %v5063
        %5408 = vmatpush.bf16.msra.mxu0 %v5062
        %5409 = vmatmul.bf16.gmra.mxu0 %v4657
        %v5410 = vpop.f32.mrf.mxu0
        %v5411 = vadd.f32 %v5322, %v5410
        %v5412 = vpop.f32.mrf.mxu0
        %v5413 = vadd.f32 %v5324, %v5412
        %5414 = vmatmul.bf16.gmra.mxu0 %v4663
        %v5415 = vpop.f32.mrf.mxu0
        %v5416 = vadd.f32 %v5327, %v5415
        %v5417 = vpop.f32.mrf.mxu0
        %v5418 = vadd.f32 %v5329, %v5417
        %5419 = vmatmul.bf16.gmra.mxu0 %v4669
        %v5420 = vpop.f32.mrf.mxu0
        %v5421 = vadd.f32 %v5332, %v5420
        %v5422 = vpop.f32.mrf.mxu0
        %v5423 = vadd.f32 %v5334, %v5422
        %5424 = vmatmul.bf16.gmra.mxu0 %v4675
        %v5425 = vpop.f32.mrf.mxu0
        %v5426 = vadd.f32 %v5337, %v5425
        %v5427 = vpop.f32.mrf.mxu0
        %v5428 = vadd.f32 %v5339, %v5427
        %5429 = vmatmul.bf16.gmra.mxu0 %v4681
        %v5430 = vpop.f32.mrf.mxu0
        %v5431 = vadd.f32 %v5342, %v5430
        %v5432 = vpop.f32.mrf.mxu0
        %v5433 = vadd.f32 %v5344, %v5432
        %5434 = vmatmul.bf16.gmra.mxu0 %v4687
        %v5435 = vpop.f32.mrf.mxu0
        %v5436 = vadd.f32 %v5347, %v5435
        %v5437 = vpop.f32.mrf.mxu0
        %v5438 = vadd.f32 %v5349, %v5437
        %5439 = vmatmul.bf16.gmra.mxu0 %v4693
        %v5440 = vpop.f32.mrf.mxu0
        %v5441 = vadd.f32 %v5352, %v5440
        %v5442 = vpop.f32.mrf.mxu0
        %v5443 = vadd.f32 %v5354, %v5442
        %5444 = vmatmul.bf16.gmra.mxu0 %v4699
        %v5445 = vpop.f32.mrf.mxu0
        %v5446 = vadd.f32 %v5357, %v5445
        %v5447 = vpop.f32.mrf.mxu0
        %v5448 = vadd.f32 %v5359, %v5447
        %5449 = vmatmul.bf16.gmra.mxu0 %v4705
        %v5450 = vpop.f32.mrf.mxu0
        %v5451 = vadd.f32 %v5362, %v5450
        %v5452 = vpop.f32.mrf.mxu0
        %v5453 = vadd.f32 %v5364, %v5452
        %5454 = vmatmul.bf16.gmra.mxu0 %v4711
        %v5455 = vpop.f32.mrf.mxu0
        %v5456 = vadd.f32 %v5367, %v5455
        %v5457 = vpop.f32.mrf.mxu0
        %v5458 = vadd.f32 %v5369, %v5457
        %5459 = vmatmul.bf16.gmra.mxu0 %v4717
        %v5460 = vpop.f32.mrf.mxu0
        %v5461 = vadd.f32 %v5372, %v5460
        %v5462 = vpop.f32.mrf.mxu0
        %v5463 = vadd.f32 %v5374, %v5462
        %5464 = vmatmul.bf16.gmra.mxu0 %v4723
        %v5465 = vpop.f32.mrf.mxu0
        %v5466 = vadd.f32 %v5377, %v5465
        %v5467 = vpop.f32.mrf.mxu0
        %v5468 = vadd.f32 %v5379, %v5467
        %5469 = vmatmul.bf16.gmra.mxu0 %v4729
        %v5470 = vpop.f32.mrf.mxu0
        %v5471 = vadd.f32 %v5382, %v5470
        %v5472 = vpop.f32.mrf.mxu0
        %v5473 = vadd.f32 %v5384, %v5472
        %5474 = vmatmul.bf16.gmra.mxu0 %v4735
        %v5475 = vpop.f32.mrf.mxu0
        %v5476 = vadd.f32 %v5387, %v5475
        %v5477 = vpop.f32.mrf.mxu0
        %v5478 = vadd.f32 %v5389, %v5477
        %5479 = vmatmul.bf16.gmra.mxu0 %v4741
        %v5480 = vpop.f32.mrf.mxu0
        %v5481 = vadd.f32 %v5392, %v5480
        %v5482 = vpop.f32.mrf.mxu0
        %v5483 = vadd.f32 %v5394, %v5482
        %5484 = vmatmul.bf16.gmra.mxu0 %v4747
        %v5485 = vpop.f32.mrf.mxu0
        %v5486 = vadd.f32 %v5397, %v5485
        %v5487 = vpop.f32.mrf.mxu0
        %v5488 = vadd.f32 %v5399, %v5487
        %5489 = vdwg.mxu0
        %5490 = vmatpush.bf16.msra.mxu0 %v5077
        %5491 = vmatpush.bf16.msra.mxu0 %v5076
        %5492 = vmatpush.bf16.msra.mxu0 %v5075
        %5493 = vmatpush.bf16.msra.mxu0 %v5074
        %5494 = vmatpush.bf16.msra.mxu0 %v5073
        %5495 = vmatpush.bf16.msra.mxu0 %v5072
        %5496 = vmatpush.bf16.msra.mxu0 %v5071
        %5497 = vmatpush.bf16.msra.mxu0 %v5070
        %5498 = vmatmul.bf16.gmra.mxu0 %v4658
        %v5499 = vpop.f32.mrf.mxu0
        %v5500 = vadd.f32 %v5411, %v5499
        %v5501 = vpop.f32.mrf.mxu0
        %v5502 = vadd.f32 %v5413, %v5501
        %5503 = vmatmul.bf16.gmra.mxu0 %v4664
        %v5504 = vpop.f32.mrf.mxu0
        %v5505 = vadd.f32 %v5416, %v5504
        %v5506 = vpop.f32.mrf.mxu0
        %v5507 = vadd.f32 %v5418, %v5506
        %5508 = vmatmul.bf16.gmra.mxu0 %v4670
        %v5509 = vpop.f32.mrf.mxu0
        %v5510 = vadd.f32 %v5421, %v5509
        %v5511 = vpop.f32.mrf.mxu0
        %v5512 = vadd.f32 %v5423, %v5511
        %5513 = vmatmul.bf16.gmra.mxu0 %v4676
        %v5514 = vpop.f32.mrf.mxu0
        %v5515 = vadd.f32 %v5426, %v5514
        %v5516 = vpop.f32.mrf.mxu0
        %v5517 = vadd.f32 %v5428, %v5516
        %5518 = vmatmul.bf16.gmra.mxu0 %v4682
        %v5519 = vpop.f32.mrf.mxu0
        %v5520 = vadd.f32 %v5431, %v5519
        %v5521 = vpop.f32.mrf.mxu0
        %v5522 = vadd.f32 %v5433, %v5521
        %5523 = vmatmul.bf16.gmra.mxu0 %v4688
        %v5524 = vpop.f32.mrf.mxu0
        %v5525 = vadd.f32 %v5436, %v5524
        %v5526 = vpop.f32.mrf.mxu0
        %v5527 = vadd.f32 %v5438, %v5526
        %5528 = vmatmul.bf16.gmra.mxu0 %v4694
        %v5529 = vpop.f32.mrf.mxu0
        %v5530 = vadd.f32 %v5441, %v5529
        %v5531 = vpop.f32.mrf.mxu0
        %v5532 = vadd.f32 %v5443, %v5531
        %5533 = vmatmul.bf16.gmra.mxu0 %v4700
        %v5534 = vpop.f32.mrf.mxu0
        %v5535 = vadd.f32 %v5446, %v5534
        %v5536 = vpop.f32.mrf.mxu0
        %v5537 = vadd.f32 %v5448, %v5536
        %5538 = vmatmul.bf16.gmra.mxu0 %v4706
        %v5539 = vpop.f32.mrf.mxu0
        %v5540 = vadd.f32 %v5451, %v5539
        %v5541 = vpop.f32.mrf.mxu0
        %v5542 = vadd.f32 %v5453, %v5541
        %5543 = vmatmul.bf16.gmra.mxu0 %v4712
        %v5544 = vpop.f32.mrf.mxu0
        %v5545 = vadd.f32 %v5456, %v5544
        %v5546 = vpop.f32.mrf.mxu0
        %v5547 = vadd.f32 %v5458, %v5546
        %5548 = vmatmul.bf16.gmra.mxu0 %v4718
        %v5549 = vpop.f32.mrf.mxu0
        %v5550 = vadd.f32 %v5461, %v5549
        %v5551 = vpop.f32.mrf.mxu0
        %v5552 = vadd.f32 %v5463, %v5551
        %5553 = vmatmul.bf16.gmra.mxu0 %v4724
        %v5554 = vpop.f32.mrf.mxu0
        %v5555 = vadd.f32 %v5466, %v5554
        %v5556 = vpop.f32.mrf.mxu0
        %v5557 = vadd.f32 %v5468, %v5556
        %5558 = vmatmul.bf16.gmra.mxu0 %v4730
        %v5559 = vpop.f32.mrf.mxu0
        %v5560 = vadd.f32 %v5471, %v5559
        %v5561 = vpop.f32.mrf.mxu0
        %v5562 = vadd.f32 %v5473, %v5561
        %5563 = vmatmul.bf16.gmra.mxu0 %v4736
        %v5564 = vpop.f32.mrf.mxu0
        %v5565 = vadd.f32 %v5476, %v5564
        %v5566 = vpop.f32.mrf.mxu0
        %v5567 = vadd.f32 %v5478, %v5566
        %5568 = vmatmul.bf16.gmra.mxu0 %v4742
        %v5569 = vpop.f32.mrf.mxu0
        %v5570 = vadd.f32 %v5481, %v5569
        %v5571 = vpop.f32.mrf.mxu0
        %v5572 = vadd.f32 %v5483, %v5571
        %5573 = vmatmul.bf16.gmra.mxu0 %v4748
        %v5574 = vpop.f32.mrf.mxu0
        %v5575 = vadd.f32 %v5486, %v5574
        %v5576 = vpop.f32.mrf.mxu0
        %v5577 = vadd.f32 %v5488, %v5576
        %5578 = vdwg.mxu0
        %5579 = vmatpush.bf16.msra.mxu0 %v5085
        %5580 = vmatpush.bf16.msra.mxu0 %v5084
        %5581 = vmatpush.bf16.msra.mxu0 %v5083
        %5582 = vmatpush.bf16.msra.mxu0 %v5082
        %5583 = vmatpush.bf16.msra.mxu0 %v5081
        %5584 = vmatpush.bf16.msra.mxu0 %v5080
        %5585 = vmatpush.bf16.msra.mxu0 %v5079
        %5586 = vmatpush.bf16.msra.mxu0 %v5078
        %5587 = vmatmul.bf16.gmra.mxu0 %v4659
        %v5588 = vpop.f32.mrf.mxu0
        %v5589 = vadd.f32 %v5500, %v5588
        %v5590 = vpop.f32.mrf.mxu0
        %v5591 = vadd.f32 %v5502, %v5590
        %5592 = vmatmul.bf16.gmra.mxu0 %v4665
        %v5593 = vpop.f32.mrf.mxu0
        %v5594 = vadd.f32 %v5505, %v5593
        %v5595 = vpop.f32.mrf.mxu0
        %v5596 = vadd.f32 %v5507, %v5595
        %5597 = vmatmul.bf16.gmra.mxu0 %v4671
        %v5598 = vpop.f32.mrf.mxu0
        %v5599 = vadd.f32 %v5510, %v5598
        %v5600 = vpop.f32.mrf.mxu0
        %v5601 = vadd.f32 %v5512, %v5600
        %5602 = vmatmul.bf16.gmra.mxu0 %v4677
        %v5603 = vpop.f32.mrf.mxu0
        %v5604 = vadd.f32 %v5515, %v5603
        %v5605 = vpop.f32.mrf.mxu0
        %v5606 = vadd.f32 %v5517, %v5605
        %5607 = vmatmul.bf16.gmra.mxu0 %v4683
        %v5608 = vpop.f32.mrf.mxu0
        %v5609 = vadd.f32 %v5520, %v5608
        %v5610 = vpop.f32.mrf.mxu0
        %v5611 = vadd.f32 %v5522, %v5610
        %5612 = vmatmul.bf16.gmra.mxu0 %v4689
        %v5613 = vpop.f32.mrf.mxu0
        %v5614 = vadd.f32 %v5525, %v5613
        %v5615 = vpop.f32.mrf.mxu0
        %v5616 = vadd.f32 %v5527, %v5615
        %5617 = vmatmul.bf16.gmra.mxu0 %v4695
        %v5618 = vpop.f32.mrf.mxu0
        %v5619 = vadd.f32 %v5530, %v5618
        %v5620 = vpop.f32.mrf.mxu0
        %v5621 = vadd.f32 %v5532, %v5620
        %5622 = vmatmul.bf16.gmra.mxu0 %v4701
        %v5623 = vpop.f32.mrf.mxu0
        %v5624 = vadd.f32 %v5535, %v5623
        %v5625 = vpop.f32.mrf.mxu0
        %v5626 = vadd.f32 %v5537, %v5625
        %5627 = vmatmul.bf16.gmra.mxu0 %v4707
        %v5628 = vpop.f32.mrf.mxu0
        %v5629 = vadd.f32 %v5540, %v5628
        %v5630 = vpop.f32.mrf.mxu0
        %v5631 = vadd.f32 %v5542, %v5630
        %5632 = vmatmul.bf16.gmra.mxu0 %v4713
        %v5633 = vpop.f32.mrf.mxu0
        %v5634 = vadd.f32 %v5545, %v5633
        %v5635 = vpop.f32.mrf.mxu0
        %v5636 = vadd.f32 %v5547, %v5635
        %5637 = vmatmul.bf16.gmra.mxu0 %v4719
        %v5638 = vpop.f32.mrf.mxu0
        %v5639 = vadd.f32 %v5550, %v5638
        %v5640 = vpop.f32.mrf.mxu0
        %v5641 = vadd.f32 %v5552, %v5640
        %5642 = vmatmul.bf16.gmra.mxu0 %v4725
        %v5643 = vpop.f32.mrf.mxu0
        %v5644 = vadd.f32 %v5555, %v5643
        %v5645 = vpop.f32.mrf.mxu0
        %v5646 = vadd.f32 %v5557, %v5645
        %5647 = vmatmul.bf16.gmra.mxu0 %v4731
        %v5648 = vpop.f32.mrf.mxu0
        %v5649 = vadd.f32 %v5560, %v5648
        %v5650 = vpop.f32.mrf.mxu0
        %v5651 = vadd.f32 %v5562, %v5650
        %5652 = vmatmul.bf16.gmra.mxu0 %v4737
        %v5653 = vpop.f32.mrf.mxu0
        %v5654 = vadd.f32 %v5565, %v5653
        %v5655 = vpop.f32.mrf.mxu0
        %v5656 = vadd.f32 %v5567, %v5655
        %5657 = vmatmul.bf16.gmra.mxu0 %v4743
        %v5658 = vpop.f32.mrf.mxu0
        %v5659 = vadd.f32 %v5570, %v5658
        %v5660 = vpop.f32.mrf.mxu0
        %v5661 = vadd.f32 %v5572, %v5660
        %5662 = vmatmul.bf16.gmra.mxu0 %v4749
        %v5663 = vpop.f32.mrf.mxu0
        %v5664 = vadd.f32 %v5575, %v5663
        %v5665 = vpop.f32.mrf.mxu0
        %v5666 = vadd.f32 %v5577, %v5665
        %5667 = vdwg.mxu0
        %s5668 = scalar_lea.vmem [#allocation2], 96
        %v5669 = vld [vmem:[%s5668] sm:$0xff]
        %v5670 = vld [vmem:[%s5668 + $0x8] sm:$0xff]
        %v5671 = vld [vmem:[%s5668 + $0x10] sm:$0xff]
        %v5672 = vld [vmem:[%s5668 + $0x18] sm:$0xff]
        %v5673 = vld [vmem:[%s5668 + $0x20] sm:$0xff]
        %v5674 = vld [vmem:[%s5668 + $0x28] sm:$0xff]
        %v5675 = vld [vmem:[%s5668 + $0x30] sm:$0xff]
        %v5676 = vld [vmem:[%s5668 + $0x38] sm:$0xff]
        %v5677 = vld [vmem:[%s5668 + $0x40] sm:$0xff]
        %v5678 = vld [vmem:[%s5668 + $0x48] sm:$0xff]
        %v5679 = vld [vmem:[%s5668 + $0x50] sm:$0xff]
        %v5680 = vld [vmem:[%s5668 + $0x58] sm:$0xff]
        %v5681 = vld [vmem:[%s5668 + $0x60] sm:$0xff]
        %v5682 = vld [vmem:[%s5668 + $0x68] sm:$0xff]
        %v5683 = vld [vmem:[%s5668 + $0x70] sm:$0xff]
        %v5684 = vld [vmem:[%s5668 + $0x78] sm:$0xff]
        %v5685 = vld [vmem:[%s5668 + $0x80] sm:$0xff]
        %v5686 = vld [vmem:[%s5668 + $0x88] sm:$0xff]
        %v5687 = vld [vmem:[%s5668 + $0x90] sm:$0xff]
        %v5688 = vld [vmem:[%s5668 + $0x98] sm:$0xff]
        %v5689 = vld [vmem:[%s5668 + $0xa0] sm:$0xff]
        %v5690 = vld [vmem:[%s5668 + $0xa8] sm:$0xff]
        %v5691 = vld [vmem:[%s5668 + $0xb0] sm:$0xff]
        %v5692 = vld [vmem:[%s5668 + $0xb8] sm:$0xff]
        %v5693 = vld [vmem:[%s5668 + $0xc0] sm:$0xff]
        %v5694 = vld [vmem:[%s5668 + $0xc8] sm:$0xff]
        %v5695 = vld [vmem:[%s5668 + $0xd0] sm:$0xff]
        %v5696 = vld [vmem:[%s5668 + $0xd8] sm:$0xff]
        %v5697 = vld [vmem:[%s5668 + $0xe0] sm:$0xff]
        %v5698 = vld [vmem:[%s5668 + $0xe8] sm:$0xff]
        %v5699 = vld [vmem:[%s5668 + $0xf0] sm:$0xff]
        %v5700 = vld [vmem:[%s5668 + $0xf8] sm:$0xff]
        %v5701 = vld [vmem:[%s5668 + $0x100] sm:$0xff]
        %v5702 = vld [vmem:[%s5668 + $0x108] sm:$0xff]
        %v5703 = vld [vmem:[%s5668 + $0x110] sm:$0xff]
        %v5704 = vld [vmem:[%s5668 + $0x118] sm:$0xff]
        %v5705 = vld [vmem:[%s5668 + $0x120] sm:$0xff]
        %v5706 = vld [vmem:[%s5668 + $0x128] sm:$0xff]
        %v5707 = vld [vmem:[%s5668 + $0x130] sm:$0xff]
        %v5708 = vld [vmem:[%s5668 + $0x138] sm:$0xff]
        %v5709 = vld [vmem:[%s5668 + $0x140] sm:$0xff]
        %v5710 = vld [vmem:[%s5668 + $0x148] sm:$0xff]
        %v5711 = vld [vmem:[%s5668 + $0x150] sm:$0xff]
        %v5712 = vld [vmem:[%s5668 + $0x158] sm:$0xff]
        %v5713 = vld [vmem:[%s5668 + $0x160] sm:$0xff]
        %v5714 = vld [vmem:[%s5668 + $0x168] sm:$0xff]
        %v5715 = vld [vmem:[%s5668 + $0x170] sm:$0xff]
        %v5716 = vld [vmem:[%s5668 + $0x178] sm:$0xff]
        %v5717 = vld [vmem:[%s5668 + $0x180] sm:$0xff]
        %v5718 = vld [vmem:[%s5668 + $0x188] sm:$0xff]
        %v5719 = vld [vmem:[%s5668 + $0x190] sm:$0xff]
        %v5720 = vld [vmem:[%s5668 + $0x198] sm:$0xff]
        %v5721 = vld [vmem:[%s5668 + $0x1a0] sm:$0xff]
        %v5722 = vld [vmem:[%s5668 + $0x1a8] sm:$0xff]
        %v5723 = vld [vmem:[%s5668 + $0x1b0] sm:$0xff]
        %v5724 = vld [vmem:[%s5668 + $0x1b8] sm:$0xff]
        %v5725 = vld [vmem:[%s5668 + $0x1c0] sm:$0xff]
        %v5726 = vld [vmem:[%s5668 + $0x1c8] sm:$0xff]
        %v5727 = vld [vmem:[%s5668 + $0x1d0] sm:$0xff]
        %v5728 = vld [vmem:[%s5668 + $0x1d8] sm:$0xff]
        %v5729 = vld [vmem:[%s5668 + $0x1e0] sm:$0xff]
        %v5730 = vld [vmem:[%s5668 + $0x1e8] sm:$0xff]
        %v5731 = vld [vmem:[%s5668 + $0x1f0] sm:$0xff]
        %v5732 = vld [vmem:[%s5668 + $0x1f8] sm:$0xff]
        %v5733 = vld [vmem:[%s5668 + $0x200] sm:$0xff]
        %v5734 = vld [vmem:[%s5668 + $0x208] sm:$0xff]
        %v5735 = vld [vmem:[%s5668 + $0x210] sm:$0xff]
        %v5736 = vld [vmem:[%s5668 + $0x218] sm:$0xff]
        %v5737 = vld [vmem:[%s5668 + $0x220] sm:$0xff]
        %v5738 = vld [vmem:[%s5668 + $0x228] sm:$0xff]
        %v5739 = vld [vmem:[%s5668 + $0x230] sm:$0xff]
        %v5740 = vld [vmem:[%s5668 + $0x238] sm:$0xff]
        %v5741 = vld [vmem:[%s5668 + $0x240] sm:$0xff]
        %v5742 = vld [vmem:[%s5668 + $0x248] sm:$0xff]
        %v5743 = vld [vmem:[%s5668 + $0x250] sm:$0xff]
        %v5744 = vld [vmem:[%s5668 + $0x258] sm:$0xff]
        %v5745 = vld [vmem:[%s5668 + $0x260] sm:$0xff]
        %v5746 = vld [vmem:[%s5668 + $0x268] sm:$0xff]
        %v5747 = vld [vmem:[%s5668 + $0x270] sm:$0xff]
        %v5748 = vld [vmem:[%s5668 + $0x278] sm:$0xff]
        %v5749 = vld [vmem:[%s5668 + $0x280] sm:$0xff]
        %v5750 = vld [vmem:[%s5668 + $0x288] sm:$0xff]
        %v5751 = vld [vmem:[%s5668 + $0x290] sm:$0xff]
        %v5752 = vld [vmem:[%s5668 + $0x298] sm:$0xff]
        %v5753 = vld [vmem:[%s5668 + $0x2a0] sm:$0xff]
        %v5754 = vld [vmem:[%s5668 + $0x2a8] sm:$0xff]
        %v5755 = vld [vmem:[%s5668 + $0x2b0] sm:$0xff]
        %v5756 = vld [vmem:[%s5668 + $0x2b8] sm:$0xff]
        %v5757 = vld [vmem:[%s5668 + $0x2c0] sm:$0xff]
        %v5758 = vld [vmem:[%s5668 + $0x2c8] sm:$0xff]
        %v5759 = vld [vmem:[%s5668 + $0x2d0] sm:$0xff]
        %v5760 = vld [vmem:[%s5668 + $0x2d8] sm:$0xff]
        %v5761 = vld [vmem:[%s5668 + $0x2e0] sm:$0xff]
        %v5762 = vld [vmem:[%s5668 + $0x2e8] sm:$0xff]
        %v5763 = vld [vmem:[%s5668 + $0x2f0] sm:$0xff]
        %v5764 = vld [vmem:[%s5668 + $0x2f8] sm:$0xff]
        %s5765 = scalar_lea.vmem [#allocation7], 768
        %v5766 = vld [vmem:[%s5765] sm:$0xf]
        %v5767 = vld [vmem:[%s5765 + $0x4] sm:$0xf]
        %v5768 = vld [vmem:[%s5765 + $0x8] sm:$0xf]
        %v5769 = vld [vmem:[%s5765 + $0xc] sm:$0xf]
        %v5770 = vld [vmem:[%s5765 + $0x10] sm:$0xf]
        %v5771 = vld [vmem:[%s5765 + $0x14] sm:$0xf]
        %v5772 = vld [vmem:[%s5765 + $0x18] sm:$0xf]
        %v5773 = vld [vmem:[%s5765 + $0x1c] sm:$0xf]
        %v5774 = vld [vmem:[%s5765 + $0x20] sm:$0xf]
        %v5775 = vld [vmem:[%s5765 + $0x24] sm:$0xf]
        %v5776 = vld [vmem:[%s5765 + $0x28] sm:$0xf]
        %v5777 = vld [vmem:[%s5765 + $0x2c] sm:$0xf]
        %v5778 = vld [vmem:[%s5765 + $0x30] sm:$0xf]
        %v5779 = vld [vmem:[%s5765 + $0x34] sm:$0xf]
        %v5780 = vld [vmem:[%s5765 + $0x38] sm:$0xf]
        %v5781 = vld [vmem:[%s5765 + $0x3c] sm:$0xf]
        %v5782 = vld [vmem:[%s5765 + $0x40] sm:$0xf]
        %v5783 = vld [vmem:[%s5765 + $0x44] sm:$0xf]
        %v5784 = vld [vmem:[%s5765 + $0x48] sm:$0xf]
        %v5785 = vld [vmem:[%s5765 + $0x4c] sm:$0xf]
        %v5786 = vld [vmem:[%s5765 + $0x50] sm:$0xf]
        %v5787 = vld [vmem:[%s5765 + $0x54] sm:$0xf]
        %v5788 = vld [vmem:[%s5765 + $0x58] sm:$0xf]
        %v5789 = vld [vmem:[%s5765 + $0x5c] sm:$0xf]
        %v5790 = vld [vmem:[%s5765 + $0x60] sm:$0xf]
        %v5791 = vld [vmem:[%s5765 + $0x64] sm:$0xf]
        %v5792 = vld [vmem:[%s5765 + $0x68] sm:$0xf]
        %v5793 = vld [vmem:[%s5765 + $0x6c] sm:$0xf]
        %v5794 = vld [vmem:[%s5765 + $0x70] sm:$0xf]
        %v5795 = vld [vmem:[%s5765 + $0x74] sm:$0xf]
        %v5796 = vld [vmem:[%s5765 + $0x78] sm:$0xf]
        %v5797 = vld [vmem:[%s5765 + $0x7c] sm:$0xf]
        %v5798 = vld [vmem:[%s5765 + $0x80] sm:$0xf]
        %v5799 = vld [vmem:[%s5765 + $0x84] sm:$0xf]
        %v5800 = vld [vmem:[%s5765 + $0x88] sm:$0xf]
        %v5801 = vld [vmem:[%s5765 + $0x8c] sm:$0xf]
        %v5802 = vld [vmem:[%s5765 + $0x90] sm:$0xf]
        %v5803 = vld [vmem:[%s5765 + $0x94] sm:$0xf]
        %v5804 = vld [vmem:[%s5765 + $0x98] sm:$0xf]
        %v5805 = vld [vmem:[%s5765 + $0x9c] sm:$0xf]
        %v5806 = vld [vmem:[%s5765 + $0xa0] sm:$0xf]
        %v5807 = vld [vmem:[%s5765 + $0xa4] sm:$0xf]
        %v5808 = vld [vmem:[%s5765 + $0xa8] sm:$0xf]
        %v5809 = vld [vmem:[%s5765 + $0xac] sm:$0xf]
        %v5810 = vld [vmem:[%s5765 + $0xb0] sm:$0xf]
        %v5811 = vld [vmem:[%s5765 + $0xb4] sm:$0xf]
        %v5812 = vld [vmem:[%s5765 + $0xb8] sm:$0xf]
        %v5813 = vld [vmem:[%s5765 + $0xbc] sm:$0xf]
        %v5814 = vld [vmem:[%s5765 + $0xc0] sm:$0xf]
        %v5815 = vld [vmem:[%s5765 + $0xc4] sm:$0xf]
        %v5816 = vld [vmem:[%s5765 + $0xc8] sm:$0xf]
        %v5817 = vld [vmem:[%s5765 + $0xcc] sm:$0xf]
        %v5818 = vld [vmem:[%s5765 + $0xd0] sm:$0xf]
        %v5819 = vld [vmem:[%s5765 + $0xd4] sm:$0xf]
        %v5820 = vld [vmem:[%s5765 + $0xd8] sm:$0xf]
        %v5821 = vld [vmem:[%s5765 + $0xdc] sm:$0xf]
        %v5822 = vld [vmem:[%s5765 + $0xe0] sm:$0xf]
        %v5823 = vld [vmem:[%s5765 + $0xe4] sm:$0xf]
        %v5824 = vld [vmem:[%s5765 + $0xe8] sm:$0xf]
        %v5825 = vld [vmem:[%s5765 + $0xec] sm:$0xf]
        %v5826 = vld [vmem:[%s5765 + $0xf0] sm:$0xf]
        %v5827 = vld [vmem:[%s5765 + $0xf4] sm:$0xf]
        %v5828 = vld [vmem:[%s5765 + $0xf8] sm:$0xf]
        %v5829 = vld [vmem:[%s5765 + $0xfc] sm:$0xf]
        %v5830 = vld [vmem:[%s5765 + $0x100] sm:$0xf]
        %v5831 = vld [vmem:[%s5765 + $0x104] sm:$0xf]
        %v5832 = vld [vmem:[%s5765 + $0x108] sm:$0xf]
        %v5833 = vld [vmem:[%s5765 + $0x10c] sm:$0xf]
        %v5834 = vld [vmem:[%s5765 + $0x110] sm:$0xf]
        %v5835 = vld [vmem:[%s5765 + $0x114] sm:$0xf]
        %v5836 = vld [vmem:[%s5765 + $0x118] sm:$0xf]
        %v5837 = vld [vmem:[%s5765 + $0x11c] sm:$0xf]
        %v5838 = vld [vmem:[%s5765 + $0x120] sm:$0xf]
        %v5839 = vld [vmem:[%s5765 + $0x124] sm:$0xf]
        %v5840 = vld [vmem:[%s5765 + $0x128] sm:$0xf]
        %v5841 = vld [vmem:[%s5765 + $0x12c] sm:$0xf]
        %v5842 = vld [vmem:[%s5765 + $0x130] sm:$0xf]
        %v5843 = vld [vmem:[%s5765 + $0x134] sm:$0xf]
        %v5844 = vld [vmem:[%s5765 + $0x138] sm:$0xf]
        %v5845 = vld [vmem:[%s5765 + $0x13c] sm:$0xf]
        %v5846 = vld [vmem:[%s5765 + $0x140] sm:$0xf]
        %v5847 = vld [vmem:[%s5765 + $0x144] sm:$0xf]
        %v5848 = vld [vmem:[%s5765 + $0x148] sm:$0xf]
        %v5849 = vld [vmem:[%s5765 + $0x14c] sm:$0xf]
        %v5850 = vld [vmem:[%s5765 + $0x150] sm:$0xf]
        %v5851 = vld [vmem:[%s5765 + $0x154] sm:$0xf]
        %v5852 = vld [vmem:[%s5765 + $0x158] sm:$0xf]
        %v5853 = vld [vmem:[%s5765 + $0x15c] sm:$0xf]
        %v5854 = vld [vmem:[%s5765 + $0x160] sm:$0xf]
        %v5855 = vld [vmem:[%s5765 + $0x164] sm:$0xf]
        %v5856 = vld [vmem:[%s5765 + $0x168] sm:$0xf]
        %v5857 = vld [vmem:[%s5765 + $0x16c] sm:$0xf]
        %v5858 = vld [vmem:[%s5765 + $0x170] sm:$0xf]
        %v5859 = vld [vmem:[%s5765 + $0x174] sm:$0xf]
        %v5860 = vld [vmem:[%s5765 + $0x178] sm:$0xf]
        %v5861 = vld [vmem:[%s5765 + $0x17c] sm:$0xf]
        %v5958 = vunpack.c.l.b16 %v5669
        %v5959 = vunpack.c.h.b16 %v5669
        %v5960 = vunpack.c.l.b16 %v5670
        %v5961 = vunpack.c.h.b16 %v5670
        %v5962 = vunpack.c.l.b16 %v5671
        %v5963 = vunpack.c.h.b16 %v5671
        %v5964 = vunpack.c.l.b16 %v5672
        %v5965 = vunpack.c.h.b16 %v5672
        %v5966 = vunpack.c.l.b16 %v5673
        %v5967 = vunpack.c.h.b16 %v5673
        %v5968 = vunpack.c.l.b16 %v5674
        %v5969 = vunpack.c.h.b16 %v5674
        %v5970 = vunpack.c.l.b16 %v5675
        %v5971 = vunpack.c.h.b16 %v5675
        %v5972 = vunpack.c.l.b16 %v5676
        %v5973 = vunpack.c.h.b16 %v5676
        %v5974 = vunpack.c.l.b16 %v5677
        %v5975 = vunpack.c.h.b16 %v5677
        %v5976 = vunpack.c.l.b16 %v5678
        %v5977 = vunpack.c.h.b16 %v5678
        %v5978 = vunpack.c.l.b16 %v5679
        %v5979 = vunpack.c.h.b16 %v5679
        %v5980 = vunpack.c.l.b16 %v5680
        %v5981 = vunpack.c.h.b16 %v5680
        %v5982 = vunpack.c.l.b16 %v5681
        %v5983 = vunpack.c.h.b16 %v5681
        %v5984 = vunpack.c.l.b16 %v5682
        %v5985 = vunpack.c.h.b16 %v5682
        %v5986 = vunpack.c.l.b16 %v5683
        %v5987 = vunpack.c.h.b16 %v5683
        %v5988 = vunpack.c.l.b16 %v5684
        %v5989 = vunpack.c.h.b16 %v5684
        %v5990 = vunpack.c.l.b16 %v5685
        %v5991 = vunpack.c.h.b16 %v5685
        %v5992 = vunpack.c.l.b16 %v5686
        %v5993 = vunpack.c.h.b16 %v5686
        %v5994 = vunpack.c.l.b16 %v5687
        %v5995 = vunpack.c.h.b16 %v5687
        %v5996 = vunpack.c.l.b16 %v5688
        %v5997 = vunpack.c.h.b16 %v5688
        %v5998 = vunpack.c.l.b16 %v5689
        %v5999 = vunpack.c.h.b16 %v5689
        %v6000 = vunpack.c.l.b16 %v5690
        %v6001 = vunpack.c.h.b16 %v5690
        %v6002 = vunpack.c.l.b16 %v5691
        %v6003 = vunpack.c.h.b16 %v5691
        %v6004 = vunpack.c.l.b16 %v5692
        %v6005 = vunpack.c.h.b16 %v5692
        %v6006 = vunpack.c.l.b16 %v5693
        %v6007 = vunpack.c.h.b16 %v5693
        %v6008 = vunpack.c.l.b16 %v5694
        %v6009 = vunpack.c.h.b16 %v5694
        %v6010 = vunpack.c.l.b16 %v5695
        %v6011 = vunpack.c.h.b16 %v5695
        %v6012 = vunpack.c.l.b16 %v5696
        %v6013 = vunpack.c.h.b16 %v5696
        %v6014 = vunpack.c.l.b16 %v5697
        %v6015 = vunpack.c.h.b16 %v5697
        %v6016 = vunpack.c.l.b16 %v5698
        %v6017 = vunpack.c.h.b16 %v5698
        %v6018 = vunpack.c.l.b16 %v5699
        %v6019 = vunpack.c.h.b16 %v5699
        %v6020 = vunpack.c.l.b16 %v5700
        %v6021 = vunpack.c.h.b16 %v5700
        %v6022 = vunpack.c.l.b16 %v5701
        %v6023 = vunpack.c.h.b16 %v5701
        %v6024 = vunpack.c.l.b16 %v5702
        %v6025 = vunpack.c.h.b16 %v5702
        %v6026 = vunpack.c.l.b16 %v5703
        %v6027 = vunpack.c.h.b16 %v5703
        %v6028 = vunpack.c.l.b16 %v5704
        %v6029 = vunpack.c.h.b16 %v5704
        %v6030 = vunpack.c.l.b16 %v5705
        %v6031 = vunpack.c.h.b16 %v5705
        %v6032 = vunpack.c.l.b16 %v5706
        %v6033 = vunpack.c.h.b16 %v5706
        %v6034 = vunpack.c.l.b16 %v5707
        %v6035 = vunpack.c.h.b16 %v5707
        %v6036 = vunpack.c.l.b16 %v5708
        %v6037 = vunpack.c.h.b16 %v5708
        %v6038 = vunpack.c.l.b16 %v5709
        %v6039 = vunpack.c.h.b16 %v5709
        %v6040 = vunpack.c.l.b16 %v5710
        %v6041 = vunpack.c.h.b16 %v5710
        %v6042 = vunpack.c.l.b16 %v5711
        %v6043 = vunpack.c.h.b16 %v5711
        %v6044 = vunpack.c.l.b16 %v5712
        %v6045 = vunpack.c.h.b16 %v5712
        %v6046 = vunpack.c.l.b16 %v5713
        %v6047 = vunpack.c.h.b16 %v5713
        %v6048 = vunpack.c.l.b16 %v5714
        %v6049 = vunpack.c.h.b16 %v5714
        %v6050 = vunpack.c.l.b16 %v5715
        %v6051 = vunpack.c.h.b16 %v5715
        %v6052 = vunpack.c.l.b16 %v5716
        %v6053 = vunpack.c.h.b16 %v5716
        %v6054 = vunpack.c.l.b16 %v5717
        %v6055 = vunpack.c.h.b16 %v5717
        %v6056 = vunpack.c.l.b16 %v5718
        %v6057 = vunpack.c.h.b16 %v5718
        %v6058 = vunpack.c.l.b16 %v5719
        %v6059 = vunpack.c.h.b16 %v5719
        %v6060 = vunpack.c.l.b16 %v5720
        %v6061 = vunpack.c.h.b16 %v5720
        %v6062 = vunpack.c.l.b16 %v5721
        %v6063 = vunpack.c.h.b16 %v5721
        %v6064 = vunpack.c.l.b16 %v5722
        %v6065 = vunpack.c.h.b16 %v5722
        %v6066 = vunpack.c.l.b16 %v5723
        %v6067 = vunpack.c.h.b16 %v5723
        %v6068 = vunpack.c.l.b16 %v5724
        %v6069 = vunpack.c.h.b16 %v5724
        %v6070 = vunpack.c.l.b16 %v5725
        %v6071 = vunpack.c.h.b16 %v5725
        %v6072 = vunpack.c.l.b16 %v5726
        %v6073 = vunpack.c.h.b16 %v5726
        %v6074 = vunpack.c.l.b16 %v5727
        %v6075 = vunpack.c.h.b16 %v5727
        %v6076 = vunpack.c.l.b16 %v5728
        %v6077 = vunpack.c.h.b16 %v5728
        %v6078 = vunpack.c.l.b16 %v5729
        %v6079 = vunpack.c.h.b16 %v5729
        %v6080 = vunpack.c.l.b16 %v5730
        %v6081 = vunpack.c.h.b16 %v5730
        %v6082 = vunpack.c.l.b16 %v5731
        %v6083 = vunpack.c.h.b16 %v5731
        %v6084 = vunpack.c.l.b16 %v5732
        %v6085 = vunpack.c.h.b16 %v5732
        %v6086 = vunpack.c.l.b16 %v5733
        %v6087 = vunpack.c.h.b16 %v5733
        %v6088 = vunpack.c.l.b16 %v5734
        %v6089 = vunpack.c.h.b16 %v5734
        %v6090 = vunpack.c.l.b16 %v5735
        %v6091 = vunpack.c.h.b16 %v5735
        %v6092 = vunpack.c.l.b16 %v5736
        %v6093 = vunpack.c.h.b16 %v5736
        %v6094 = vunpack.c.l.b16 %v5737
        %v6095 = vunpack.c.h.b16 %v5737
        %v6096 = vunpack.c.l.b16 %v5738
        %v6097 = vunpack.c.h.b16 %v5738
        %v6098 = vunpack.c.l.b16 %v5739
        %v6099 = vunpack.c.h.b16 %v5739
        %v6100 = vunpack.c.l.b16 %v5740
        %v6101 = vunpack.c.h.b16 %v5740
        %v6102 = vunpack.c.l.b16 %v5741
        %v6103 = vunpack.c.h.b16 %v5741
        %v6104 = vunpack.c.l.b16 %v5742
        %v6105 = vunpack.c.h.b16 %v5742
        %v6106 = vunpack.c.l.b16 %v5743
        %v6107 = vunpack.c.h.b16 %v5743
        %v6108 = vunpack.c.l.b16 %v5744
        %v6109 = vunpack.c.h.b16 %v5744
        %v6110 = vunpack.c.l.b16 %v5745
        %v6111 = vunpack.c.h.b16 %v5745
        %v6112 = vunpack.c.l.b16 %v5746
        %v6113 = vunpack.c.h.b16 %v5746
        %v6114 = vunpack.c.l.b16 %v5747
        %v6115 = vunpack.c.h.b16 %v5747
        %v6116 = vunpack.c.l.b16 %v5748
        %v6117 = vunpack.c.h.b16 %v5748
        %v6118 = vunpack.c.l.b16 %v5749
        %v6119 = vunpack.c.h.b16 %v5749
        %v6120 = vunpack.c.l.b16 %v5750
        %v6121 = vunpack.c.h.b16 %v5750
        %v6122 = vunpack.c.l.b16 %v5751
        %v6123 = vunpack.c.h.b16 %v5751
        %v6124 = vunpack.c.l.b16 %v5752
        %v6125 = vunpack.c.h.b16 %v5752
        %v6126 = vunpack.c.l.b16 %v5753
        %v6127 = vunpack.c.h.b16 %v5753
        %v6128 = vunpack.c.l.b16 %v5754
        %v6129 = vunpack.c.h.b16 %v5754
        %v6130 = vunpack.c.l.b16 %v5755
        %v6131 = vunpack.c.h.b16 %v5755
        %v6132 = vunpack.c.l.b16 %v5756
        %v6133 = vunpack.c.h.b16 %v5756
        %v6134 = vunpack.c.l.b16 %v5757
        %v6135 = vunpack.c.h.b16 %v5757
        %v6136 = vunpack.c.l.b16 %v5758
        %v6137 = vunpack.c.h.b16 %v5758
        %v6138 = vunpack.c.l.b16 %v5759
        %v6139 = vunpack.c.h.b16 %v5759
        %v6140 = vunpack.c.l.b16 %v5760
        %v6141 = vunpack.c.h.b16 %v5760
        %v6142 = vunpack.c.l.b16 %v5761
        %v6143 = vunpack.c.h.b16 %v5761
        %v6144 = vunpack.c.l.b16 %v5762
        %v6145 = vunpack.c.h.b16 %v5762
        %v6146 = vunpack.c.l.b16 %v5763
        %v6147 = vunpack.c.h.b16 %v5763
        %v6148 = vunpack.c.l.b16 %v5764
        %v6149 = vunpack.c.h.b16 %v5764
        %v6150 = vpack.c.b16 %v5964, %v5958
        %v6151 = vpack.c.b16 %v5965, %v5959
        %v6152 = vpack.c.b16 %v5966, %v5960
        %v6153 = vpack.c.b16 %v5967, %v5961
        %v6154 = vpack.c.b16 %v5968, %v5962
        %v6155 = vpack.c.b16 %v5969, %v5963
        %v6156 = vpack.c.b16 %v5976, %v5970
        %v6157 = vpack.c.b16 %v5977, %v5971
        %v6158 = vpack.c.b16 %v5978, %v5972
        %v6159 = vpack.c.b16 %v5979, %v5973
        %v6160 = vpack.c.b16 %v5980, %v5974
        %v6161 = vpack.c.b16 %v5981, %v5975
        %v6162 = vpack.c.b16 %v5988, %v5982
        %v6163 = vpack.c.b16 %v5989, %v5983
        %v6164 = vpack.c.b16 %v5990, %v5984
        %v6165 = vpack.c.b16 %v5991, %v5985
        %v6166 = vpack.c.b16 %v5992, %v5986
        %v6167 = vpack.c.b16 %v5993, %v5987
        %v6168 = vpack.c.b16 %v6000, %v5994
        %v6169 = vpack.c.b16 %v6001, %v5995
        %v6170 = vpack.c.b16 %v6002, %v5996
        %v6171 = vpack.c.b16 %v6003, %v5997
        %v6172 = vpack.c.b16 %v6004, %v5998
        %v6173 = vpack.c.b16 %v6005, %v5999
        %v6174 = vpack.c.b16 %v6012, %v6006
        %v6175 = vpack.c.b16 %v6013, %v6007
        %v6176 = vpack.c.b16 %v6014, %v6008
        %v6177 = vpack.c.b16 %v6015, %v6009
        %v6178 = vpack.c.b16 %v6016, %v6010
        %v6179 = vpack.c.b16 %v6017, %v6011
        %v6180 = vpack.c.b16 %v6024, %v6018
        %v6181 = vpack.c.b16 %v6025, %v6019
        %v6182 = vpack.c.b16 %v6026, %v6020
        %v6183 = vpack.c.b16 %v6027, %v6021
        %v6184 = vpack.c.b16 %v6028, %v6022
        %v6185 = vpack.c.b16 %v6029, %v6023
        %v6186 = vpack.c.b16 %v6036, %v6030
        %v6187 = vpack.c.b16 %v6037, %v6031
        %v6188 = vpack.c.b16 %v6038, %v6032
        %v6189 = vpack.c.b16 %v6039, %v6033
        %v6190 = vpack.c.b16 %v6040, %v6034
        %v6191 = vpack.c.b16 %v6041, %v6035
        %v6192 = vpack.c.b16 %v6048, %v6042
        %v6193 = vpack.c.b16 %v6049, %v6043
        %v6194 = vpack.c.b16 %v6050, %v6044
        %v6195 = vpack.c.b16 %v6051, %v6045
        %v6196 = vpack.c.b16 %v6052, %v6046
        %v6197 = vpack.c.b16 %v6053, %v6047
        %v6198 = vpack.c.b16 %v6060, %v6054
        %v6199 = vpack.c.b16 %v6061, %v6055
        %v6200 = vpack.c.b16 %v6062, %v6056
        %v6201 = vpack.c.b16 %v6063, %v6057
        %v6202 = vpack.c.b16 %v6064, %v6058
        %v6203 = vpack.c.b16 %v6065, %v6059
        %v6204 = vpack.c.b16 %v6072, %v6066
        %v6205 = vpack.c.b16 %v6073, %v6067
        %v6206 = vpack.c.b16 %v6074, %v6068
        %v6207 = vpack.c.b16 %v6075, %v6069
        %v6208 = vpack.c.b16 %v6076, %v6070
        %v6209 = vpack.c.b16 %v6077, %v6071
        %v6210 = vpack.c.b16 %v6084, %v6078
        %v6211 = vpack.c.b16 %v6085, %v6079
        %v6212 = vpack.c.b16 %v6086, %v6080
        %v6213 = vpack.c.b16 %v6087, %v6081
        %v6214 = vpack.c.b16 %v6088, %v6082
        %v6215 = vpack.c.b16 %v6089, %v6083
        %v6216 = vpack.c.b16 %v6096, %v6090
        %v6217 = vpack.c.b16 %v6097, %v6091
        %v6218 = vpack.c.b16 %v6098, %v6092
        %v6219 = vpack.c.b16 %v6099, %v6093
        %v6220 = vpack.c.b16 %v6100, %v6094
        %v6221 = vpack.c.b16 %v6101, %v6095
        %v6222 = vpack.c.b16 %v6108, %v6102
        %v6223 = vpack.c.b16 %v6109, %v6103
        %v6224 = vpack.c.b16 %v6110, %v6104
        %v6225 = vpack.c.b16 %v6111, %v6105
        %v6226 = vpack.c.b16 %v6112, %v6106
        %v6227 = vpack.c.b16 %v6113, %v6107
        %v6228 = vpack.c.b16 %v6120, %v6114
        %v6229 = vpack.c.b16 %v6121, %v6115
        %v6230 = vpack.c.b16 %v6122, %v6116
        %v6231 = vpack.c.b16 %v6123, %v6117
        %v6232 = vpack.c.b16 %v6124, %v6118
        %v6233 = vpack.c.b16 %v6125, %v6119
        %v6234 = vpack.c.b16 %v6132, %v6126
        %v6235 = vpack.c.b16 %v6133, %v6127
        %v6236 = vpack.c.b16 %v6134, %v6128
        %v6237 = vpack.c.b16 %v6135, %v6129
        %v6238 = vpack.c.b16 %v6136, %v6130
        %v6239 = vpack.c.b16 %v6137, %v6131
        %v6240 = vpack.c.b16 %v6144, %v6138
        %v6241 = vpack.c.b16 %v6145, %v6139
        %v6242 = vpack.c.b16 %v6146, %v6140
        %v6243 = vpack.c.b16 %v6147, %v6141
        %v6244 = vpack.c.b16 %v6148, %v6142
        %v6245 = vpack.c.b16 %v6149, %v6143
        %v6438 = vunpack.c.l.b16 %v5766
        %v6439 = vunpack.c.l.b16 %v5767
        %v6440 = vunpack.c.l.b16 %v5768
        %v6441 = vunpack.c.l.b16 %v5769
        %v6442 = vunpack.c.l.b16 %v5770
        %v6443 = vunpack.c.l.b16 %v5771
        %v6444 = vunpack.c.l.b16 %v5772
        %v6445 = vunpack.c.l.b16 %v5773
        %v6446 = vunpack.c.l.b16 %v5774
        %v6447 = vunpack.c.l.b16 %v5775
        %v6448 = vunpack.c.l.b16 %v5776
        %v6449 = vunpack.c.l.b16 %v5777
        %v6450 = vunpack.c.l.b16 %v5778
        %v6451 = vunpack.c.l.b16 %v5779
        %v6452 = vunpack.c.l.b16 %v5780
        %v6453 = vunpack.c.l.b16 %v5781
        %v6454 = vunpack.c.l.b16 %v5782
        %v6455 = vunpack.c.l.b16 %v5783
        %v6456 = vunpack.c.l.b16 %v5784
        %v6457 = vunpack.c.l.b16 %v5785
        %v6458 = vunpack.c.l.b16 %v5786
        %v6459 = vunpack.c.l.b16 %v5787
        %v6460 = vunpack.c.l.b16 %v5788
        %v6461 = vunpack.c.l.b16 %v5789
        %v6462 = vunpack.c.l.b16 %v5790
        %v6463 = vunpack.c.l.b16 %v5791
        %v6464 = vunpack.c.l.b16 %v5792
        %v6465 = vunpack.c.l.b16 %v5793
        %v6466 = vunpack.c.l.b16 %v5794
        %v6467 = vunpack.c.l.b16 %v5795
        %v6468 = vunpack.c.l.b16 %v5796
        %v6469 = vunpack.c.l.b16 %v5797
        %v6470 = vunpack.c.l.b16 %v5798
        %v6471 = vunpack.c.l.b16 %v5799
        %v6472 = vunpack.c.l.b16 %v5800
        %v6473 = vunpack.c.l.b16 %v5801
        %v6474 = vunpack.c.l.b16 %v5802
        %v6475 = vunpack.c.l.b16 %v5803
        %v6476 = vunpack.c.l.b16 %v5804
        %v6477 = vunpack.c.l.b16 %v5805
        %v6478 = vunpack.c.l.b16 %v5806
        %v6479 = vunpack.c.l.b16 %v5807
        %v6480 = vunpack.c.l.b16 %v5808
        %v6481 = vunpack.c.l.b16 %v5809
        %v6482 = vunpack.c.l.b16 %v5810
        %v6483 = vunpack.c.l.b16 %v5811
        %v6484 = vunpack.c.l.b16 %v5812
        %v6485 = vunpack.c.l.b16 %v5813
        %v6486 = vunpack.c.l.b16 %v5814
        %v6487 = vunpack.c.l.b16 %v5815
        %v6488 = vunpack.c.l.b16 %v5816
        %v6489 = vunpack.c.l.b16 %v5817
        %v6490 = vunpack.c.l.b16 %v5818
        %v6491 = vunpack.c.l.b16 %v5819
        %v6492 = vunpack.c.l.b16 %v5820
        %v6493 = vunpack.c.l.b16 %v5821
        %v6494 = vunpack.c.l.b16 %v5822
        %v6495 = vunpack.c.l.b16 %v5823
        %v6496 = vunpack.c.l.b16 %v5824
        %v6497 = vunpack.c.l.b16 %v5825
        %v6498 = vunpack.c.l.b16 %v5826
        %v6499 = vunpack.c.l.b16 %v5827
        %v6500 = vunpack.c.l.b16 %v5828
        %v6501 = vunpack.c.l.b16 %v5829
        %v6502 = vunpack.c.l.b16 %v5830
        %v6503 = vunpack.c.l.b16 %v5831
        %v6504 = vunpack.c.l.b16 %v5832
        %v6505 = vunpack.c.l.b16 %v5833
        %v6506 = vunpack.c.l.b16 %v5834
        %v6507 = vunpack.c.l.b16 %v5835
        %v6508 = vunpack.c.l.b16 %v5836
        %v6509 = vunpack.c.l.b16 %v5837
        %v6510 = vunpack.c.l.b16 %v5838
        %v6511 = vunpack.c.l.b16 %v5839
        %v6512 = vunpack.c.l.b16 %v5840
        %v6513 = vunpack.c.l.b16 %v5841
        %v6514 = vunpack.c.l.b16 %v5842
        %v6515 = vunpack.c.l.b16 %v5843
        %v6516 = vunpack.c.l.b16 %v5844
        %v6517 = vunpack.c.l.b16 %v5845
        %v6518 = vunpack.c.l.b16 %v5846
        %v6519 = vunpack.c.l.b16 %v5847
        %v6520 = vunpack.c.l.b16 %v5848
        %v6521 = vunpack.c.l.b16 %v5849
        %v6522 = vunpack.c.l.b16 %v5850
        %v6523 = vunpack.c.l.b16 %v5851
        %v6524 = vunpack.c.l.b16 %v5852
        %v6525 = vunpack.c.l.b16 %v5853
        %v6526 = vunpack.c.l.b16 %v5854
        %v6527 = vunpack.c.l.b16 %v5855
        %v6528 = vunpack.c.l.b16 %v5856
        %v6529 = vunpack.c.l.b16 %v5857
        %v6530 = vunpack.c.l.b16 %v5858
        %v6531 = vunpack.c.l.b16 %v5859
        %v6532 = vunpack.c.l.b16 %v5860
        %v6533 = vunpack.c.l.b16 %v5861
        %v6534 = vpack.c.b16 %v6439, %v6438
        %v6535 = vpack.c.b16 %v6441, %v6440
        %v6536 = vpack.c.b16 %v6443, %v6442
        %v6537 = vpack.c.b16 %v6445, %v6444
        %v6538 = vpack.c.b16 %v6447, %v6446
        %v6539 = vpack.c.b16 %v6449, %v6448
        %v6540 = vpack.c.b16 %v6451, %v6450
        %v6541 = vpack.c.b16 %v6453, %v6452
        %v6542 = vpack.c.b16 %v6455, %v6454
        %v6543 = vpack.c.b16 %v6457, %v6456
        %v6544 = vpack.c.b16 %v6459, %v6458
        %v6545 = vpack.c.b16 %v6461, %v6460
        %v6546 = vpack.c.b16 %v6463, %v6462
        %v6547 = vpack.c.b16 %v6465, %v6464
        %v6548 = vpack.c.b16 %v6467, %v6466
        %v6549 = vpack.c.b16 %v6469, %v6468
        %v6550 = vpack.c.b16 %v6471, %v6470
        %v6551 = vpack.c.b16 %v6473, %v6472
        %v6552 = vpack.c.b16 %v6475, %v6474
        %v6553 = vpack.c.b16 %v6477, %v6476
        %v6554 = vpack.c.b16 %v6479, %v6478
        %v6555 = vpack.c.b16 %v6481, %v6480
        %v6556 = vpack.c.b16 %v6483, %v6482
        %v6557 = vpack.c.b16 %v6485, %v6484
        %v6558 = vpack.c.b16 %v6487, %v6486
        %v6559 = vpack.c.b16 %v6489, %v6488
        %v6560 = vpack.c.b16 %v6491, %v6490
        %v6561 = vpack.c.b16 %v6493, %v6492
        %v6562 = vpack.c.b16 %v6495, %v6494
        %v6563 = vpack.c.b16 %v6497, %v6496
        %v6564 = vpack.c.b16 %v6499, %v6498
        %v6565 = vpack.c.b16 %v6501, %v6500
        %v6566 = vpack.c.b16 %v6503, %v6502
        %v6567 = vpack.c.b16 %v6505, %v6504
        %v6568 = vpack.c.b16 %v6507, %v6506
        %v6569 = vpack.c.b16 %v6509, %v6508
        %v6570 = vpack.c.b16 %v6511, %v6510
        %v6571 = vpack.c.b16 %v6513, %v6512
        %v6572 = vpack.c.b16 %v6515, %v6514
        %v6573 = vpack.c.b16 %v6517, %v6516
        %v6574 = vpack.c.b16 %v6519, %v6518
        %v6575 = vpack.c.b16 %v6521, %v6520
        %v6576 = vpack.c.b16 %v6523, %v6522
        %v6577 = vpack.c.b16 %v6525, %v6524
        %v6578 = vpack.c.b16 %v6527, %v6526
        %v6579 = vpack.c.b16 %v6529, %v6528
        %v6580 = vpack.c.b16 %v6531, %v6530
        %v6581 = vpack.c.b16 %v6533, %v6532
        %6630 = vmatpush.bf16.msra.mxu0 %v6541
        %6631 = vmatpush.bf16.msra.mxu0 %v6540
        %6632 = vmatpush.bf16.msra.mxu0 %v6539
        %6633 = vmatpush.bf16.msra.mxu0 %v6538
        %6634 = vmatpush.bf16.msra.mxu0 %v6537
        %6635 = vmatpush.bf16.msra.mxu0 %v6536
        %6636 = vmatpush.bf16.msra.mxu0 %v6535
        %6637 = vmatpush.bf16.msra.mxu0 %v6534
        %6638 = vmatmul.bf16.gmra.mxu0 %v6150
        %v6639 = vpop.f32.mrf.mxu0
        %v6640 = vadd.f32 0.0, %v6639
        %v6641 = vpop.f32.mrf.mxu0
        %v6642 = vadd.f32 0.0, %v6641
        %6643 = vmatmul.bf16.gmra.mxu0 %v6156
        %v6644 = vpop.f32.mrf.mxu0
        %v6645 = vadd.f32 0.0, %v6644
        %v6646 = vpop.f32.mrf.mxu0
        %v6647 = vadd.f32 0.0, %v6646
        %6648 = vmatmul.bf16.gmra.mxu0 %v6162
        %v6649 = vpop.f32.mrf.mxu0
        %v6650 = vadd.f32 0.0, %v6649
        %v6651 = vpop.f32.mrf.mxu0
        %v6652 = vadd.f32 0.0, %v6651
        %6653 = vmatmul.bf16.gmra.mxu0 %v6168
        %v6654 = vpop.f32.mrf.mxu0
        %v6655 = vadd.f32 0.0, %v6654
        %v6656 = vpop.f32.mrf.mxu0
        %v6657 = vadd.f32 0.0, %v6656
        %6658 = vmatmul.bf16.gmra.mxu0 %v6174
        %v6659 = vpop.f32.mrf.mxu0
        %v6660 = vadd.f32 0.0, %v6659
        %v6661 = vpop.f32.mrf.mxu0
        %v6662 = vadd.f32 0.0, %v6661
        %6663 = vmatmul.bf16.gmra.mxu0 %v6180
        %v6664 = vpop.f32.mrf.mxu0
        %v6665 = vadd.f32 0.0, %v6664
        %v6666 = vpop.f32.mrf.mxu0
        %v6667 = vadd.f32 0.0, %v6666
        %6668 = vmatmul.bf16.gmra.mxu0 %v6186
        %v6669 = vpop.f32.mrf.mxu0
        %v6670 = vadd.f32 0.0, %v6669
        %v6671 = vpop.f32.mrf.mxu0
        %v6672 = vadd.f32 0.0, %v6671
        %6673 = vmatmul.bf16.gmra.mxu0 %v6192
        %v6674 = vpop.f32.mrf.mxu0
        %v6675 = vadd.f32 0.0, %v6674
        %v6676 = vpop.f32.mrf.mxu0
        %v6677 = vadd.f32 0.0, %v6676
        %6678 = vmatmul.bf16.gmra.mxu0 %v6198
        %v6679 = vpop.f32.mrf.mxu0
        %v6680 = vadd.f32 0.0, %v6679
        %v6681 = vpop.f32.mrf.mxu0
        %v6682 = vadd.f32 0.0, %v6681
        %6683 = vmatmul.bf16.gmra.mxu0 %v6204
        %v6684 = vpop.f32.mrf.mxu0
        %v6685 = vadd.f32 0.0, %v6684
        %v6686 = vpop.f32.mrf.mxu0
        %v6687 = vadd.f32 0.0, %v6686
        %6688 = vmatmul.bf16.gmra.mxu0 %v6210
        %v6689 = vpop.f32.mrf.mxu0
        %v6690 = vadd.f32 0.0, %v6689
        %v6691 = vpop.f32.mrf.mxu0
        %v6692 = vadd.f32 0.0, %v6691
        %6693 = vmatmul.bf16.gmra.mxu0 %v6216
        %v6694 = vpop.f32.mrf.mxu0
        %v6695 = vadd.f32 0.0, %v6694
        %v6696 = vpop.f32.mrf.mxu0
        %v6697 = vadd.f32 0.0, %v6696
        %6698 = vmatmul.bf16.gmra.mxu0 %v6222
        %v6699 = vpop.f32.mrf.mxu0
        %v6700 = vadd.f32 0.0, %v6699
        %v6701 = vpop.f32.mrf.mxu0
        %v6702 = vadd.f32 0.0, %v6701
        %6703 = vmatmul.bf16.gmra.mxu0 %v6228
        %v6704 = vpop.f32.mrf.mxu0
        %v6705 = vadd.f32 0.0, %v6704
        %v6706 = vpop.f32.mrf.mxu0
        %v6707 = vadd.f32 0.0, %v6706
        %6708 = vmatmul.bf16.gmra.mxu0 %v6234
        %v6709 = vpop.f32.mrf.mxu0
        %v6710 = vadd.f32 0.0, %v6709
        %v6711 = vpop.f32.mrf.mxu0
        %v6712 = vadd.f32 0.0, %v6711
        %6713 = vmatmul.bf16.gmra.mxu0 %v6240
        %v6714 = vpop.f32.mrf.mxu0
        %v6715 = vadd.f32 0.0, %v6714
        %v6716 = vpop.f32.mrf.mxu0
        %v6717 = vadd.f32 0.0, %v6716
        %6718 = vdwg.mxu0
        %6719 = vmatpush.bf16.msra.mxu0 %v6549
        %6720 = vmatpush.bf16.msra.mxu0 %v6548
        %6721 = vmatpush.bf16.msra.mxu0 %v6547
        %6722 = vmatpush.bf16.msra.mxu0 %v6546
        %6723 = vmatpush.bf16.msra.mxu0 %v6545
        %6724 = vmatpush.bf16.msra.mxu0 %v6544
        %6725 = vmatpush.bf16.msra.mxu0 %v6543
        %6726 = vmatpush.bf16.msra.mxu0 %v6542
        %6727 = vmatmul.bf16.gmra.mxu0 %v6151
        %v6728 = vpop.f32.mrf.mxu0
        %v6729 = vadd.f32 %v6640, %v6728
        %v6730 = vpop.f32.mrf.mxu0
        %v6731 = vadd.f32 %v6642, %v6730
        %6732 = vmatmul.bf16.gmra.mxu0 %v6157
        %v6733 = vpop.f32.mrf.mxu0
        %v6734 = vadd.f32 %v6645, %v6733
        %v6735 = vpop.f32.mrf.mxu0
        %v6736 = vadd.f32 %v6647, %v6735
        %6737 = vmatmul.bf16.gmra.mxu0 %v6163
        %v6738 = vpop.f32.mrf.mxu0
        %v6739 = vadd.f32 %v6650, %v6738
        %v6740 = vpop.f32.mrf.mxu0
        %v6741 = vadd.f32 %v6652, %v6740
        %6742 = vmatmul.bf16.gmra.mxu0 %v6169
        %v6743 = vpop.f32.mrf.mxu0
        %v6744 = vadd.f32 %v6655, %v6743
        %v6745 = vpop.f32.mrf.mxu0
        %v6746 = vadd.f32 %v6657, %v6745
        %6747 = vmatmul.bf16.gmra.mxu0 %v6175
        %v6748 = vpop.f32.mrf.mxu0
        %v6749 = vadd.f32 %v6660, %v6748
        %v6750 = vpop.f32.mrf.mxu0
        %v6751 = vadd.f32 %v6662, %v6750
        %6752 = vmatmul.bf16.gmra.mxu0 %v6181
        %v6753 = vpop.f32.mrf.mxu0
        %v6754 = vadd.f32 %v6665, %v6753
        %v6755 = vpop.f32.mrf.mxu0
        %v6756 = vadd.f32 %v6667, %v6755
        %6757 = vmatmul.bf16.gmra.mxu0 %v6187
        %v6758 = vpop.f32.mrf.mxu0
        %v6759 = vadd.f32 %v6670, %v6758
        %v6760 = vpop.f32.mrf.mxu0
        %v6761 = vadd.f32 %v6672, %v6760
        %6762 = vmatmul.bf16.gmra.mxu0 %v6193
        %v6763 = vpop.f32.mrf.mxu0
        %v6764 = vadd.f32 %v6675, %v6763
        %v6765 = vpop.f32.mrf.mxu0
        %v6766 = vadd.f32 %v6677, %v6765
        %6767 = vmatmul.bf16.gmra.mxu0 %v6199
        %v6768 = vpop.f32.mrf.mxu0
        %v6769 = vadd.f32 %v6680, %v6768
        %v6770 = vpop.f32.mrf.mxu0
        %v6771 = vadd.f32 %v6682, %v6770
        %6772 = vmatmul.bf16.gmra.mxu0 %v6205
        %v6773 = vpop.f32.mrf.mxu0
        %v6774 = vadd.f32 %v6685, %v6773
        %v6775 = vpop.f32.mrf.mxu0
        %v6776 = vadd.f32 %v6687, %v6775
        %6777 = vmatmul.bf16.gmra.mxu0 %v6211
        %v6778 = vpop.f32.mrf.mxu0
        %v6779 = vadd.f32 %v6690, %v6778
        %v6780 = vpop.f32.mrf.mxu0
        %v6781 = vadd.f32 %v6692, %v6780
        %6782 = vmatmul.bf16.gmra.mxu0 %v6217
        %v6783 = vpop.f32.mrf.mxu0
        %v6784 = vadd.f32 %v6695, %v6783
        %v6785 = vpop.f32.mrf.mxu0
        %v6786 = vadd.f32 %v6697, %v6785
        %6787 = vmatmul.bf16.gmra.mxu0 %v6223
        %v6788 = vpop.f32.mrf.mxu0
        %v6789 = vadd.f32 %v6700, %v6788
        %v6790 = vpop.f32.mrf.mxu0
        %v6791 = vadd.f32 %v6702, %v6790
        %6792 = vmatmul.bf16.gmra.mxu0 %v6229
        %v6793 = vpop.f32.mrf.mxu0
        %v6794 = vadd.f32 %v6705, %v6793
        %v6795 = vpop.f32.mrf.mxu0
        %v6796 = vadd.f32 %v6707, %v6795
        %6797 = vmatmul.bf16.gmra.mxu0 %v6235
        %v6798 = vpop.f32.mrf.mxu0
        %v6799 = vadd.f32 %v6710, %v6798
        %v6800 = vpop.f32.mrf.mxu0
        %v6801 = vadd.f32 %v6712, %v6800
        %6802 = vmatmul.bf16.gmra.mxu0 %v6241
        %v6803 = vpop.f32.mrf.mxu0
        %v6804 = vadd.f32 %v6715, %v6803
        %v6805 = vpop.f32.mrf.mxu0
        %v6806 = vadd.f32 %v6717, %v6805
        %6807 = vdwg.mxu0
        %6808 = vmatpush.bf16.msra.mxu0 %v6557
        %6809 = vmatpush.bf16.msra.mxu0 %v6556
        %6810 = vmatpush.bf16.msra.mxu0 %v6555
        %6811 = vmatpush.bf16.msra.mxu0 %v6554
        %6812 = vmatpush.bf16.msra.mxu0 %v6553
        %6813 = vmatpush.bf16.msra.mxu0 %v6552
        %6814 = vmatpush.bf16.msra.mxu0 %v6551
        %6815 = vmatpush.bf16.msra.mxu0 %v6550
        %6816 = vmatmul.bf16.gmra.mxu0 %v6152
        %v6817 = vpop.f32.mrf.mxu0
        %v6818 = vadd.f32 %v6729, %v6817
        %v6819 = vpop.f32.mrf.mxu0
        %v6820 = vadd.f32 %v6731, %v6819
        %6821 = vmatmul.bf16.gmra.mxu0 %v6158
        %v6822 = vpop.f32.mrf.mxu0
        %v6823 = vadd.f32 %v6734, %v6822
        %v6824 = vpop.f32.mrf.mxu0
        %v6825 = vadd.f32 %v6736, %v6824
        %6826 = vmatmul.bf16.gmra.mxu0 %v6164
        %v6827 = vpop.f32.mrf.mxu0
        %v6828 = vadd.f32 %v6739, %v6827
        %v6829 = vpop.f32.mrf.mxu0
        %v6830 = vadd.f32 %v6741, %v6829
        %6831 = vmatmul.bf16.gmra.mxu0 %v6170
        %v6832 = vpop.f32.mrf.mxu0
        %v6833 = vadd.f32 %v6744, %v6832
        %v6834 = vpop.f32.mrf.mxu0
        %v6835 = vadd.f32 %v6746, %v6834
        %6836 = vmatmul.bf16.gmra.mxu0 %v6176
        %v6837 = vpop.f32.mrf.mxu0
        %v6838 = vadd.f32 %v6749, %v6837
        %v6839 = vpop.f32.mrf.mxu0
        %v6840 = vadd.f32 %v6751, %v6839
        %6841 = vmatmul.bf16.gmra.mxu0 %v6182
        %v6842 = vpop.f32.mrf.mxu0
        %v6843 = vadd.f32 %v6754, %v6842
        %v6844 = vpop.f32.mrf.mxu0
        %v6845 = vadd.f32 %v6756, %v6844
        %6846 = vmatmul.bf16.gmra.mxu0 %v6188
        %v6847 = vpop.f32.mrf.mxu0
        %v6848 = vadd.f32 %v6759, %v6847
        %v6849 = vpop.f32.mrf.mxu0
        %v6850 = vadd.f32 %v6761, %v6849
        %6851 = vmatmul.bf16.gmra.mxu0 %v6194
        %v6852 = vpop.f32.mrf.mxu0
        %v6853 = vadd.f32 %v6764, %v6852
        %v6854 = vpop.f32.mrf.mxu0
        %v6855 = vadd.f32 %v6766, %v6854
        %6856 = vmatmul.bf16.gmra.mxu0 %v6200
        %v6857 = vpop.f32.mrf.mxu0
        %v6858 = vadd.f32 %v6769, %v6857
        %v6859 = vpop.f32.mrf.mxu0
        %v6860 = vadd.f32 %v6771, %v6859
        %6861 = vmatmul.bf16.gmra.mxu0 %v6206
        %v6862 = vpop.f32.mrf.mxu0
        %v6863 = vadd.f32 %v6774, %v6862
        %v6864 = vpop.f32.mrf.mxu0
        %v6865 = vadd.f32 %v6776, %v6864
        %6866 = vmatmul.bf16.gmra.mxu0 %v6212
        %v6867 = vpop.f32.mrf.mxu0
        %v6868 = vadd.f32 %v6779, %v6867
        %v6869 = vpop.f32.mrf.mxu0
        %v6870 = vadd.f32 %v6781, %v6869
        %6871 = vmatmul.bf16.gmra.mxu0 %v6218
        %v6872 = vpop.f32.mrf.mxu0
        %v6873 = vadd.f32 %v6784, %v6872
        %v6874 = vpop.f32.mrf.mxu0
        %v6875 = vadd.f32 %v6786, %v6874
        %6876 = vmatmul.bf16.gmra.mxu0 %v6224
        %v6877 = vpop.f32.mrf.mxu0
        %v6878 = vadd.f32 %v6789, %v6877
        %v6879 = vpop.f32.mrf.mxu0
        %v6880 = vadd.f32 %v6791, %v6879
        %6881 = vmatmul.bf16.gmra.mxu0 %v6230
        %v6882 = vpop.f32.mrf.mxu0
        %v6883 = vadd.f32 %v6794, %v6882
        %v6884 = vpop.f32.mrf.mxu0
        %v6885 = vadd.f32 %v6796, %v6884
        %6886 = vmatmul.bf16.gmra.mxu0 %v6236
        %v6887 = vpop.f32.mrf.mxu0
        %v6888 = vadd.f32 %v6799, %v6887
        %v6889 = vpop.f32.mrf.mxu0
        %v6890 = vadd.f32 %v6801, %v6889
        %6891 = vmatmul.bf16.gmra.mxu0 %v6242
        %v6892 = vpop.f32.mrf.mxu0
        %v6893 = vadd.f32 %v6804, %v6892
        %v6894 = vpop.f32.mrf.mxu0
        %v6895 = vadd.f32 %v6806, %v6894
        %6896 = vdwg.mxu0
        %6897 = vmatpush.bf16.msra.mxu0 %v6565
        %6898 = vmatpush.bf16.msra.mxu0 %v6564
        %6899 = vmatpush.bf16.msra.mxu0 %v6563
        %6900 = vmatpush.bf16.msra.mxu0 %v6562
        %6901 = vmatpush.bf16.msra.mxu0 %v6561
        %6902 = vmatpush.bf16.msra.mxu0 %v6560
        %6903 = vmatpush.bf16.msra.mxu0 %v6559
        %6904 = vmatpush.bf16.msra.mxu0 %v6558
        %6905 = vmatmul.bf16.gmra.mxu0 %v6153
        %v6906 = vpop.f32.mrf.mxu0
        %v6907 = vadd.f32 %v6818, %v6906
        %v6908 = vpop.f32.mrf.mxu0
        %v6909 = vadd.f32 %v6820, %v6908
        %6910 = vmatmul.bf16.gmra.mxu0 %v6159
        %v6911 = vpop.f32.mrf.mxu0
        %v6912 = vadd.f32 %v6823, %v6911
        %v6913 = vpop.f32.mrf.mxu0
        %v6914 = vadd.f32 %v6825, %v6913
        %6915 = vmatmul.bf16.gmra.mxu0 %v6165
        %v6916 = vpop.f32.mrf.mxu0
        %v6917 = vadd.f32 %v6828, %v6916
        %v6918 = vpop.f32.mrf.mxu0
        %v6919 = vadd.f32 %v6830, %v6918
        %6920 = vmatmul.bf16.gmra.mxu0 %v6171
        %v6921 = vpop.f32.mrf.mxu0
        %v6922 = vadd.f32 %v6833, %v6921
        %v6923 = vpop.f32.mrf.mxu0
        %v6924 = vadd.f32 %v6835, %v6923
        %6925 = vmatmul.bf16.gmra.mxu0 %v6177
        %v6926 = vpop.f32.mrf.mxu0
        %v6927 = vadd.f32 %v6838, %v6926
        %v6928 = vpop.f32.mrf.mxu0
        %v6929 = vadd.f32 %v6840, %v6928
        %6930 = vmatmul.bf16.gmra.mxu0 %v6183
        %v6931 = vpop.f32.mrf.mxu0
        %v6932 = vadd.f32 %v6843, %v6931
        %v6933 = vpop.f32.mrf.mxu0
        %v6934 = vadd.f32 %v6845, %v6933
        %6935 = vmatmul.bf16.gmra.mxu0 %v6189
        %v6936 = vpop.f32.mrf.mxu0
        %v6937 = vadd.f32 %v6848, %v6936
        %v6938 = vpop.f32.mrf.mxu0
        %v6939 = vadd.f32 %v6850, %v6938
        %6940 = vmatmul.bf16.gmra.mxu0 %v6195
        %v6941 = vpop.f32.mrf.mxu0
        %v6942 = vadd.f32 %v6853, %v6941
        %v6943 = vpop.f32.mrf.mxu0
        %v6944 = vadd.f32 %v6855, %v6943
        %6945 = vmatmul.bf16.gmra.mxu0 %v6201
        %v6946 = vpop.f32.mrf.mxu0
        %v6947 = vadd.f32 %v6858, %v6946
        %v6948 = vpop.f32.mrf.mxu0
        %v6949 = vadd.f32 %v6860, %v6948
        %6950 = vmatmul.bf16.gmra.mxu0 %v6207
        %v6951 = vpop.f32.mrf.mxu0
        %v6952 = vadd.f32 %v6863, %v6951
        %v6953 = vpop.f32.mrf.mxu0
        %v6954 = vadd.f32 %v6865, %v6953
        %6955 = vmatmul.bf16.gmra.mxu0 %v6213
        %v6956 = vpop.f32.mrf.mxu0
        %v6957 = vadd.f32 %v6868, %v6956
        %v6958 = vpop.f32.mrf.mxu0
        %v6959 = vadd.f32 %v6870, %v6958
        %6960 = vmatmul.bf16.gmra.mxu0 %v6219
        %v6961 = vpop.f32.mrf.mxu0
        %v6962 = vadd.f32 %v6873, %v6961
        %v6963 = vpop.f32.mrf.mxu0
        %v6964 = vadd.f32 %v6875, %v6963
        %6965 = vmatmul.bf16.gmra.mxu0 %v6225
        %v6966 = vpop.f32.mrf.mxu0
        %v6967 = vadd.f32 %v6878, %v6966
        %v6968 = vpop.f32.mrf.mxu0
        %v6969 = vadd.f32 %v6880, %v6968
        %6970 = vmatmul.bf16.gmra.mxu0 %v6231
        %v6971 = vpop.f32.mrf.mxu0
        %v6972 = vadd.f32 %v6883, %v6971
        %v6973 = vpop.f32.mrf.mxu0
        %v6974 = vadd.f32 %v6885, %v6973
        %6975 = vmatmul.bf16.gmra.mxu0 %v6237
        %v6976 = vpop.f32.mrf.mxu0
        %v6977 = vadd.f32 %v6888, %v6976
        %v6978 = vpop.f32.mrf.mxu0
        %v6979 = vadd.f32 %v6890, %v6978
        %6980 = vmatmul.bf16.gmra.mxu0 %v6243
        %v6981 = vpop.f32.mrf.mxu0
        %v6982 = vadd.f32 %v6893, %v6981
        %v6983 = vpop.f32.mrf.mxu0
        %v6984 = vadd.f32 %v6895, %v6983
        %6985 = vdwg.mxu0
        %6986 = vmatpush.bf16.msra.mxu0 %v6573
        %6987 = vmatpush.bf16.msra.mxu0 %v6572
        %6988 = vmatpush.bf16.msra.mxu0 %v6571
        %6989 = vmatpush.bf16.msra.mxu0 %v6570
        %6990 = vmatpush.bf16.msra.mxu0 %v6569
        %6991 = vmatpush.bf16.msra.mxu0 %v6568
        %6992 = vmatpush.bf16.msra.mxu0 %v6567
        %6993 = vmatpush.bf16.msra.mxu0 %v6566
        %6994 = vmatmul.bf16.gmra.mxu0 %v6154
        %v6995 = vpop.f32.mrf.mxu0
        %v6996 = vadd.f32 %v6907, %v6995
        %v6997 = vpop.f32.mrf.mxu0
        %v6998 = vadd.f32 %v6909, %v6997
        %6999 = vmatmul.bf16.gmra.mxu0 %v6160
        %v7000 = vpop.f32.mrf.mxu0
        %v7001 = vadd.f32 %v6912, %v7000
        %v7002 = vpop.f32.mrf.mxu0
        %v7003 = vadd.f32 %v6914, %v7002
        %7004 = vmatmul.bf16.gmra.mxu0 %v6166
        %v7005 = vpop.f32.mrf.mxu0
        %v7006 = vadd.f32 %v6917, %v7005
        %v7007 = vpop.f32.mrf.mxu0
        %v7008 = vadd.f32 %v6919, %v7007
        %7009 = vmatmul.bf16.gmra.mxu0 %v6172
        %v7010 = vpop.f32.mrf.mxu0
        %v7011 = vadd.f32 %v6922, %v7010
        %v7012 = vpop.f32.mrf.mxu0
        %v7013 = vadd.f32 %v6924, %v7012
        %7014 = vmatmul.bf16.gmra.mxu0 %v6178
        %v7015 = vpop.f32.mrf.mxu0
        %v7016 = vadd.f32 %v6927, %v7015
        %v7017 = vpop.f32.mrf.mxu0
        %v7018 = vadd.f32 %v6929, %v7017
        %7019 = vmatmul.bf16.gmra.mxu0 %v6184
        %v7020 = vpop.f32.mrf.mxu0
        %v7021 = vadd.f32 %v6932, %v7020
        %v7022 = vpop.f32.mrf.mxu0
        %v7023 = vadd.f32 %v6934, %v7022
        %7024 = vmatmul.bf16.gmra.mxu0 %v6190
        %v7025 = vpop.f32.mrf.mxu0
        %v7026 = vadd.f32 %v6937, %v7025
        %v7027 = vpop.f32.mrf.mxu0
        %v7028 = vadd.f32 %v6939, %v7027
        %7029 = vmatmul.bf16.gmra.mxu0 %v6196
        %v7030 = vpop.f32.mrf.mxu0
        %v7031 = vadd.f32 %v6942, %v7030
        %v7032 = vpop.f32.mrf.mxu0
        %v7033 = vadd.f32 %v6944, %v7032
        %7034 = vmatmul.bf16.gmra.mxu0 %v6202
        %v7035 = vpop.f32.mrf.mxu0
        %v7036 = vadd.f32 %v6947, %v7035
        %v7037 = vpop.f32.mrf.mxu0
        %v7038 = vadd.f32 %v6949, %v7037
        %7039 = vmatmul.bf16.gmra.mxu0 %v6208
        %v7040 = vpop.f32.mrf.mxu0
        %v7041 = vadd.f32 %v6952, %v7040
        %v7042 = vpop.f32.mrf.mxu0
        %v7043 = vadd.f32 %v6954, %v7042
        %7044 = vmatmul.bf16.gmra.mxu0 %v6214
        %v7045 = vpop.f32.mrf.mxu0
        %v7046 = vadd.f32 %v6957, %v7045
        %v7047 = vpop.f32.mrf.mxu0
        %v7048 = vadd.f32 %v6959, %v7047
        %7049 = vmatmul.bf16.gmra.mxu0 %v6220
        %v7050 = vpop.f32.mrf.mxu0
        %v7051 = vadd.f32 %v6962, %v7050
        %v7052 = vpop.f32.mrf.mxu0
        %v7053 = vadd.f32 %v6964, %v7052
        %7054 = vmatmul.bf16.gmra.mxu0 %v6226
        %v7055 = vpop.f32.mrf.mxu0
        %v7056 = vadd.f32 %v6967, %v7055
        %v7057 = vpop.f32.mrf.mxu0
        %v7058 = vadd.f32 %v6969, %v7057
        %7059 = vmatmul.bf16.gmra.mxu0 %v6232
        %v7060 = vpop.f32.mrf.mxu0
        %v7061 = vadd.f32 %v6972, %v7060
        %v7062 = vpop.f32.mrf.mxu0
        %v7063 = vadd.f32 %v6974, %v7062
        %7064 = vmatmul.bf16.gmra.mxu0 %v6238
        %v7065 = vpop.f32.mrf.mxu0
        %v7066 = vadd.f32 %v6977, %v7065
        %v7067 = vpop.f32.mrf.mxu0
        %v7068 = vadd.f32 %v6979, %v7067
        %7069 = vmatmul.bf16.gmra.mxu0 %v6244
        %v7070 = vpop.f32.mrf.mxu0
        %v7071 = vadd.f32 %v6982, %v7070
        %v7072 = vpop.f32.mrf.mxu0
        %v7073 = vadd.f32 %v6984, %v7072
        %7074 = vdwg.mxu0
        %7075 = vmatpush.bf16.msra.mxu0 %v6581
        %7076 = vmatpush.bf16.msra.mxu0 %v6580
        %7077 = vmatpush.bf16.msra.mxu0 %v6579
        %7078 = vmatpush.bf16.msra.mxu0 %v6578
        %7079 = vmatpush.bf16.msra.mxu0 %v6577
        %7080 = vmatpush.bf16.msra.mxu0 %v6576
        %7081 = vmatpush.bf16.msra.mxu0 %v6575
        %7082 = vmatpush.bf16.msra.mxu0 %v6574
        %7083 = vmatmul.bf16.gmra.mxu0 %v6155
        %v7084 = vpop.f32.mrf.mxu0
        %v7085 = vadd.f32 %v6996, %v7084
        %v7086 = vpop.f32.mrf.mxu0
        %v7087 = vadd.f32 %v6998, %v7086
        %7088 = vmatmul.bf16.gmra.mxu0 %v6161
        %v7089 = vpop.f32.mrf.mxu0
        %v7090 = vadd.f32 %v7001, %v7089
        %v7091 = vpop.f32.mrf.mxu0
        %v7092 = vadd.f32 %v7003, %v7091
        %7093 = vmatmul.bf16.gmra.mxu0 %v6167
        %v7094 = vpop.f32.mrf.mxu0
        %v7095 = vadd.f32 %v7006, %v7094
        %v7096 = vpop.f32.mrf.mxu0
        %v7097 = vadd.f32 %v7008, %v7096
        %7098 = vmatmul.bf16.gmra.mxu0 %v6173
        %v7099 = vpop.f32.mrf.mxu0
        %v7100 = vadd.f32 %v7011, %v7099
        %v7101 = vpop.f32.mrf.mxu0
        %v7102 = vadd.f32 %v7013, %v7101
        %7103 = vmatmul.bf16.gmra.mxu0 %v6179
        %v7104 = vpop.f32.mrf.mxu0
        %v7105 = vadd.f32 %v7016, %v7104
        %v7106 = vpop.f32.mrf.mxu0
        %v7107 = vadd.f32 %v7018, %v7106
        %7108 = vmatmul.bf16.gmra.mxu0 %v6185
        %v7109 = vpop.f32.mrf.mxu0
        %v7110 = vadd.f32 %v7021, %v7109
        %v7111 = vpop.f32.mrf.mxu0
        %v7112 = vadd.f32 %v7023, %v7111
        %7113 = vmatmul.bf16.gmra.mxu0 %v6191
        %v7114 = vpop.f32.mrf.mxu0
        %v7115 = vadd.f32 %v7026, %v7114
        %v7116 = vpop.f32.mrf.mxu0
        %v7117 = vadd.f32 %v7028, %v7116
        %7118 = vmatmul.bf16.gmra.mxu0 %v6197
        %v7119 = vpop.f32.mrf.mxu0
        %v7120 = vadd.f32 %v7031, %v7119
        %v7121 = vpop.f32.mrf.mxu0
        %v7122 = vadd.f32 %v7033, %v7121
        %7123 = vmatmul.bf16.gmra.mxu0 %v6203
        %v7124 = vpop.f32.mrf.mxu0
        %v7125 = vadd.f32 %v7036, %v7124
        %v7126 = vpop.f32.mrf.mxu0
        %v7127 = vadd.f32 %v7038, %v7126
        %7128 = vmatmul.bf16.gmra.mxu0 %v6209
        %v7129 = vpop.f32.mrf.mxu0
        %v7130 = vadd.f32 %v7041, %v7129
        %v7131 = vpop.f32.mrf.mxu0
        %v7132 = vadd.f32 %v7043, %v7131
        %7133 = vmatmul.bf16.gmra.mxu0 %v6215
        %v7134 = vpop.f32.mrf.mxu0
        %v7135 = vadd.f32 %v7046, %v7134
        %v7136 = vpop.f32.mrf.mxu0
        %v7137 = vadd.f32 %v7048, %v7136
        %7138 = vmatmul.bf16.gmra.mxu0 %v6221
        %v7139 = vpop.f32.mrf.mxu0
        %v7140 = vadd.f32 %v7051, %v7139
        %v7141 = vpop.f32.mrf.mxu0
        %v7142 = vadd.f32 %v7053, %v7141
        %7143 = vmatmul.bf16.gmra.mxu0 %v6227
        %v7144 = vpop.f32.mrf.mxu0
        %v7145 = vadd.f32 %v7056, %v7144
        %v7146 = vpop.f32.mrf.mxu0
        %v7147 = vadd.f32 %v7058, %v7146
        %7148 = vmatmul.bf16.gmra.mxu0 %v6233
        %v7149 = vpop.f32.mrf.mxu0
        %v7150 = vadd.f32 %v7061, %v7149
        %v7151 = vpop.f32.mrf.mxu0
        %v7152 = vadd.f32 %v7063, %v7151
        %7153 = vmatmul.bf16.gmra.mxu0 %v6239
        %v7154 = vpop.f32.mrf.mxu0
        %v7155 = vadd.f32 %v7066, %v7154
        %v7156 = vpop.f32.mrf.mxu0
        %v7157 = vadd.f32 %v7068, %v7156
        %7158 = vmatmul.bf16.gmra.mxu0 %v6245
        %v7159 = vpop.f32.mrf.mxu0
        %v7160 = vadd.f32 %v7071, %v7159
        %v7161 = vpop.f32.mrf.mxu0
        %v7162 = vadd.f32 %v7073, %v7161
        %7163 = vdwg.mxu0
        %v7164 = vadd.f32 %v5589, %v7085
        %v7165 = vadd.f32 %v5591, %v7087
        %v7166 = vadd.f32 %v5594, %v7090
        %v7167 = vadd.f32 %v5596, %v7092
        %v7168 = vadd.f32 %v5599, %v7095
        %v7169 = vadd.f32 %v5601, %v7097
        %v7170 = vadd.f32 %v5604, %v7100
        %v7171 = vadd.f32 %v5606, %v7102
        %v7172 = vadd.f32 %v5609, %v7105
        %v7173 = vadd.f32 %v5611, %v7107
        %v7174 = vadd.f32 %v5614, %v7110
        %v7175 = vadd.f32 %v5616, %v7112
        %v7176 = vadd.f32 %v5619, %v7115
        %v7177 = vadd.f32 %v5621, %v7117
        %v7178 = vadd.f32 %v5624, %v7120
        %v7179 = vadd.f32 %v5626, %v7122
        %v7180 = vadd.f32 %v5629, %v7125
        %v7181 = vadd.f32 %v5631, %v7127
        %v7182 = vadd.f32 %v5634, %v7130
        %v7183 = vadd.f32 %v5636, %v7132
        %v7184 = vadd.f32 %v5639, %v7135
        %v7185 = vadd.f32 %v5641, %v7137
        %v7186 = vadd.f32 %v5644, %v7140
        %v7187 = vadd.f32 %v5646, %v7142
        %v7188 = vadd.f32 %v5649, %v7145
        %v7189 = vadd.f32 %v5651, %v7147
        %v7190 = vadd.f32 %v5654, %v7150
        %v7191 = vadd.f32 %v5656, %v7152
        %v7192 = vadd.f32 %v5659, %v7155
        %v7193 = vadd.f32 %v5661, %v7157
        %v7194 = vadd.f32 %v5664, %v7160
        %v7195 = vadd.f32 %v5666, %v7162
        %v7197 = vperm.slane %v2678, 0
        %v7199 = vadd.f32 %v7164, %v7197
        %v7200 = vadd.f32 %v7165, %v7197
        %v7201 = vadd.f32 %v7166, %v7197
        %v7202 = vadd.f32 %v7167, %v7197
        %v7203 = vadd.f32 %v7168, %v7197
        %v7204 = vadd.f32 %v7169, %v7197
        %v7205 = vadd.f32 %v7170, %v7197
        %v7206 = vadd.f32 %v7171, %v7197
        %v7207 = vadd.f32 %v7172, %v7197
        %v7208 = vadd.f32 %v7173, %v7197
        %v7209 = vadd.f32 %v7174, %v7197
        %v7210 = vadd.f32 %v7175, %v7197
        %v7211 = vadd.f32 %v7176, %v7197
        %v7212 = vadd.f32 %v7177, %v7197
        %v7213 = vadd.f32 %v7178, %v7197
        %v7214 = vadd.f32 %v7179, %v7197
        %v7215 = vadd.f32 %v7180, %v7197
        %v7216 = vadd.f32 %v7181, %v7197
        %v7217 = vadd.f32 %v7182, %v7197
        %v7218 = vadd.f32 %v7183, %v7197
        %v7219 = vadd.f32 %v7184, %v7197
        %v7220 = vadd.f32 %v7185, %v7197
        %v7221 = vadd.f32 %v7186, %v7197
        %v7222 = vadd.f32 %v7187, %v7197
        %v7223 = vadd.f32 %v7188, %v7197
        %v7224 = vadd.f32 %v7189, %v7197
        %v7225 = vadd.f32 %v7190, %v7197
        %v7226 = vadd.f32 %v7191, %v7197
        %v7227 = vadd.f32 %v7192, %v7197
        %v7228 = vadd.f32 %v7193, %v7197
        %v7229 = vadd.f32 %v7194, %v7197
        %v7230 = vadd.f32 %v7195, %v7197
        %v7231 = vmax.f32 %v7199, 0.0
        %v7232 = vmax.f32 %v7200, 0.0
        %v7233 = vmax.f32 %v7201, 0.0
        %v7234 = vmax.f32 %v7202, 0.0
        %v7235 = vmax.f32 %v7203, 0.0
        %v7236 = vmax.f32 %v7204, 0.0
        %v7237 = vmax.f32 %v7205, 0.0
        %v7238 = vmax.f32 %v7206, 0.0
        %v7239 = vmax.f32 %v7207, 0.0
        %v7240 = vmax.f32 %v7208, 0.0
        %v7241 = vmax.f32 %v7209, 0.0
        %v7242 = vmax.f32 %v7210, 0.0
        %v7243 = vmax.f32 %v7211, 0.0
        %v7244 = vmax.f32 %v7212, 0.0
        %v7245 = vmax.f32 %v7213, 0.0
        %v7246 = vmax.f32 %v7214, 0.0
        %v7247 = vmax.f32 %v7215, 0.0
        %v7248 = vmax.f32 %v7216, 0.0
        %v7249 = vmax.f32 %v7217, 0.0
        %v7250 = vmax.f32 %v7218, 0.0
        %v7251 = vmax.f32 %v7219, 0.0
        %v7252 = vmax.f32 %v7220, 0.0
        %v7253 = vmax.f32 %v7221, 0.0
        %v7254 = vmax.f32 %v7222, 0.0
        %v7255 = vmax.f32 %v7223, 0.0
        %v7256 = vmax.f32 %v7224, 0.0
        %v7257 = vmax.f32 %v7225, 0.0
        %v7258 = vmax.f32 %v7226, 0.0
        %v7259 = vmax.f32 %v7227, 0.0
        %v7260 = vmax.f32 %v7228, 0.0
        %v7261 = vmax.f32 %v7229, 0.0
        %v7262 = vmax.f32 %v7230, 0.0
        %v7263 = vpack.c.bf16 %v7231, %v7231
        %v7264 = vpack.c.bf16 %v7232, %v7232
        %v7265 = vpack.c.bf16 %v7233, %v7233
        %v7266 = vpack.c.bf16 %v7234, %v7234
        %v7267 = vpack.c.bf16 %v7235, %v7235
        %v7268 = vpack.c.bf16 %v7236, %v7236
        %v7269 = vpack.c.bf16 %v7237, %v7237
        %v7270 = vpack.c.bf16 %v7238, %v7238
        %v7271 = vpack.c.bf16 %v7239, %v7239
        %v7272 = vpack.c.bf16 %v7240, %v7240
        %v7273 = vpack.c.bf16 %v7241, %v7241
        %v7274 = vpack.c.bf16 %v7242, %v7242
        %v7275 = vpack.c.bf16 %v7243, %v7243
        %v7276 = vpack.c.bf16 %v7244, %v7244
        %v7277 = vpack.c.bf16 %v7245, %v7245
        %v7278 = vpack.c.bf16 %v7246, %v7246
        %v7279 = vpack.c.bf16 %v7247, %v7247
        %v7280 = vpack.c.bf16 %v7248, %v7248
        %v7281 = vpack.c.bf16 %v7249, %v7249
        %v7282 = vpack.c.bf16 %v7250, %v7250
        %v7283 = vpack.c.bf16 %v7251, %v7251
        %v7284 = vpack.c.bf16 %v7252, %v7252
        %v7285 = vpack.c.bf16 %v7253, %v7253
        %v7286 = vpack.c.bf16 %v7254, %v7254
        %v7287 = vpack.c.bf16 %v7255, %v7255
        %v7288 = vpack.c.bf16 %v7256, %v7256
        %v7289 = vpack.c.bf16 %v7257, %v7257
        %v7290 = vpack.c.bf16 %v7258, %v7258
        %v7291 = vpack.c.bf16 %v7259, %v7259
        %v7292 = vpack.c.bf16 %v7260, %v7260
        %v7293 = vpack.c.bf16 %v7261, %v7261
        %v7294 = vpack.c.bf16 %v7262, %v7262
        %v7296 = vshrl.u32 %v7263, 16
        %v7298 = vrot.slane %v7296, 7
        %v7299 = vshll.u32 %v7263, 16
        %v7301 = vor.u32 %v7298, %v7299
        %v7302 = vrot.slane %v7298, 4
        %v7304 = vshrl.u32 %v7264, 16
        %v7306 = vrot.slane %v7304, 7
        %v7307 = vshll.u32 %v7264, 16
        %v7309 = vor.u32 %v7306, %v7307
        %v7310 = vsel %vm1226, %v7302, %v7309
        %v7312 = vshrl.u32 %v7265, 16
        %v7314 = vrot.slane %v7312, 7
        %v7315 = vshll.u32 %v7265, 16
        %v7317 = vor.u32 %v7314, %v7315
        %v7318 = vrot.slane %v7314, 4
        %v7320 = vshrl.u32 %v7266, 16
        %v7322 = vrot.slane %v7320, 7
        %v7323 = vshll.u32 %v7266, 16
        %v7325 = vor.u32 %v7322, %v7323
        %v7326 = vsel %vm1226, %v7318, %v7325
        %v7328 = vshrl.u32 %v7267, 16
        %v7330 = vrot.slane %v7328, 7
        %v7331 = vshll.u32 %v7267, 16
        %v7333 = vor.u32 %v7330, %v7331
        %v7334 = vrot.slane %v7330, 4
        %v7336 = vshrl.u32 %v7268, 16
        %v7338 = vrot.slane %v7336, 7
        %v7339 = vshll.u32 %v7268, 16
        %v7341 = vor.u32 %v7338, %v7339
        %v7342 = vsel %vm1226, %v7334, %v7341
        %v7344 = vshrl.u32 %v7269, 16
        %v7346 = vrot.slane %v7344, 7
        %v7347 = vshll.u32 %v7269, 16
        %v7349 = vor.u32 %v7346, %v7347
        %v7350 = vrot.slane %v7346, 4
        %v7352 = vshrl.u32 %v7270, 16
        %v7354 = vrot.slane %v7352, 7
        %v7355 = vshll.u32 %v7270, 16
        %v7357 = vor.u32 %v7354, %v7355
        %v7358 = vsel %vm1226, %v7350, %v7357
        %v7360 = vshrl.u32 %v7271, 16
        %v7362 = vrot.slane %v7360, 7
        %v7363 = vshll.u32 %v7271, 16
        %v7365 = vor.u32 %v7362, %v7363
        %v7366 = vrot.slane %v7362, 4
        %v7368 = vshrl.u32 %v7272, 16
        %v7370 = vrot.slane %v7368, 7
        %v7371 = vshll.u32 %v7272, 16
        %v7373 = vor.u32 %v7370, %v7371
        %v7374 = vsel %vm1226, %v7366, %v7373
        %v7376 = vshrl.u32 %v7273, 16
        %v7378 = vrot.slane %v7376, 7
        %v7379 = vshll.u32 %v7273, 16
        %v7381 = vor.u32 %v7378, %v7379
        %v7382 = vrot.slane %v7378, 4
        %v7384 = vshrl.u32 %v7274, 16
        %v7386 = vrot.slane %v7384, 7
        %v7387 = vshll.u32 %v7274, 16
        %v7389 = vor.u32 %v7386, %v7387
        %v7390 = vsel %vm1226, %v7382, %v7389
        %v7392 = vshrl.u32 %v7275, 16
        %v7394 = vrot.slane %v7392, 7
        %v7395 = vshll.u32 %v7275, 16
        %v7397 = vor.u32 %v7394, %v7395
        %v7398 = vrot.slane %v7394, 4
        %v7400 = vshrl.u32 %v7276, 16
        %v7402 = vrot.slane %v7400, 7
        %v7403 = vshll.u32 %v7276, 16
        %v7405 = vor.u32 %v7402, %v7403
        %v7406 = vsel %vm1226, %v7398, %v7405
        %v7408 = vshrl.u32 %v7277, 16
        %v7410 = vrot.slane %v7408, 7
        %v7411 = vshll.u32 %v7277, 16
        %v7413 = vor.u32 %v7410, %v7411
        %v7414 = vrot.slane %v7410, 4
        %v7416 = vshrl.u32 %v7278, 16
        %v7418 = vrot.slane %v7416, 7
        %v7419 = vshll.u32 %v7278, 16
        %v7421 = vor.u32 %v7418, %v7419
        %v7422 = vsel %vm1226, %v7414, %v7421
        %v7424 = vshrl.u32 %v7279, 16
        %v7426 = vrot.slane %v7424, 7
        %v7427 = vshll.u32 %v7279, 16
        %v7429 = vor.u32 %v7426, %v7427
        %v7430 = vrot.slane %v7426, 4
        %v7432 = vshrl.u32 %v7280, 16
        %v7434 = vrot.slane %v7432, 7
        %v7435 = vshll.u32 %v7280, 16
        %v7437 = vor.u32 %v7434, %v7435
        %v7438 = vsel %vm1226, %v7430, %v7437
        %v7440 = vshrl.u32 %v7281, 16
        %v7442 = vrot.slane %v7440, 7
        %v7443 = vshll.u32 %v7281, 16
        %v7445 = vor.u32 %v7442, %v7443
        %v7446 = vrot.slane %v7442, 4
        %v7448 = vshrl.u32 %v7282, 16
        %v7450 = vrot.slane %v7448, 7
        %v7451 = vshll.u32 %v7282, 16
        %v7453 = vor.u32 %v7450, %v7451
        %v7454 = vsel %vm1226, %v7446, %v7453
        %v7456 = vshrl.u32 %v7283, 16
        %v7458 = vrot.slane %v7456, 7
        %v7459 = vshll.u32 %v7283, 16
        %v7461 = vor.u32 %v7458, %v7459
        %v7462 = vrot.slane %v7458, 4
        %v7464 = vshrl.u32 %v7284, 16
        %v7466 = vrot.slane %v7464, 7
        %v7467 = vshll.u32 %v7284, 16
        %v7469 = vor.u32 %v7466, %v7467
        %v7470 = vsel %vm1226, %v7462, %v7469
        %v7472 = vshrl.u32 %v7285, 16
        %v7474 = vrot.slane %v7472, 7
        %v7475 = vshll.u32 %v7285, 16
        %v7477 = vor.u32 %v7474, %v7475
        %v7478 = vrot.slane %v7474, 4
        %v7480 = vshrl.u32 %v7286, 16
        %v7482 = vrot.slane %v7480, 7
        %v7483 = vshll.u32 %v7286, 16
        %v7485 = vor.u32 %v7482, %v7483
        %v7486 = vsel %vm1226, %v7478, %v7485
        %v7488 = vshrl.u32 %v7287, 16
        %v7490 = vrot.slane %v7488, 7
        %v7491 = vshll.u32 %v7287, 16
        %v7493 = vor.u32 %v7490, %v7491
        %v7494 = vrot.slane %v7490, 4
        %v7496 = vshrl.u32 %v7288, 16
        %v7498 = vrot.slane %v7496, 7
        %v7499 = vshll.u32 %v7288, 16
        %v7501 = vor.u32 %v7498, %v7499
        %v7502 = vsel %vm1226, %v7494, %v7501
        %v7504 = vshrl.u32 %v7289, 16
        %v7506 = vrot.slane %v7504, 7
        %v7507 = vshll.u32 %v7289, 16
        %v7509 = vor.u32 %v7506, %v7507
        %v7510 = vrot.slane %v7506, 4
        %v7512 = vshrl.u32 %v7290, 16
        %v7514 = vrot.slane %v7512, 7
        %v7515 = vshll.u32 %v7290, 16
        %v7517 = vor.u32 %v7514, %v7515
        %v7518 = vsel %vm1226, %v7510, %v7517
        %v7520 = vshrl.u32 %v7291, 16
        %v7522 = vrot.slane %v7520, 7
        %v7523 = vshll.u32 %v7291, 16
        %v7525 = vor.u32 %v7522, %v7523
        %v7526 = vrot.slane %v7522, 4
        %v7528 = vshrl.u32 %v7292, 16
        %v7530 = vrot.slane %v7528, 7
        %v7531 = vshll.u32 %v7292, 16
        %v7533 = vor.u32 %v7530, %v7531
        %v7534 = vsel %vm1226, %v7526, %v7533
        %v7536 = vshrl.u32 %v7293, 16
        %v7538 = vrot.slane %v7536, 7
        %v7539 = vshll.u32 %v7293, 16
        %v7541 = vor.u32 %v7538, %v7539
        %v7542 = vrot.slane %v7538, 4
        %v7544 = vshrl.u32 %v7294, 16
        %v7546 = vrot.slane %v7544, 7
        %v7547 = vshll.u32 %v7294, 16
        %v7549 = vor.u32 %v7546, %v7547
        %v7550 = vsel %vm1226, %v7542, %v7549
        %v7583 = vld [vmem:[%s492] sm:$0xf]
        %v7584 = vsel %vm1517, %v7301, %v7583
        %7585 = vst [vmem:[%s492] sm:$0xf] %v7584
        %7586 = vst [vmem:[%s492 + $0xc] sm:$0xf] %v7310
        %v7587 = vld [vmem:[%s492 + $0x18] sm:$0xf]
        %v7588 = vsel %vm1517, %v7317, %v7587
        %7589 = vst [vmem:[%s492 + $0x18] sm:$0xf] %v7588
        %7590 = vst [vmem:[%s492 + $0x24] sm:$0xf] %v7326
        %v7591 = vld [vmem:[%s492 + $0x30] sm:$0xf]
        %v7592 = vsel %vm1517, %v7333, %v7591
        %7593 = vst [vmem:[%s492 + $0x30] sm:$0xf] %v7592
        %7594 = vst [vmem:[%s492 + $0x3c] sm:$0xf] %v7342
        %v7595 = vld [vmem:[%s492 + $0x48] sm:$0xf]
        %v7596 = vsel %vm1517, %v7349, %v7595
        %7597 = vst [vmem:[%s492 + $0x48] sm:$0xf] %v7596
        %7598 = vst [vmem:[%s492 + $0x54] sm:$0xf] %v7358
        %v7599 = vld [vmem:[%s492 + $0x60] sm:$0xf]
        %v7600 = vsel %vm1517, %v7365, %v7599
        %7601 = vst [vmem:[%s492 + $0x60] sm:$0xf] %v7600
        %7602 = vst [vmem:[%s492 + $0x6c] sm:$0xf] %v7374
        %v7603 = vld [vmem:[%s492 + $0x78] sm:$0xf]
        %v7604 = vsel %vm1517, %v7381, %v7603
        %7605 = vst [vmem:[%s492 + $0x78] sm:$0xf] %v7604
        %7606 = vst [vmem:[%s492 + $0x84] sm:$0xf] %v7390
        %v7607 = vld [vmem:[%s492 + $0x90] sm:$0xf]
        %v7608 = vsel %vm1517, %v7397, %v7607
        %7609 = vst [vmem:[%s492 + $0x90] sm:$0xf] %v7608
        %7610 = vst [vmem:[%s492 + $0x9c] sm:$0xf] %v7406
        %v7611 = vld [vmem:[%s492 + $0xa8] sm:$0xf]
        %v7612 = vsel %vm1517, %v7413, %v7611
        %7613 = vst [vmem:[%s492 + $0xa8] sm:$0xf] %v7612
        %7614 = vst [vmem:[%s492 + $0xb4] sm:$0xf] %v7422
        %v7615 = vld [vmem:[%s492 + $0xc0] sm:$0xf]
        %v7616 = vsel %vm1517, %v7429, %v7615
        %7617 = vst [vmem:[%s492 + $0xc0] sm:$0xf] %v7616
        %7618 = vst [vmem:[%s492 + $0xcc] sm:$0xf] %v7438
        %v7619 = vld [vmem:[%s492 + $0xd8] sm:$0xf]
        %v7620 = vsel %vm1517, %v7445, %v7619
        %7621 = vst [vmem:[%s492 + $0xd8] sm:$0xf] %v7620
        %7622 = vst [vmem:[%s492 + $0xe4] sm:$0xf] %v7454
        %v7623 = vld [vmem:[%s492 + $0xf0] sm:$0xf]
        %v7624 = vsel %vm1517, %v7461, %v7623
        %7625 = vst [vmem:[%s492 + $0xf0] sm:$0xf] %v7624
        %7626 = vst [vmem:[%s492 + $0xfc] sm:$0xf] %v7470
        %v7627 = vld [vmem:[%s492 + $0x108] sm:$0xf]
        %v7628 = vsel %vm1517, %v7477, %v7627
        %7629 = vst [vmem:[%s492 + $0x108] sm:$0xf] %v7628
        %7630 = vst [vmem:[%s492 + $0x114] sm:$0xf] %v7486
        %v7631 = vld [vmem:[%s492 + $0x120] sm:$0xf]
        %v7632 = vsel %vm1517, %v7493, %v7631
        %7633 = vst [vmem:[%s492 + $0x120] sm:$0xf] %v7632
        %7634 = vst [vmem:[%s492 + $0x12c] sm:$0xf] %v7502
        %v7635 = vld [vmem:[%s492 + $0x138] sm:$0xf]
        %v7636 = vsel %vm1517, %v7509, %v7635
        %7637 = vst [vmem:[%s492 + $0x138] sm:$0xf] %v7636
        %7638 = vst [vmem:[%s492 + $0x144] sm:$0xf] %v7518
        %v7639 = vld [vmem:[%s492 + $0x150] sm:$0xf]
        %v7640 = vsel %vm1517, %v7525, %v7639
        %7641 = vst [vmem:[%s492 + $0x150] sm:$0xf] %v7640
        %7642 = vst [vmem:[%s492 + $0x15c] sm:$0xf] %v7534
        %v7643 = vld [vmem:[%s492 + $0x168] sm:$0xf]
        %v7644 = vsel %vm1517, %v7541, %v7643
        %7645 = vst [vmem:[%s492 + $0x168] sm:$0xf] %v7644
        %7646 = vst [vmem:[%s492 + $0x174] sm:$0xf] %v7550
        %7647 = vst [vmem:[%s492 + $0x4] sm:$0xf] %v7263
        %7648 = vst [vmem:[%s492 + $0x10] sm:$0xf] %v7264
        %7649 = vst [vmem:[%s492 + $0x1c] sm:$0xf] %v7265
        %7650 = vst [vmem:[%s492 + $0x28] sm:$0xf] %v7266
        %7651 = vst [vmem:[%s492 + $0x34] sm:$0xf] %v7267
        %7652 = vst [vmem:[%s492 + $0x40] sm:$0xf] %v7268
        %7653 = vst [vmem:[%s492 + $0x4c] sm:$0xf] %v7269
        %7654 = vst [vmem:[%s492 + $0x58] sm:$0xf] %v7270
        %7655 = vst [vmem:[%s492 + $0x64] sm:$0xf] %v7271
        %7656 = vst [vmem:[%s492 + $0x70] sm:$0xf] %v7272
        %7657 = vst [vmem:[%s492 + $0x7c] sm:$0xf] %v7273
        %7658 = vst [vmem:[%s492 + $0x88] sm:$0xf] %v7274
        %7659 = vst [vmem:[%s492 + $0x94] sm:$0xf] %v7275
        %7660 = vst [vmem:[%s492 + $0xa0] sm:$0xf] %v7276
        %7661 = vst [vmem:[%s492 + $0xac] sm:$0xf] %v7277
        %7662 = vst [vmem:[%s492 + $0xb8] sm:$0xf] %v7278
        %7663 = vst [vmem:[%s492 + $0xc4] sm:$0xf] %v7279
        %7664 = vst [vmem:[%s492 + $0xd0] sm:$0xf] %v7280
        %7665 = vst [vmem:[%s492 + $0xdc] sm:$0xf] %v7281
        %7666 = vst [vmem:[%s492 + $0xe8] sm:$0xf] %v7282
        %7667 = vst [vmem:[%s492 + $0xf4] sm:$0xf] %v7283
        %7668 = vst [vmem:[%s492 + $0x100] sm:$0xf] %v7284
        %7669 = vst [vmem:[%s492 + $0x10c] sm:$0xf] %v7285
        %7670 = vst [vmem:[%s492 + $0x118] sm:$0xf] %v7286
        %7671 = vst [vmem:[%s492 + $0x124] sm:$0xf] %v7287
        %7672 = vst [vmem:[%s492 + $0x130] sm:$0xf] %v7288
        %7673 = vst [vmem:[%s492 + $0x13c] sm:$0xf] %v7289
        %7674 = vst [vmem:[%s492 + $0x148] sm:$0xf] %v7290
        %7675 = vst [vmem:[%s492 + $0x154] sm:$0xf] %v7291
        %7676 = vst [vmem:[%s492 + $0x160] sm:$0xf] %v7292
        %7677 = vst [vmem:[%s492 + $0x16c] sm:$0xf] %v7293
        %7678 = vst [vmem:[%s492 + $0x178] sm:$0xf] %v7294
        %v7679 = vrot.slane %v7296, 4
        %v7680 = vrot.slane %v7299, 5
        %v7681 = vor.u32 %v7679, %v7680
        %v7682 = vrot.slane %v7681, 4
        %v7683 = vrot.slane %v7307, 5
        %v7684 = vsel %vm1616, %v7682, %v7683
        %v7685 = vrot.slane %v7304, 4
        %v7686 = vor.u32 %v7685, %v7683
        %v7687 = vrot.slane %v7686, 4
        %v7688 = vrot.slane %v7312, 4
        %v7689 = vrot.slane %v7315, 5
        %v7690 = vor.u32 %v7688, %v7689
        %v7691 = vrot.slane %v7690, 4
        %v7692 = vrot.slane %v7323, 5
        %v7693 = vsel %vm1616, %v7691, %v7692
        %v7694 = vrot.slane %v7320, 4
        %v7695 = vor.u32 %v7694, %v7692
        %v7696 = vrot.slane %v7695, 4
        %v7697 = vrot.slane %v7328, 4
        %v7698 = vrot.slane %v7331, 5
        %v7699 = vor.u32 %v7697, %v7698
        %v7700 = vrot.slane %v7699, 4
        %v7701 = vrot.slane %v7339, 5
        %v7702 = vsel %vm1616, %v7700, %v7701
        %v7703 = vrot.slane %v7336, 4
        %v7704 = vor.u32 %v7703, %v7701
        %v7705 = vrot.slane %v7704, 4
        %v7706 = vrot.slane %v7344, 4
        %v7707 = vrot.slane %v7347, 5
        %v7708 = vor.u32 %v7706, %v7707
        %v7709 = vrot.slane %v7708, 4
        %v7710 = vrot.slane %v7355, 5
        %v7711 = vsel %vm1616, %v7709, %v7710
        %v7712 = vrot.slane %v7352, 4
        %v7713 = vor.u32 %v7712, %v7710
        %v7714 = vrot.slane %v7713, 4
        %v7715 = vrot.slane %v7360, 4
        %v7716 = vrot.slane %v7363, 5
        %v7717 = vor.u32 %v7715, %v7716
        %v7718 = vrot.slane %v7717, 4
        %v7719 = vrot.slane %v7371, 5
        %v7720 = vsel %vm1616, %v7718, %v7719
        %v7721 = vrot.slane %v7368, 4
        %v7722 = vor.u32 %v7721, %v7719
        %v7723 = vrot.slane %v7722, 4
        %v7724 = vrot.slane %v7376, 4
        %v7725 = vrot.slane %v7379, 5
        %v7726 = vor.u32 %v7724, %v7725
        %v7727 = vrot.slane %v7726, 4
        %v7728 = vrot.slane %v7387, 5
        %v7729 = vsel %vm1616, %v7727, %v7728
        %v7730 = vrot.slane %v7384, 4
        %v7731 = vor.u32 %v7730, %v7728
        %v7732 = vrot.slane %v7731, 4
        %v7733 = vrot.slane %v7392, 4
        %v7734 = vrot.slane %v7395, 5
        %v7735 = vor.u32 %v7733, %v7734
        %v7736 = vrot.slane %v7735, 4
        %v7737 = vrot.slane %v7403, 5
        %v7738 = vsel %vm1616, %v7736, %v7737
        %v7739 = vrot.slane %v7400, 4
        %v7740 = vor.u32 %v7739, %v7737
        %v7741 = vrot.slane %v7740, 4
        %v7742 = vrot.slane %v7408, 4
        %v7743 = vrot.slane %v7411, 5
        %v7744 = vor.u32 %v7742, %v7743
        %v7745 = vrot.slane %v7744, 4
        %v7746 = vrot.slane %v7419, 5
        %v7747 = vsel %vm1616, %v7745, %v7746
        %v7748 = vrot.slane %v7416, 4
        %v7749 = vor.u32 %v7748, %v7746
        %v7750 = vrot.slane %v7749, 4
        %v7751 = vrot.slane %v7424, 4
        %v7752 = vrot.slane %v7427, 5
        %v7753 = vor.u32 %v7751, %v7752
        %v7754 = vrot.slane %v7753, 4
        %v7755 = vrot.slane %v7435, 5
        %v7756 = vsel %vm1616, %v7754, %v7755
        %v7757 = vrot.slane %v7432, 4
        %v7758 = vor.u32 %v7757, %v7755
        %v7759 = vrot.slane %v7758, 4
        %v7760 = vrot.slane %v7440, 4
        %v7761 = vrot.slane %v7443, 5
        %v7762 = vor.u32 %v7760, %v7761
        %v7763 = vrot.slane %v7762, 4
        %v7764 = vrot.slane %v7451, 5
        %v7765 = vsel %vm1616, %v7763, %v7764
        %v7766 = vrot.slane %v7448, 4
        %v7767 = vor.u32 %v7766, %v7764
        %v7768 = vrot.slane %v7767, 4
        %v7769 = vrot.slane %v7456, 4
        %v7770 = vrot.slane %v7459, 5
        %v7771 = vor.u32 %v7769, %v7770
        %v7772 = vrot.slane %v7771, 4
        %v7773 = vrot.slane %v7467, 5
        %v7774 = vsel %vm1616, %v7772, %v7773
        %v7775 = vrot.slane %v7464, 4
        %v7776 = vor.u32 %v7775, %v7773
        %v7777 = vrot.slane %v7776, 4
        %v7778 = vrot.slane %v7472, 4
        %v7779 = vrot.slane %v7475, 5
        %v7780 = vor.u32 %v7778, %v7779
        %v7781 = vrot.slane %v7780, 4
        %v7782 = vrot.slane %v7483, 5
        %v7783 = vsel %vm1616, %v7781, %v7782
        %v7784 = vrot.slane %v7480, 4
        %v7785 = vor.u32 %v7784, %v7782
        %v7786 = vrot.slane %v7785, 4
        %v7787 = vrot.slane %v7488, 4
        %v7788 = vrot.slane %v7491, 5
        %v7789 = vor.u32 %v7787, %v7788
        %v7790 = vrot.slane %v7789, 4
        %v7791 = vrot.slane %v7499, 5
        %v7792 = vsel %vm1616, %v7790, %v7791
        %v7793 = vrot.slane %v7496, 4
        %v7794 = vor.u32 %v7793, %v7791
        %v7795 = vrot.slane %v7794, 4
        %v7796 = vrot.slane %v7504, 4
        %v7797 = vrot.slane %v7507, 5
        %v7798 = vor.u32 %v7796, %v7797
        %v7799 = vrot.slane %v7798, 4
        %v7800 = vrot.slane %v7515, 5
        %v7801 = vsel %vm1616, %v7799, %v7800
        %v7802 = vrot.slane %v7512, 4
        %v7803 = vor.u32 %v7802, %v7800
        %v7804 = vrot.slane %v7803, 4
        %v7805 = vrot.slane %v7520, 4
        %v7806 = vrot.slane %v7523, 5
        %v7807 = vor.u32 %v7805, %v7806
        %v7808 = vrot.slane %v7807, 4
        %v7809 = vrot.slane %v7531, 5
        %v7810 = vsel %vm1616, %v7808, %v7809
        %v7811 = vrot.slane %v7528, 4
        %v7812 = vor.u32 %v7811, %v7809
        %v7813 = vrot.slane %v7812, 4
        %v7814 = vrot.slane %v7536, 4
        %v7815 = vrot.slane %v7539, 5
        %v7816 = vor.u32 %v7814, %v7815
        %v7817 = vrot.slane %v7816, 4
        %v7818 = vrot.slane %v7547, 5
        %v7819 = vsel %vm1616, %v7817, %v7818
        %v7820 = vrot.slane %v7544, 4
        %v7821 = vor.u32 %v7820, %v7818
        %v7822 = vrot.slane %v7821, 4
        %7855 = vst [vmem:[%s492 + $0x8] sm:$0xf] %v7684
        %v7856 = vld [vmem:[%s492 + $0x14] sm:$0xf]
        %v7857 = vsel %vm1794, %v7687, %v7856
        %7858 = vst [vmem:[%s492 + $0x14] sm:$0xf] %v7857
        %7859 = vst [vmem:[%s492 + $0x20] sm:$0xf] %v7693
        %v7860 = vld [vmem:[%s492 + $0x2c] sm:$0xf]
        %v7861 = vsel %vm1794, %v7696, %v7860
        %7862 = vst [vmem:[%s492 + $0x2c] sm:$0xf] %v7861
        %7863 = vst [vmem:[%s492 + $0x38] sm:$0xf] %v7702
        %v7864 = vld [vmem:[%s492 + $0x44] sm:$0xf]
        %v7865 = vsel %vm1794, %v7705, %v7864
        %7866 = vst [vmem:[%s492 + $0x44] sm:$0xf] %v7865
        %7867 = vst [vmem:[%s492 + $0x50] sm:$0xf] %v7711
        %v7868 = vld [vmem:[%s492 + $0x5c] sm:$0xf]
        %v7869 = vsel %vm1794, %v7714, %v7868
        %7870 = vst [vmem:[%s492 + $0x5c] sm:$0xf] %v7869
        %7871 = vst [vmem:[%s492 + $0x68] sm:$0xf] %v7720
        %v7872 = vld [vmem:[%s492 + $0x74] sm:$0xf]
        %v7873 = vsel %vm1794, %v7723, %v7872
        %7874 = vst [vmem:[%s492 + $0x74] sm:$0xf] %v7873
        %7875 = vst [vmem:[%s492 + $0x80] sm:$0xf] %v7729
        %v7876 = vld [vmem:[%s492 + $0x8c] sm:$0xf]
        %v7877 = vsel %vm1794, %v7732, %v7876
        %7878 = vst [vmem:[%s492 + $0x8c] sm:$0xf] %v7877
        %7879 = vst [vmem:[%s492 + $0x98] sm:$0xf] %v7738
        %v7880 = vld [vmem:[%s492 + $0xa4] sm:$0xf]
        %v7881 = vsel %vm1794, %v7741, %v7880
        %7882 = vst [vmem:[%s492 + $0xa4] sm:$0xf] %v7881
        %7883 = vst [vmem:[%s492 + $0xb0] sm:$0xf] %v7747
        %v7884 = vld [vmem:[%s492 + $0xbc] sm:$0xf]
        %v7885 = vsel %vm1794, %v7750, %v7884
        %7886 = vst [vmem:[%s492 + $0xbc] sm:$0xf] %v7885
        %7887 = vst [vmem:[%s492 + $0xc8] sm:$0xf] %v7756
        %v7888 = vld [vmem:[%s492 + $0xd4] sm:$0xf]
        %v7889 = vsel %vm1794, %v7759, %v7888
        %7890 = vst [vmem:[%s492 + $0xd4] sm:$0xf] %v7889
        %7891 = vst [vmem:[%s492 + $0xe0] sm:$0xf] %v7765
        %v7892 = vld [vmem:[%s492 + $0xec] sm:$0xf]
        %v7893 = vsel %vm1794, %v7768, %v7892
        %7894 = vst [vmem:[%s492 + $0xec] sm:$0xf] %v7893
        %7895 = vst [vmem:[%s492 + $0xf8] sm:$0xf] %v7774
        %v7896 = vld [vmem:[%s492 + $0x104] sm:$0xf]
        %v7897 = vsel %vm1794, %v7777, %v7896
        %7898 = vst [vmem:[%s492 + $0x104] sm:$0xf] %v7897
        %7899 = vst [vmem:[%s492 + $0x110] sm:$0xf] %v7783
        %v7900 = vld [vmem:[%s492 + $0x11c] sm:$0xf]
        %v7901 = vsel %vm1794, %v7786, %v7900
        %7902 = vst [vmem:[%s492 + $0x11c] sm:$0xf] %v7901
        %7903 = vst [vmem:[%s492 + $0x128] sm:$0xf] %v7792
        %v7904 = vld [vmem:[%s492 + $0x134] sm:$0xf]
        %v7905 = vsel %vm1794, %v7795, %v7904
        %7906 = vst [vmem:[%s492 + $0x134] sm:$0xf] %v7905
        %7907 = vst [vmem:[%s492 + $0x140] sm:$0xf] %v7801
        %v7908 = vld [vmem:[%s492 + $0x14c] sm:$0xf]
        %v7909 = vsel %vm1794, %v7804, %v7908
        %7910 = vst [vmem:[%s492 + $0x14c] sm:$0xf] %v7909
        %7911 = vst [vmem:[%s492 + $0x158] sm:$0xf] %v7810
        %v7912 = vld [vmem:[%s492 + $0x164] sm:$0xf]
        %v7913 = vsel %vm1794, %v7813, %v7912
        %7914 = vst [vmem:[%s492 + $0x164] sm:$0xf] %v7913
        %7915 = vst [vmem:[%s492 + $0x170] sm:$0xf] %v7819
        %v7916 = vld [vmem:[%s492 + $0x17c] sm:$0xf]
        %v7917 = vsel %vm1794, %v7822, %v7916
        %7918 = vst [vmem:[%s492 + $0x17c] sm:$0xf] %v7917
        %v7919 = vld [vmem:[%s7] sm:$0x1]
        %v7920 = vld [vmem:[#allocation3] sm:$0xff]
        %v7921 = vld [vmem:[#allocation3 + $0x8] sm:$0xf]
        %v7922 = vld [vmem:[#allocation3 + $0xc] sm:$0xff]
        %v7923 = vld [vmem:[#allocation3 + $0x14] sm:$0xf]
        %v7924 = vld [vmem:[#allocation3 + $0x18] sm:$0xff]
        %v7925 = vld [vmem:[#allocation3 + $0x20] sm:$0xf]
        %v7926 = vld [vmem:[#allocation3 + $0x24] sm:$0xff]
        %v7927 = vld [vmem:[#allocation3 + $0x2c] sm:$0xf]
        %v7928 = vld [vmem:[#allocation3 + $0x30] sm:$0xff]
        %v7929 = vld [vmem:[#allocation3 + $0x38] sm:$0xf]
        %v7930 = vld [vmem:[#allocation3 + $0x3c] sm:$0xff]
        %v7931 = vld [vmem:[#allocation3 + $0x44] sm:$0xf]
        %v7932 = vld [vmem:[#allocation3 + $0x48] sm:$0xff]
        %v7933 = vld [vmem:[#allocation3 + $0x50] sm:$0xf]
        %v7934 = vld [vmem:[#allocation3 + $0x54] sm:$0xff]
        %v7935 = vld [vmem:[#allocation3 + $0x5c] sm:$0xf]
        %v7936 = vld [vmem:[#allocation3 + $0x60] sm:$0xff]
        %v7937 = vld [vmem:[#allocation3 + $0x68] sm:$0xf]
        %v7938 = vld [vmem:[#allocation3 + $0x6c] sm:$0xff]
        %v7939 = vld [vmem:[#allocation3 + $0x74] sm:$0xf]
        %v7940 = vld [vmem:[#allocation3 + $0x78] sm:$0xff]
        %v7941 = vld [vmem:[#allocation3 + $0x80] sm:$0xf]
        %v7942 = vld [vmem:[#allocation3 + $0x84] sm:$0xff]
        %v7943 = vld [vmem:[#allocation3 + $0x8c] sm:$0xf]
        %v7944 = vld [vmem:[#allocation3 + $0x90] sm:$0xff]
        %v7945 = vld [vmem:[#allocation3 + $0x98] sm:$0xf]
        %v7946 = vld [vmem:[#allocation3 + $0x9c] sm:$0xff]
        %v7947 = vld [vmem:[#allocation3 + $0xa4] sm:$0xf]
        %v7948 = vld [vmem:[#allocation3 + $0xa8] sm:$0xff]
        %v7949 = vld [vmem:[#allocation3 + $0xb0] sm:$0xf]
        %v7950 = vld [vmem:[#allocation3 + $0xb4] sm:$0xff]
        %v7951 = vld [vmem:[#allocation3 + $0xbc] sm:$0xf]
        %v7952 = vld [vmem:[#allocation3 + $0xc0] sm:$0xff]
        %v7953 = vld [vmem:[#allocation3 + $0xc8] sm:$0xf]
        %v7954 = vld [vmem:[#allocation3 + $0xcc] sm:$0xff]
        %v7955 = vld [vmem:[#allocation3 + $0xd4] sm:$0xf]
        %v7956 = vld [vmem:[#allocation3 + $0xd8] sm:$0xff]
        %v7957 = vld [vmem:[#allocation3 + $0xe0] sm:$0xf]
        %v7958 = vld [vmem:[#allocation3 + $0xe4] sm:$0xff]
        %v7959 = vld [vmem:[#allocation3 + $0xec] sm:$0xf]
        %v7960 = vld [vmem:[#allocation3 + $0xf0] sm:$0xff]
        %v7961 = vld [vmem:[#allocation3 + $0xf8] sm:$0xf]
        %v7962 = vld [vmem:[#allocation3 + $0xfc] sm:$0xff]
        %v7963 = vld [vmem:[#allocation3 + $0x104] sm:$0xf]
        %v7964 = vld [vmem:[#allocation3 + $0x108] sm:$0xff]
        %v7965 = vld [vmem:[#allocation3 + $0x110] sm:$0xf]
        %v7966 = vld [vmem:[#allocation3 + $0x114] sm:$0xff]
        %v7967 = vld [vmem:[#allocation3 + $0x11c] sm:$0xf]
        %v7968 = vld [vmem:[#allocation3 + $0x120] sm:$0xff]
        %v7969 = vld [vmem:[#allocation3 + $0x128] sm:$0xf]
        %v7970 = vld [vmem:[#allocation3 + $0x12c] sm:$0xff]
        %v7971 = vld [vmem:[#allocation3 + $0x134] sm:$0xf]
        %v7972 = vld [vmem:[#allocation3 + $0x138] sm:$0xff]
        %v7973 = vld [vmem:[#allocation3 + $0x140] sm:$0xf]
        %v7974 = vld [vmem:[#allocation3 + $0x144] sm:$0xff]
        %v7975 = vld [vmem:[#allocation3 + $0x14c] sm:$0xf]
        %v7976 = vld [vmem:[#allocation3 + $0x150] sm:$0xff]
        %v7977 = vld [vmem:[#allocation3 + $0x158] sm:$0xf]
        %v7978 = vld [vmem:[#allocation3 + $0x15c] sm:$0xff]
        %v7979 = vld [vmem:[#allocation3 + $0x164] sm:$0xf]
        %v7980 = vld [vmem:[#allocation3 + $0x168] sm:$0xff]
        %v7981 = vld [vmem:[#allocation3 + $0x170] sm:$0xf]
        %v7982 = vld [vmem:[#allocation3 + $0x174] sm:$0xff]
        %v7983 = vld [vmem:[#allocation3 + $0x17c] sm:$0xf]
        %v7984 = vld [vmem:[%s6] sm:$0xf]
        %v7985 = vld [vmem:[%s6 + $0x4] sm:$0xf]
        %v7986 = vld [vmem:[%s6 + $0x8] sm:$0xf]
        %v7987 = vld [vmem:[%s6 + $0xc] sm:$0xf]
        %v7988 = vld [vmem:[%s6 + $0x10] sm:$0xf]
        %v7989 = vld [vmem:[%s6 + $0x14] sm:$0xf]
        %v7990 = vld [vmem:[%s6 + $0x18] sm:$0xf]
        %v7991 = vld [vmem:[%s6 + $0x1c] sm:$0xf]
        %v7992 = vld [vmem:[%s6 + $0x20] sm:$0xf]
        %v7993 = vld [vmem:[%s6 + $0x24] sm:$0xf]
        %v7994 = vld [vmem:[%s6 + $0x28] sm:$0xf]
        %v7995 = vld [vmem:[%s6 + $0x2c] sm:$0xf]
        %v7996 = vld [vmem:[%s6 + $0x30] sm:$0xf]
        %v7997 = vld [vmem:[%s6 + $0x34] sm:$0xf]
        %v7998 = vld [vmem:[%s6 + $0x38] sm:$0xf]
        %v7999 = vld [vmem:[%s6 + $0x3c] sm:$0xf]
        %v8000 = vld [vmem:[%s6 + $0x40] sm:$0xf]
        %v8001 = vld [vmem:[%s6 + $0x44] sm:$0xf]
        %v8002 = vld [vmem:[%s6 + $0x48] sm:$0xf]
        %v8003 = vld [vmem:[%s6 + $0x4c] sm:$0xf]
        %v8004 = vld [vmem:[%s6 + $0x50] sm:$0xf]
        %v8005 = vld [vmem:[%s6 + $0x54] sm:$0xf]
        %v8006 = vld [vmem:[%s6 + $0x58] sm:$0xf]
        %v8007 = vld [vmem:[%s6 + $0x5c] sm:$0xf]
        %v8008 = vld [vmem:[%s6 + $0x60] sm:$0xf]
        %v8009 = vld [vmem:[%s6 + $0x64] sm:$0xf]
        %v8010 = vld [vmem:[%s6 + $0x68] sm:$0xf]
        %v8011 = vld [vmem:[%s6 + $0x6c] sm:$0xf]
        %v8012 = vld [vmem:[%s6 + $0x70] sm:$0xf]
        %v8013 = vld [vmem:[%s6 + $0x74] sm:$0xf]
        %v8014 = vld [vmem:[%s6 + $0x78] sm:$0xf]
        %v8015 = vld [vmem:[%s6 + $0x7c] sm:$0xf]
        %v8016 = vld [vmem:[%s6 + $0x80] sm:$0xf]
        %v8017 = vld [vmem:[%s6 + $0x84] sm:$0xf]
        %v8018 = vld [vmem:[%s6 + $0x88] sm:$0xf]
        %v8019 = vld [vmem:[%s6 + $0x8c] sm:$0xf]
        %v8020 = vld [vmem:[%s6 + $0x90] sm:$0xf]
        %v8021 = vld [vmem:[%s6 + $0x94] sm:$0xf]
        %v8022 = vld [vmem:[%s6 + $0x98] sm:$0xf]
        %v8023 = vld [vmem:[%s6 + $0x9c] sm:$0xf]
        %v8024 = vld [vmem:[%s6 + $0xa0] sm:$0xf]
        %v8025 = vld [vmem:[%s6 + $0xa4] sm:$0xf]
        %v8026 = vld [vmem:[%s6 + $0xa8] sm:$0xf]
        %v8027 = vld [vmem:[%s6 + $0xac] sm:$0xf]
        %v8028 = vld [vmem:[%s6 + $0xb0] sm:$0xf]
        %v8029 = vld [vmem:[%s6 + $0xb4] sm:$0xf]
        %v8030 = vld [vmem:[%s6 + $0xb8] sm:$0xf]
        %v8031 = vld [vmem:[%s6 + $0xbc] sm:$0xf]
        %v8032 = vld [vmem:[%s492] sm:$0xff]
        %v8033 = vld [vmem:[%s492 + $0x8] sm:$0xf]
        %v8034 = vld [vmem:[%s492 + $0xc] sm:$0xff]
        %v8035 = vld [vmem:[%s492 + $0x14] sm:$0xf]
        %v8036 = vld [vmem:[%s492 + $0x18] sm:$0xff]
        %v8037 = vld [vmem:[%s492 + $0x20] sm:$0xf]
        %v8038 = vld [vmem:[%s492 + $0x24] sm:$0xff]
        %v8039 = vld [vmem:[%s492 + $0x2c] sm:$0xf]
        %v8040 = vld [vmem:[%s492 + $0x30] sm:$0xff]
        %v8041 = vld [vmem:[%s492 + $0x38] sm:$0xf]
        %v8042 = vld [vmem:[%s492 + $0x3c] sm:$0xff]
        %v8043 = vld [vmem:[%s492 + $0x44] sm:$0xf]
        %v8044 = vld [vmem:[%s492 + $0x48] sm:$0xff]
        %v8045 = vld [vmem:[%s492 + $0x50] sm:$0xf]
        %v8046 = vld [vmem:[%s492 + $0x54] sm:$0xff]
        %v8047 = vld [vmem:[%s492 + $0x5c] sm:$0xf]
        %v8048 = vld [vmem:[%s492 + $0x60] sm:$0xff]
        %v8049 = vld [vmem:[%s492 + $0x68] sm:$0xf]
        %v8050 = vld [vmem:[%s492 + $0x6c] sm:$0xff]
        %v8051 = vld [vmem:[%s492 + $0x74] sm:$0xf]
        %v8052 = vld [vmem:[%s492 + $0x78] sm:$0xff]
        %v8053 = vld [vmem:[%s492 + $0x80] sm:$0xf]
        %v8054 = vld [vmem:[%s492 + $0x84] sm:$0xff]
        %v8055 = vld [vmem:[%s492 + $0x8c] sm:$0xf]
        %v8056 = vld [vmem:[%s492 + $0x90] sm:$0xff]
        %v8057 = vld [vmem:[%s492 + $0x98] sm:$0xf]
        %v8058 = vld [vmem:[%s492 + $0x9c] sm:$0xff]
        %v8059 = vld [vmem:[%s492 + $0xa4] sm:$0xf]
        %v8060 = vld [vmem:[%s492 + $0xa8] sm:$0xff]
        %v8061 = vld [vmem:[%s492 + $0xb0] sm:$0xf]
        %v8062 = vld [vmem:[%s492 + $0xb4] sm:$0xff]
        %v8063 = vld [vmem:[%s492 + $0xbc] sm:$0xf]
        %v8064 = vld [vmem:[%s492 + $0xc0] sm:$0xff]
        %v8065 = vld [vmem:[%s492 + $0xc8] sm:$0xf]
        %v8066 = vld [vmem:[%s492 + $0xcc] sm:$0xff]
        %v8067 = vld [vmem:[%s492 + $0xd4] sm:$0xf]
        %v8068 = vld [vmem:[%s492 + $0xd8] sm:$0xff]
        %v8069 = vld [vmem:[%s492 + $0xe0] sm:$0xf]
        %v8070 = vld [vmem:[%s492 + $0xe4] sm:$0xff]
        %v8071 = vld [vmem:[%s492 + $0xec] sm:$0xf]
        %v8072 = vld [vmem:[%s492 + $0xf0] sm:$0xff]
        %v8073 = vld [vmem:[%s492 + $0xf8] sm:$0xf]
        %v8074 = vld [vmem:[%s492 + $0xfc] sm:$0xff]
        %v8075 = vld [vmem:[%s492 + $0x104] sm:$0xf]
        %v8076 = vld [vmem:[%s492 + $0x108] sm:$0xff]
        %v8077 = vld [vmem:[%s492 + $0x110] sm:$0xf]
        %v8078 = vld [vmem:[%s492 + $0x114] sm:$0xff]
        %v8079 = vld [vmem:[%s492 + $0x11c] sm:$0xf]
        %v8080 = vld [vmem:[%s492 + $0x120] sm:$0xff]
        %v8081 = vld [vmem:[%s492 + $0x128] sm:$0xf]
        %v8082 = vld [vmem:[%s492 + $0x12c] sm:$0xff]
        %v8083 = vld [vmem:[%s492 + $0x134] sm:$0xf]
        %v8084 = vld [vmem:[%s492 + $0x138] sm:$0xff]
        %v8085 = vld [vmem:[%s492 + $0x140] sm:$0xf]
        %v8086 = vld [vmem:[%s492 + $0x144] sm:$0xff]
        %v8087 = vld [vmem:[%s492 + $0x14c] sm:$0xf]
        %v8088 = vld [vmem:[%s492 + $0x150] sm:$0xff]
        %v8089 = vld [vmem:[%s492 + $0x158] sm:$0xf]
        %v8090 = vld [vmem:[%s492 + $0x15c] sm:$0xff]
        %v8091 = vld [vmem:[%s492 + $0x164] sm:$0xf]
        %v8092 = vld [vmem:[%s492 + $0x168] sm:$0xff]
        %v8093 = vld [vmem:[%s492 + $0x170] sm:$0xf]
        %v8094 = vld [vmem:[%s492 + $0x174] sm:$0xff]
        %v8095 = vld [vmem:[%s492 + $0x17c] sm:$0xf]
        %s8096 = scalar_lea.vmem %s6, 192
        %v8097 = vld [vmem:[%s8096] sm:$0xf]
        %v8098 = vld [vmem:[%s8096 + $0x4] sm:$0xf]
        %v8099 = vld [vmem:[%s8096 + $0x8] sm:$0xf]
        %v8100 = vld [vmem:[%s8096 + $0xc] sm:$0xf]
        %v8101 = vld [vmem:[%s8096 + $0x10] sm:$0xf]
        %v8102 = vld [vmem:[%s8096 + $0x14] sm:$0xf]
        %v8103 = vld [vmem:[%s8096 + $0x18] sm:$0xf]
        %v8104 = vld [vmem:[%s8096 + $0x1c] sm:$0xf]
        %v8105 = vld [vmem:[%s8096 + $0x20] sm:$0xf]
        %v8106 = vld [vmem:[%s8096 + $0x24] sm:$0xf]
        %v8107 = vld [vmem:[%s8096 + $0x28] sm:$0xf]
        %v8108 = vld [vmem:[%s8096 + $0x2c] sm:$0xf]
        %v8109 = vld [vmem:[%s8096 + $0x30] sm:$0xf]
        %v8110 = vld [vmem:[%s8096 + $0x34] sm:$0xf]
        %v8111 = vld [vmem:[%s8096 + $0x38] sm:$0xf]
        %v8112 = vld [vmem:[%s8096 + $0x3c] sm:$0xf]
        %v8113 = vld [vmem:[%s8096 + $0x40] sm:$0xf]
        %v8114 = vld [vmem:[%s8096 + $0x44] sm:$0xf]
        %v8115 = vld [vmem:[%s8096 + $0x48] sm:$0xf]
        %v8116 = vld [vmem:[%s8096 + $0x4c] sm:$0xf]
        %v8117 = vld [vmem:[%s8096 + $0x50] sm:$0xf]
        %v8118 = vld [vmem:[%s8096 + $0x54] sm:$0xf]
        %v8119 = vld [vmem:[%s8096 + $0x58] sm:$0xf]
        %v8120 = vld [vmem:[%s8096 + $0x5c] sm:$0xf]
        %v8121 = vld [vmem:[%s8096 + $0x60] sm:$0xf]
        %v8122 = vld [vmem:[%s8096 + $0x64] sm:$0xf]
        %v8123 = vld [vmem:[%s8096 + $0x68] sm:$0xf]
        %v8124 = vld [vmem:[%s8096 + $0x6c] sm:$0xf]
        %v8125 = vld [vmem:[%s8096 + $0x70] sm:$0xf]
        %v8126 = vld [vmem:[%s8096 + $0x74] sm:$0xf]
        %v8127 = vld [vmem:[%s8096 + $0x78] sm:$0xf]
        %v8128 = vld [vmem:[%s8096 + $0x7c] sm:$0xf]
        %v8129 = vld [vmem:[%s8096 + $0x80] sm:$0xf]
        %v8130 = vld [vmem:[%s8096 + $0x84] sm:$0xf]
        %v8131 = vld [vmem:[%s8096 + $0x88] sm:$0xf]
        %v8132 = vld [vmem:[%s8096 + $0x8c] sm:$0xf]
        %v8133 = vld [vmem:[%s8096 + $0x90] sm:$0xf]
        %v8134 = vld [vmem:[%s8096 + $0x94] sm:$0xf]
        %v8135 = vld [vmem:[%s8096 + $0x98] sm:$0xf]
        %v8136 = vld [vmem:[%s8096 + $0x9c] sm:$0xf]
        %v8137 = vld [vmem:[%s8096 + $0xa0] sm:$0xf]
        %v8138 = vld [vmem:[%s8096 + $0xa4] sm:$0xf]
        %v8139 = vld [vmem:[%s8096 + $0xa8] sm:$0xf]
        %v8140 = vld [vmem:[%s8096 + $0xac] sm:$0xf]
        %v8141 = vld [vmem:[%s8096 + $0xb0] sm:$0xf]
        %v8142 = vld [vmem:[%s8096 + $0xb4] sm:$0xf]
        %v8143 = vld [vmem:[%s8096 + $0xb8] sm:$0xf]
        %v8144 = vld [vmem:[%s8096 + $0xbc] sm:$0xf]
        %v8209 = vunpack.c.l.b16 %v8032
        %v8210 = vunpack.c.h.b16 %v8032
        %v8211 = vunpack.c.l.b16 %v8033
        %v8212 = vunpack.c.l.b16 %v8034
        %v8213 = vunpack.c.h.b16 %v8034
        %v8214 = vunpack.c.l.b16 %v8035
        %v8215 = vunpack.c.l.b16 %v8036
        %v8216 = vunpack.c.h.b16 %v8036
        %v8217 = vunpack.c.l.b16 %v8037
        %v8218 = vunpack.c.l.b16 %v8038
        %v8219 = vunpack.c.h.b16 %v8038
        %v8220 = vunpack.c.l.b16 %v8039
        %v8221 = vunpack.c.l.b16 %v8040
        %v8222 = vunpack.c.h.b16 %v8040
        %v8223 = vunpack.c.l.b16 %v8041
        %v8224 = vunpack.c.l.b16 %v8042
        %v8225 = vunpack.c.h.b16 %v8042
        %v8226 = vunpack.c.l.b16 %v8043
        %v8227 = vunpack.c.l.b16 %v8044
        %v8228 = vunpack.c.h.b16 %v8044
        %v8229 = vunpack.c.l.b16 %v8045
        %v8230 = vunpack.c.l.b16 %v8046
        %v8231 = vunpack.c.h.b16 %v8046
        %v8232 = vunpack.c.l.b16 %v8047
        %v8233 = vunpack.c.l.b16 %v8048
        %v8234 = vunpack.c.h.b16 %v8048
        %v8235 = vunpack.c.l.b16 %v8049
        %v8236 = vunpack.c.l.b16 %v8050
        %v8237 = vunpack.c.h.b16 %v8050
        %v8238 = vunpack.c.l.b16 %v8051
        %v8239 = vunpack.c.l.b16 %v8052
        %v8240 = vunpack.c.h.b16 %v8052
        %v8241 = vunpack.c.l.b16 %v8053
        %v8242 = vunpack.c.l.b16 %v8054
        %v8243 = vunpack.c.h.b16 %v8054
        %v8244 = vunpack.c.l.b16 %v8055
        %v8245 = vunpack.c.l.b16 %v8056
        %v8246 = vunpack.c.h.b16 %v8056
        %v8247 = vunpack.c.l.b16 %v8057
        %v8248 = vunpack.c.l.b16 %v8058
        %v8249 = vunpack.c.h.b16 %v8058
        %v8250 = vunpack.c.l.b16 %v8059
        %v8251 = vunpack.c.l.b16 %v8060
        %v8252 = vunpack.c.h.b16 %v8060
        %v8253 = vunpack.c.l.b16 %v8061
        %v8254 = vunpack.c.l.b16 %v8062
        %v8255 = vunpack.c.h.b16 %v8062
        %v8256 = vunpack.c.l.b16 %v8063
        %v8257 = vunpack.c.l.b16 %v8064
        %v8258 = vunpack.c.h.b16 %v8064
        %v8259 = vunpack.c.l.b16 %v8065
        %v8260 = vunpack.c.l.b16 %v8066
        %v8261 = vunpack.c.h.b16 %v8066
        %v8262 = vunpack.c.l.b16 %v8067
        %v8263 = vunpack.c.l.b16 %v8068
        %v8264 = vunpack.c.h.b16 %v8068
        %v8265 = vunpack.c.l.b16 %v8069
        %v8266 = vunpack.c.l.b16 %v8070
        %v8267 = vunpack.c.h.b16 %v8070
        %v8268 = vunpack.c.l.b16 %v8071
        %v8269 = vunpack.c.l.b16 %v8072
        %v8270 = vunpack.c.h.b16 %v8072
        %v8271 = vunpack.c.l.b16 %v8073
        %v8272 = vunpack.c.l.b16 %v8074
        %v8273 = vunpack.c.h.b16 %v8074
        %v8274 = vunpack.c.l.b16 %v8075
        %v8275 = vunpack.c.l.b16 %v8076
        %v8276 = vunpack.c.h.b16 %v8076
        %v8277 = vunpack.c.l.b16 %v8077
        %v8278 = vunpack.c.l.b16 %v8078
        %v8279 = vunpack.c.h.b16 %v8078
        %v8280 = vunpack.c.l.b16 %v8079
        %v8281 = vunpack.c.l.b16 %v8080
        %v8282 = vunpack.c.h.b16 %v8080
        %v8283 = vunpack.c.l.b16 %v8081
        %v8284 = vunpack.c.l.b16 %v8082
        %v8285 = vunpack.c.h.b16 %v8082
        %v8286 = vunpack.c.l.b16 %v8083
        %v8287 = vunpack.c.l.b16 %v8084
        %v8288 = vunpack.c.h.b16 %v8084
        %v8289 = vunpack.c.l.b16 %v8085
        %v8290 = vunpack.c.l.b16 %v8086
        %v8291 = vunpack.c.h.b16 %v8086
        %v8292 = vunpack.c.l.b16 %v8087
        %v8293 = vunpack.c.l.b16 %v8088
        %v8294 = vunpack.c.h.b16 %v8088
        %v8295 = vunpack.c.l.b16 %v8089
        %v8296 = vunpack.c.l.b16 %v8090
        %v8297 = vunpack.c.h.b16 %v8090
        %v8298 = vunpack.c.l.b16 %v8091
        %v8299 = vunpack.c.l.b16 %v8092
        %v8300 = vunpack.c.h.b16 %v8092
        %v8301 = vunpack.c.l.b16 %v8093
        %v8302 = vunpack.c.l.b16 %v8094
        %v8303 = vunpack.c.h.b16 %v8094
        %v8304 = vunpack.c.l.b16 %v8095
        %v8305 = vpack.c.b16 %v8212, %v8209
        %v8306 = vpack.c.b16 %v8213, %v8210
        %v8307 = vpack.c.b16 %v8214, %v8211
        %v8308 = vpack.c.b16 %v8218, %v8215
        %v8309 = vpack.c.b16 %v8219, %v8216
        %v8310 = vpack.c.b16 %v8220, %v8217
        %v8311 = vpack.c.b16 %v8224, %v8221
        %v8312 = vpack.c.b16 %v8225, %v8222
        %v8313 = vpack.c.b16 %v8226, %v8223
        %v8314 = vpack.c.b16 %v8230, %v8227
        %v8315 = vpack.c.b16 %v8231, %v8228
        %v8316 = vpack.c.b16 %v8232, %v8229
        %v8317 = vpack.c.b16 %v8236, %v8233
        %v8318 = vpack.c.b16 %v8237, %v8234
        %v8319 = vpack.c.b16 %v8238, %v8235
        %v8320 = vpack.c.b16 %v8242, %v8239
        %v8321 = vpack.c.b16 %v8243, %v8240
        %v8322 = vpack.c.b16 %v8244, %v8241
        %v8323 = vpack.c.b16 %v8248, %v8245
        %v8324 = vpack.c.b16 %v8249, %v8246
        %v8325 = vpack.c.b16 %v8250, %v8247
        %v8326 = vpack.c.b16 %v8254, %v8251
        %v8327 = vpack.c.b16 %v8255, %v8252
        %v8328 = vpack.c.b16 %v8256, %v8253
        %v8329 = vpack.c.b16 %v8260, %v8257
        %v8330 = vpack.c.b16 %v8261, %v8258
        %v8331 = vpack.c.b16 %v8262, %v8259
        %v8332 = vpack.c.b16 %v8266, %v8263
        %v8333 = vpack.c.b16 %v8267, %v8264
        %v8334 = vpack.c.b16 %v8268, %v8265
        %v8335 = vpack.c.b16 %v8272, %v8269
        %v8336 = vpack.c.b16 %v8273, %v8270
        %v8337 = vpack.c.b16 %v8274, %v8271
        %v8338 = vpack.c.b16 %v8278, %v8275
        %v8339 = vpack.c.b16 %v8279, %v8276
        %v8340 = vpack.c.b16 %v8280, %v8277
        %v8341 = vpack.c.b16 %v8284, %v8281
        %v8342 = vpack.c.b16 %v8285, %v8282
        %v8343 = vpack.c.b16 %v8286, %v8283
        %v8344 = vpack.c.b16 %v8290, %v8287
        %v8345 = vpack.c.b16 %v8291, %v8288
        %v8346 = vpack.c.b16 %v8292, %v8289
        %v8347 = vpack.c.b16 %v8296, %v8293
        %v8348 = vpack.c.b16 %v8297, %v8294
        %v8349 = vpack.c.b16 %v8298, %v8295
        %v8350 = vpack.c.b16 %v8302, %v8299
        %v8351 = vpack.c.b16 %v8303, %v8300
        %v8352 = vpack.c.b16 %v8304, %v8301
        %v8449 = vunpack.c.l.b16 %v8097
        %v8450 = vunpack.c.l.b16 %v8098
        %v8451 = vunpack.c.l.b16 %v8099
        %v8452 = vunpack.c.l.b16 %v8100
        %v8453 = vunpack.c.l.b16 %v8101
        %v8454 = vunpack.c.l.b16 %v8102
        %v8455 = vunpack.c.l.b16 %v8103
        %v8456 = vunpack.c.l.b16 %v8104
        %v8457 = vunpack.c.l.b16 %v8105
        %v8458 = vunpack.c.l.b16 %v8106
        %v8459 = vunpack.c.l.b16 %v8107
        %v8460 = vunpack.c.l.b16 %v8108
        %v8461 = vunpack.c.l.b16 %v8109
        %v8462 = vunpack.c.l.b16 %v8110
        %v8463 = vunpack.c.l.b16 %v8111
        %v8464 = vunpack.c.l.b16 %v8112
        %v8465 = vunpack.c.l.b16 %v8113
        %v8466 = vunpack.c.l.b16 %v8114
        %v8467 = vunpack.c.l.b16 %v8115
        %v8468 = vunpack.c.l.b16 %v8116
        %v8469 = vunpack.c.l.b16 %v8117
        %v8470 = vunpack.c.l.b16 %v8118
        %v8471 = vunpack.c.l.b16 %v8119
        %v8472 = vunpack.c.l.b16 %v8120
        %v8473 = vunpack.c.l.b16 %v8121
        %v8474 = vunpack.c.l.b16 %v8122
        %v8475 = vunpack.c.l.b16 %v8123
        %v8476 = vunpack.c.l.b16 %v8124
        %v8477 = vunpack.c.l.b16 %v8125
        %v8478 = vunpack.c.l.b16 %v8126
        %v8479 = vunpack.c.l.b16 %v8127
        %v8480 = vunpack.c.l.b16 %v8128
        %v8481 = vunpack.c.l.b16 %v8129
        %v8482 = vunpack.c.l.b16 %v8130
        %v8483 = vunpack.c.l.b16 %v8131
        %v8484 = vunpack.c.l.b16 %v8132
        %v8485 = vunpack.c.l.b16 %v8133
        %v8486 = vunpack.c.l.b16 %v8134
        %v8487 = vunpack.c.l.b16 %v8135
        %v8488 = vunpack.c.l.b16 %v8136
        %v8489 = vunpack.c.l.b16 %v8137
        %v8490 = vunpack.c.l.b16 %v8138
        %v8491 = vunpack.c.l.b16 %v8139
        %v8492 = vunpack.c.l.b16 %v8140
        %v8493 = vunpack.c.l.b16 %v8141
        %v8494 = vunpack.c.l.b16 %v8142
        %v8495 = vunpack.c.l.b16 %v8143
        %v8496 = vunpack.c.l.b16 %v8144
        %v8497 = vpack.c.b16 %v8450, %v8449
        %v8498 = vpack.c.b16 %v8452, %v8451
        %v8499 = vpack.c.b16 %v8454, %v8453
        %v8500 = vpack.c.b16 %v8456, %v8455
        %v8501 = vpack.c.b16 %v8458, %v8457
        %v8502 = vpack.c.b16 %v8460, %v8459
        %v8503 = vpack.c.b16 %v8462, %v8461
        %v8504 = vpack.c.b16 %v8464, %v8463
        %v8505 = vpack.c.b16 %v8466, %v8465
        %v8506 = vpack.c.b16 %v8468, %v8467
        %v8507 = vpack.c.b16 %v8470, %v8469
        %v8508 = vpack.c.b16 %v8472, %v8471
        %v8509 = vpack.c.b16 %v8474, %v8473
        %v8510 = vpack.c.b16 %v8476, %v8475
        %v8511 = vpack.c.b16 %v8478, %v8477
        %v8512 = vpack.c.b16 %v8480, %v8479
        %v8513 = vpack.c.b16 %v8482, %v8481
        %v8514 = vpack.c.b16 %v8484, %v8483
        %v8515 = vpack.c.b16 %v8486, %v8485
        %v8516 = vpack.c.b16 %v8488, %v8487
        %v8517 = vpack.c.b16 %v8490, %v8489
        %v8518 = vpack.c.b16 %v8492, %v8491
        %v8519 = vpack.c.b16 %v8494, %v8493
        %v8520 = vpack.c.b16 %v8496, %v8495
        %8545 = vmatpush.bf16.msra.mxu0 %v8504
        %8546 = vmatpush.bf16.msra.mxu0 %v8503
        %8547 = vmatpush.bf16.msra.mxu0 %v8502
        %8548 = vmatpush.bf16.msra.mxu0 %v8501
        %8549 = vmatpush.bf16.msra.mxu0 %v8500
        %8550 = vmatpush.bf16.msra.mxu0 %v8499
        %8551 = vmatpush.bf16.msra.mxu0 %v8498
        %8552 = vmatpush.bf16.msra.mxu0 %v8497
        %8553 = vmatmul.bf16.gmra.mxu0 %v8305
        %v8554 = vpop.f32.mrf.mxu0
        %v8555 = vadd.f32 0.0, %v8554
        %v8556 = vpop.f32.mrf.mxu0
        %v8557 = vadd.f32 0.0, %v8556
        %8558 = vmatmul.bf16.gmra.mxu0 %v8308
        %v8559 = vpop.f32.mrf.mxu0
        %v8560 = vadd.f32 0.0, %v8559
        %v8561 = vpop.f32.mrf.mxu0
        %v8562 = vadd.f32 0.0, %v8561
        %8563 = vmatmul.bf16.gmra.mxu0 %v8311
        %v8564 = vpop.f32.mrf.mxu0
        %v8565 = vadd.f32 0.0, %v8564
        %v8566 = vpop.f32.mrf.mxu0
        %v8567 = vadd.f32 0.0, %v8566
        %8568 = vmatmul.bf16.gmra.mxu0 %v8314
        %v8569 = vpop.f32.mrf.mxu0
        %v8570 = vadd.f32 0.0, %v8569
        %v8571 = vpop.f32.mrf.mxu0
        %v8572 = vadd.f32 0.0, %v8571
        %8573 = vmatmul.bf16.gmra.mxu0 %v8317
        %v8574 = vpop.f32.mrf.mxu0
        %v8575 = vadd.f32 0.0, %v8574
        %v8576 = vpop.f32.mrf.mxu0
        %v8577 = vadd.f32 0.0, %v8576
        %8578 = vmatmul.bf16.gmra.mxu0 %v8320
        %v8579 = vpop.f32.mrf.mxu0
        %v8580 = vadd.f32 0.0, %v8579
        %v8581 = vpop.f32.mrf.mxu0
        %v8582 = vadd.f32 0.0, %v8581
        %8583 = vmatmul.bf16.gmra.mxu0 %v8323
        %v8584 = vpop.f32.mrf.mxu0
        %v8585 = vadd.f32 0.0, %v8584
        %v8586 = vpop.f32.mrf.mxu0
        %v8587 = vadd.f32 0.0, %v8586
        %8588 = vmatmul.bf16.gmra.mxu0 %v8326
        %v8589 = vpop.f32.mrf.mxu0
        %v8590 = vadd.f32 0.0, %v8589
        %v8591 = vpop.f32.mrf.mxu0
        %v8592 = vadd.f32 0.0, %v8591
        %8593 = vmatmul.bf16.gmra.mxu0 %v8329
        %v8594 = vpop.f32.mrf.mxu0
        %v8595 = vadd.f32 0.0, %v8594
        %v8596 = vpop.f32.mrf.mxu0
        %v8597 = vadd.f32 0.0, %v8596
        %8598 = vmatmul.bf16.gmra.mxu0 %v8332
        %v8599 = vpop.f32.mrf.mxu0
        %v8600 = vadd.f32 0.0, %v8599
        %v8601 = vpop.f32.mrf.mxu0
        %v8602 = vadd.f32 0.0, %v8601
        %8603 = vmatmul.bf16.gmra.mxu0 %v8335
        %v8604 = vpop.f32.mrf.mxu0
        %v8605 = vadd.f32 0.0, %v8604
        %v8606 = vpop.f32.mrf.mxu0
        %v8607 = vadd.f32 0.0, %v8606
        %8608 = vmatmul.bf16.gmra.mxu0 %v8338
        %v8609 = vpop.f32.mrf.mxu0
        %v8610 = vadd.f32 0.0, %v8609
        %v8611 = vpop.f32.mrf.mxu0
        %v8612 = vadd.f32 0.0, %v8611
        %8613 = vmatmul.bf16.gmra.mxu0 %v8341
        %v8614 = vpop.f32.mrf.mxu0
        %v8615 = vadd.f32 0.0, %v8614
        %v8616 = vpop.f32.mrf.mxu0
        %v8617 = vadd.f32 0.0, %v8616
        %8618 = vmatmul.bf16.gmra.mxu0 %v8344
        %v8619 = vpop.f32.mrf.mxu0
        %v8620 = vadd.f32 0.0, %v8619
        %v8621 = vpop.f32.mrf.mxu0
        %v8622 = vadd.f32 0.0, %v8621
        %8623 = vmatmul.bf16.gmra.mxu0 %v8347
        %v8624 = vpop.f32.mrf.mxu0
        %v8625 = vadd.f32 0.0, %v8624
        %v8626 = vpop.f32.mrf.mxu0
        %v8627 = vadd.f32 0.0, %v8626
        %8628 = vmatmul.bf16.gmra.mxu0 %v8350
        %v8629 = vpop.f32.mrf.mxu0
        %v8630 = vadd.f32 0.0, %v8629
        %v8631 = vpop.f32.mrf.mxu0
        %v8632 = vadd.f32 0.0, %v8631
        %8633 = vdwg.mxu0
        %8634 = vmatpush.bf16.msra.mxu0 %v8512
        %8635 = vmatpush.bf16.msra.mxu0 %v8511
        %8636 = vmatpush.bf16.msra.mxu0 %v8510
        %8637 = vmatpush.bf16.msra.mxu0 %v8509
        %8638 = vmatpush.bf16.msra.mxu0 %v8508
        %8639 = vmatpush.bf16.msra.mxu0 %v8507
        %8640 = vmatpush.bf16.msra.mxu0 %v8506
        %8641 = vmatpush.bf16.msra.mxu0 %v8505
        %8642 = vmatmul.bf16.gmra.mxu0 %v8306
        %v8643 = vpop.f32.mrf.mxu0
        %v8644 = vadd.f32 %v8555, %v8643
        %v8645 = vpop.f32.mrf.mxu0
        %v8646 = vadd.f32 %v8557, %v8645
        %8647 = vmatmul.bf16.gmra.mxu0 %v8309
        %v8648 = vpop.f32.mrf.mxu0
        %v8649 = vadd.f32 %v8560, %v8648
        %v8650 = vpop.f32.mrf.mxu0
        %v8651 = vadd.f32 %v8562, %v8650
        %8652 = vmatmul.bf16.gmra.mxu0 %v8312
        %v8653 = vpop.f32.mrf.mxu0
        %v8654 = vadd.f32 %v8565, %v8653
        %v8655 = vpop.f32.mrf.mxu0
        %v8656 = vadd.f32 %v8567, %v8655
        %8657 = vmatmul.bf16.gmra.mxu0 %v8315
        %v8658 = vpop.f32.mrf.mxu0
        %v8659 = vadd.f32 %v8570, %v8658
        %v8660 = vpop.f32.mrf.mxu0
        %v8661 = vadd.f32 %v8572, %v8660
        %8662 = vmatmul.bf16.gmra.mxu0 %v8318
        %v8663 = vpop.f32.mrf.mxu0
        %v8664 = vadd.f32 %v8575, %v8663
        %v8665 = vpop.f32.mrf.mxu0
        %v8666 = vadd.f32 %v8577, %v8665
        %8667 = vmatmul.bf16.gmra.mxu0 %v8321
        %v8668 = vpop.f32.mrf.mxu0
        %v8669 = vadd.f32 %v8580, %v8668
        %v8670 = vpop.f32.mrf.mxu0
        %v8671 = vadd.f32 %v8582, %v8670
        %8672 = vmatmul.bf16.gmra.mxu0 %v8324
        %v8673 = vpop.f32.mrf.mxu0
        %v8674 = vadd.f32 %v8585, %v8673
        %v8675 = vpop.f32.mrf.mxu0
        %v8676 = vadd.f32 %v8587, %v8675
        %8677 = vmatmul.bf16.gmra.mxu0 %v8327
        %v8678 = vpop.f32.mrf.mxu0
        %v8679 = vadd.f32 %v8590, %v8678
        %v8680 = vpop.f32.mrf.mxu0
        %v8681 = vadd.f32 %v8592, %v8680
        %8682 = vmatmul.bf16.gmra.mxu0 %v8330
        %v8683 = vpop.f32.mrf.mxu0
        %v8684 = vadd.f32 %v8595, %v8683
        %v8685 = vpop.f32.mrf.mxu0
        %v8686 = vadd.f32 %v8597, %v8685
        %8687 = vmatmul.bf16.gmra.mxu0 %v8333
        %v8688 = vpop.f32.mrf.mxu0
        %v8689 = vadd.f32 %v8600, %v8688
        %v8690 = vpop.f32.mrf.mxu0
        %v8691 = vadd.f32 %v8602, %v8690
        %8692 = vmatmul.bf16.gmra.mxu0 %v8336
        %v8693 = vpop.f32.mrf.mxu0
        %v8694 = vadd.f32 %v8605, %v8693
        %v8695 = vpop.f32.mrf.mxu0
        %v8696 = vadd.f32 %v8607, %v8695
        %8697 = vmatmul.bf16.gmra.mxu0 %v8339
        %v8698 = vpop.f32.mrf.mxu0
        %v8699 = vadd.f32 %v8610, %v8698
        %v8700 = vpop.f32.mrf.mxu0
        %v8701 = vadd.f32 %v8612, %v8700
        %8702 = vmatmul.bf16.gmra.mxu0 %v8342
        %v8703 = vpop.f32.mrf.mxu0
        %v8704 = vadd.f32 %v8615, %v8703
        %v8705 = vpop.f32.mrf.mxu0
        %v8706 = vadd.f32 %v8617, %v8705
        %8707 = vmatmul.bf16.gmra.mxu0 %v8345
        %v8708 = vpop.f32.mrf.mxu0
        %v8709 = vadd.f32 %v8620, %v8708
        %v8710 = vpop.f32.mrf.mxu0
        %v8711 = vadd.f32 %v8622, %v8710
        %8712 = vmatmul.bf16.gmra.mxu0 %v8348
        %v8713 = vpop.f32.mrf.mxu0
        %v8714 = vadd.f32 %v8625, %v8713
        %v8715 = vpop.f32.mrf.mxu0
        %v8716 = vadd.f32 %v8627, %v8715
        %8717 = vmatmul.bf16.gmra.mxu0 %v8351
        %v8718 = vpop.f32.mrf.mxu0
        %v8719 = vadd.f32 %v8630, %v8718
        %v8720 = vpop.f32.mrf.mxu0
        %v8721 = vadd.f32 %v8632, %v8720
        %8722 = vdwg.mxu0
        %8723 = vmatpush.bf16.msra.mxu0 %v8520
        %8724 = vmatpush.bf16.msra.mxu0 %v8519
        %8725 = vmatpush.bf16.msra.mxu0 %v8518
        %8726 = vmatpush.bf16.msra.mxu0 %v8517
        %8727 = vmatpush.bf16.msra.mxu0 %v8516
        %8728 = vmatpush.bf16.msra.mxu0 %v8515
        %8729 = vmatpush.bf16.msra.mxu0 %v8514
        %8730 = vmatpush.bf16.msra.mxu0 %v8513
        %8731 = vmatmul.bf16.gmra.mxu0 %v8307
        %v8732 = vpop.f32.mrf.mxu0
        %v8733 = vadd.f32 %v8644, %v8732
        %v8734 = vpop.f32.mrf.mxu0
        %v8735 = vadd.f32 %v8646, %v8734
        %8736 = vmatmul.bf16.gmra.mxu0 %v8310
        %v8737 = vpop.f32.mrf.mxu0
        %v8738 = vadd.f32 %v8649, %v8737
        %v8739 = vpop.f32.mrf.mxu0
        %v8740 = vadd.f32 %v8651, %v8739
        %8741 = vmatmul.bf16.gmra.mxu0 %v8313
        %v8742 = vpop.f32.mrf.mxu0
        %v8743 = vadd.f32 %v8654, %v8742
        %v8744 = vpop.f32.mrf.mxu0
        %v8745 = vadd.f32 %v8656, %v8744
        %8746 = vmatmul.bf16.gmra.mxu0 %v8316
        %v8747 = vpop.f32.mrf.mxu0
        %v8748 = vadd.f32 %v8659, %v8747
        %v8749 = vpop.f32.mrf.mxu0
        %v8750 = vadd.f32 %v8661, %v8749
        %8751 = vmatmul.bf16.gmra.mxu0 %v8319
        %v8752 = vpop.f32.mrf.mxu0
        %v8753 = vadd.f32 %v8664, %v8752
        %v8754 = vpop.f32.mrf.mxu0
        %v8755 = vadd.f32 %v8666, %v8754
        %8756 = vmatmul.bf16.gmra.mxu0 %v8322
        %v8757 = vpop.f32.mrf.mxu0
        %v8758 = vadd.f32 %v8669, %v8757
        %v8759 = vpop.f32.mrf.mxu0
        %v8760 = vadd.f32 %v8671, %v8759
        %8761 = vmatmul.bf16.gmra.mxu0 %v8325
        %v8762 = vpop.f32.mrf.mxu0
        %v8763 = vadd.f32 %v8674, %v8762
        %v8764 = vpop.f32.mrf.mxu0
        %v8765 = vadd.f32 %v8676, %v8764
        %8766 = vmatmul.bf16.gmra.mxu0 %v8328
        %v8767 = vpop.f32.mrf.mxu0
        %v8768 = vadd.f32 %v8679, %v8767
        %v8769 = vpop.f32.mrf.mxu0
        %v8770 = vadd.f32 %v8681, %v8769
        %8771 = vmatmul.bf16.gmra.mxu0 %v8331
        %v8772 = vpop.f32.mrf.mxu0
        %v8773 = vadd.f32 %v8684, %v8772
        %v8774 = vpop.f32.mrf.mxu0
        %v8775 = vadd.f32 %v8686, %v8774
        %8776 = vmatmul.bf16.gmra.mxu0 %v8334
        %v8777 = vpop.f32.mrf.mxu0
        %v8778 = vadd.f32 %v8689, %v8777
        %v8779 = vpop.f32.mrf.mxu0
        %v8780 = vadd.f32 %v8691, %v8779
        %8781 = vmatmul.bf16.gmra.mxu0 %v8337
        %v8782 = vpop.f32.mrf.mxu0
        %v8783 = vadd.f32 %v8694, %v8782
        %v8784 = vpop.f32.mrf.mxu0
        %v8785 = vadd.f32 %v8696, %v8784
        %8786 = vmatmul.bf16.gmra.mxu0 %v8340
        %v8787 = vpop.f32.mrf.mxu0
        %v8788 = vadd.f32 %v8699, %v8787
        %v8789 = vpop.f32.mrf.mxu0
        %v8790 = vadd.f32 %v8701, %v8789
        %8791 = vmatmul.bf16.gmra.mxu0 %v8343
        %v8792 = vpop.f32.mrf.mxu0
        %v8793 = vadd.f32 %v8704, %v8792
        %v8794 = vpop.f32.mrf.mxu0
        %v8795 = vadd.f32 %v8706, %v8794
        %8796 = vmatmul.bf16.gmra.mxu0 %v8346
        %v8797 = vpop.f32.mrf.mxu0
        %v8798 = vadd.f32 %v8709, %v8797
        %v8799 = vpop.f32.mrf.mxu0
        %v8800 = vadd.f32 %v8711, %v8799
        %8801 = vmatmul.bf16.gmra.mxu0 %v8349
        %v8802 = vpop.f32.mrf.mxu0
        %v8803 = vadd.f32 %v8714, %v8802
        %v8804 = vpop.f32.mrf.mxu0
        %v8805 = vadd.f32 %v8716, %v8804
        %8806 = vmatmul.bf16.gmra.mxu0 %v8352
        %v8807 = vpop.f32.mrf.mxu0
        %v8808 = vadd.f32 %v8719, %v8807
        %v8809 = vpop.f32.mrf.mxu0
        %v8810 = vadd.f32 %v8721, %v8809
        %8811 = vdwg.mxu0
        %v8876 = vunpack.c.l.b16 %v7920
        %v8877 = vunpack.c.h.b16 %v7920
        %v8878 = vunpack.c.l.b16 %v7921
        %v8879 = vunpack.c.l.b16 %v7922
        %v8880 = vunpack.c.h.b16 %v7922
        %v8881 = vunpack.c.l.b16 %v7923
        %v8882 = vunpack.c.l.b16 %v7924
        %v8883 = vunpack.c.h.b16 %v7924
        %v8884 = vunpack.c.l.b16 %v7925
        %v8885 = vunpack.c.l.b16 %v7926
        %v8886 = vunpack.c.h.b16 %v7926
        %v8887 = vunpack.c.l.b16 %v7927
        %v8888 = vunpack.c.l.b16 %v7928
        %v8889 = vunpack.c.h.b16 %v7928
        %v8890 = vunpack.c.l.b16 %v7929
        %v8891 = vunpack.c.l.b16 %v7930
        %v8892 = vunpack.c.h.b16 %v7930
        %v8893 = vunpack.c.l.b16 %v7931
        %v8894 = vunpack.c.l.b16 %v7932
        %v8895 = vunpack.c.h.b16 %v7932
        %v8896 = vunpack.c.l.b16 %v7933
        %v8897 = vunpack.c.l.b16 %v7934
        %v8898 = vunpack.c.h.b16 %v7934
        %v8899 = vunpack.c.l.b16 %v7935
        %v8900 = vunpack.c.l.b16 %v7936
        %v8901 = vunpack.c.h.b16 %v7936
        %v8902 = vunpack.c.l.b16 %v7937
        %v8903 = vunpack.c.l.b16 %v7938
        %v8904 = vunpack.c.h.b16 %v7938
        %v8905 = vunpack.c.l.b16 %v7939
        %v8906 = vunpack.c.l.b16 %v7940
        %v8907 = vunpack.c.h.b16 %v7940
        %v8908 = vunpack.c.l.b16 %v7941
        %v8909 = vunpack.c.l.b16 %v7942
        %v8910 = vunpack.c.h.b16 %v7942
        %v8911 = vunpack.c.l.b16 %v7943
        %v8912 = vunpack.c.l.b16 %v7944
        %v8913 = vunpack.c.h.b16 %v7944
        %v8914 = vunpack.c.l.b16 %v7945
        %v8915 = vunpack.c.l.b16 %v7946
        %v8916 = vunpack.c.h.b16 %v7946
        %v8917 = vunpack.c.l.b16 %v7947
        %v8918 = vunpack.c.l.b16 %v7948
        %v8919 = vunpack.c.h.b16 %v7948
        %v8920 = vunpack.c.l.b16 %v7949
        %v8921 = vunpack.c.l.b16 %v7950
        %v8922 = vunpack.c.h.b16 %v7950
        %v8923 = vunpack.c.l.b16 %v7951
        %v8924 = vunpack.c.l.b16 %v7952
        %v8925 = vunpack.c.h.b16 %v7952
        %v8926 = vunpack.c.l.b16 %v7953
        %v8927 = vunpack.c.l.b16 %v7954
        %v8928 = vunpack.c.h.b16 %v7954
        %v8929 = vunpack.c.l.b16 %v7955
        %v8930 = vunpack.c.l.b16 %v7956
        %v8931 = vunpack.c.h.b16 %v7956
        %v8932 = vunpack.c.l.b16 %v7957
        %v8933 = vunpack.c.l.b16 %v7958
        %v8934 = vunpack.c.h.b16 %v7958
        %v8935 = vunpack.c.l.b16 %v7959
        %v8936 = vunpack.c.l.b16 %v7960
        %v8937 = vunpack.c.h.b16 %v7960
        %v8938 = vunpack.c.l.b16 %v7961
        %v8939 = vunpack.c.l.b16 %v7962
        %v8940 = vunpack.c.h.b16 %v7962
        %v8941 = vunpack.c.l.b16 %v7963
        %v8942 = vunpack.c.l.b16 %v7964
        %v8943 = vunpack.c.h.b16 %v7964
        %v8944 = vunpack.c.l.b16 %v7965
        %v8945 = vunpack.c.l.b16 %v7966
        %v8946 = vunpack.c.h.b16 %v7966
        %v8947 = vunpack.c.l.b16 %v7967
        %v8948 = vunpack.c.l.b16 %v7968
        %v8949 = vunpack.c.h.b16 %v7968
        %v8950 = vunpack.c.l.b16 %v7969
        %v8951 = vunpack.c.l.b16 %v7970
        %v8952 = vunpack.c.h.b16 %v7970
        %v8953 = vunpack.c.l.b16 %v7971
        %v8954 = vunpack.c.l.b16 %v7972
        %v8955 = vunpack.c.h.b16 %v7972
        %v8956 = vunpack.c.l.b16 %v7973
        %v8957 = vunpack.c.l.b16 %v7974
        %v8958 = vunpack.c.h.b16 %v7974
        %v8959 = vunpack.c.l.b16 %v7975
        %v8960 = vunpack.c.l.b16 %v7976
        %v8961 = vunpack.c.h.b16 %v7976
        %v8962 = vunpack.c.l.b16 %v7977
        %v8963 = vunpack.c.l.b16 %v7978
        %v8964 = vunpack.c.h.b16 %v7978
        %v8965 = vunpack.c.l.b16 %v7979
        %v8966 = vunpack.c.l.b16 %v7980
        %v8967 = vunpack.c.h.b16 %v7980
        %v8968 = vunpack.c.l.b16 %v7981
        %v8969 = vunpack.c.l.b16 %v7982
        %v8970 = vunpack.c.h.b16 %v7982
        %v8971 = vunpack.c.l.b16 %v7983
        %v8972 = vpack.c.b16 %v8879, %v8876
        %v8973 = vpack.c.b16 %v8880, %v8877
        %v8974 = vpack.c.b16 %v8881, %v8878
        %v8975 = vpack.c.b16 %v8885, %v8882
        %v8976 = vpack.c.b16 %v8886, %v8883
        %v8977 = vpack.c.b16 %v8887, %v8884
        %v8978 = vpack.c.b16 %v8891, %v8888
        %v8979 = vpack.c.b16 %v8892, %v8889
        %v8980 = vpack.c.b16 %v8893, %v8890
        %v8981 = vpack.c.b16 %v8897, %v8894
        %v8982 = vpack.c.b16 %v8898, %v8895
        %v8983 = vpack.c.b16 %v8899, %v8896
        %v8984 = vpack.c.b16 %v8903, %v8900
        %v8985 = vpack.c.b16 %v8904, %v8901
        %v8986 = vpack.c.b16 %v8905, %v8902
        %v8987 = vpack.c.b16 %v8909, %v8906
        %v8988 = vpack.c.b16 %v8910, %v8907
        %v8989 = vpack.c.b16 %v8911, %v8908
        %v8990 = vpack.c.b16 %v8915, %v8912
        %v8991 = vpack.c.b16 %v8916, %v8913
        %v8992 = vpack.c.b16 %v8917, %v8914
        %v8993 = vpack.c.b16 %v8921, %v8918
        %v8994 = vpack.c.b16 %v8922, %v8919
        %v8995 = vpack.c.b16 %v8923, %v8920
        %v8996 = vpack.c.b16 %v8927, %v8924
        %v8997 = vpack.c.b16 %v8928, %v8925
        %v8998 = vpack.c.b16 %v8929, %v8926
        %v8999 = vpack.c.b16 %v8933, %v8930
        %v9000 = vpack.c.b16 %v8934, %v8931
        %v9001 = vpack.c.b16 %v8935, %v8932
        %v9002 = vpack.c.b16 %v8939, %v8936
        %v9003 = vpack.c.b16 %v8940, %v8937
        %v9004 = vpack.c.b16 %v8941, %v8938
        %v9005 = vpack.c.b16 %v8945, %v8942
        %v9006 = vpack.c.b16 %v8946, %v8943
        %v9007 = vpack.c.b16 %v8947, %v8944
        %v9008 = vpack.c.b16 %v8951, %v8948
        %v9009 = vpack.c.b16 %v8952, %v8949
        %v9010 = vpack.c.b16 %v8953, %v8950
        %v9011 = vpack.c.b16 %v8957, %v8954
        %v9012 = vpack.c.b16 %v8958, %v8955
        %v9013 = vpack.c.b16 %v8959, %v8956
        %v9014 = vpack.c.b16 %v8963, %v8960
        %v9015 = vpack.c.b16 %v8964, %v8961
        %v9016 = vpack.c.b16 %v8965, %v8962
        %v9017 = vpack.c.b16 %v8969, %v8966
        %v9018 = vpack.c.b16 %v8970, %v8967
        %v9019 = vpack.c.b16 %v8971, %v8968
        %v9116 = vunpack.c.l.b16 %v7984
        %v9117 = vunpack.c.l.b16 %v7985
        %v9118 = vunpack.c.l.b16 %v7986
        %v9119 = vunpack.c.l.b16 %v7987
        %v9120 = vunpack.c.l.b16 %v7988
        %v9121 = vunpack.c.l.b16 %v7989
        %v9122 = vunpack.c.l.b16 %v7990
        %v9123 = vunpack.c.l.b16 %v7991
        %v9124 = vunpack.c.l.b16 %v7992
        %v9125 = vunpack.c.l.b16 %v7993
        %v9126 = vunpack.c.l.b16 %v7994
        %v9127 = vunpack.c.l.b16 %v7995
        %v9128 = vunpack.c.l.b16 %v7996
        %v9129 = vunpack.c.l.b16 %v7997
        %v9130 = vunpack.c.l.b16 %v7998
        %v9131 = vunpack.c.l.b16 %v7999
        %v9132 = vunpack.c.l.b16 %v8000
        %v9133 = vunpack.c.l.b16 %v8001
        %v9134 = vunpack.c.l.b16 %v8002
        %v9135 = vunpack.c.l.b16 %v8003
        %v9136 = vunpack.c.l.b16 %v8004
        %v9137 = vunpack.c.l.b16 %v8005
        %v9138 = vunpack.c.l.b16 %v8006
        %v9139 = vunpack.c.l.b16 %v8007
        %v9140 = vunpack.c.l.b16 %v8008
        %v9141 = vunpack.c.l.b16 %v8009
        %v9142 = vunpack.c.l.b16 %v8010
        %v9143 = vunpack.c.l.b16 %v8011
        %v9144 = vunpack.c.l.b16 %v8012
        %v9145 = vunpack.c.l.b16 %v8013
        %v9146 = vunpack.c.l.b16 %v8014
        %v9147 = vunpack.c.l.b16 %v8015
        %v9148 = vunpack.c.l.b16 %v8016
        %v9149 = vunpack.c.l.b16 %v8017
        %v9150 = vunpack.c.l.b16 %v8018
        %v9151 = vunpack.c.l.b16 %v8019
        %v9152 = vunpack.c.l.b16 %v8020
        %v9153 = vunpack.c.l.b16 %v8021
        %v9154 = vunpack.c.l.b16 %v8022
        %v9155 = vunpack.c.l.b16 %v8023
        %v9156 = vunpack.c.l.b16 %v8024
        %v9157 = vunpack.c.l.b16 %v8025
        %v9158 = vunpack.c.l.b16 %v8026
        %v9159 = vunpack.c.l.b16 %v8027
        %v9160 = vunpack.c.l.b16 %v8028
        %v9161 = vunpack.c.l.b16 %v8029
        %v9162 = vunpack.c.l.b16 %v8030
        %v9163 = vunpack.c.l.b16 %v8031
        %v9164 = vpack.c.b16 %v9117, %v9116
        %v9165 = vpack.c.b16 %v9119, %v9118
        %v9166 = vpack.c.b16 %v9121, %v9120
        %v9167 = vpack.c.b16 %v9123, %v9122
        %v9168 = vpack.c.b16 %v9125, %v9124
        %v9169 = vpack.c.b16 %v9127, %v9126
        %v9170 = vpack.c.b16 %v9129, %v9128
        %v9171 = vpack.c.b16 %v9131, %v9130
        %v9172 = vpack.c.b16 %v9133, %v9132
        %v9173 = vpack.c.b16 %v9135, %v9134
        %v9174 = vpack.c.b16 %v9137, %v9136
        %v9175 = vpack.c.b16 %v9139, %v9138
        %v9176 = vpack.c.b16 %v9141, %v9140
        %v9177 = vpack.c.b16 %v9143, %v9142
        %v9178 = vpack.c.b16 %v9145, %v9144
        %v9179 = vpack.c.b16 %v9147, %v9146
        %v9180 = vpack.c.b16 %v9149, %v9148
        %v9181 = vpack.c.b16 %v9151, %v9150
        %v9182 = vpack.c.b16 %v9153, %v9152
        %v9183 = vpack.c.b16 %v9155, %v9154
        %v9184 = vpack.c.b16 %v9157, %v9156
        %v9185 = vpack.c.b16 %v9159, %v9158
        %v9186 = vpack.c.b16 %v9161, %v9160
        %v9187 = vpack.c.b16 %v9163, %v9162
        %9212 = vmatpush.bf16.msra.mxu0 %v9171
        %9213 = vmatpush.bf16.msra.mxu0 %v9170
        %9214 = vmatpush.bf16.msra.mxu0 %v9169
        %9215 = vmatpush.bf16.msra.mxu0 %v9168
        %9216 = vmatpush.bf16.msra.mxu0 %v9167
        %9217 = vmatpush.bf16.msra.mxu0 %v9166
        %9218 = vmatpush.bf16.msra.mxu0 %v9165
        %9219 = vmatpush.bf16.msra.mxu0 %v9164
        %9220 = vmatmul.bf16.gmra.mxu0 %v8972
        %v9221 = vpop.f32.mrf.mxu0
        %v9222 = vadd.f32 %v8733, %v9221
        %v9223 = vpop.f32.mrf.mxu0
        %v9224 = vadd.f32 %v8735, %v9223
        %9225 = vmatmul.bf16.gmra.mxu0 %v8975
        %v9226 = vpop.f32.mrf.mxu0
        %v9227 = vadd.f32 %v8738, %v9226
        %v9228 = vpop.f32.mrf.mxu0
        %v9229 = vadd.f32 %v8740, %v9228
        %9230 = vmatmul.bf16.gmra.mxu0 %v8978
        %v9231 = vpop.f32.mrf.mxu0
        %v9232 = vadd.f32 %v8743, %v9231
        %v9233 = vpop.f32.mrf.mxu0
        %v9234 = vadd.f32 %v8745, %v9233
        %9235 = vmatmul.bf16.gmra.mxu0 %v8981
        %v9236 = vpop.f32.mrf.mxu0
        %v9237 = vadd.f32 %v8748, %v9236
        %v9238 = vpop.f32.mrf.mxu0
        %v9239 = vadd.f32 %v8750, %v9238
        %9240 = vmatmul.bf16.gmra.mxu0 %v8984
        %v9241 = vpop.f32.mrf.mxu0
        %v9242 = vadd.f32 %v8753, %v9241
        %v9243 = vpop.f32.mrf.mxu0
        %v9244 = vadd.f32 %v8755, %v9243
        %9245 = vmatmul.bf16.gmra.mxu0 %v8987
        %v9246 = vpop.f32.mrf.mxu0
        %v9247 = vadd.f32 %v8758, %v9246
        %v9248 = vpop.f32.mrf.mxu0
        %v9249 = vadd.f32 %v8760, %v9248
        %9250 = vmatmul.bf16.gmra.mxu0 %v8990
        %v9251 = vpop.f32.mrf.mxu0
        %v9252 = vadd.f32 %v8763, %v9251
        %v9253 = vpop.f32.mrf.mxu0
        %v9254 = vadd.f32 %v8765, %v9253
        %9255 = vmatmul.bf16.gmra.mxu0 %v8993
        %v9256 = vpop.f32.mrf.mxu0
        %v9257 = vadd.f32 %v8768, %v9256
        %v9258 = vpop.f32.mrf.mxu0
        %v9259 = vadd.f32 %v8770, %v9258
        %9260 = vmatmul.bf16.gmra.mxu0 %v8996
        %v9261 = vpop.f32.mrf.mxu0
        %v9262 = vadd.f32 %v8773, %v9261
        %v9263 = vpop.f32.mrf.mxu0
        %v9264 = vadd.f32 %v8775, %v9263
        %9265 = vmatmul.bf16.gmra.mxu0 %v8999
        %v9266 = vpop.f32.mrf.mxu0
        %v9267 = vadd.f32 %v8778, %v9266
        %v9268 = vpop.f32.mrf.mxu0
        %v9269 = vadd.f32 %v8780, %v9268
        %9270 = vmatmul.bf16.gmra.mxu0 %v9002
        %v9271 = vpop.f32.mrf.mxu0
        %v9272 = vadd.f32 %v8783, %v9271
        %v9273 = vpop.f32.mrf.mxu0
        %v9274 = vadd.f32 %v8785, %v9273
        %9275 = vmatmul.bf16.gmra.mxu0 %v9005
        %v9276 = vpop.f32.mrf.mxu0
        %v9277 = vadd.f32 %v8788, %v9276
        %v9278 = vpop.f32.mrf.mxu0
        %v9279 = vadd.f32 %v8790, %v9278
        %9280 = vmatmul.bf16.gmra.mxu0 %v9008
        %v9281 = vpop.f32.mrf.mxu0
        %v9282 = vadd.f32 %v8793, %v9281
        %v9283 = vpop.f32.mrf.mxu0
        %v9284 = vadd.f32 %v8795, %v9283
        %9285 = vmatmul.bf16.gmra.mxu0 %v9011
        %v9286 = vpop.f32.mrf.mxu0
        %v9287 = vadd.f32 %v8798, %v9286
        %v9288 = vpop.f32.mrf.mxu0
        %v9289 = vadd.f32 %v8800, %v9288
        %9290 = vmatmul.bf16.gmra.mxu0 %v9014
        %v9291 = vpop.f32.mrf.mxu0
        %v9292 = vadd.f32 %v8803, %v9291
        %v9293 = vpop.f32.mrf.mxu0
        %v9294 = vadd.f32 %v8805, %v9293
        %9295 = vmatmul.bf16.gmra.mxu0 %v9017
        %v9296 = vpop.f32.mrf.mxu0
        %v9297 = vadd.f32 %v8808, %v9296
        %v9298 = vpop.f32.mrf.mxu0
        %v9299 = vadd.f32 %v8810, %v9298
        %9300 = vdwg.mxu0
        %9301 = vmatpush.bf16.msra.mxu0 %v9179
        %9302 = vmatpush.bf16.msra.mxu0 %v9178
        %9303 = vmatpush.bf16.msra.mxu0 %v9177
        %9304 = vmatpush.bf16.msra.mxu0 %v9176
        %9305 = vmatpush.bf16.msra.mxu0 %v9175
        %9306 = vmatpush.bf16.msra.mxu0 %v9174
        %9307 = vmatpush.bf16.msra.mxu0 %v9173
        %9308 = vmatpush.bf16.msra.mxu0 %v9172
        %9309 = vmatmul.bf16.gmra.mxu0 %v8973
        %v9310 = vpop.f32.mrf.mxu0
        %v9311 = vadd.f32 %v9222, %v9310
        %v9312 = vpop.f32.mrf.mxu0
        %v9313 = vadd.f32 %v9224, %v9312
        %9314 = vmatmul.bf16.gmra.mxu0 %v8976
        %v9315 = vpop.f32.mrf.mxu0
        %v9316 = vadd.f32 %v9227, %v9315
        %v9317 = vpop.f32.mrf.mxu0
        %v9318 = vadd.f32 %v9229, %v9317
        %9319 = vmatmul.bf16.gmra.mxu0 %v8979
        %v9320 = vpop.f32.mrf.mxu0
        %v9321 = vadd.f32 %v9232, %v9320
        %v9322 = vpop.f32.mrf.mxu0
        %v9323 = vadd.f32 %v9234, %v9322
        %9324 = vmatmul.bf16.gmra.mxu0 %v8982
        %v9325 = vpop.f32.mrf.mxu0
        %v9326 = vadd.f32 %v9237, %v9325
        %v9327 = vpop.f32.mrf.mxu0
        %v9328 = vadd.f32 %v9239, %v9327
        %9329 = vmatmul.bf16.gmra.mxu0 %v8985
        %v9330 = vpop.f32.mrf.mxu0
        %v9331 = vadd.f32 %v9242, %v9330
        %v9332 = vpop.f32.mrf.mxu0
        %v9333 = vadd.f32 %v9244, %v9332
        %9334 = vmatmul.bf16.gmra.mxu0 %v8988
        %v9335 = vpop.f32.mrf.mxu0
        %v9336 = vadd.f32 %v9247, %v9335
        %v9337 = vpop.f32.mrf.mxu0
        %v9338 = vadd.f32 %v9249, %v9337
        %9339 = vmatmul.bf16.gmra.mxu0 %v8991
        %v9340 = vpop.f32.mrf.mxu0
        %v9341 = vadd.f32 %v9252, %v9340
        %v9342 = vpop.f32.mrf.mxu0
        %v9343 = vadd.f32 %v9254, %v9342
        %9344 = vmatmul.bf16.gmra.mxu0 %v8994
        %v9345 = vpop.f32.mrf.mxu0
        %v9346 = vadd.f32 %v9257, %v9345
        %v9347 = vpop.f32.mrf.mxu0
        %v9348 = vadd.f32 %v9259, %v9347
        %9349 = vmatmul.bf16.gmra.mxu0 %v8997
        %v9350 = vpop.f32.mrf.mxu0
        %v9351 = vadd.f32 %v9262, %v9350
        %v9352 = vpop.f32.mrf.mxu0
        %v9353 = vadd.f32 %v9264, %v9352
        %9354 = vmatmul.bf16.gmra.mxu0 %v9000
        %v9355 = vpop.f32.mrf.mxu0
        %v9356 = vadd.f32 %v9267, %v9355
        %v9357 = vpop.f32.mrf.mxu0
        %v9358 = vadd.f32 %v9269, %v9357
        %9359 = vmatmul.bf16.gmra.mxu0 %v9003
        %v9360 = vpop.f32.mrf.mxu0
        %v9361 = vadd.f32 %v9272, %v9360
        %v9362 = vpop.f32.mrf.mxu0
        %v9363 = vadd.f32 %v9274, %v9362
        %9364 = vmatmul.bf16.gmra.mxu0 %v9006
        %v9365 = vpop.f32.mrf.mxu0
        %v9366 = vadd.f32 %v9277, %v9365
        %v9367 = vpop.f32.mrf.mxu0
        %v9368 = vadd.f32 %v9279, %v9367
        %9369 = vmatmul.bf16.gmra.mxu0 %v9009
        %v9370 = vpop.f32.mrf.mxu0
        %v9371 = vadd.f32 %v9282, %v9370
        %v9372 = vpop.f32.mrf.mxu0
        %v9373 = vadd.f32 %v9284, %v9372
        %9374 = vmatmul.bf16.gmra.mxu0 %v9012
        %v9375 = vpop.f32.mrf.mxu0
        %v9376 = vadd.f32 %v9287, %v9375
        %v9377 = vpop.f32.mrf.mxu0
        %v9378 = vadd.f32 %v9289, %v9377
        %9379 = vmatmul.bf16.gmra.mxu0 %v9015
        %v9380 = vpop.f32.mrf.mxu0
        %v9381 = vadd.f32 %v9292, %v9380
        %v9382 = vpop.f32.mrf.mxu0
        %v9383 = vadd.f32 %v9294, %v9382
        %9384 = vmatmul.bf16.gmra.mxu0 %v9018
        %v9385 = vpop.f32.mrf.mxu0
        %v9386 = vadd.f32 %v9297, %v9385
        %v9387 = vpop.f32.mrf.mxu0
        %v9388 = vadd.f32 %v9299, %v9387
        %9389 = vdwg.mxu0
        %9390 = vmatpush.bf16.msra.mxu0 %v9187
        %9391 = vmatpush.bf16.msra.mxu0 %v9186
        %9392 = vmatpush.bf16.msra.mxu0 %v9185
        %9393 = vmatpush.bf16.msra.mxu0 %v9184
        %9394 = vmatpush.bf16.msra.mxu0 %v9183
        %9395 = vmatpush.bf16.msra.mxu0 %v9182
        %9396 = vmatpush.bf16.msra.mxu0 %v9181
        %9397 = vmatpush.bf16.msra.mxu0 %v9180
        %9398 = vmatmul.bf16.gmra.mxu0 %v8974
        %v9399 = vpop.f32.mrf.mxu0
        %v9400 = vadd.f32 %v9311, %v9399
        %v9401 = vpop.f32.mrf.mxu0
        %v9402 = vadd.f32 %v9313, %v9401
        %9403 = vmatmul.bf16.gmra.mxu0 %v8977
        %v9404 = vpop.f32.mrf.mxu0
        %v9405 = vadd.f32 %v9316, %v9404
        %v9406 = vpop.f32.mrf.mxu0
        %v9407 = vadd.f32 %v9318, %v9406
        %9408 = vmatmul.bf16.gmra.mxu0 %v8980
        %v9409 = vpop.f32.mrf.mxu0
        %v9410 = vadd.f32 %v9321, %v9409
        %v9411 = vpop.f32.mrf.mxu0
        %v9412 = vadd.f32 %v9323, %v9411
        %9413 = vmatmul.bf16.gmra.mxu0 %v8983
        %v9414 = vpop.f32.mrf.mxu0
        %v9415 = vadd.f32 %v9326, %v9414
        %v9416 = vpop.f32.mrf.mxu0
        %v9417 = vadd.f32 %v9328, %v9416
        %9418 = vmatmul.bf16.gmra.mxu0 %v8986
        %v9419 = vpop.f32.mrf.mxu0
        %v9420 = vadd.f32 %v9331, %v9419
        %v9421 = vpop.f32.mrf.mxu0
        %v9422 = vadd.f32 %v9333, %v9421
        %9423 = vmatmul.bf16.gmra.mxu0 %v8989
        %v9424 = vpop.f32.mrf.mxu0
        %v9425 = vadd.f32 %v9336, %v9424
        %v9426 = vpop.f32.mrf.mxu0
        %v9427 = vadd.f32 %v9338, %v9426
        %9428 = vmatmul.bf16.gmra.mxu0 %v8992
        %v9429 = vpop.f32.mrf.mxu0
        %v9430 = vadd.f32 %v9341, %v9429
        %v9431 = vpop.f32.mrf.mxu0
        %v9432 = vadd.f32 %v9343, %v9431
        %9433 = vmatmul.bf16.gmra.mxu0 %v8995
        %v9434 = vpop.f32.mrf.mxu0
        %v9435 = vadd.f32 %v9346, %v9434
        %v9436 = vpop.f32.mrf.mxu0
        %v9437 = vadd.f32 %v9348, %v9436
        %9438 = vmatmul.bf16.gmra.mxu0 %v8998
        %v9439 = vpop.f32.mrf.mxu0
        %v9440 = vadd.f32 %v9351, %v9439
        %v9441 = vpop.f32.mrf.mxu0
        %v9442 = vadd.f32 %v9353, %v9441
        %9443 = vmatmul.bf16.gmra.mxu0 %v9001
        %v9444 = vpop.f32.mrf.mxu0
        %v9445 = vadd.f32 %v9356, %v9444
        %v9446 = vpop.f32.mrf.mxu0
        %v9447 = vadd.f32 %v9358, %v9446
        %9448 = vmatmul.bf16.gmra.mxu0 %v9004
        %v9449 = vpop.f32.mrf.mxu0
        %v9450 = vadd.f32 %v9361, %v9449
        %v9451 = vpop.f32.mrf.mxu0
        %v9452 = vadd.f32 %v9363, %v9451
        %9453 = vmatmul.bf16.gmra.mxu0 %v9007
        %v9454 = vpop.f32.mrf.mxu0
        %v9455 = vadd.f32 %v9366, %v9454
        %v9456 = vpop.f32.mrf.mxu0
        %v9457 = vadd.f32 %v9368, %v9456
        %9458 = vmatmul.bf16.gmra.mxu0 %v9010
        %v9459 = vpop.f32.mrf.mxu0
        %v9460 = vadd.f32 %v9371, %v9459
        %v9461 = vpop.f32.mrf.mxu0
        %v9462 = vadd.f32 %v9373, %v9461
        %9463 = vmatmul.bf16.gmra.mxu0 %v9013
        %v9464 = vpop.f32.mrf.mxu0
        %v9465 = vadd.f32 %v9376, %v9464
        %v9466 = vpop.f32.mrf.mxu0
        %v9467 = vadd.f32 %v9378, %v9466
        %9468 = vmatmul.bf16.gmra.mxu0 %v9016
        %v9469 = vpop.f32.mrf.mxu0
        %v9470 = vadd.f32 %v9381, %v9469
        %v9471 = vpop.f32.mrf.mxu0
        %v9472 = vadd.f32 %v9383, %v9471
        %9473 = vmatmul.bf16.gmra.mxu0 %v9019
        %v9474 = vpop.f32.mrf.mxu0
        %v9475 = vadd.f32 %v9386, %v9474
        %v9476 = vpop.f32.mrf.mxu0
        %v9477 = vadd.f32 %v9388, %v9476
        %9478 = vdwg.mxu0
        %s9479 = scalar_lea.vmem [#allocation3], 48
        %v9480 = vld [vmem:[%s9479] sm:$0xff]
        %v9481 = vld [vmem:[%s9479 + $0x8] sm:$0xf]
        %v9482 = vld [vmem:[%s9479 + $0xc] sm:$0xff]
        %v9483 = vld [vmem:[%s9479 + $0x14] sm:$0xf]
        %v9484 = vld [vmem:[%s9479 + $0x18] sm:$0xff]
        %v9485 = vld [vmem:[%s9479 + $0x20] sm:$0xf]
        %v9486 = vld [vmem:[%s9479 + $0x24] sm:$0xff]
        %v9487 = vld [vmem:[%s9479 + $0x2c] sm:$0xf]
        %v9488 = vld [vmem:[%s9479 + $0x30] sm:$0xff]
        %v9489 = vld [vmem:[%s9479 + $0x38] sm:$0xf]
        %v9490 = vld [vmem:[%s9479 + $0x3c] sm:$0xff]
        %v9491 = vld [vmem:[%s9479 + $0x44] sm:$0xf]
        %v9492 = vld [vmem:[%s9479 + $0x48] sm:$0xff]
        %v9493 = vld [vmem:[%s9479 + $0x50] sm:$0xf]
        %v9494 = vld [vmem:[%s9479 + $0x54] sm:$0xff]
        %v9495 = vld [vmem:[%s9479 + $0x5c] sm:$0xf]
        %v9496 = vld [vmem:[%s9479 + $0x60] sm:$0xff]
        %v9497 = vld [vmem:[%s9479 + $0x68] sm:$0xf]
        %v9498 = vld [vmem:[%s9479 + $0x6c] sm:$0xff]
        %v9499 = vld [vmem:[%s9479 + $0x74] sm:$0xf]
        %v9500 = vld [vmem:[%s9479 + $0x78] sm:$0xff]
        %v9501 = vld [vmem:[%s9479 + $0x80] sm:$0xf]
        %v9502 = vld [vmem:[%s9479 + $0x84] sm:$0xff]
        %v9503 = vld [vmem:[%s9479 + $0x8c] sm:$0xf]
        %v9504 = vld [vmem:[%s9479 + $0x90] sm:$0xff]
        %v9505 = vld [vmem:[%s9479 + $0x98] sm:$0xf]
        %v9506 = vld [vmem:[%s9479 + $0x9c] sm:$0xff]
        %v9507 = vld [vmem:[%s9479 + $0xa4] sm:$0xf]
        %v9508 = vld [vmem:[%s9479 + $0xa8] sm:$0xff]
        %v9509 = vld [vmem:[%s9479 + $0xb0] sm:$0xf]
        %v9510 = vld [vmem:[%s9479 + $0xb4] sm:$0xff]
        %v9511 = vld [vmem:[%s9479 + $0xbc] sm:$0xf]
        %v9512 = vld [vmem:[%s9479 + $0xc0] sm:$0xff]
        %v9513 = vld [vmem:[%s9479 + $0xc8] sm:$0xf]
        %v9514 = vld [vmem:[%s9479 + $0xcc] sm:$0xff]
        %v9515 = vld [vmem:[%s9479 + $0xd4] sm:$0xf]
        %v9516 = vld [vmem:[%s9479 + $0xd8] sm:$0xff]
        %v9517 = vld [vmem:[%s9479 + $0xe0] sm:$0xf]
        %v9518 = vld [vmem:[%s9479 + $0xe4] sm:$0xff]
        %v9519 = vld [vmem:[%s9479 + $0xec] sm:$0xf]
        %v9520 = vld [vmem:[%s9479 + $0xf0] sm:$0xff]
        %v9521 = vld [vmem:[%s9479 + $0xf8] sm:$0xf]
        %v9522 = vld [vmem:[%s9479 + $0xfc] sm:$0xff]
        %v9523 = vld [vmem:[%s9479 + $0x104] sm:$0xf]
        %v9524 = vld [vmem:[%s9479 + $0x108] sm:$0xff]
        %v9525 = vld [vmem:[%s9479 + $0x110] sm:$0xf]
        %v9526 = vld [vmem:[%s9479 + $0x114] sm:$0xff]
        %v9527 = vld [vmem:[%s9479 + $0x11c] sm:$0xf]
        %v9528 = vld [vmem:[%s9479 + $0x120] sm:$0xff]
        %v9529 = vld [vmem:[%s9479 + $0x128] sm:$0xf]
        %v9530 = vld [vmem:[%s9479 + $0x12c] sm:$0xff]
        %v9531 = vld [vmem:[%s9479 + $0x134] sm:$0xf]
        %v9532 = vld [vmem:[%s9479 + $0x138] sm:$0xff]
        %v9533 = vld [vmem:[%s9479 + $0x140] sm:$0xf]
        %v9534 = vld [vmem:[%s9479 + $0x144] sm:$0xff]
        %v9535 = vld [vmem:[%s9479 + $0x14c] sm:$0xf]
        %v9536 = vld [vmem:[%s9479 + $0x150] sm:$0xff]
        %v9537 = vld [vmem:[%s9479 + $0x158] sm:$0xf]
        %v9538 = vld [vmem:[%s9479 + $0x15c] sm:$0xff]
        %v9539 = vld [vmem:[%s9479 + $0x164] sm:$0xf]
        %v9540 = vld [vmem:[%s9479 + $0x168] sm:$0xff]
        %v9541 = vld [vmem:[%s9479 + $0x170] sm:$0xf]
        %v9542 = vld [vmem:[%s9479 + $0x174] sm:$0xff]
        %v9543 = vld [vmem:[%s9479 + $0x17c] sm:$0xf]
        %s9544 = scalar_lea.vmem %s6, 384
        %v9545 = vld [vmem:[%s9544] sm:$0xf]
        %v9546 = vld [vmem:[%s9544 + $0x4] sm:$0xf]
        %v9547 = vld [vmem:[%s9544 + $0x8] sm:$0xf]
        %v9548 = vld [vmem:[%s9544 + $0xc] sm:$0xf]
        %v9549 = vld [vmem:[%s9544 + $0x10] sm:$0xf]
        %v9550 = vld [vmem:[%s9544 + $0x14] sm:$0xf]
        %v9551 = vld [vmem:[%s9544 + $0x18] sm:$0xf]
        %v9552 = vld [vmem:[%s9544 + $0x1c] sm:$0xf]
        %v9553 = vld [vmem:[%s9544 + $0x20] sm:$0xf]
        %v9554 = vld [vmem:[%s9544 + $0x24] sm:$0xf]
        %v9555 = vld [vmem:[%s9544 + $0x28] sm:$0xf]
        %v9556 = vld [vmem:[%s9544 + $0x2c] sm:$0xf]
        %v9557 = vld [vmem:[%s9544 + $0x30] sm:$0xf]
        %v9558 = vld [vmem:[%s9544 + $0x34] sm:$0xf]
        %v9559 = vld [vmem:[%s9544 + $0x38] sm:$0xf]
        %v9560 = vld [vmem:[%s9544 + $0x3c] sm:$0xf]
        %v9561 = vld [vmem:[%s9544 + $0x40] sm:$0xf]
        %v9562 = vld [vmem:[%s9544 + $0x44] sm:$0xf]
        %v9563 = vld [vmem:[%s9544 + $0x48] sm:$0xf]
        %v9564 = vld [vmem:[%s9544 + $0x4c] sm:$0xf]
        %v9565 = vld [vmem:[%s9544 + $0x50] sm:$0xf]
        %v9566 = vld [vmem:[%s9544 + $0x54] sm:$0xf]
        %v9567 = vld [vmem:[%s9544 + $0x58] sm:$0xf]
        %v9568 = vld [vmem:[%s9544 + $0x5c] sm:$0xf]
        %v9569 = vld [vmem:[%s9544 + $0x60] sm:$0xf]
        %v9570 = vld [vmem:[%s9544 + $0x64] sm:$0xf]
        %v9571 = vld [vmem:[%s9544 + $0x68] sm:$0xf]
        %v9572 = vld [vmem:[%s9544 + $0x6c] sm:$0xf]
        %v9573 = vld [vmem:[%s9544 + $0x70] sm:$0xf]
        %v9574 = vld [vmem:[%s9544 + $0x74] sm:$0xf]
        %v9575 = vld [vmem:[%s9544 + $0x78] sm:$0xf]
        %v9576 = vld [vmem:[%s9544 + $0x7c] sm:$0xf]
        %v9577 = vld [vmem:[%s9544 + $0x80] sm:$0xf]
        %v9578 = vld [vmem:[%s9544 + $0x84] sm:$0xf]
        %v9579 = vld [vmem:[%s9544 + $0x88] sm:$0xf]
        %v9580 = vld [vmem:[%s9544 + $0x8c] sm:$0xf]
        %v9581 = vld [vmem:[%s9544 + $0x90] sm:$0xf]
        %v9582 = vld [vmem:[%s9544 + $0x94] sm:$0xf]
        %v9583 = vld [vmem:[%s9544 + $0x98] sm:$0xf]
        %v9584 = vld [vmem:[%s9544 + $0x9c] sm:$0xf]
        %v9585 = vld [vmem:[%s9544 + $0xa0] sm:$0xf]
        %v9586 = vld [vmem:[%s9544 + $0xa4] sm:$0xf]
        %v9587 = vld [vmem:[%s9544 + $0xa8] sm:$0xf]
        %v9588 = vld [vmem:[%s9544 + $0xac] sm:$0xf]
        %v9589 = vld [vmem:[%s9544 + $0xb0] sm:$0xf]
        %v9590 = vld [vmem:[%s9544 + $0xb4] sm:$0xf]
        %v9591 = vld [vmem:[%s9544 + $0xb8] sm:$0xf]
        %v9592 = vld [vmem:[%s9544 + $0xbc] sm:$0xf]
        %v9657 = vunpack.c.l.b16 %v9480
        %v9658 = vunpack.c.h.b16 %v9480
        %v9659 = vunpack.c.l.b16 %v9481
        %v9660 = vunpack.c.l.b16 %v9482
        %v9661 = vunpack.c.h.b16 %v9482
        %v9662 = vunpack.c.l.b16 %v9483
        %v9663 = vunpack.c.l.b16 %v9484
        %v9664 = vunpack.c.h.b16 %v9484
        %v9665 = vunpack.c.l.b16 %v9485
        %v9666 = vunpack.c.l.b16 %v9486
        %v9667 = vunpack.c.h.b16 %v9486
        %v9668 = vunpack.c.l.b16 %v9487
        %v9669 = vunpack.c.l.b16 %v9488
        %v9670 = vunpack.c.h.b16 %v9488
        %v9671 = vunpack.c.l.b16 %v9489
        %v9672 = vunpack.c.l.b16 %v9490
        %v9673 = vunpack.c.h.b16 %v9490
        %v9674 = vunpack.c.l.b16 %v9491
        %v9675 = vunpack.c.l.b16 %v9492
        %v9676 = vunpack.c.h.b16 %v9492
        %v9677 = vunpack.c.l.b16 %v9493
        %v9678 = vunpack.c.l.b16 %v9494
        %v9679 = vunpack.c.h.b16 %v9494
        %v9680 = vunpack.c.l.b16 %v9495
        %v9681 = vunpack.c.l.b16 %v9496
        %v9682 = vunpack.c.h.b16 %v9496
        %v9683 = vunpack.c.l.b16 %v9497
        %v9684 = vunpack.c.l.b16 %v9498
        %v9685 = vunpack.c.h.b16 %v9498
        %v9686 = vunpack.c.l.b16 %v9499
        %v9687 = vunpack.c.l.b16 %v9500
        %v9688 = vunpack.c.h.b16 %v9500
        %v9689 = vunpack.c.l.b16 %v9501
        %v9690 = vunpack.c.l.b16 %v9502
        %v9691 = vunpack.c.h.b16 %v9502
        %v9692 = vunpack.c.l.b16 %v9503
        %v9693 = vunpack.c.l.b16 %v9504
        %v9694 = vunpack.c.h.b16 %v9504
        %v9695 = vunpack.c.l.b16 %v9505
        %v9696 = vunpack.c.l.b16 %v9506
        %v9697 = vunpack.c.h.b16 %v9506
        %v9698 = vunpack.c.l.b16 %v9507
        %v9699 = vunpack.c.l.b16 %v9508
        %v9700 = vunpack.c.h.b16 %v9508
        %v9701 = vunpack.c.l.b16 %v9509
        %v9702 = vunpack.c.l.b16 %v9510
        %v9703 = vunpack.c.h.b16 %v9510
        %v9704 = vunpack.c.l.b16 %v9511
        %v9705 = vunpack.c.l.b16 %v9512
        %v9706 = vunpack.c.h.b16 %v9512
        %v9707 = vunpack.c.l.b16 %v9513
        %v9708 = vunpack.c.l.b16 %v9514
        %v9709 = vunpack.c.h.b16 %v9514
        %v9710 = vunpack.c.l.b16 %v9515
        %v9711 = vunpack.c.l.b16 %v9516
        %v9712 = vunpack.c.h.b16 %v9516
        %v9713 = vunpack.c.l.b16 %v9517
        %v9714 = vunpack.c.l.b16 %v9518
        %v9715 = vunpack.c.h.b16 %v9518
        %v9716 = vunpack.c.l.b16 %v9519
        %v9717 = vunpack.c.l.b16 %v9520
        %v9718 = vunpack.c.h.b16 %v9520
        %v9719 = vunpack.c.l.b16 %v9521
        %v9720 = vunpack.c.l.b16 %v9522
        %v9721 = vunpack.c.h.b16 %v9522
        %v9722 = vunpack.c.l.b16 %v9523
        %v9723 = vunpack.c.l.b16 %v9524
        %v9724 = vunpack.c.h.b16 %v9524
        %v9725 = vunpack.c.l.b16 %v9525
        %v9726 = vunpack.c.l.b16 %v9526
        %v9727 = vunpack.c.h.b16 %v9526
        %v9728 = vunpack.c.l.b16 %v9527
        %v9729 = vunpack.c.l.b16 %v9528
        %v9730 = vunpack.c.h.b16 %v9528
        %v9731 = vunpack.c.l.b16 %v9529
        %v9732 = vunpack.c.l.b16 %v9530
        %v9733 = vunpack.c.h.b16 %v9530
        %v9734 = vunpack.c.l.b16 %v9531
        %v9735 = vunpack.c.l.b16 %v9532
        %v9736 = vunpack.c.h.b16 %v9532
        %v9737 = vunpack.c.l.b16 %v9533
        %v9738 = vunpack.c.l.b16 %v9534
        %v9739 = vunpack.c.h.b16 %v9534
        %v9740 = vunpack.c.l.b16 %v9535
        %v9741 = vunpack.c.l.b16 %v9536
        %v9742 = vunpack.c.h.b16 %v9536
        %v9743 = vunpack.c.l.b16 %v9537
        %v9744 = vunpack.c.l.b16 %v9538
        %v9745 = vunpack.c.h.b16 %v9538
        %v9746 = vunpack.c.l.b16 %v9539
        %v9747 = vunpack.c.l.b16 %v9540
        %v9748 = vunpack.c.h.b16 %v9540
        %v9749 = vunpack.c.l.b16 %v9541
        %v9750 = vunpack.c.l.b16 %v9542
        %v9751 = vunpack.c.h.b16 %v9542
        %v9752 = vunpack.c.l.b16 %v9543
        %v9753 = vpack.c.b16 %v9660, %v9657
        %v9754 = vpack.c.b16 %v9661, %v9658
        %v9755 = vpack.c.b16 %v9662, %v9659
        %v9756 = vpack.c.b16 %v9666, %v9663
        %v9757 = vpack.c.b16 %v9667, %v9664
        %v9758 = vpack.c.b16 %v9668, %v9665
        %v9759 = vpack.c.b16 %v9672, %v9669
        %v9760 = vpack.c.b16 %v9673, %v9670
        %v9761 = vpack.c.b16 %v9674, %v9671
        %v9762 = vpack.c.b16 %v9678, %v9675
        %v9763 = vpack.c.b16 %v9679, %v9676
        %v9764 = vpack.c.b16 %v9680, %v9677
        %v9765 = vpack.c.b16 %v9684, %v9681
        %v9766 = vpack.c.b16 %v9685, %v9682
        %v9767 = vpack.c.b16 %v9686, %v9683
        %v9768 = vpack.c.b16 %v9690, %v9687
        %v9769 = vpack.c.b16 %v9691, %v9688
        %v9770 = vpack.c.b16 %v9692, %v9689
        %v9771 = vpack.c.b16 %v9696, %v9693
        %v9772 = vpack.c.b16 %v9697, %v9694
        %v9773 = vpack.c.b16 %v9698, %v9695
        %v9774 = vpack.c.b16 %v9702, %v9699
        %v9775 = vpack.c.b16 %v9703, %v9700
        %v9776 = vpack.c.b16 %v9704, %v9701
        %v9777 = vpack.c.b16 %v9708, %v9705
        %v9778 = vpack.c.b16 %v9709, %v9706
        %v9779 = vpack.c.b16 %v9710, %v9707
        %v9780 = vpack.c.b16 %v9714, %v9711
        %v9781 = vpack.c.b16 %v9715, %v9712
        %v9782 = vpack.c.b16 %v9716, %v9713
        %v9783 = vpack.c.b16 %v9720, %v9717
        %v9784 = vpack.c.b16 %v9721, %v9718
        %v9785 = vpack.c.b16 %v9722, %v9719
        %v9786 = vpack.c.b16 %v9726, %v9723
        %v9787 = vpack.c.b16 %v9727, %v9724
        %v9788 = vpack.c.b16 %v9728, %v9725
        %v9789 = vpack.c.b16 %v9732, %v9729
        %v9790 = vpack.c.b16 %v9733, %v9730
        %v9791 = vpack.c.b16 %v9734, %v9731
        %v9792 = vpack.c.b16 %v9738, %v9735
        %v9793 = vpack.c.b16 %v9739, %v9736
        %v9794 = vpack.c.b16 %v9740, %v9737
        %v9795 = vpack.c.b16 %v9744, %v9741
        %v9796 = vpack.c.b16 %v9745, %v9742
        %v9797 = vpack.c.b16 %v9746, %v9743
        %v9798 = vpack.c.b16 %v9750, %v9747
        %v9799 = vpack.c.b16 %v9751, %v9748
        %v9800 = vpack.c.b16 %v9752, %v9749
        %v9897 = vunpack.c.l.b16 %v9545
        %v9898 = vunpack.c.l.b16 %v9546
        %v9899 = vunpack.c.l.b16 %v9547
        %v9900 = vunpack.c.l.b16 %v9548
        %v9901 = vunpack.c.l.b16 %v9549
        %v9902 = vunpack.c.l.b16 %v9550
        %v9903 = vunpack.c.l.b16 %v9551
        %v9904 = vunpack.c.l.b16 %v9552
        %v9905 = vunpack.c.l.b16 %v9553
        %v9906 = vunpack.c.l.b16 %v9554
        %v9907 = vunpack.c.l.b16 %v9555
        %v9908 = vunpack.c.l.b16 %v9556
        %v9909 = vunpack.c.l.b16 %v9557
        %v9910 = vunpack.c.l.b16 %v9558
        %v9911 = vunpack.c.l.b16 %v9559
        %v9912 = vunpack.c.l.b16 %v9560
        %v9913 = vunpack.c.l.b16 %v9561
        %v9914 = vunpack.c.l.b16 %v9562
        %v9915 = vunpack.c.l.b16 %v9563
        %v9916 = vunpack.c.l.b16 %v9564
        %v9917 = vunpack.c.l.b16 %v9565
        %v9918 = vunpack.c.l.b16 %v9566
        %v9919 = vunpack.c.l.b16 %v9567
        %v9920 = vunpack.c.l.b16 %v9568
        %v9921 = vunpack.c.l.b16 %v9569
        %v9922 = vunpack.c.l.b16 %v9570
        %v9923 = vunpack.c.l.b16 %v9571
        %v9924 = vunpack.c.l.b16 %v9572
        %v9925 = vunpack.c.l.b16 %v9573
        %v9926 = vunpack.c.l.b16 %v9574
        %v9927 = vunpack.c.l.b16 %v9575
        %v9928 = vunpack.c.l.b16 %v9576
        %v9929 = vunpack.c.l.b16 %v9577
        %v9930 = vunpack.c.l.b16 %v9578
        %v9931 = vunpack.c.l.b16 %v9579
        %v9932 = vunpack.c.l.b16 %v9580
        %v9933 = vunpack.c.l.b16 %v9581
        %v9934 = vunpack.c.l.b16 %v9582
        %v9935 = vunpack.c.l.b16 %v9583
        %v9936 = vunpack.c.l.b16 %v9584
        %v9937 = vunpack.c.l.b16 %v9585
        %v9938 = vunpack.c.l.b16 %v9586
        %v9939 = vunpack.c.l.b16 %v9587
        %v9940 = vunpack.c.l.b16 %v9588
        %v9941 = vunpack.c.l.b16 %v9589
        %v9942 = vunpack.c.l.b16 %v9590
        %v9943 = vunpack.c.l.b16 %v9591
        %v9944 = vunpack.c.l.b16 %v9592
        %v9945 = vpack.c.b16 %v9898, %v9897
        %v9946 = vpack.c.b16 %v9900, %v9899
        %v9947 = vpack.c.b16 %v9902, %v9901
        %v9948 = vpack.c.b16 %v9904, %v9903
        %v9949 = vpack.c.b16 %v9906, %v9905
        %v9950 = vpack.c.b16 %v9908, %v9907
        %v9951 = vpack.c.b16 %v9910, %v9909
        %v9952 = vpack.c.b16 %v9912, %v9911
        %v9953 = vpack.c.b16 %v9914, %v9913
        %v9954 = vpack.c.b16 %v9916, %v9915
        %v9955 = vpack.c.b16 %v9918, %v9917
        %v9956 = vpack.c.b16 %v9920, %v9919
        %v9957 = vpack.c.b16 %v9922, %v9921
        %v9958 = vpack.c.b16 %v9924, %v9923
        %v9959 = vpack.c.b16 %v9926, %v9925
        %v9960 = vpack.c.b16 %v9928, %v9927
        %v9961 = vpack.c.b16 %v9930, %v9929
        %v9962 = vpack.c.b16 %v9932, %v9931
        %v9963 = vpack.c.b16 %v9934, %v9933
        %v9964 = vpack.c.b16 %v9936, %v9935
        %v9965 = vpack.c.b16 %v9938, %v9937
        %v9966 = vpack.c.b16 %v9940, %v9939
        %v9967 = vpack.c.b16 %v9942, %v9941
        %v9968 = vpack.c.b16 %v9944, %v9943
        %9993 = vmatpush.bf16.msra.mxu0 %v9952
        %9994 = vmatpush.bf16.msra.mxu0 %v9951
        %9995 = vmatpush.bf16.msra.mxu0 %v9950
        %9996 = vmatpush.bf16.msra.mxu0 %v9949
        %9997 = vmatpush.bf16.msra.mxu0 %v9948
        %9998 = vmatpush.bf16.msra.mxu0 %v9947
        %9999 = vmatpush.bf16.msra.mxu0 %v9946
        %10000 = vmatpush.bf16.msra.mxu0 %v9945
        %10001 = vmatmul.bf16.gmra.mxu0 %v9753
        %v10002 = vpop.f32.mrf.mxu0
        %v10003 = vadd.f32 0.0, %v10002
        %v10004 = vpop.f32.mrf.mxu0
        %v10005 = vadd.f32 0.0, %v10004
        %10006 = vmatmul.bf16.gmra.mxu0 %v9756
        %v10007 = vpop.f32.mrf.mxu0
        %v10008 = vadd.f32 0.0, %v10007
        %v10009 = vpop.f32.mrf.mxu0
        %v10010 = vadd.f32 0.0, %v10009
        %10011 = vmatmul.bf16.gmra.mxu0 %v9759
        %v10012 = vpop.f32.mrf.mxu0
        %v10013 = vadd.f32 0.0, %v10012
        %v10014 = vpop.f32.mrf.mxu0
        %v10015 = vadd.f32 0.0, %v10014
        %10016 = vmatmul.bf16.gmra.mxu0 %v9762
        %v10017 = vpop.f32.mrf.mxu0
        %v10018 = vadd.f32 0.0, %v10017
        %v10019 = vpop.f32.mrf.mxu0
        %v10020 = vadd.f32 0.0, %v10019
        %10021 = vmatmul.bf16.gmra.mxu0 %v9765
        %v10022 = vpop.f32.mrf.mxu0
        %v10023 = vadd.f32 0.0, %v10022
        %v10024 = vpop.f32.mrf.mxu0
        %v10025 = vadd.f32 0.0, %v10024
        %10026 = vmatmul.bf16.gmra.mxu0 %v9768
        %v10027 = vpop.f32.mrf.mxu0
        %v10028 = vadd.f32 0.0, %v10027
        %v10029 = vpop.f32.mrf.mxu0
        %v10030 = vadd.f32 0.0, %v10029
        %10031 = vmatmul.bf16.gmra.mxu0 %v9771
        %v10032 = vpop.f32.mrf.mxu0
        %v10033 = vadd.f32 0.0, %v10032
        %v10034 = vpop.f32.mrf.mxu0
        %v10035 = vadd.f32 0.0, %v10034
        %10036 = vmatmul.bf16.gmra.mxu0 %v9774
        %v10037 = vpop.f32.mrf.mxu0
        %v10038 = vadd.f32 0.0, %v10037
        %v10039 = vpop.f32.mrf.mxu0
        %v10040 = vadd.f32 0.0, %v10039
        %10041 = vmatmul.bf16.gmra.mxu0 %v9777
        %v10042 = vpop.f32.mrf.mxu0
        %v10043 = vadd.f32 0.0, %v10042
        %v10044 = vpop.f32.mrf.mxu0
        %v10045 = vadd.f32 0.0, %v10044
        %10046 = vmatmul.bf16.gmra.mxu0 %v9780
        %v10047 = vpop.f32.mrf.mxu0
        %v10048 = vadd.f32 0.0, %v10047
        %v10049 = vpop.f32.mrf.mxu0
        %v10050 = vadd.f32 0.0, %v10049
        %10051 = vmatmul.bf16.gmra.mxu0 %v9783
        %v10052 = vpop.f32.mrf.mxu0
        %v10053 = vadd.f32 0.0, %v10052
        %v10054 = vpop.f32.mrf.mxu0
        %v10055 = vadd.f32 0.0, %v10054
        %10056 = vmatmul.bf16.gmra.mxu0 %v9786
        %v10057 = vpop.f32.mrf.mxu0
        %v10058 = vadd.f32 0.0, %v10057
        %v10059 = vpop.f32.mrf.mxu0
        %v10060 = vadd.f32 0.0, %v10059
        %10061 = vmatmul.bf16.gmra.mxu0 %v9789
        %v10062 = vpop.f32.mrf.mxu0
        %v10063 = vadd.f32 0.0, %v10062
        %v10064 = vpop.f32.mrf.mxu0
        %v10065 = vadd.f32 0.0, %v10064
        %10066 = vmatmul.bf16.gmra.mxu0 %v9792
        %v10067 = vpop.f32.mrf.mxu0
        %v10068 = vadd.f32 0.0, %v10067
        %v10069 = vpop.f32.mrf.mxu0
        %v10070 = vadd.f32 0.0, %v10069
        %10071 = vmatmul.bf16.gmra.mxu0 %v9795
        %v10072 = vpop.f32.mrf.mxu0
        %v10073 = vadd.f32 0.0, %v10072
        %v10074 = vpop.f32.mrf.mxu0
        %v10075 = vadd.f32 0.0, %v10074
        %10076 = vmatmul.bf16.gmra.mxu0 %v9798
        %v10077 = vpop.f32.mrf.mxu0
        %v10078 = vadd.f32 0.0, %v10077
        %v10079 = vpop.f32.mrf.mxu0
        %v10080 = vadd.f32 0.0, %v10079
        %10081 = vdwg.mxu0
        %10082 = vmatpush.bf16.msra.mxu0 %v9960
        %10083 = vmatpush.bf16.msra.mxu0 %v9959
        %10084 = vmatpush.bf16.msra.mxu0 %v9958
        %10085 = vmatpush.bf16.msra.mxu0 %v9957
        %10086 = vmatpush.bf16.msra.mxu0 %v9956
        %10087 = vmatpush.bf16.msra.mxu0 %v9955
        %10088 = vmatpush.bf16.msra.mxu0 %v9954
        %10089 = vmatpush.bf16.msra.mxu0 %v9953
        %10090 = vmatmul.bf16.gmra.mxu0 %v9754
        %v10091 = vpop.f32.mrf.mxu0
        %v10092 = vadd.f32 %v10003, %v10091
        %v10093 = vpop.f32.mrf.mxu0
        %v10094 = vadd.f32 %v10005, %v10093
        %10095 = vmatmul.bf16.gmra.mxu0 %v9757
        %v10096 = vpop.f32.mrf.mxu0
        %v10097 = vadd.f32 %v10008, %v10096
        %v10098 = vpop.f32.mrf.mxu0
        %v10099 = vadd.f32 %v10010, %v10098
        %10100 = vmatmul.bf16.gmra.mxu0 %v9760
        %v10101 = vpop.f32.mrf.mxu0
        %v10102 = vadd.f32 %v10013, %v10101
        %v10103 = vpop.f32.mrf.mxu0
        %v10104 = vadd.f32 %v10015, %v10103
        %10105 = vmatmul.bf16.gmra.mxu0 %v9763
        %v10106 = vpop.f32.mrf.mxu0
        %v10107 = vadd.f32 %v10018, %v10106
        %v10108 = vpop.f32.mrf.mxu0
        %v10109 = vadd.f32 %v10020, %v10108
        %10110 = vmatmul.bf16.gmra.mxu0 %v9766
        %v10111 = vpop.f32.mrf.mxu0
        %v10112 = vadd.f32 %v10023, %v10111
        %v10113 = vpop.f32.mrf.mxu0
        %v10114 = vadd.f32 %v10025, %v10113
        %10115 = vmatmul.bf16.gmra.mxu0 %v9769
        %v10116 = vpop.f32.mrf.mxu0
        %v10117 = vadd.f32 %v10028, %v10116
        %v10118 = vpop.f32.mrf.mxu0
        %v10119 = vadd.f32 %v10030, %v10118
        %10120 = vmatmul.bf16.gmra.mxu0 %v9772
        %v10121 = vpop.f32.mrf.mxu0
        %v10122 = vadd.f32 %v10033, %v10121
        %v10123 = vpop.f32.mrf.mxu0
        %v10124 = vadd.f32 %v10035, %v10123
        %10125 = vmatmul.bf16.gmra.mxu0 %v9775
        %v10126 = vpop.f32.mrf.mxu0
        %v10127 = vadd.f32 %v10038, %v10126
        %v10128 = vpop.f32.mrf.mxu0
        %v10129 = vadd.f32 %v10040, %v10128
        %10130 = vmatmul.bf16.gmra.mxu0 %v9778
        %v10131 = vpop.f32.mrf.mxu0
        %v10132 = vadd.f32 %v10043, %v10131
        %v10133 = vpop.f32.mrf.mxu0
        %v10134 = vadd.f32 %v10045, %v10133
        %10135 = vmatmul.bf16.gmra.mxu0 %v9781
        %v10136 = vpop.f32.mrf.mxu0
        %v10137 = vadd.f32 %v10048, %v10136
        %v10138 = vpop.f32.mrf.mxu0
        %v10139 = vadd.f32 %v10050, %v10138
        %10140 = vmatmul.bf16.gmra.mxu0 %v9784
        %v10141 = vpop.f32.mrf.mxu0
        %v10142 = vadd.f32 %v10053, %v10141
        %v10143 = vpop.f32.mrf.mxu0
        %v10144 = vadd.f32 %v10055, %v10143
        %10145 = vmatmul.bf16.gmra.mxu0 %v9787
        %v10146 = vpop.f32.mrf.mxu0
        %v10147 = vadd.f32 %v10058, %v10146
        %v10148 = vpop.f32.mrf.mxu0
        %v10149 = vadd.f32 %v10060, %v10148
        %10150 = vmatmul.bf16.gmra.mxu0 %v9790
        %v10151 = vpop.f32.mrf.mxu0
        %v10152 = vadd.f32 %v10063, %v10151
        %v10153 = vpop.f32.mrf.mxu0
        %v10154 = vadd.f32 %v10065, %v10153
        %10155 = vmatmul.bf16.gmra.mxu0 %v9793
        %v10156 = vpop.f32.mrf.mxu0
        %v10157 = vadd.f32 %v10068, %v10156
        %v10158 = vpop.f32.mrf.mxu0
        %v10159 = vadd.f32 %v10070, %v10158
        %10160 = vmatmul.bf16.gmra.mxu0 %v9796
        %v10161 = vpop.f32.mrf.mxu0
        %v10162 = vadd.f32 %v10073, %v10161
        %v10163 = vpop.f32.mrf.mxu0
        %v10164 = vadd.f32 %v10075, %v10163
        %10165 = vmatmul.bf16.gmra.mxu0 %v9799
        %v10166 = vpop.f32.mrf.mxu0
        %v10167 = vadd.f32 %v10078, %v10166
        %v10168 = vpop.f32.mrf.mxu0
        %v10169 = vadd.f32 %v10080, %v10168
        %10170 = vdwg.mxu0
        %10171 = vmatpush.bf16.msra.mxu0 %v9968
        %10172 = vmatpush.bf16.msra.mxu0 %v9967
        %10173 = vmatpush.bf16.msra.mxu0 %v9966
        %10174 = vmatpush.bf16.msra.mxu0 %v9965
        %10175 = vmatpush.bf16.msra.mxu0 %v9964
        %10176 = vmatpush.bf16.msra.mxu0 %v9963
        %10177 = vmatpush.bf16.msra.mxu0 %v9962
        %10178 = vmatpush.bf16.msra.mxu0 %v9961
        %10179 = vmatmul.bf16.gmra.mxu0 %v9755
        %v10180 = vpop.f32.mrf.mxu0
        %v10181 = vadd.f32 %v10092, %v10180
        %v10182 = vpop.f32.mrf.mxu0
        %v10183 = vadd.f32 %v10094, %v10182
        %10184 = vmatmul.bf16.gmra.mxu0 %v9758
        %v10185 = vpop.f32.mrf.mxu0
        %v10186 = vadd.f32 %v10097, %v10185
        %v10187 = vpop.f32.mrf.mxu0
        %v10188 = vadd.f32 %v10099, %v10187
        %10189 = vmatmul.bf16.gmra.mxu0 %v9761
        %v10190 = vpop.f32.mrf.mxu0
        %v10191 = vadd.f32 %v10102, %v10190
        %v10192 = vpop.f32.mrf.mxu0
        %v10193 = vadd.f32 %v10104, %v10192
        %10194 = vmatmul.bf16.gmra.mxu0 %v9764
        %v10195 = vpop.f32.mrf.mxu0
        %v10196 = vadd.f32 %v10107, %v10195
        %v10197 = vpop.f32.mrf.mxu0
        %v10198 = vadd.f32 %v10109, %v10197
        %10199 = vmatmul.bf16.gmra.mxu0 %v9767
        %v10200 = vpop.f32.mrf.mxu0
        %v10201 = vadd.f32 %v10112, %v10200
        %v10202 = vpop.f32.mrf.mxu0
        %v10203 = vadd.f32 %v10114, %v10202
        %10204 = vmatmul.bf16.gmra.mxu0 %v9770
        %v10205 = vpop.f32.mrf.mxu0
        %v10206 = vadd.f32 %v10117, %v10205
        %v10207 = vpop.f32.mrf.mxu0
        %v10208 = vadd.f32 %v10119, %v10207
        %10209 = vmatmul.bf16.gmra.mxu0 %v9773
        %v10210 = vpop.f32.mrf.mxu0
        %v10211 = vadd.f32 %v10122, %v10210
        %v10212 = vpop.f32.mrf.mxu0
        %v10213 = vadd.f32 %v10124, %v10212
        %10214 = vmatmul.bf16.gmra.mxu0 %v9776
        %v10215 = vpop.f32.mrf.mxu0
        %v10216 = vadd.f32 %v10127, %v10215
        %v10217 = vpop.f32.mrf.mxu0
        %v10218 = vadd.f32 %v10129, %v10217
        %10219 = vmatmul.bf16.gmra.mxu0 %v9779
        %v10220 = vpop.f32.mrf.mxu0
        %v10221 = vadd.f32 %v10132, %v10220
        %v10222 = vpop.f32.mrf.mxu0
        %v10223 = vadd.f32 %v10134, %v10222
        %10224 = vmatmul.bf16.gmra.mxu0 %v9782
        %v10225 = vpop.f32.mrf.mxu0
        %v10226 = vadd.f32 %v10137, %v10225
        %v10227 = vpop.f32.mrf.mxu0
        %v10228 = vadd.f32 %v10139, %v10227
        %10229 = vmatmul.bf16.gmra.mxu0 %v9785
        %v10230 = vpop.f32.mrf.mxu0
        %v10231 = vadd.f32 %v10142, %v10230
        %v10232 = vpop.f32.mrf.mxu0
        %v10233 = vadd.f32 %v10144, %v10232
        %10234 = vmatmul.bf16.gmra.mxu0 %v9788
        %v10235 = vpop.f32.mrf.mxu0
        %v10236 = vadd.f32 %v10147, %v10235
        %v10237 = vpop.f32.mrf.mxu0
        %v10238 = vadd.f32 %v10149, %v10237
        %10239 = vmatmul.bf16.gmra.mxu0 %v9791
        %v10240 = vpop.f32.mrf.mxu0
        %v10241 = vadd.f32 %v10152, %v10240
        %v10242 = vpop.f32.mrf.mxu0
        %v10243 = vadd.f32 %v10154, %v10242
        %10244 = vmatmul.bf16.gmra.mxu0 %v9794
        %v10245 = vpop.f32.mrf.mxu0
        %v10246 = vadd.f32 %v10157, %v10245
        %v10247 = vpop.f32.mrf.mxu0
        %v10248 = vadd.f32 %v10159, %v10247
        %10249 = vmatmul.bf16.gmra.mxu0 %v9797
        %v10250 = vpop.f32.mrf.mxu0
        %v10251 = vadd.f32 %v10162, %v10250
        %v10252 = vpop.f32.mrf.mxu0
        %v10253 = vadd.f32 %v10164, %v10252
        %10254 = vmatmul.bf16.gmra.mxu0 %v9800
        %v10255 = vpop.f32.mrf.mxu0
        %v10256 = vadd.f32 %v10167, %v10255
        %v10257 = vpop.f32.mrf.mxu0
        %v10258 = vadd.f32 %v10169, %v10257
        %10259 = vdwg.mxu0
        %v10260 = vadd.f32 %v9400, %v10181
        %v10261 = vadd.f32 %v9402, %v10183
        %v10262 = vadd.f32 %v9405, %v10186
        %v10263 = vadd.f32 %v9407, %v10188
        %v10264 = vadd.f32 %v9410, %v10191
        %v10265 = vadd.f32 %v9412, %v10193
        %v10266 = vadd.f32 %v9415, %v10196
        %v10267 = vadd.f32 %v9417, %v10198
        %v10268 = vadd.f32 %v9420, %v10201
        %v10269 = vadd.f32 %v9422, %v10203
        %v10270 = vadd.f32 %v9425, %v10206
        %v10271 = vadd.f32 %v9427, %v10208
        %v10272 = vadd.f32 %v9430, %v10211
        %v10273 = vadd.f32 %v9432, %v10213
        %v10274 = vadd.f32 %v9435, %v10216
        %v10275 = vadd.f32 %v9437, %v10218
        %v10276 = vadd.f32 %v9440, %v10221
        %v10277 = vadd.f32 %v9442, %v10223
        %v10278 = vadd.f32 %v9445, %v10226
        %v10279 = vadd.f32 %v9447, %v10228
        %v10280 = vadd.f32 %v9450, %v10231
        %v10281 = vadd.f32 %v9452, %v10233
        %v10282 = vadd.f32 %v9455, %v10236
        %v10283 = vadd.f32 %v9457, %v10238
        %v10284 = vadd.f32 %v9460, %v10241
        %v10285 = vadd.f32 %v9462, %v10243
        %v10286 = vadd.f32 %v9465, %v10246
        %v10287 = vadd.f32 %v9467, %v10248
        %v10288 = vadd.f32 %v9470, %v10251
        %v10289 = vadd.f32 %v9472, %v10253
        %v10290 = vadd.f32 %v9475, %v10256
        %v10291 = vadd.f32 %v9477, %v10258
        %v10293 = vperm.slane %v7919, 0
        %v10295 = vadd.f32 %v10260, %v10293
        %v10296 = vadd.f32 %v10261, %v10293
        %v10297 = vadd.f32 %v10262, %v10293
        %v10298 = vadd.f32 %v10263, %v10293
        %v10299 = vadd.f32 %v10264, %v10293
        %v10300 = vadd.f32 %v10265, %v10293
        %v10301 = vadd.f32 %v10266, %v10293
        %v10302 = vadd.f32 %v10267, %v10293
        %v10303 = vadd.f32 %v10268, %v10293
        %v10304 = vadd.f32 %v10269, %v10293
        %v10305 = vadd.f32 %v10270, %v10293
        %v10306 = vadd.f32 %v10271, %v10293
        %v10307 = vadd.f32 %v10272, %v10293
        %v10308 = vadd.f32 %v10273, %v10293
        %v10309 = vadd.f32 %v10274, %v10293
        %v10310 = vadd.f32 %v10275, %v10293
        %v10311 = vadd.f32 %v10276, %v10293
        %v10312 = vadd.f32 %v10277, %v10293
        %v10313 = vadd.f32 %v10278, %v10293
        %v10314 = vadd.f32 %v10279, %v10293
        %v10315 = vadd.f32 %v10280, %v10293
        %v10316 = vadd.f32 %v10281, %v10293
        %v10317 = vadd.f32 %v10282, %v10293
        %v10318 = vadd.f32 %v10283, %v10293
        %v10319 = vadd.f32 %v10284, %v10293
        %v10320 = vadd.f32 %v10285, %v10293
        %v10321 = vadd.f32 %v10286, %v10293
        %v10322 = vadd.f32 %v10287, %v10293
        %v10323 = vadd.f32 %v10288, %v10293
        %v10324 = vadd.f32 %v10289, %v10293
        %v10325 = vadd.f32 %v10290, %v10293
        %v10326 = vadd.f32 %v10291, %v10293
        %v10327 = vmax.f32 %v10295, 0.0
        %v10328 = vmax.f32 %v10296, 0.0
        %v10329 = vmax.f32 %v10297, 0.0
        %v10330 = vmax.f32 %v10298, 0.0
        %v10331 = vmax.f32 %v10299, 0.0
        %v10332 = vmax.f32 %v10300, 0.0
        %v10333 = vmax.f32 %v10301, 0.0
        %v10334 = vmax.f32 %v10302, 0.0
        %v10335 = vmax.f32 %v10303, 0.0
        %v10336 = vmax.f32 %v10304, 0.0
        %v10337 = vmax.f32 %v10305, 0.0
        %v10338 = vmax.f32 %v10306, 0.0
        %v10339 = vmax.f32 %v10307, 0.0
        %v10340 = vmax.f32 %v10308, 0.0
        %v10341 = vmax.f32 %v10309, 0.0
        %v10342 = vmax.f32 %v10310, 0.0
        %v10343 = vmax.f32 %v10311, 0.0
        %v10344 = vmax.f32 %v10312, 0.0
        %v10345 = vmax.f32 %v10313, 0.0
        %v10346 = vmax.f32 %v10314, 0.0
        %v10347 = vmax.f32 %v10315, 0.0
        %v10348 = vmax.f32 %v10316, 0.0
        %v10349 = vmax.f32 %v10317, 0.0
        %v10350 = vmax.f32 %v10318, 0.0
        %v10351 = vmax.f32 %v10319, 0.0
        %v10352 = vmax.f32 %v10320, 0.0
        %v10353 = vmax.f32 %v10321, 0.0
        %v10354 = vmax.f32 %v10322, 0.0
        %v10355 = vmax.f32 %v10323, 0.0
        %v10356 = vmax.f32 %v10324, 0.0
        %v10357 = vmax.f32 %v10325, 0.0
        %v10358 = vmax.f32 %v10326, 0.0
        %10359 = vst [vmem:[%s347] sm:$0xff] %v10327
        %10360 = vst [vmem:[%s347 + $0x8] sm:$0xff] %v10328
        %10361 = vst [vmem:[%s347 + $0x10] sm:$0xff] %v10329
        %10362 = vst [vmem:[%s347 + $0x18] sm:$0xff] %v10330
        %10363 = vst [vmem:[%s347 + $0x20] sm:$0xff] %v10331
        %10364 = vst [vmem:[%s347 + $0x28] sm:$0xff] %v10332
        %10365 = vst [vmem:[%s347 + $0x30] sm:$0xff] %v10333
        %10366 = vst [vmem:[%s347 + $0x38] sm:$0xff] %v10334
        %10367 = vst [vmem:[%s347 + $0x40] sm:$0xff] %v10335
        %10368 = vst [vmem:[%s347 + $0x48] sm:$0xff] %v10336
        %10369 = vst [vmem:[%s347 + $0x50] sm:$0xff] %v10337
        %10370 = vst [vmem:[%s347 + $0x58] sm:$0xff] %v10338
        %10371 = vst [vmem:[%s347 + $0x60] sm:$0xff] %v10339
        %10372 = vst [vmem:[%s347 + $0x68] sm:$0xff] %v10340
        %10373 = vst [vmem:[%s347 + $0x70] sm:$0xff] %v10341
        %10374 = vst [vmem:[%s347 + $0x78] sm:$0xff] %v10342
        %10375 = vst [vmem:[%s347 + $0x80] sm:$0xff] %v10343
        %10376 = vst [vmem:[%s347 + $0x88] sm:$0xff] %v10344
        %10377 = vst [vmem:[%s347 + $0x90] sm:$0xff] %v10345
        %10378 = vst [vmem:[%s347 + $0x98] sm:$0xff] %v10346
        %10379 = vst [vmem:[%s347 + $0xa0] sm:$0xff] %v10347
        %10380 = vst [vmem:[%s347 + $0xa8] sm:$0xff] %v10348
        %10381 = vst [vmem:[%s347 + $0xb0] sm:$0xff] %v10349
        %10382 = vst [vmem:[%s347 + $0xb8] sm:$0xff] %v10350
        %10383 = vst [vmem:[%s347 + $0xc0] sm:$0xff] %v10351
        %10384 = vst [vmem:[%s347 + $0xc8] sm:$0xff] %v10352
        %10385 = vst [vmem:[%s347 + $0xd0] sm:$0xff] %v10353
        %10386 = vst [vmem:[%s347 + $0xd8] sm:$0xff] %v10354
        %10387 = vst [vmem:[%s347 + $0xe0] sm:$0xff] %v10355
        %10388 = vst [vmem:[%s347 + $0xe8] sm:$0xff] %v10356
        %10389 = vst [vmem:[%s347 + $0xf0] sm:$0xff] %v10357
        %10390 = vst [vmem:[%s347 + $0xf8] sm:$0xff] %v10358
        %s10391 = sand.u32 %s210, 1
        %s10392 = scalar_lea.sflag [#allocation6], %s10391
        %s10393 = sand.u32 %s210, 1
        %s10394 = smul.addr %s10393, 256
        %s10395 = scalar_lea.vmem [#allocation9], %s10394
        // Predicated region
        $region61: #{tpu_custom_call.1} parent=51 // pred_check
          %p10396 = pneg %p220
        $region62: #{tpu_custom_call.1} parent=51 // pred_check_branch
          %10398 = sbr.rel (%p10396) target = $region64
        $region63: #{tpu_custom_call.1} parent=51 // pred_region
          %10400 = vsyncadd %s10392, 0
          %s10401 = smul.addr %s24, 32
          %s10402 = smul.addr %s10401, 8
          %s10403 = scalar_lea.hbm %s8, %s10402
          %s10404 = sshll.u32 %s10395, 4
          %s10405 = int_to_ptr.vmem [resolvable:$true] %s10404
          %s10406 = sshll.u32 %s10403, 4
          %s10407 = int_to_ptr.hbm [resolvable:$true] %s10406
          %10412 = dma.vmem_to_hbm [thread:$0]  %s10405, 4096, %s10407, %s10392, 128, 128, 8
        $region64: #{tpu_custom_call.1} parent=51 // pred_fallthru
          _
      $region52: #{tpu_custom_call.1} parent=5 // pred_fallthru
        _
      %p10413 = scmp.le.s32.totalorder 2, %s19
      // Predicated region
      $region65: #{tpu_custom_call.1} parent=5 // pred_check
        %p10414 = pneg %p10413
      $region66: #{tpu_custom_call.1} parent=5 // pred_check_branch
        %10416 = sbr.rel (%p10414) target = $region68
      $region67: #{tpu_custom_call.1} parent=5 // pred_region
        %s10417 = ssub.s32 %s19, 2
        // Predicated region
        $region69: #{tpu_custom_call.1} parent=67 // pred_check
          %p10418 = pneg %p226
        $region70: #{tpu_custom_call.1} parent=67 // pred_check_branch
          %10420 = sbr.rel (%p10418) target = $region72
        $region71: #{tpu_custom_call.1} parent=67 // pred_region
          %s10421 = sand.u32 %s211, 1
          %s10422 = scalar_lea.sflag [#allocation6], %s10421
          %s10423 = sand.u32 %s211, 1
          %s10424 = smul.addr %s10423, 256
          %s10425 = scalar_lea.vmem [#allocation9], %s10424
          %10427 = dma.done %s10422, 4096
        $region72: #{tpu_custom_call.1} parent=67 // pred_fallthru
          _
      $region68: #{tpu_custom_call.1} parent=5 // pred_fallthru
        _
    $region6: #{tpu_custom_call.1} parent=1 // loop_footer
      %s23 = sadd.s32 1, %s19
    $region7: #{tpu_custom_call.1} parent=1 // loop_footer_branch
      %18 = sbr.rel target = $region3
    $region8: #{tpu_custom_call.1} parent=1 // loop_exit
      _
    %10428 = vsyncpa [#allocation5], 1
    %s10429 = scalar_lea.sflag [#allocation5], 1
    %10430 = vsyncpa %s10429, 1
    %10431 = vsyncpa [#allocation8], 1
    %10432 = vsyncpa [#allocation6], 1
    %s10433 = scalar_lea.sflag [#allocation6], 1
    %10434 = vsyncpa %s10433, 1

</llo_original>
